<compile_context>
chip_gen: v7x
topology: tpu7x:2x2x1
jax: 0.10.0
libtpu: 0.0.40
codegen_flags: <defaults>
</compile_context>

<pallas_src>
import functools
import math
from dataclasses import dataclass

import jax
import jax.numpy as jnp
from jax import lax
from jax.experimental import pallas as pl
from jax.experimental.pallas import tpu as pltpu


# ----------------------------- config ---------------------------------------


@dataclass
class Config:
    vocab_size: int = 64
    block_size: int = 16
    n_layer: int = 2
    n_head: int = 4
    n_embd: int = 32


# ----------------------------- in-kernel helpers -----------------------------


def _gelu_tanh(x):
    # GELU(approximate='tanh') — matches torch.nn.GELU(approximate='tanh').
    c = jnp.float32(math.sqrt(2.0 / math.pi))
    return 0.5 * x * (1.0 + jnp.tanh(c * (x + 0.044715 * x * x * x)))


def _layernorm(x, g, b, eps=1e-5):
    # x: (M, C); g, b: (1, C)
    mean = jnp.mean(x, axis=-1, keepdims=True)
    var = jnp.mean((x - mean) ** 2, axis=-1, keepdims=True)
    return (x - mean) * lax.rsqrt(var + eps) * g + b


# ----------------------------- fully fused kernel ----------------------------


def gpt_kernel(
    x_ref,                       # (B*T, C)
    ln1_g_ref, ln1_b_ref,        # (L, 1, C)
    wq_ref, wk_ref, wv_ref,      # (L, H, C, D)   (scale folded into wq)
    bq_ref, bk_ref, bv_ref,      # (L, H, 1, D)
    wproj_ref, bproj_ref,        # (L, H, D, C), (L, 1, C)
    ln2_g_ref, ln2_b_ref,        # (L, 1, C)
    wfc_ref, bfc_ref,            # (L, C, 4C), (L, 1, 4C)
    wmlp_ref, bmlp_ref,          # (L, 4C, C), (L, 1, C)
    lnf_g_ref, lnf_b_ref,        # (1, C)
    wlm_ref,                     # (C, Vp)  (lane-dense, pre-transposed tied head)
    o_ref,                       # (B*T, Vp)
    *, n_layer, n_head, batch, seq,
):
    x = x_ref[...]                                   # (BT, C) f32
    BT, C = x.shape
    D = C // n_head

    # Causal mask bias built ONCE, shared across all layers and heads (hoisted).
    row = lax.broadcasted_iota(jnp.int32, (seq, seq), 0)
    col = lax.broadcasted_iota(jnp.int32, (seq, seq), 1)
    mask_bias = jnp.where(col <= row, 0.0, -1e30).astype(jnp.float32)       # (T, T)
    mask_bias = jnp.broadcast_to(mask_bias[None, :, :], (batch, seq, seq))  # (B, T, T)

    for l in range(n_layer):                         # unrolled layer loop
        # ---- attention branch ----
        h = _layernorm(x, ln1_g_ref[l], ln1_b_ref[l])                        # (BT, C)
        y = jnp.zeros((BT, C), jnp.float32)
        for hh in range(n_head):                     # unrolled head loop; no lane slices
            q = jnp.dot(h, wq_ref[l, hh], preferred_element_type=jnp.float32) + bq_ref[l, hh]
            k = jnp.dot(h, wk_ref[l, hh], preferred_element_type=jnp.float32) + bk_ref[l, hh]
            v = jnp.dot(h, wv_ref[l, hh], preferred_element_type=jnp.float32) + bv_ref[l, hh]
            q3 = q.reshape(batch, seq, D)            # (B, T, D) — sublane-aligned split
            k3 = k.reshape(batch, seq, D)
            v3 = v.reshape(batch, seq, D)
            # Batched contraction over D (no explicit transpose): scale already in wq.
            s = jnp.einsum("btd,bsd->bts", q3, k3,
                           preferred_element_type=jnp.float32)               # (B, T, T)
            s = s + mask_bias
            s = s - jnp.max(s, axis=-1, keepdims=True)
            p = jnp.exp(s)
            p = p / jnp.sum(p, axis=-1, keepdims=True)
            o3 = jnp.einsum("bts,bsd->btd", p, v3,
                            preferred_element_type=jnp.float32)              # (B, T, D)
            # Per-head slice of the output projection (indexed on leading dims, free).
            y = y + jnp.dot(o3.reshape(BT, D), wproj_ref[l, hh],
                            preferred_element_type=jnp.float32)              # (BT, C)
        x = x + y + bproj_ref[l]                                             # residual

        # ---- MLP branch ----
        h2 = _layernorm(x, ln2_g_ref[l], ln2_b_ref[l])                       # (BT, C)
        h2 = jnp.dot(h2, wfc_ref[l], preferred_element_type=jnp.float32) + bfc_ref[l]
        h2 = _gelu_tanh(h2)                                                  # (BT, 4C) lane-dense
        h2 = jnp.dot(h2, wmlp_ref[l], preferred_element_type=jnp.float32) + bmlp_ref[l]
        x = x + h2                                                           # residual

    # ---- final LayerNorm + tied lm_head (lane-dense, padded to Vp) ----
    hf = _layernorm(x, lnf_g_ref[...], lnf_b_ref[...])
    o_ref[...] = jnp.dot(hf, wlm_ref[...],
                         preferred_element_type=jnp.float32).astype(o_ref.dtype)


# ----------------------------- wrapper ---------------------------------------


def _full_spec(a):
    nd = a.ndim
    if nd == 2:
        return pl.BlockSpec(a.shape, lambda i: (0, 0))
    if nd == 3:
        return pl.BlockSpec(a.shape, lambda i: (0, 0, 0))
    return pl.BlockSpec(a.shape, lambda i: (0, 0, 0, 0))


def gpt_forward(params, idx, cfg: Config):
    B, T = idx.shape
    C = cfg.n_embd
    V = cfg.vocab_size
    assert T <= cfg.block_size
    Vp = params["lm_head_w"].shape[1]

    # Embedding gather + positional add stay in JAX (gather glue).
    x = (params["wte"][idx] + params["wpe"][:T][None, :, :]).reshape(B * T, C)

    args = (
        x,
        params["ln1_g"], params["ln1_b"],
        params["w_q"], params["w_k"], params["w_v"],
        params["b_q"], params["b_k"], params["b_v"],
        params["w_proj"], params["b_proj"],
        params["ln2_g"], params["ln2_b"],
        params["w_fc"], params["b_fc"],
        params["w_mlp"], params["b_mlp"],
        params["ln_f_g"], params["ln_f_b"],
        params["lm_head_w"],
    )

    logits_pad = pl.pallas_call(
        functools.partial(gpt_kernel, n_layer=cfg.n_layer, n_head=cfg.n_head,
                          batch=B, seq=T),
        out_shape=jax.ShapeDtypeStruct((B * T, Vp), jnp.float32),
        grid=(1,),                                   # single grid step: whole forward
        in_specs=[_full_spec(a) for a in args],
        out_specs=pl.BlockSpec((B * T, Vp), lambda i: (0, 0)),
        compiler_params=pltpu.CompilerParams(
            dimension_semantics=("arbitrary",)
        ),
    )(*args)

    return logits_pad[:, :V].reshape(B, T, V)
    # TODO(synk): optional cross-entropy loss branch (targets=...) not implemented;
    # this is the targets=None path of the PyTorch module (returns logits only).


# ----------------------------- params ----------------------------------------


def init_params(key, cfg: Config):
    std = 0.02
    C, V, L, H = cfg.n_embd, cfg.vocab_size, cfg.n_layer, cfg.n_head
    D = C // H
    Vp = ((V + 127) // 128) * 128                 # lane-dense lm_head output
    att_scale = 1.0 / math.sqrt(D)
    ks = jax.random.split(key, 2 + 4 * L)

    wte = std * jax.random.normal(ks[0], (V, C), jnp.float32)
    wpe = std * jax.random.normal(ks[1], (cfg.block_size, C), jnp.float32)

    ln1_g, ln1_b, ln2_g, ln2_b = [], [], [], []
    w_q, w_k, w_v = [], [], []
    b_q, b_k, b_v = [], [], []
    w_pr, b_pr = [], []
    w_fc, b_fc, w_ml, b_ml = [], [], [], []

    for l in range(L):
        kq = ks[2 + 4 * l: 2 + 4 * (l + 1)]
        # weights stored (in_features, out_features): y = x @ W + b
        w_attn = std * jax.random.normal(kq[0], (C, 3 * C), jnp.float32)
        # Pre-split head-major: (H, C, D). Attention scale folded into Q weight
        # (Q bias is zero so no bias scaling needed).
        w_q.append(jnp.transpose(w_attn[:, 0 * C:1 * C].reshape(C, H, D), (1, 0, 2)) * att_scale)
        w_k.append(jnp.transpose(w_attn[:, 1 * C:2 * C].reshape(C, H, D), (1, 0, 2)))
        w_v.append(jnp.transpose(w_attn[:, 2 * C:3 * C].reshape(C, H, D), (1, 0, 2)))
        b_q.append(jnp.zeros((H, 1, D), jnp.float32))
        b_k.append(jnp.zeros((H, 1, D), jnp.float32))
        b_v.append(jnp.zeros((H, 1, D), jnp.float32))
        # Per-head rows of the output projection: (H, D, C).
        w_pr.append((std * jax.random.normal(kq[1], (C, C), jnp.float32)).reshape(H, D, C))
        b_pr.append(jnp.zeros((1, C), jnp.float32))
        ln1_g.append(jnp.ones((1, C), jnp.float32)); ln1_b.append(jnp.zeros((1, C), jnp.float32))
        ln2_g.append(jnp.ones((1, C), jnp.float32)); ln2_b.append(jnp.zeros((1, C), jnp.float32))
        w_fc.append(std * jax.random.normal(kq[2], (C, 4 * C), jnp.float32))
        b_fc.append(jnp.zeros((1, 4 * C), jnp.float32))
        w_ml.append(std * jax.random.normal(kq[3], (4 * C, C), jnp.float32))
        b_ml.append(jnp.zeros((1, C), jnp.float32))

    stack = lambda xs: jnp.stack(xs, axis=0)
    return {
        "wte": wte,                                # embedding gather (tied weights)
        "wpe": wpe,
        "ln1_g": stack(ln1_g), "ln1_b": stack(ln1_b),
        "w_q": stack(w_q), "w_k": stack(w_k), "w_v": stack(w_v),
        "b_q": stack(b_q), "b_k": stack(b_k), "b_v": stack(b_v),
        "w_proj": stack(w_pr), "b_proj": stack(b_pr),
        "ln2_g": stack(ln2_g), "ln2_b": stack(ln2_b),
        "w_fc": stack(w_fc), "b_fc": stack(b_fc),
        "w_mlp": stack(w_ml), "b_mlp": stack(b_ml),
        "ln_f_g": jnp.ones((1, C), jnp.float32),
        "ln_f_b": jnp.zeros((1, C), jnp.float32),
        # Pre-transposed + zero-padded tied lm_head weight, computed once.
        "lm_head_w": jnp.zeros((C, Vp), jnp.float32).at[:, :V].set(wte.T),
    }


# ----------------------------- main -----------------------------------------


if __name__ == "__main__":
    cfg = Config(vocab_size=64, block_size=16, n_layer=2, n_head=4, n_embd=32)
    key = jax.random.PRNGKey(0)
    k_params, k_idx = jax.random.split(key)

    params = init_params(k_params, cfg)

    B, T = 2, 8
    idx = jax.random.randint(k_idx, (B, T), 0, cfg.vocab_size, dtype=jnp.int32)

    fwd = jax.jit(functools.partial(gpt_forward, cfg=cfg))
    logits = fwd(params, idx)
    jax.block_until_ready(logits)

    assert logits.shape == (B, T, cfg.vocab_size)
    assert bool(jnp.all(jnp.isfinite(logits)))
    print("KERNEL_OK")
</pallas_src>

<mosaic_0001>
module attributes {stable_mosaic.version = 11 : i64} {
  func.func @gpt_kernel(%arg0: i32, %arg1: memref<16x32xf32, #tpu.memory_space<vmem>>, %arg2: memref<2x1x32xf32, #tpu.memory_space<vmem>>, %arg3: memref<2x1x32xf32, #tpu.memory_space<vmem>>, %arg4: memref<2x4x32x8xf32, #tpu.memory_space<vmem>>, %arg5: memref<2x4x32x8xf32, #tpu.memory_space<vmem>>, %arg6: memref<2x4x32x8xf32, #tpu.memory_space<vmem>>, %arg7: memref<2x4x1x8xf32, #tpu.memory_space<vmem>>, %arg8: memref<2x4x1x8xf32, #tpu.memory_space<vmem>>, %arg9: memref<2x4x1x8xf32, #tpu.memory_space<vmem>>, %arg10: memref<2x4x8x32xf32, #tpu.memory_space<vmem>>, %arg11: memref<2x1x32xf32, #tpu.memory_space<vmem>>, %arg12: memref<2x1x32xf32, #tpu.memory_space<vmem>>, %arg13: memref<2x1x32xf32, #tpu.memory_space<vmem>>, %arg14: memref<2x32x128xf32, #tpu.memory_space<vmem>>, %arg15: memref<2x1x128xf32, #tpu.memory_space<vmem>>, %arg16: memref<2x128x32xf32, #tpu.memory_space<vmem>>, %arg17: memref<2x1x32xf32, #tpu.memory_space<vmem>>, %arg18: memref<1x32xf32, #tpu.memory_space<vmem>>, %arg19: memref<1x32xf32, #tpu.memory_space<vmem>>, %arg20: memref<32x128xf32, #tpu.memory_space<vmem>>, %arg21: memref<16x128xf32, #tpu.memory_space<vmem>>) attributes {dimension_semantics = [#tpu.dimension_semantics<arbitrary>], iteration_bounds = array<i64: 1>, scalar_prefetch = 0 : i64, scratch_operands = 0 : i64, tpu.core_type = #tpu.core_type<tc>, window_params = [{pipeline_mode = #tpu.pipeline_mode<synchronous>, transform_indices = @transform_0, window_bounds = array<i64: 16, 32>}, {pipeline_mode = #tpu.pipeline_mode<synchronous>, transform_indices = @transform_1, window_bounds = array<i64: 2, 1, 32>}, {pipeline_mode = #tpu.pipeline_mode<synchronous>, transform_indices = @transform_2, window_bounds = array<i64: 2, 1, 32>}, {pipeline_mode = #tpu.pipeline_mode<synchronous>, transform_indices = @transform_3, window_bounds = array<i64: 2, 4, 32, 8>}, {pipeline_mode = #tpu.pipeline_mode<synchronous>, transform_indices = @transform_4, window_bounds = array<i64: 2, 4, 32, 8>}, {pipeline_mode = #tpu.pipeline_mode<synchronous>, transform_indices = @transform_5, window_bounds = array<i64: 2, 4, 32, 8>}, {pipeline_mode = #tpu.pipeline_mode<synchronous>, transform_indices = @transform_6, window_bounds = array<i64: 2, 4, 1, 8>}, {pipeline_mode = #tpu.pipeline_mode<synchronous>, transform_indices = @transform_7, window_bounds = array<i64: 2, 4, 1, 8>}, {pipeline_mode = #tpu.pipeline_mode<synchronous>, transform_indices = @transform_8, window_bounds = array<i64: 2, 4, 1, 8>}, {pipeline_mode = #tpu.pipeline_mode<synchronous>, transform_indices = @transform_9, window_bounds = array<i64: 2, 4, 8, 32>}, {pipeline_mode = #tpu.pipeline_mode<synchronous>, transform_indices = @transform_10, window_bounds = array<i64: 2, 1, 32>}, {pipeline_mode = #tpu.pipeline_mode<synchronous>, transform_indices = @transform_11, window_bounds = array<i64: 2, 1, 32>}, {pipeline_mode = #tpu.pipeline_mode<synchronous>, transform_indices = @transform_12, window_bounds = array<i64: 2, 1, 32>}, {pipeline_mode = #tpu.pipeline_mode<synchronous>, transform_indices = @transform_13, window_bounds = array<i64: 2, 32, 128>}, {pipeline_mode = #tpu.pipeline_mode<synchronous>, transform_indices = @transform_14, window_bounds = array<i64: 2, 1, 128>}, {pipeline_mode = #tpu.pipeline_mode<synchronous>, transform_indices = @transform_15, window_bounds = array<i64: 2, 128, 32>}, {pipeline_mode = #tpu.pipeline_mode<synchronous>, transform_indices = @transform_16, window_bounds = array<i64: 2, 1, 32>}, {pipeline_mode = #tpu.pipeline_mode<synchronous>, transform_indices = @transform_17, window_bounds = array<i64: 1, 32>}, {pipeline_mode = #tpu.pipeline_mode<synchronous>, transform_indices = @transform_18, window_bounds = array<i64: 1, 32>}, {pipeline_mode = #tpu.pipeline_mode<synchronous>, transform_indices = @transform_19, window_bounds = array<i64: 32, 128>}, {pipeline_mode = #tpu.pipeline_mode<synchronous>, transform_indices = @transform_20, window_bounds = array<i64: 16, 128>}]} {
    %c0 = arith.constant 0 : index
    %c0_0 = arith.constant 0 : index
    %0 = vector.load %arg1[%c0, %c0_0] : memref<16x32xf32, #tpu.memory_space<vmem>>, vector<16x32xf32>
    %1 = tpu.iota {dimensions = array<i32: 0>} : vector<8x8xi32>
    %2 = tpu.iota {dimensions = array<i32: 1>} : vector<8x8xi32>
    %3 = arith.cmpi sle, %2, %1 : vector<8x8xi32>
    %cst = arith.constant 0.000000e+00 : f32
    %cst_1 = arith.constant -1.000000e+30 : f32
    %4 = vector.broadcast %cst : f32 to vector<8x8xf32>
    %5 = vector.broadcast %cst_1 : f32 to vector<8x8xf32>
    %6 = arith.select %3, %4, %5 : vector<8x8xi1>, vector<8x8xf32>
    %7 = vector.shape_cast %6 : vector<8x8xf32> to vector<1x8x8xf32>
    %8 = vector.shape_cast %7 : vector<1x8x8xf32> to vector<1x8x8xf32>
    %9 = vector.broadcast %8 : vector<1x8x8xf32> to vector<2x8x8xf32>
    %c0_2 = arith.constant 0 : index
    %c0_3 = arith.constant 0 : index
    %c0_4 = arith.constant 0 : index
    %10 = vector.load %arg2[%c0_2, %c0_3, %c0_4] : memref<2x1x32xf32, #tpu.memory_space<vmem>>, vector<1x1x32xf32>
    %11 = vector.shape_cast %10 : vector<1x1x32xf32> to vector<1x32xf32>
    %c0_5 = arith.constant 0 : index
    %c0_6 = arith.constant 0 : index
    %c0_7 = arith.constant 0 : index
    %12 = vector.load %arg3[%c0_5, %c0_6, %c0_7] : memref<2x1x32xf32, #tpu.memory_space<vmem>>, vector<1x1x32xf32>
    %13 = vector.shape_cast %12 : vector<1x1x32xf32> to vector<1x32xf32>
    %cst_8 = arith.constant dense<0.000000e+00> : vector<16xf32>
    %14 = vector.multi_reduction <add>, %0, %cst_8 [1] : vector<16x32xf32> to vector<16xf32>
    %15 = vector.shape_cast %14 : vector<16xf32> to vector<16x1xf32>
    %cst_9 = arith.constant 3.200000e+01 : f32
    %16 = vector.broadcast %cst_9 : f32 to vector<16x1xf32>
    %17 = arith.divf %15, %16 : vector<16x1xf32>
    %18 = vector.broadcast %17 : vector<16x1xf32> to vector<16x32xf32>
    %19 = arith.subf %0, %18 : vector<16x32xf32>
    %20 = arith.mulf %19, %19 : vector<16x32xf32>
    %cst_10 = arith.constant dense<0.000000e+00> : vector<16xf32>
    %21 = vector.multi_reduction <add>, %20, %cst_10 [1] : vector<16x32xf32> to vector<16xf32>
    %22 = vector.shape_cast %21 : vector<16xf32> to vector<16x1xf32>
    %cst_11 = arith.constant 3.200000e+01 : f32
    %23 = vector.broadcast %cst_11 : f32 to vector<16x1xf32>
    %24 = arith.divf %22, %23 : vector<16x1xf32>
    %25 = vector.broadcast %17 : vector<16x1xf32> to vector<16x32xf32>
    %26 = arith.subf %0, %25 : vector<16x32xf32>
    %cst_12 = arith.constant 9.99999974E-6 : f32
    %27 = vector.broadcast %cst_12 : f32 to vector<16x1xf32>
    %28 = arith.addf %24, %27 : vector<16x1xf32>
    %29 = math.rsqrt %28 : vector<16x1xf32>
    %30 = vector.broadcast %29 : vector<16x1xf32> to vector<16x32xf32>
    %31 = arith.mulf %26, %30 : vector<16x32xf32>
    %32 = vector.broadcast %11 : vector<1x32xf32> to vector<16x32xf32>
    %33 = arith.mulf %31, %32 : vector<16x32xf32>
    %34 = vector.broadcast %13 : vector<1x32xf32> to vector<16x32xf32>
    %35 = arith.addf %33, %34 : vector<16x32xf32>
    %cst_13 = arith.constant 0.000000e+00 : f32
    %36 = vector.broadcast %cst_13 : f32 to vector<16x32xf32>
    %c0_14 = arith.constant 0 : index
    %c0_15 = arith.constant 0 : index
    %c0_16 = arith.constant 0 : index
    %c0_17 = arith.constant 0 : index
    %37 = vector.load %arg4[%c0_14, %c0_15, %c0_16, %c0_17] : memref<2x4x32x8xf32, #tpu.memory_space<vmem>>, vector<1x1x32x8xf32>
    %38 = vector.shape_cast %37 : vector<1x1x32x8xf32> to vector<32x8xf32>
    %cst_18 = arith.constant dense<0.000000e+00> : vector<16x8xf32>
    %39 = tpu.matmul %35, %38, %cst_18 {dimension_numbers = #tpu.dot_dimension_numbers<[1], [0], [0], [1], [0, 0, 1, 1], [], []>} : vector<16x32xf32>, vector<32x8xf32>, vector<16x8xf32> -> vector<16x8xf32>
    %c0_19 = arith.constant 0 : index
    %c0_20 = arith.constant 0 : index
    %c0_21 = arith.constant 0 : index
    %c0_22 = arith.constant 0 : index
    %40 = vector.load %arg7[%c0_19, %c0_20, %c0_21, %c0_22] : memref<2x4x1x8xf32, #tpu.memory_space<vmem>>, vector<1x1x1x8xf32>
    %41 = vector.shape_cast %40 : vector<1x1x1x8xf32> to vector<1x8xf32>
    %42 = vector.broadcast %41 : vector<1x8xf32> to vector<16x8xf32>
    %43 = arith.addf %39, %42 : vector<16x8xf32>
    %c0_23 = arith.constant 0 : index
    %c0_24 = arith.constant 0 : index
    %c0_25 = arith.constant 0 : index
    %c0_26 = arith.constant 0 : index
    %44 = vector.load %arg5[%c0_23, %c0_24, %c0_25, %c0_26] : memref<2x4x32x8xf32, #tpu.memory_space<vmem>>, vector<1x1x32x8xf32>
    %45 = vector.shape_cast %44 : vector<1x1x32x8xf32> to vector<32x8xf32>
    %cst_27 = arith.constant dense<0.000000e+00> : vector<16x8xf32>
    %46 = tpu.matmul %35, %45, %cst_27 {dimension_numbers = #tpu.dot_dimension_numbers<[1], [0], [0], [1], [0, 0, 1, 1], [], []>} : vector<16x32xf32>, vector<32x8xf32>, vector<16x8xf32> -> vector<16x8xf32>
    %c0_28 = arith.constant 0 : index
    %c0_29 = arith.constant 0 : index
    %c0_30 = arith.constant 0 : index
    %c0_31 = arith.constant 0 : index
    %47 = vector.load %arg8[%c0_28, %c0_29, %c0_30, %c0_31] : memref<2x4x1x8xf32, #tpu.memory_space<vmem>>, vector<1x1x1x8xf32>
    %48 = vector.shape_cast %47 : vector<1x1x1x8xf32> to vector<1x8xf32>
    %49 = vector.broadcast %48 : vector<1x8xf32> to vector<16x8xf32>
    %50 = arith.addf %46, %49 : vector<16x8xf32>
    %c0_32 = arith.constant 0 : index
    %c0_33 = arith.constant 0 : index
    %c0_34 = arith.constant 0 : index
    %c0_35 = arith.constant 0 : index
    %51 = vector.load %arg6[%c0_32, %c0_33, %c0_34, %c0_35] : memref<2x4x32x8xf32, #tpu.memory_space<vmem>>, vector<1x1x32x8xf32>
    %52 = vector.shape_cast %51 : vector<1x1x32x8xf32> to vector<32x8xf32>
    %cst_36 = arith.constant dense<0.000000e+00> : vector<16x8xf32>
    %53 = tpu.matmul %35, %52, %cst_36 {dimension_numbers = #tpu.dot_dimension_numbers<[1], [0], [0], [1], [0, 0, 1, 1], [], []>} : vector<16x32xf32>, vector<32x8xf32>, vector<16x8xf32> -> vector<16x8xf32>
    %c0_37 = arith.constant 0 : index
    %c0_38 = arith.constant 0 : index
    %c0_39 = arith.constant 0 : index
    %c0_40 = arith.constant 0 : index
    %54 = vector.load %arg9[%c0_37, %c0_38, %c0_39, %c0_40] : memref<2x4x1x8xf32, #tpu.memory_space<vmem>>, vector<1x1x1x8xf32>
    %55 = vector.shape_cast %54 : vector<1x1x1x8xf32> to vector<1x8xf32>
    %56 = vector.broadcast %55 : vector<1x8xf32> to vector<16x8xf32>
    %57 = arith.addf %53, %56 : vector<16x8xf32>
    %58 = vector.shape_cast %43 : vector<16x8xf32> to vector<2x8x8xf32>
    %59 = vector.shape_cast %50 : vector<16x8xf32> to vector<2x8x8xf32>
    %60 = vector.shape_cast %57 : vector<16x8xf32> to vector<2x8x8xf32>
    "tpu.trace_start"() <{level = 10 : i32, message = "btd,bsd->bts"}> : () -> ()
    %cst_41 = arith.constant dense<0.000000e+00> : vector<2x8x8xf32>
    %61 = tpu.matmul %58, %59, %cst_41 {dimension_numbers = #tpu.dot_dimension_numbers<[2], [2], [1], [1], [0, 0, 0, 1, 1, 1], [0], [0]>} : vector<2x8x8xf32>, vector<2x8x8xf32>, vector<2x8x8xf32> -> vector<2x8x8xf32>
    "tpu.trace_stop"() : () -> ()
    %62 = arith.addf %61, %9 : vector<2x8x8xf32>
    %cst_42 = arith.constant dense<0xFF800000> : vector<2x8xf32>
    %63 = vector.multi_reduction <maximumf>, %62, %cst_42 [2] : vector<2x8x8xf32> to vector<2x8xf32>
    %64 = vector.shape_cast %63 : vector<2x8xf32> to vector<2x8x1xf32>
    %65 = vector.broadcast %64 : vector<2x8x1xf32> to vector<2x8x8xf32>
    %66 = arith.subf %62, %65 : vector<2x8x8xf32>
    %67 = math.exp %66 : vector<2x8x8xf32>
    %cst_43 = arith.constant dense<0.000000e+00> : vector<2x8xf32>
    %68 = vector.multi_reduction <add>, %67, %cst_43 [2] : vector<2x8x8xf32> to vector<2x8xf32>
    %69 = vector.shape_cast %68 : vector<2x8xf32> to vector<2x8x1xf32>
    %70 = vector.broadcast %69 : vector<2x8x1xf32> to vector<2x8x8xf32>
    %71 = arith.divf %67, %70 : vector<2x8x8xf32>
    "tpu.trace_start"() <{level = 10 : i32, message = "bts,bsd->btd"}> : () -> ()
    %cst_44 = arith.constant dense<0.000000e+00> : vector<2x8x8xf32>
    %72 = tpu.matmul %71, %60, %cst_44 {dimension_numbers = #tpu.dot_dimension_numbers<[2], [1], [1], [2], [0, 0, 0, 1, 1, 2], [0], [0]>} : vector<2x8x8xf32>, vector<2x8x8xf32>, vector<2x8x8xf32> -> vector<2x8x8xf32>
    "tpu.trace_stop"() : () -> ()
    %73 = vector.shape_cast %72 : vector<2x8x8xf32> to vector<16x8xf32>
    %c0_45 = arith.constant 0 : index
    %c0_46 = arith.constant 0 : index
    %c0_47 = arith.constant 0 : index
    %c0_48 = arith.constant 0 : index
    %74 = vector.load %arg10[%c0_45, %c0_46, %c0_47, %c0_48] : memref<2x4x8x32xf32, #tpu.memory_space<vmem>>, vector<1x1x8x32xf32>
    %75 = vector.shape_cast %74 : vector<1x1x8x32xf32> to vector<8x32xf32>
    %cst_49 = arith.constant dense<0.000000e+00> : vector<16x32xf32>
    %76 = tpu.matmul %73, %75, %cst_49 {dimension_numbers = #tpu.dot_dimension_numbers<[1], [0], [0], [1], [0, 0, 1, 1], [], []>} : vector<16x8xf32>, vector<8x32xf32>, vector<16x32xf32> -> vector<16x32xf32>
    %77 = arith.addf %36, %76 : vector<16x32xf32>
    %c0_50 = arith.constant 0 : index
    %c1 = arith.constant 1 : index
    %c0_51 = arith.constant 0 : index
    %c0_52 = arith.constant 0 : index
    %78 = vector.load %arg4[%c0_50, %c1, %c0_51, %c0_52] : memref<2x4x32x8xf32, #tpu.memory_space<vmem>>, vector<1x1x32x8xf32>
    %79 = vector.shape_cast %78 : vector<1x1x32x8xf32> to vector<32x8xf32>
    %cst_53 = arith.constant dense<0.000000e+00> : vector<16x8xf32>
    %80 = tpu.matmul %35, %79, %cst_53 {dimension_numbers = #tpu.dot_dimension_numbers<[1], [0], [0], [1], [0, 0, 1, 1], [], []>} : vector<16x32xf32>, vector<32x8xf32>, vector<16x8xf32> -> vector<16x8xf32>
    %c0_54 = arith.constant 0 : index
    %c1_55 = arith.constant 1 : index
    %c0_56 = arith.constant 0 : index
    %c0_57 = arith.constant 0 : index
    %81 = vector.load %arg7[%c0_54, %c1_55, %c0_56, %c0_57] : memref<2x4x1x8xf32, #tpu.memory_space<vmem>>, vector<1x1x1x8xf32>
    %82 = vector.shape_cast %81 : vector<1x1x1x8xf32> to vector<1x8xf32>
    %83 = vector.broadcast %82 : vector<1x8xf32> to vector<16x8xf32>
    %84 = arith.addf %80, %83 : vector<16x8xf32>
    %c0_58 = arith.constant 0 : index
    %c1_59 = arith.constant 1 : index
    %c0_60 = arith.constant 0 : index
    %c0_61 = arith.constant 0 : index
    %85 = vector.load %arg5[%c0_58, %c1_59, %c0_60, %c0_61] : memref<2x4x32x8xf32, #tpu.memory_space<vmem>>, vector<1x1x32x8xf32>
    %86 = vector.shape_cast %85 : vector<1x1x32x8xf32> to vector<32x8xf32>
    %cst_62 = arith.constant dense<0.000000e+00> : vector<16x8xf32>
    %87 = tpu.matmul %35, %86, %cst_62 {dimension_numbers = #tpu.dot_dimension_numbers<[1], [0], [0], [1], [0, 0, 1, 1], [], []>} : vector<16x32xf32>, vector<32x8xf32>, vector<16x8xf32> -> vector<16x8xf32>
    %c0_63 = arith.constant 0 : index
    %c1_64 = arith.constant 1 : index
    %c0_65 = arith.constant 0 : index
    %c0_66 = arith.constant 0 : index
    %88 = vector.load %arg8[%c0_63, %c1_64, %c0_65, %c0_66] : memref<2x4x1x8xf32, #tpu.memory_space<vmem>>, vector<1x1x1x8xf32>
    %89 = vector.shape_cast %88 : vector<1x1x1x8xf32> to vector<1x8xf32>
    %90 = vector.broadcast %89 : vector<1x8xf32> to vector<16x8xf32>
    %91 = arith.addf %87, %90 : vector<16x8xf32>
    %c0_67 = arith.constant 0 : index
    %c1_68 = arith.constant 1 : index
    %c0_69 = arith.constant 0 : index
    %c0_70 = arith.constant 0 : index
    %92 = vector.load %arg6[%c0_67, %c1_68, %c0_69, %c0_70] : memref<2x4x32x8xf32, #tpu.memory_space<vmem>>, vector<1x1x32x8xf32>
    %93 = vector.shape_cast %92 : vector<1x1x32x8xf32> to vector<32x8xf32>
    %cst_71 = arith.constant dense<0.000000e+00> : vector<16x8xf32>
    %94 = tpu.matmul %35, %93, %cst_71 {dimension_numbers = #tpu.dot_dimension_numbers<[1], [0], [0], [1], [0, 0, 1, 1], [], []>} : vector<16x32xf32>, vector<32x8xf32>, vector<16x8xf32> -> vector<16x8xf32>
    %c0_72 = arith.constant 0 : index
    %c1_73 = arith.constant 1 : index
    %c0_74 = arith.constant 0 : index
    %c0_75 = arith.constant 0 : index
    %95 = vector.load %arg9[%c0_72, %c1_73, %c0_74, %c0_75] : memref<2x4x1x8xf32, #tpu.memory_space<vmem>>, vector<1x1x1x8xf32>
    %96 = vector.shape_cast %95 : vector<1x1x1x8xf32> to vector<1x8xf32>
    %97 = vector.broadcast %96 : vector<1x8xf32> to vector<16x8xf32>
    %98 = arith.addf %94, %97 : vector<16x8xf32>
    %99 = vector.shape_cast %84 : vector<16x8xf32> to vector<2x8x8xf32>
    %100 = vector.shape_cast %91 : vector<16x8xf32> to vector<2x8x8xf32>
    %101 = vector.shape_cast %98 : vector<16x8xf32> to vector<2x8x8xf32>
    "tpu.trace_start"() <{level = 10 : i32, message = "btd,bsd->bts"}> : () -> ()
    %cst_76 = arith.constant dense<0.000000e+00> : vector<2x8x8xf32>
    %102 = tpu.matmul %99, %100, %cst_76 {dimension_numbers = #tpu.dot_dimension_numbers<[2], [2], [1], [1], [0, 0, 0, 1, 1, 1], [0], [0]>} : vector<2x8x8xf32>, vector<2x8x8xf32>, vector<2x8x8xf32> -> vector<2x8x8xf32>
    "tpu.trace_stop"() : () -> ()
    %103 = arith.addf %102, %9 : vector<2x8x8xf32>
    %cst_77 = arith.constant dense<0xFF800000> : vector<2x8xf32>
    %104 = vector.multi_reduction <maximumf>, %103, %cst_77 [2] : vector<2x8x8xf32> to vector<2x8xf32>
    %105 = vector.shape_cast %104 : vector<2x8xf32> to vector<2x8x1xf32>
    %106 = vector.broadcast %105 : vector<2x8x1xf32> to vector<2x8x8xf32>
    %107 = arith.subf %103, %106 : vector<2x8x8xf32>
    %108 = math.exp %107 : vector<2x8x8xf32>
    %cst_78 = arith.constant dense<0.000000e+00> : vector<2x8xf32>
    %109 = vector.multi_reduction <add>, %108, %cst_78 [2] : vector<2x8x8xf32> to vector<2x8xf32>
    %110 = vector.shape_cast %109 : vector<2x8xf32> to vector<2x8x1xf32>
    %111 = vector.broadcast %110 : vector<2x8x1xf32> to vector<2x8x8xf32>
    %112 = arith.divf %108, %111 : vector<2x8x8xf32>
    "tpu.trace_start"() <{level = 10 : i32, message = "bts,bsd->btd"}> : () -> ()
    %cst_79 = arith.constant dense<0.000000e+00> : vector<2x8x8xf32>
    %113 = tpu.matmul %112, %101, %cst_79 {dimension_numbers = #tpu.dot_dimension_numbers<[2], [1], [1], [2], [0, 0, 0, 1, 1, 2], [0], [0]>} : vector<2x8x8xf32>, vector<2x8x8xf32>, vector<2x8x8xf32> -> vector<2x8x8xf32>
    "tpu.trace_stop"() : () -> ()
    %114 = vector.shape_cast %113 : vector<2x8x8xf32> to vector<16x8xf32>
    %c0_80 = arith.constant 0 : index
    %c1_81 = arith.constant 1 : index
    %c0_82 = arith.constant 0 : index
    %c0_83 = arith.constant 0 : index
    %115 = vector.load %arg10[%c0_80, %c1_81, %c0_82, %c0_83] : memref<2x4x8x32xf32, #tpu.memory_space<vmem>>, vector<1x1x8x32xf32>
    %116 = vector.shape_cast %115 : vector<1x1x8x32xf32> to vector<8x32xf32>
    %cst_84 = arith.constant dense<0.000000e+00> : vector<16x32xf32>
    %117 = tpu.matmul %114, %116, %cst_84 {dimension_numbers = #tpu.dot_dimension_numbers<[1], [0], [0], [1], [0, 0, 1, 1], [], []>} : vector<16x8xf32>, vector<8x32xf32>, vector<16x32xf32> -> vector<16x32xf32>
    %118 = arith.addf %77, %117 : vector<16x32xf32>
    %c0_85 = arith.constant 0 : index
    %c2 = arith.constant 2 : index
    %c0_86 = arith.constant 0 : index
    %c0_87 = arith.constant 0 : index
    %119 = vector.load %arg4[%c0_85, %c2, %c0_86, %c0_87] : memref<2x4x32x8xf32, #tpu.memory_space<vmem>>, vector<1x1x32x8xf32>
    %120 = vector.shape_cast %119 : vector<1x1x32x8xf32> to vector<32x8xf32>
    %cst_88 = arith.constant dense<0.000000e+00> : vector<16x8xf32>
    %121 = tpu.matmul %35, %120, %cst_88 {dimension_numbers = #tpu.dot_dimension_numbers<[1], [0], [0], [1], [0, 0, 1, 1], [], []>} : vector<16x32xf32>, vector<32x8xf32>, vector<16x8xf32> -> vector<16x8xf32>
    %c0_89 = arith.constant 0 : index
    %c2_90 = arith.constant 2 : index
    %c0_91 = arith.constant 0 : index
    %c0_92 = arith.constant 0 : index
    %122 = vector.load %arg7[%c0_89, %c2_90, %c0_91, %c0_92] : memref<2x4x1x8xf32, #tpu.memory_space<vmem>>, vector<1x1x1x8xf32>
    %123 = vector.shape_cast %122 : vector<1x1x1x8xf32> to vector<1x8xf32>
    %124 = vector.broadcast %123 : vector<1x8xf32> to vector<16x8xf32>
    %125 = arith.addf %121, %124 : vector<16x8xf32>
    %c0_93 = arith.constant 0 : index
    %c2_94 = arith.constant 2 : index
    %c0_95 = arith.constant 0 : index
    %c0_96 = arith.constant 0 : index
    %126 = vector.load %arg5[%c0_93, %c2_94, %c0_95, %c0_96] : memref<2x4x32x8xf32, #tpu.memory_space<vmem>>, vector<1x1x32x8xf32>
    %127 = vector.shape_cast %126 : vector<1x1x32x8xf32> to vector<32x8xf32>
    %cst_97 = arith.constant dense<0.000000e+00> : vector<16x8xf32>
    %128 = tpu.matmul %35, %127, %cst_97 {dimension_numbers = #tpu.dot_dimension_numbers<[1], [0], [0], [1], [0, 0, 1, 1], [], []>} : vector<16x32xf32>, vector<32x8xf32>, vector<16x8xf32> -> vector<16x8xf32>
    %c0_98 = arith.constant 0 : index
    %c2_99 = arith.constant 2 : index
    %c0_100 = arith.constant 0 : index
    %c0_101 = arith.constant 0 : index
    %129 = vector.load %arg8[%c0_98, %c2_99, %c0_100, %c0_101] : memref<2x4x1x8xf32, #tpu.memory_space<vmem>>, vector<1x1x1x8xf32>
    %130 = vector.shape_cast %129 : vector<1x1x1x8xf32> to vector<1x8xf32>
    %131 = vector.broadcast %130 : vector<1x8xf32> to vector<16x8xf32>
    %132 = arith.addf %128, %131 : vector<16x8xf32>
    %c0_102 = arith.constant 0 : index
    %c2_103 = arith.constant 2 : index
    %c0_104 = arith.constant 0 : index
    %c0_105 = arith.constant 0 : index
    %133 = vector.load %arg6[%c0_102, %c2_103, %c0_104, %c0_105] : memref<2x4x32x8xf32, #tpu.memory_space<vmem>>, vector<1x1x32x8xf32>
    %134 = vector.shape_cast %133 : vector<1x1x32x8xf32> to vector<32x8xf32>
    %cst_106 = arith.constant dense<0.000000e+00> : vector<16x8xf32>
    %135 = tpu.matmul %35, %134, %cst_106 {dimension_numbers = #tpu.dot_dimension_numbers<[1], [0], [0], [1], [0, 0, 1, 1], [], []>} : vector<16x32xf32>, vector<32x8xf32>, vector<16x8xf32> -> vector<16x8xf32>
    %c0_107 = arith.constant 0 : index
    %c2_108 = arith.constant 2 : index
    %c0_109 = arith.constant 0 : index
    %c0_110 = arith.constant 0 : index
    %136 = vector.load %arg9[%c0_107, %c2_108, %c0_109, %c0_110] : memref<2x4x1x8xf32, #tpu.memory_space<vmem>>, vector<1x1x1x8xf32>
    %137 = vector.shape_cast %136 : vector<1x1x1x8xf32> to vector<1x8xf32>
    %138 = vector.broadcast %137 : vector<1x8xf32> to vector<16x8xf32>
    %139 = arith.addf %135, %138 : vector<16x8xf32>
    %140 = vector.shape_cast %125 : vector<16x8xf32> to vector<2x8x8xf32>
    %141 = vector.shape_cast %132 : vector<16x8xf32> to vector<2x8x8xf32>
    %142 = vector.shape_cast %139 : vector<16x8xf32> to vector<2x8x8xf32>
    "tpu.trace_start"() <{level = 10 : i32, message = "btd,bsd->bts"}> : () -> ()
    %cst_111 = arith.constant dense<0.000000e+00> : vector<2x8x8xf32>
    %143 = tpu.matmul %140, %141, %cst_111 {dimension_numbers = #tpu.dot_dimension_numbers<[2], [2], [1], [1], [0, 0, 0, 1, 1, 1], [0], [0]>} : vector<2x8x8xf32>, vector<2x8x8xf32>, vector<2x8x8xf32> -> vector<2x8x8xf32>
    "tpu.trace_stop"() : () -> ()
    %144 = arith.addf %143, %9 : vector<2x8x8xf32>
    %cst_112 = arith.constant dense<0xFF800000> : vector<2x8xf32>
    %145 = vector.multi_reduction <maximumf>, %144, %cst_112 [2] : vector<2x8x8xf32> to vector<2x8xf32>
    %146 = vector.shape_cast %145 : vector<2x8xf32> to vector<2x8x1xf32>
    %147 = vector.broadcast %146 : vector<2x8x1xf32> to vector<2x8x8xf32>
    %148 = arith.subf %144, %147 : vector<2x8x8xf32>
    %149 = math.exp %148 : vector<2x8x8xf32>
    %cst_113 = arith.constant dense<0.000000e+00> : vector<2x8xf32>
    %150 = vector.multi_reduction <add>, %149, %cst_113 [2] : vector<2x8x8xf32> to vector<2x8xf32>
    %151 = vector.shape_cast %150 : vector<2x8xf32> to vector<2x8x1xf32>
    %152 = vector.broadcast %151 : vector<2x8x1xf32> to vector<2x8x8xf32>
    %153 = arith.divf %149, %152 : vector<2x8x8xf32>
    "tpu.trace_start"() <{level = 10 : i32, message = "bts,bsd->btd"}> : () -> ()
    %cst_114 = arith.constant dense<0.000000e+00> : vector<2x8x8xf32>
    %154 = tpu.matmul %153, %142, %cst_114 {dimension_numbers = #tpu.dot_dimension_numbers<[2], [1], [1], [2], [0, 0, 0, 1, 1, 2], [0], [0]>} : vector<2x8x8xf32>, vector<2x8x8xf32>, vector<2x8x8xf32> -> vector<2x8x8xf32>
    "tpu.trace_stop"() : () -> ()
    %155 = vector.shape_cast %154 : vector<2x8x8xf32> to vector<16x8xf32>
    %c0_115 = arith.constant 0 : index
    %c2_116 = arith.constant 2 : index
    %c0_117 = arith.constant 0 : index
    %c0_118 = arith.constant 0 : index
    %156 = vector.load %arg10[%c0_115, %c2_116, %c0_117, %c0_118] : memref<2x4x8x32xf32, #tpu.memory_space<vmem>>, vector<1x1x8x32xf32>
    %157 = vector.shape_cast %156 : vector<1x1x8x32xf32> to vector<8x32xf32>
    %cst_119 = arith.constant dense<0.000000e+00> : vector<16x32xf32>
    %158 = tpu.matmul %155, %157, %cst_119 {dimension_numbers = #tpu.dot_dimension_numbers<[1], [0], [0], [1], [0, 0, 1, 1], [], []>} : vector<16x8xf32>, vector<8x32xf32>, vector<16x32xf32> -> vector<16x32xf32>
    %159 = arith.addf %118, %158 : vector<16x32xf32>
    %c0_120 = arith.constant 0 : index
    %c3 = arith.constant 3 : index
    %c0_121 = arith.constant 0 : index
    %c0_122 = arith.constant 0 : index
    %160 = vector.load %arg4[%c0_120, %c3, %c0_121, %c0_122] : memref<2x4x32x8xf32, #tpu.memory_space<vmem>>, vector<1x1x32x8xf32>
    %161 = vector.shape_cast %160 : vector<1x1x32x8xf32> to vector<32x8xf32>
    %cst_123 = arith.constant dense<0.000000e+00> : vector<16x8xf32>
    %162 = tpu.matmul %35, %161, %cst_123 {dimension_numbers = #tpu.dot_dimension_numbers<[1], [0], [0], [1], [0, 0, 1, 1], [], []>} : vector<16x32xf32>, vector<32x8xf32>, vector<16x8xf32> -> vector<16x8xf32>
    %c0_124 = arith.constant 0 : index
    %c3_125 = arith.constant 3 : index
    %c0_126 = arith.constant 0 : index
    %c0_127 = arith.constant 0 : index
    %163 = vector.load %arg7[%c0_124, %c3_125, %c0_126, %c0_127] : memref<2x4x1x8xf32, #tpu.memory_space<vmem>>, vector<1x1x1x8xf32>
    %164 = vector.shape_cast %163 : vector<1x1x1x8xf32> to vector<1x8xf32>
    %165 = vector.broadcast %164 : vector<1x8xf32> to vector<16x8xf32>
    %166 = arith.addf %162, %165 : vector<16x8xf32>
    %c0_128 = arith.constant 0 : index
    %c3_129 = arith.constant 3 : index
    %c0_130 = arith.constant 0 : index
    %c0_131 = arith.constant 0 : index
    %167 = vector.load %arg5[%c0_128, %c3_129, %c0_130, %c0_131] : memref<2x4x32x8xf32, #tpu.memory_space<vmem>>, vector<1x1x32x8xf32>
    %168 = vector.shape_cast %167 : vector<1x1x32x8xf32> to vector<32x8xf32>
    %cst_132 = arith.constant dense<0.000000e+00> : vector<16x8xf32>
    %169 = tpu.matmul %35, %168, %cst_132 {dimension_numbers = #tpu.dot_dimension_numbers<[1], [0], [0], [1], [0, 0, 1, 1], [], []>} : vector<16x32xf32>, vector<32x8xf32>, vector<16x8xf32> -> vector<16x8xf32>
    %c0_133 = arith.constant 0 : index
    %c3_134 = arith.constant 3 : index
    %c0_135 = arith.constant 0 : index
    %c0_136 = arith.constant 0 : index
    %170 = vector.load %arg8[%c0_133, %c3_134, %c0_135, %c0_136] : memref<2x4x1x8xf32, #tpu.memory_space<vmem>>, vector<1x1x1x8xf32>
    %171 = vector.shape_cast %170 : vector<1x1x1x8xf32> to vector<1x8xf32>
    %172 = vector.broadcast %171 : vector<1x8xf32> to vector<16x8xf32>
    %173 = arith.addf %169, %172 : vector<16x8xf32>
    %c0_137 = arith.constant 0 : index
    %c3_138 = arith.constant 3 : index
    %c0_139 = arith.constant 0 : index
    %c0_140 = arith.constant 0 : index
    %174 = vector.load %arg6[%c0_137, %c3_138, %c0_139, %c0_140] : memref<2x4x32x8xf32, #tpu.memory_space<vmem>>, vector<1x1x32x8xf32>
    %175 = vector.shape_cast %174 : vector<1x1x32x8xf32> to vector<32x8xf32>
    %cst_141 = arith.constant dense<0.000000e+00> : vector<16x8xf32>
    %176 = tpu.matmul %35, %175, %cst_141 {dimension_numbers = #tpu.dot_dimension_numbers<[1], [0], [0], [1], [0, 0, 1, 1], [], []>} : vector<16x32xf32>, vector<32x8xf32>, vector<16x8xf32> -> vector<16x8xf32>
    %c0_142 = arith.constant 0 : index
    %c3_143 = arith.constant 3 : index
    %c0_144 = arith.constant 0 : index
    %c0_145 = arith.constant 0 : index
    %177 = vector.load %arg9[%c0_142, %c3_143, %c0_144, %c0_145] : memref<2x4x1x8xf32, #tpu.memory_space<vmem>>, vector<1x1x1x8xf32>
    %178 = vector.shape_cast %177 : vector<1x1x1x8xf32> to vector<1x8xf32>
    %179 = vector.broadcast %178 : vector<1x8xf32> to vector<16x8xf32>
    %180 = arith.addf %176, %179 : vector<16x8xf32>
    %181 = vector.shape_cast %166 : vector<16x8xf32> to vector<2x8x8xf32>
    %182 = vector.shape_cast %173 : vector<16x8xf32> to vector<2x8x8xf32>
    %183 = vector.shape_cast %180 : vector<16x8xf32> to vector<2x8x8xf32>
    "tpu.trace_start"() <{level = 10 : i32, message = "btd,bsd->bts"}> : () -> ()
    %cst_146 = arith.constant dense<0.000000e+00> : vector<2x8x8xf32>
    %184 = tpu.matmul %181, %182, %cst_146 {dimension_numbers = #tpu.dot_dimension_numbers<[2], [2], [1], [1], [0, 0, 0, 1, 1, 1], [0], [0]>} : vector<2x8x8xf32>, vector<2x8x8xf32>, vector<2x8x8xf32> -> vector<2x8x8xf32>
    "tpu.trace_stop"() : () -> ()
    %185 = arith.addf %184, %9 : vector<2x8x8xf32>
    %cst_147 = arith.constant dense<0xFF800000> : vector<2x8xf32>
    %186 = vector.multi_reduction <maximumf>, %185, %cst_147 [2] : vector<2x8x8xf32> to vector<2x8xf32>
    %187 = vector.shape_cast %186 : vector<2x8xf32> to vector<2x8x1xf32>
    %188 = vector.broadcast %187 : vector<2x8x1xf32> to vector<2x8x8xf32>
    %189 = arith.subf %185, %188 : vector<2x8x8xf32>
    %190 = math.exp %189 : vector<2x8x8xf32>
    %cst_148 = arith.constant dense<0.000000e+00> : vector<2x8xf32>
    %191 = vector.multi_reduction <add>, %190, %cst_148 [2] : vector<2x8x8xf32> to vector<2x8xf32>
    %192 = vector.shape_cast %191 : vector<2x8xf32> to vector<2x8x1xf32>
    %193 = vector.broadcast %192 : vector<2x8x1xf32> to vector<2x8x8xf32>
    %194 = arith.divf %190, %193 : vector<2x8x8xf32>
    "tpu.trace_start"() <{level = 10 : i32, message = "bts,bsd->btd"}> : () -> ()
    %cst_149 = arith.constant dense<0.000000e+00> : vector<2x8x8xf32>
    %195 = tpu.matmul %194, %183, %cst_149 {dimension_numbers = #tpu.dot_dimension_numbers<[2], [1], [1], [2], [0, 0, 0, 1, 1, 2], [0], [0]>} : vector<2x8x8xf32>, vector<2x8x8xf32>, vector<2x8x8xf32> -> vector<2x8x8xf32>
    "tpu.trace_stop"() : () -> ()
    %196 = vector.shape_cast %195 : vector<2x8x8xf32> to vector<16x8xf32>
    %c0_150 = arith.constant 0 : index
    %c3_151 = arith.constant 3 : index
    %c0_152 = arith.constant 0 : index
    %c0_153 = arith.constant 0 : index
    %197 = vector.load %arg10[%c0_150, %c3_151, %c0_152, %c0_153] : memref<2x4x8x32xf32, #tpu.memory_space<vmem>>, vector<1x1x8x32xf32>
    %198 = vector.shape_cast %197 : vector<1x1x8x32xf32> to vector<8x32xf32>
    %cst_154 = arith.constant dense<0.000000e+00> : vector<16x32xf32>
    %199 = tpu.matmul %196, %198, %cst_154 {dimension_numbers = #tpu.dot_dimension_numbers<[1], [0], [0], [1], [0, 0, 1, 1], [], []>} : vector<16x8xf32>, vector<8x32xf32>, vector<16x32xf32> -> vector<16x32xf32>
    %200 = arith.addf %159, %199 : vector<16x32xf32>
    %201 = arith.addf %0, %200 : vector<16x32xf32>
    %c0_155 = arith.constant 0 : index
    %c0_156 = arith.constant 0 : index
    %c0_157 = arith.constant 0 : index
    %202 = vector.load %arg11[%c0_155, %c0_156, %c0_157] : memref<2x1x32xf32, #tpu.memory_space<vmem>>, vector<1x1x32xf32>
    %203 = vector.shape_cast %202 : vector<1x1x32xf32> to vector<1x32xf32>
    %204 = vector.broadcast %203 : vector<1x32xf32> to vector<16x32xf32>
    %205 = arith.addf %201, %204 : vector<16x32xf32>
    %c0_158 = arith.constant 0 : index
    %c0_159 = arith.constant 0 : index
    %c0_160 = arith.constant 0 : index
    %206 = vector.load %arg12[%c0_158, %c0_159, %c0_160] : memref<2x1x32xf32, #tpu.memory_space<vmem>>, vector<1x1x32xf32>
    %207 = vector.shape_cast %206 : vector<1x1x32xf32> to vector<1x32xf32>
    %c0_161 = arith.constant 0 : index
    %c0_162 = arith.constant 0 : index
    %c0_163 = arith.constant 0 : index
    %208 = vector.load %arg13[%c0_161, %c0_162, %c0_163] : memref<2x1x32xf32, #tpu.memory_space<vmem>>, vector<1x1x32xf32>
    %209 = vector.shape_cast %208 : vector<1x1x32xf32> to vector<1x32xf32>
    %cst_164 = arith.constant dense<0.000000e+00> : vector<16xf32>
    %210 = vector.multi_reduction <add>, %205, %cst_164 [1] : vector<16x32xf32> to vector<16xf32>
    %211 = vector.shape_cast %210 : vector<16xf32> to vector<16x1xf32>
    %cst_165 = arith.constant 3.200000e+01 : f32
    %212 = vector.broadcast %cst_165 : f32 to vector<16x1xf32>
    %213 = arith.divf %211, %212 : vector<16x1xf32>
    %214 = vector.broadcast %213 : vector<16x1xf32> to vector<16x32xf32>
    %215 = arith.subf %205, %214 : vector<16x32xf32>
    %216 = arith.mulf %215, %215 : vector<16x32xf32>
    %cst_166 = arith.constant dense<0.000000e+00> : vector<16xf32>
    %217 = vector.multi_reduction <add>, %216, %cst_166 [1] : vector<16x32xf32> to vector<16xf32>
    %218 = vector.shape_cast %217 : vector<16xf32> to vector<16x1xf32>
    %cst_167 = arith.constant 3.200000e+01 : f32
    %219 = vector.broadcast %cst_167 : f32 to vector<16x1xf32>
    %220 = arith.divf %218, %219 : vector<16x1xf32>
    %221 = vector.broadcast %213 : vector<16x1xf32> to vector<16x32xf32>
    %222 = arith.subf %205, %221 : vector<16x32xf32>
    %cst_168 = arith.constant 9.99999974E-6 : f32
    %223 = vector.broadcast %cst_168 : f32 to vector<16x1xf32>
    %224 = arith.addf %220, %223 : vector<16x1xf32>
    %225 = math.rsqrt %224 : vector<16x1xf32>
    %226 = vector.broadcast %225 : vector<16x1xf32> to vector<16x32xf32>
    %227 = arith.mulf %222, %226 : vector<16x32xf32>
    %228 = vector.broadcast %207 : vector<1x32xf32> to vector<16x32xf32>
    %229 = arith.mulf %227, %228 : vector<16x32xf32>
    %230 = vector.broadcast %209 : vector<1x32xf32> to vector<16x32xf32>
    %231 = arith.addf %229, %230 : vector<16x32xf32>
    %c0_169 = arith.constant 0 : index
    %c0_170 = arith.constant 0 : index
    %c0_171 = arith.constant 0 : index
    %232 = vector.load %arg14[%c0_169, %c0_170, %c0_171] : memref<2x32x128xf32, #tpu.memory_space<vmem>>, vector<1x32x128xf32>
    %233 = vector.shape_cast %232 : vector<1x32x128xf32> to vector<32x128xf32>
    %cst_172 = arith.constant dense<0.000000e+00> : vector<16x128xf32>
    %234 = tpu.matmul %231, %233, %cst_172 {dimension_numbers = #tpu.dot_dimension_numbers<[1], [0], [0], [1], [0, 0, 1, 1], [], []>} : vector<16x32xf32>, vector<32x128xf32>, vector<16x128xf32> -> vector<16x128xf32>
    %c0_173 = arith.constant 0 : index
    %c0_174 = arith.constant 0 : index
    %c0_175 = arith.constant 0 : index
    %235 = vector.load %arg15[%c0_173, %c0_174, %c0_175] : memref<2x1x128xf32, #tpu.memory_space<vmem>>, vector<1x1x128xf32>
    %236 = vector.shape_cast %235 : vector<1x1x128xf32> to vector<1x128xf32>
    %237 = vector.broadcast %236 : vector<1x128xf32> to vector<16x128xf32>
    %238 = arith.addf %234, %237 : vector<16x128xf32>
    %cst_176 = arith.constant 5.000000e-01 : f32
    %239 = vector.broadcast %cst_176 : f32 to vector<16x128xf32>
    %240 = arith.mulf %239, %238 : vector<16x128xf32>
    %cst_177 = arith.constant 4.471500e-02 : f32
    %241 = vector.broadcast %cst_177 : f32 to vector<16x128xf32>
    %242 = arith.mulf %241, %238 : vector<16x128xf32>
    %243 = arith.mulf %242, %238 : vector<16x128xf32>
    %244 = arith.mulf %243, %238 : vector<16x128xf32>
    %245 = arith.addf %238, %244 : vector<16x128xf32>
    %cst_178 = arith.constant 0.797884583 : f32
    %246 = vector.broadcast %cst_178 : f32 to vector<16x128xf32>
    %247 = arith.mulf %246, %245 : vector<16x128xf32>
    %248 = math.tanh %247 : vector<16x128xf32>
    %cst_179 = arith.constant 1.000000e+00 : f32
    %249 = vector.broadcast %cst_179 : f32 to vector<16x128xf32>
    %250 = arith.addf %249, %248 : vector<16x128xf32>
    %251 = arith.mulf %240, %250 : vector<16x128xf32>
    %c0_180 = arith.constant 0 : index
    %c0_181 = arith.constant 0 : index
    %c0_182 = arith.constant 0 : index
    %252 = vector.load %arg16[%c0_180, %c0_181, %c0_182] : memref<2x128x32xf32, #tpu.memory_space<vmem>>, vector<1x128x32xf32>
    %253 = vector.shape_cast %252 : vector<1x128x32xf32> to vector<128x32xf32>
    %cst_183 = arith.constant dense<0.000000e+00> : vector<16x32xf32>
    %254 = tpu.matmul %251, %253, %cst_183 {dimension_numbers = #tpu.dot_dimension_numbers<[1], [0], [0], [1], [0, 0, 1, 1], [], []>} : vector<16x128xf32>, vector<128x32xf32>, vector<16x32xf32> -> vector<16x32xf32>
    %c0_184 = arith.constant 0 : index
    %c0_185 = arith.constant 0 : index
    %c0_186 = arith.constant 0 : index
    %255 = vector.load %arg17[%c0_184, %c0_185, %c0_186] : memref<2x1x32xf32, #tpu.memory_space<vmem>>, vector<1x1x32xf32>
    %256 = vector.shape_cast %255 : vector<1x1x32xf32> to vector<1x32xf32>
    %257 = vector.broadcast %256 : vector<1x32xf32> to vector<16x32xf32>
    %258 = arith.addf %254, %257 : vector<16x32xf32>
    %259 = arith.addf %205, %258 : vector<16x32xf32>
    %c1_187 = arith.constant 1 : index
    %c0_188 = arith.constant 0 : index
    %c0_189 = arith.constant 0 : index
    %260 = vector.load %arg2[%c1_187, %c0_188, %c0_189] : memref<2x1x32xf32, #tpu.memory_space<vmem>>, vector<1x1x32xf32>
    %261 = vector.shape_cast %260 : vector<1x1x32xf32> to vector<1x32xf32>
    %c1_190 = arith.constant 1 : index
    %c0_191 = arith.constant 0 : index
    %c0_192 = arith.constant 0 : index
    %262 = vector.load %arg3[%c1_190, %c0_191, %c0_192] : memref<2x1x32xf32, #tpu.memory_space<vmem>>, vector<1x1x32xf32>
    %263 = vector.shape_cast %262 : vector<1x1x32xf32> to vector<1x32xf32>
    %cst_193 = arith.constant dense<0.000000e+00> : vector<16xf32>
    %264 = vector.multi_reduction <add>, %259, %cst_193 [1] : vector<16x32xf32> to vector<16xf32>
    %265 = vector.shape_cast %264 : vector<16xf32> to vector<16x1xf32>
    %cst_194 = arith.constant 3.200000e+01 : f32
    %266 = vector.broadcast %cst_194 : f32 to vector<16x1xf32>
    %267 = arith.divf %265, %266 : vector<16x1xf32>
    %268 = vector.broadcast %267 : vector<16x1xf32> to vector<16x32xf32>
    %269 = arith.subf %259, %268 : vector<16x32xf32>
    %270 = arith.mulf %269, %269 : vector<16x32xf32>
    %cst_195 = arith.constant dense<0.000000e+00> : vector<16xf32>
    %271 = vector.multi_reduction <add>, %270, %cst_195 [1] : vector<16x32xf32> to vector<16xf32>
    %272 = vector.shape_cast %271 : vector<16xf32> to vector<16x1xf32>
    %cst_196 = arith.constant 3.200000e+01 : f32
    %273 = vector.broadcast %cst_196 : f32 to vector<16x1xf32>
    %274 = arith.divf %272, %273 : vector<16x1xf32>
    %275 = vector.broadcast %267 : vector<16x1xf32> to vector<16x32xf32>
    %276 = arith.subf %259, %275 : vector<16x32xf32>
    %cst_197 = arith.constant 9.99999974E-6 : f32
    %277 = vector.broadcast %cst_197 : f32 to vector<16x1xf32>
    %278 = arith.addf %274, %277 : vector<16x1xf32>
    %279 = math.rsqrt %278 : vector<16x1xf32>
    %280 = vector.broadcast %279 : vector<16x1xf32> to vector<16x32xf32>
    %281 = arith.mulf %276, %280 : vector<16x32xf32>
    %282 = vector.broadcast %261 : vector<1x32xf32> to vector<16x32xf32>
    %283 = arith.mulf %281, %282 : vector<16x32xf32>
    %284 = vector.broadcast %263 : vector<1x32xf32> to vector<16x32xf32>
    %285 = arith.addf %283, %284 : vector<16x32xf32>
    %cst_198 = arith.constant 0.000000e+00 : f32
    %286 = vector.broadcast %cst_198 : f32 to vector<16x32xf32>
    %c1_199 = arith.constant 1 : index
    %c0_200 = arith.constant 0 : index
    %c0_201 = arith.constant 0 : index
    %c0_202 = arith.constant 0 : index
    %287 = vector.load %arg4[%c1_199, %c0_200, %c0_201, %c0_202] : memref<2x4x32x8xf32, #tpu.memory_space<vmem>>, vector<1x1x32x8xf32>
    %288 = vector.shape_cast %287 : vector<1x1x32x8xf32> to vector<32x8xf32>
    %cst_203 = arith.constant dense<0.000000e+00> : vector<16x8xf32>
    %289 = tpu.matmul %285, %288, %cst_203 {dimension_numbers = #tpu.dot_dimension_numbers<[1], [0], [0], [1], [0, 0, 1, 1], [], []>} : vector<16x32xf32>, vector<32x8xf32>, vector<16x8xf32> -> vector<16x8xf32>
    %c1_204 = arith.constant 1 : index
    %c0_205 = arith.constant 0 : index
    %c0_206 = arith.constant 0 : index
    %c0_207 = arith.constant 0 : index
    %290 = vector.load %arg7[%c1_204, %c0_205, %c0_206, %c0_207] : memref<2x4x1x8xf32, #tpu.memory_space<vmem>>, vector<1x1x1x8xf32>
    %291 = vector.shape_cast %290 : vector<1x1x1x8xf32> to vector<1x8xf32>
    %292 = vector.broadcast %291 : vector<1x8xf32> to vector<16x8xf32>
    %293 = arith.addf %289, %292 : vector<16x8xf32>
    %c1_208 = arith.constant 1 : index
    %c0_209 = arith.constant 0 : index
    %c0_210 = arith.constant 0 : index
    %c0_211 = arith.constant 0 : index
    %294 = vector.load %arg5[%c1_208, %c0_209, %c0_210, %c0_211] : memref<2x4x32x8xf32, #tpu.memory_space<vmem>>, vector<1x1x32x8xf32>
    %295 = vector.shape_cast %294 : vector<1x1x32x8xf32> to vector<32x8xf32>
    %cst_212 = arith.constant dense<0.000000e+00> : vector<16x8xf32>
    %296 = tpu.matmul %285, %295, %cst_212 {dimension_numbers = #tpu.dot_dimension_numbers<[1], [0], [0], [1], [0, 0, 1, 1], [], []>} : vector<16x32xf32>, vector<32x8xf32>, vector<16x8xf32> -> vector<16x8xf32>
    %c1_213 = arith.constant 1 : index
    %c0_214 = arith.constant 0 : index
    %c0_215 = arith.constant 0 : index
    %c0_216 = arith.constant 0 : index
    %297 = vector.load %arg8[%c1_213, %c0_214, %c0_215, %c0_216] : memref<2x4x1x8xf32, #tpu.memory_space<vmem>>, vector<1x1x1x8xf32>
    %298 = vector.shape_cast %297 : vector<1x1x1x8xf32> to vector<1x8xf32>
    %299 = vector.broadcast %298 : vector<1x8xf32> to vector<16x8xf32>
    %300 = arith.addf %296, %299 : vector<16x8xf32>
    %c1_217 = arith.constant 1 : index
    %c0_218 = arith.constant 0 : index
    %c0_219 = arith.constant 0 : index
    %c0_220 = arith.constant 0 : index
    %301 = vector.load %arg6[%c1_217, %c0_218, %c0_219, %c0_220] : memref<2x4x32x8xf32, #tpu.memory_space<vmem>>, vector<1x1x32x8xf32>
    %302 = vector.shape_cast %301 : vector<1x1x32x8xf32> to vector<32x8xf32>
    %cst_221 = arith.constant dense<0.000000e+00> : vector<16x8xf32>
    %303 = tpu.matmul %285, %302, %cst_221 {dimension_numbers = #tpu.dot_dimension_numbers<[1], [0], [0], [1], [0, 0, 1, 1], [], []>} : vector<16x32xf32>, vector<32x8xf32>, vector<16x8xf32> -> vector<16x8xf32>
    %c1_222 = arith.constant 1 : index
    %c0_223 = arith.constant 0 : index
    %c0_224 = arith.constant 0 : index
    %c0_225 = arith.constant 0 : index
    %304 = vector.load %arg9[%c1_222, %c0_223, %c0_224, %c0_225] : memref<2x4x1x8xf32, #tpu.memory_space<vmem>>, vector<1x1x1x8xf32>
    %305 = vector.shape_cast %304 : vector<1x1x1x8xf32> to vector<1x8xf32>
    %306 = vector.broadcast %305 : vector<1x8xf32> to vector<16x8xf32>
    %307 = arith.addf %303, %306 : vector<16x8xf32>
    %308 = vector.shape_cast %293 : vector<16x8xf32> to vector<2x8x8xf32>
    %309 = vector.shape_cast %300 : vector<16x8xf32> to vector<2x8x8xf32>
    %310 = vector.shape_cast %307 : vector<16x8xf32> to vector<2x8x8xf32>
    "tpu.trace_start"() <{level = 10 : i32, message = "btd,bsd->bts"}> : () -> ()
    %cst_226 = arith.constant dense<0.000000e+00> : vector<2x8x8xf32>
    %311 = tpu.matmul %308, %309, %cst_226 {dimension_numbers = #tpu.dot_dimension_numbers<[2], [2], [1], [1], [0, 0, 0, 1, 1, 1], [0], [0]>} : vector<2x8x8xf32>, vector<2x8x8xf32>, vector<2x8x8xf32> -> vector<2x8x8xf32>
    "tpu.trace_stop"() : () -> ()
    %312 = arith.addf %311, %9 : vector<2x8x8xf32>
    %cst_227 = arith.constant dense<0xFF800000> : vector<2x8xf32>
    %313 = vector.multi_reduction <maximumf>, %312, %cst_227 [2] : vector<2x8x8xf32> to vector<2x8xf32>
    %314 = vector.shape_cast %313 : vector<2x8xf32> to vector<2x8x1xf32>
    %315 = vector.broadcast %314 : vector<2x8x1xf32> to vector<2x8x8xf32>
    %316 = arith.subf %312, %315 : vector<2x8x8xf32>
    %317 = math.exp %316 : vector<2x8x8xf32>
    %cst_228 = arith.constant dense<0.000000e+00> : vector<2x8xf32>
    %318 = vector.multi_reduction <add>, %317, %cst_228 [2] : vector<2x8x8xf32> to vector<2x8xf32>
    %319 = vector.shape_cast %318 : vector<2x8xf32> to vector<2x8x1xf32>
    %320 = vector.broadcast %319 : vector<2x8x1xf32> to vector<2x8x8xf32>
    %321 = arith.divf %317, %320 : vector<2x8x8xf32>
    "tpu.trace_start"() <{level = 10 : i32, message = "bts,bsd->btd"}> : () -> ()
    %cst_229 = arith.constant dense<0.000000e+00> : vector<2x8x8xf32>
    %322 = tpu.matmul %321, %310, %cst_229 {dimension_numbers = #tpu.dot_dimension_numbers<[2], [1], [1], [2], [0, 0, 0, 1, 1, 2], [0], [0]>} : vector<2x8x8xf32>, vector<2x8x8xf32>, vector<2x8x8xf32> -> vector<2x8x8xf32>
    "tpu.trace_stop"() : () -> ()
    %323 = vector.shape_cast %322 : vector<2x8x8xf32> to vector<16x8xf32>
    %c1_230 = arith.constant 1 : index
    %c0_231 = arith.constant 0 : index
    %c0_232 = arith.constant 0 : index
    %c0_233 = arith.constant 0 : index
    %324 = vector.load %arg10[%c1_230, %c0_231, %c0_232, %c0_233] : memref<2x4x8x32xf32, #tpu.memory_space<vmem>>, vector<1x1x8x32xf32>
    %325 = vector.shape_cast %324 : vector<1x1x8x32xf32> to vector<8x32xf32>
    %cst_234 = arith.constant dense<0.000000e+00> : vector<16x32xf32>
    %326 = tpu.matmul %323, %325, %cst_234 {dimension_numbers = #tpu.dot_dimension_numbers<[1], [0], [0], [1], [0, 0, 1, 1], [], []>} : vector<16x8xf32>, vector<8x32xf32>, vector<16x32xf32> -> vector<16x32xf32>
    %327 = arith.addf %286, %326 : vector<16x32xf32>
    %c1_235 = arith.constant 1 : index
    %c1_236 = arith.constant 1 : index
    %c0_237 = arith.constant 0 : index
    %c0_238 = arith.constant 0 : index
    %328 = vector.load %arg4[%c1_235, %c1_236, %c0_237, %c0_238] : memref<2x4x32x8xf32, #tpu.memory_space<vmem>>, vector<1x1x32x8xf32>
    %329 = vector.shape_cast %328 : vector<1x1x32x8xf32> to vector<32x8xf32>
    %cst_239 = arith.constant dense<0.000000e+00> : vector<16x8xf32>
    %330 = tpu.matmul %285, %329, %cst_239 {dimension_numbers = #tpu.dot_dimension_numbers<[1], [0], [0], [1], [0, 0, 1, 1], [], []>} : vector<16x32xf32>, vector<32x8xf32>, vector<16x8xf32> -> vector<16x8xf32>
    %c1_240 = arith.constant 1 : index
    %c1_241 = arith.constant 1 : index
    %c0_242 = arith.constant 0 : index
    %c0_243 = arith.constant 0 : index
    %331 = vector.load %arg7[%c1_240, %c1_241, %c0_242, %c0_243] : memref<2x4x1x8xf32, #tpu.memory_space<vmem>>, vector<1x1x1x8xf32>
    %332 = vector.shape_cast %331 : vector<1x1x1x8xf32> to vector<1x8xf32>
    %333 = vector.broadcast %332 : vector<1x8xf32> to vector<16x8xf32>
    %334 = arith.addf %330, %333 : vector<16x8xf32>
    %c1_244 = arith.constant 1 : index
    %c1_245 = arith.constant 1 : index
    %c0_246 = arith.constant 0 : index
    %c0_247 = arith.constant 0 : index
    %335 = vector.load %arg5[%c1_244, %c1_245, %c0_246, %c0_247] : memref<2x4x32x8xf32, #tpu.memory_space<vmem>>, vector<1x1x32x8xf32>
    %336 = vector.shape_cast %335 : vector<1x1x32x8xf32> to vector<32x8xf32>
    %cst_248 = arith.constant dense<0.000000e+00> : vector<16x8xf32>
    %337 = tpu.matmul %285, %336, %cst_248 {dimension_numbers = #tpu.dot_dimension_numbers<[1], [0], [0], [1], [0, 0, 1, 1], [], []>} : vector<16x32xf32>, vector<32x8xf32>, vector<16x8xf32> -> vector<16x8xf32>
    %c1_249 = arith.constant 1 : index
    %c1_250 = arith.constant 1 : index
    %c0_251 = arith.constant 0 : index
    %c0_252 = arith.constant 0 : index
    %338 = vector.load %arg8[%c1_249, %c1_250, %c0_251, %c0_252] : memref<2x4x1x8xf32, #tpu.memory_space<vmem>>, vector<1x1x1x8xf32>
    %339 = vector.shape_cast %338 : vector<1x1x1x8xf32> to vector<1x8xf32>
    %340 = vector.broadcast %339 : vector<1x8xf32> to vector<16x8xf32>
    %341 = arith.addf %337, %340 : vector<16x8xf32>
    %c1_253 = arith.constant 1 : index
    %c1_254 = arith.constant 1 : index
    %c0_255 = arith.constant 0 : index
    %c0_256 = arith.constant 0 : index
    %342 = vector.load %arg6[%c1_253, %c1_254, %c0_255, %c0_256] : memref<2x4x32x8xf32, #tpu.memory_space<vmem>>, vector<1x1x32x8xf32>
    %343 = vector.shape_cast %342 : vector<1x1x32x8xf32> to vector<32x8xf32>
    %cst_257 = arith.constant dense<0.000000e+00> : vector<16x8xf32>
    %344 = tpu.matmul %285, %343, %cst_257 {dimension_numbers = #tpu.dot_dimension_numbers<[1], [0], [0], [1], [0, 0, 1, 1], [], []>} : vector<16x32xf32>, vector<32x8xf32>, vector<16x8xf32> -> vector<16x8xf32>
    %c1_258 = arith.constant 1 : index
    %c1_259 = arith.constant 1 : index
    %c0_260 = arith.constant 0 : index
    %c0_261 = arith.constant 0 : index
    %345 = vector.load %arg9[%c1_258, %c1_259, %c0_260, %c0_261] : memref<2x4x1x8xf32, #tpu.memory_space<vmem>>, vector<1x1x1x8xf32>
    %346 = vector.shape_cast %345 : vector<1x1x1x8xf32> to vector<1x8xf32>
    %347 = vector.broadcast %346 : vector<1x8xf32> to vector<16x8xf32>
    %348 = arith.addf %344, %347 : vector<16x8xf32>
    %349 = vector.shape_cast %334 : vector<16x8xf32> to vector<2x8x8xf32>
    %350 = vector.shape_cast %341 : vector<16x8xf32> to vector<2x8x8xf32>
    %351 = vector.shape_cast %348 : vector<16x8xf32> to vector<2x8x8xf32>
    "tpu.trace_start"() <{level = 10 : i32, message = "btd,bsd->bts"}> : () -> ()
    %cst_262 = arith.constant dense<0.000000e+00> : vector<2x8x8xf32>
    %352 = tpu.matmul %349, %350, %cst_262 {dimension_numbers = #tpu.dot_dimension_numbers<[2], [2], [1], [1], [0, 0, 0, 1, 1, 1], [0], [0]>} : vector<2x8x8xf32>, vector<2x8x8xf32>, vector<2x8x8xf32> -> vector<2x8x8xf32>
    "tpu.trace_stop"() : () -> ()
    %353 = arith.addf %352, %9 : vector<2x8x8xf32>
    %cst_263 = arith.constant dense<0xFF800000> : vector<2x8xf32>
    %354 = vector.multi_reduction <maximumf>, %353, %cst_263 [2] : vector<2x8x8xf32> to vector<2x8xf32>
    %355 = vector.shape_cast %354 : vector<2x8xf32> to vector<2x8x1xf32>
    %356 = vector.broadcast %355 : vector<2x8x1xf32> to vector<2x8x8xf32>
    %357 = arith.subf %353, %356 : vector<2x8x8xf32>
    %358 = math.exp %357 : vector<2x8x8xf32>
    %cst_264 = arith.constant dense<0.000000e+00> : vector<2x8xf32>
    %359 = vector.multi_reduction <add>, %358, %cst_264 [2] : vector<2x8x8xf32> to vector<2x8xf32>
    %360 = vector.shape_cast %359 : vector<2x8xf32> to vector<2x8x1xf32>
    %361 = vector.broadcast %360 : vector<2x8x1xf32> to vector<2x8x8xf32>
    %362 = arith.divf %358, %361 : vector<2x8x8xf32>
    "tpu.trace_start"() <{level = 10 : i32, message = "bts,bsd->btd"}> : () -> ()
    %cst_265 = arith.constant dense<0.000000e+00> : vector<2x8x8xf32>
    %363 = tpu.matmul %362, %351, %cst_265 {dimension_numbers = #tpu.dot_dimension_numbers<[2], [1], [1], [2], [0, 0, 0, 1, 1, 2], [0], [0]>} : vector<2x8x8xf32>, vector<2x8x8xf32>, vector<2x8x8xf32> -> vector<2x8x8xf32>
    "tpu.trace_stop"() : () -> ()
    %364 = vector.shape_cast %363 : vector<2x8x8xf32> to vector<16x8xf32>
    %c1_266 = arith.constant 1 : index
    %c1_267 = arith.constant 1 : index
    %c0_268 = arith.constant 0 : index
    %c0_269 = arith.constant 0 : index
    %365 = vector.load %arg10[%c1_266, %c1_267, %c0_268, %c0_269] : memref<2x4x8x32xf32, #tpu.memory_space<vmem>>, vector<1x1x8x32xf32>
    %366 = vector.shape_cast %365 : vector<1x1x8x32xf32> to vector<8x32xf32>
    %cst_270 = arith.constant dense<0.000000e+00> : vector<16x32xf32>
    %367 = tpu.matmul %364, %366, %cst_270 {dimension_numbers = #tpu.dot_dimension_numbers<[1], [0], [0], [1], [0, 0, 1, 1], [], []>} : vector<16x8xf32>, vector<8x32xf32>, vector<16x32xf32> -> vector<16x32xf32>
    %368 = arith.addf %327, %367 : vector<16x32xf32>
    %c1_271 = arith.constant 1 : index
    %c2_272 = arith.constant 2 : index
    %c0_273 = arith.constant 0 : index
    %c0_274 = arith.constant 0 : index
    %369 = vector.load %arg4[%c1_271, %c2_272, %c0_273, %c0_274] : memref<2x4x32x8xf32, #tpu.memory_space<vmem>>, vector<1x1x32x8xf32>
    %370 = vector.shape_cast %369 : vector<1x1x32x8xf32> to vector<32x8xf32>
    %cst_275 = arith.constant dense<0.000000e+00> : vector<16x8xf32>
    %371 = tpu.matmul %285, %370, %cst_275 {dimension_numbers = #tpu.dot_dimension_numbers<[1], [0], [0], [1], [0, 0, 1, 1], [], []>} : vector<16x32xf32>, vector<32x8xf32>, vector<16x8xf32> -> vector<16x8xf32>
    %c1_276 = arith.constant 1 : index
    %c2_277 = arith.constant 2 : index
    %c0_278 = arith.constant 0 : index
    %c0_279 = arith.constant 0 : index
    %372 = vector.load %arg7[%c1_276, %c2_277, %c0_278, %c0_279] : memref<2x4x1x8xf32, #tpu.memory_space<vmem>>, vector<1x1x1x8xf32>
    %373 = vector.shape_cast %372 : vector<1x1x1x8xf32> to vector<1x8xf32>
    %374 = vector.broadcast %373 : vector<1x8xf32> to vector<16x8xf32>
    %375 = arith.addf %371, %374 : vector<16x8xf32>
    %c1_280 = arith.constant 1 : index
    %c2_281 = arith.constant 2 : index
    %c0_282 = arith.constant 0 : index
    %c0_283 = arith.constant 0 : index
    %376 = vector.load %arg5[%c1_280, %c2_281, %c0_282, %c0_283] : memref<2x4x32x8xf32, #tpu.memory_space<vmem>>, vector<1x1x32x8xf32>
    %377 = vector.shape_cast %376 : vector<1x1x32x8xf32> to vector<32x8xf32>
    %cst_284 = arith.constant dense<0.000000e+00> : vector<16x8xf32>
    %378 = tpu.matmul %285, %377, %cst_284 {dimension_numbers = #tpu.dot_dimension_numbers<[1], [0], [0], [1], [0, 0, 1, 1], [], []>} : vector<16x32xf32>, vector<32x8xf32>, vector<16x8xf32> -> vector<16x8xf32>
    %c1_285 = arith.constant 1 : index
    %c2_286 = arith.constant 2 : index
    %c0_287 = arith.constant 0 : index
    %c0_288 = arith.constant 0 : index
    %379 = vector.load %arg8[%c1_285, %c2_286, %c0_287, %c0_288] : memref<2x4x1x8xf32, #tpu.memory_space<vmem>>, vector<1x1x1x8xf32>
    %380 = vector.shape_cast %379 : vector<1x1x1x8xf32> to vector<1x8xf32>
    %381 = vector.broadcast %380 : vector<1x8xf32> to vector<16x8xf32>
    %382 = arith.addf %378, %381 : vector<16x8xf32>
    %c1_289 = arith.constant 1 : index
    %c2_290 = arith.constant 2 : index
    %c0_291 = arith.constant 0 : index
    %c0_292 = arith.constant 0 : index
    %383 = vector.load %arg6[%c1_289, %c2_290, %c0_291, %c0_292] : memref<2x4x32x8xf32, #tpu.memory_space<vmem>>, vector<1x1x32x8xf32>
    %384 = vector.shape_cast %383 : vector<1x1x32x8xf32> to vector<32x8xf32>
    %cst_293 = arith.constant dense<0.000000e+00> : vector<16x8xf32>
    %385 = tpu.matmul %285, %384, %cst_293 {dimension_numbers = #tpu.dot_dimension_numbers<[1], [0], [0], [1], [0, 0, 1, 1], [], []>} : vector<16x32xf32>, vector<32x8xf32>, vector<16x8xf32> -> vector<16x8xf32>
    %c1_294 = arith.constant 1 : index
    %c2_295 = arith.constant 2 : index
    %c0_296 = arith.constant 0 : index
    %c0_297 = arith.constant 0 : index
    %386 = vector.load %arg9[%c1_294, %c2_295, %c0_296, %c0_297] : memref<2x4x1x8xf32, #tpu.memory_space<vmem>>, vector<1x1x1x8xf32>
    %387 = vector.shape_cast %386 : vector<1x1x1x8xf32> to vector<1x8xf32>
    %388 = vector.broadcast %387 : vector<1x8xf32> to vector<16x8xf32>
    %389 = arith.addf %385, %388 : vector<16x8xf32>
    %390 = vector.shape_cast %375 : vector<16x8xf32> to vector<2x8x8xf32>
    %391 = vector.shape_cast %382 : vector<16x8xf32> to vector<2x8x8xf32>
    %392 = vector.shape_cast %389 : vector<16x8xf32> to vector<2x8x8xf32>
    "tpu.trace_start"() <{level = 10 : i32, message = "btd,bsd->bts"}> : () -> ()
    %cst_298 = arith.constant dense<0.000000e+00> : vector<2x8x8xf32>
    %393 = tpu.matmul %390, %391, %cst_298 {dimension_numbers = #tpu.dot_dimension_numbers<[2], [2], [1], [1], [0, 0, 0, 1, 1, 1], [0], [0]>} : vector<2x8x8xf32>, vector<2x8x8xf32>, vector<2x8x8xf32> -> vector<2x8x8xf32>
    "tpu.trace_stop"() : () -> ()
    %394 = arith.addf %393, %9 : vector<2x8x8xf32>
    %cst_299 = arith.constant dense<0xFF800000> : vector<2x8xf32>
    %395 = vector.multi_reduction <maximumf>, %394, %cst_299 [2] : vector<2x8x8xf32> to vector<2x8xf32>
    %396 = vector.shape_cast %395 : vector<2x8xf32> to vector<2x8x1xf32>
    %397 = vector.broadcast %396 : vector<2x8x1xf32> to vector<2x8x8xf32>
    %398 = arith.subf %394, %397 : vector<2x8x8xf32>
    %399 = math.exp %398 : vector<2x8x8xf32>
    %cst_300 = arith.constant dense<0.000000e+00> : vector<2x8xf32>
    %400 = vector.multi_reduction <add>, %399, %cst_300 [2] : vector<2x8x8xf32> to vector<2x8xf32>
    %401 = vector.shape_cast %400 : vector<2x8xf32> to vector<2x8x1xf32>
    %402 = vector.broadcast %401 : vector<2x8x1xf32> to vector<2x8x8xf32>
    %403 = arith.divf %399, %402 : vector<2x8x8xf32>
    "tpu.trace_start"() <{level = 10 : i32, message = "bts,bsd->btd"}> : () -> ()
    %cst_301 = arith.constant dense<0.000000e+00> : vector<2x8x8xf32>
    %404 = tpu.matmul %403, %392, %cst_301 {dimension_numbers = #tpu.dot_dimension_numbers<[2], [1], [1], [2], [0, 0, 0, 1, 1, 2], [0], [0]>} : vector<2x8x8xf32>, vector<2x8x8xf32>, vector<2x8x8xf32> -> vector<2x8x8xf32>
    "tpu.trace_stop"() : () -> ()
    %405 = vector.shape_cast %404 : vector<2x8x8xf32> to vector<16x8xf32>
    %c1_302 = arith.constant 1 : index
    %c2_303 = arith.constant 2 : index
    %c0_304 = arith.constant 0 : index
    %c0_305 = arith.constant 0 : index
    %406 = vector.load %arg10[%c1_302, %c2_303, %c0_304, %c0_305] : memref<2x4x8x32xf32, #tpu.memory_space<vmem>>, vector<1x1x8x32xf32>
    %407 = vector.shape_cast %406 : vector<1x1x8x32xf32> to vector<8x32xf32>
    %cst_306 = arith.constant dense<0.000000e+00> : vector<16x32xf32>
    %408 = tpu.matmul %405, %407, %cst_306 {dimension_numbers = #tpu.dot_dimension_numbers<[1], [0], [0], [1], [0, 0, 1, 1], [], []>} : vector<16x8xf32>, vector<8x32xf32>, vector<16x32xf32> -> vector<16x32xf32>
    %409 = arith.addf %368, %408 : vector<16x32xf32>
    %c1_307 = arith.constant 1 : index
    %c3_308 = arith.constant 3 : index
    %c0_309 = arith.constant 0 : index
    %c0_310 = arith.constant 0 : index
    %410 = vector.load %arg4[%c1_307, %c3_308, %c0_309, %c0_310] : memref<2x4x32x8xf32, #tpu.memory_space<vmem>>, vector<1x1x32x8xf32>
    %411 = vector.shape_cast %410 : vector<1x1x32x8xf32> to vector<32x8xf32>
    %cst_311 = arith.constant dense<0.000000e+00> : vector<16x8xf32>
    %412 = tpu.matmul %285, %411, %cst_311 {dimension_numbers = #tpu.dot_dimension_numbers<[1], [0], [0], [1], [0, 0, 1, 1], [], []>} : vector<16x32xf32>, vector<32x8xf32>, vector<16x8xf32> -> vector<16x8xf32>
    %c1_312 = arith.constant 1 : index
    %c3_313 = arith.constant 3 : index
    %c0_314 = arith.constant 0 : index
    %c0_315 = arith.constant 0 : index
    %413 = vector.load %arg7[%c1_312, %c3_313, %c0_314, %c0_315] : memref<2x4x1x8xf32, #tpu.memory_space<vmem>>, vector<1x1x1x8xf32>
    %414 = vector.shape_cast %413 : vector<1x1x1x8xf32> to vector<1x8xf32>
    %415 = vector.broadcast %414 : vector<1x8xf32> to vector<16x8xf32>
    %416 = arith.addf %412, %415 : vector<16x8xf32>
    %c1_316 = arith.constant 1 : index
    %c3_317 = arith.constant 3 : index
    %c0_318 = arith.constant 0 : index
    %c0_319 = arith.constant 0 : index
    %417 = vector.load %arg5[%c1_316, %c3_317, %c0_318, %c0_319] : memref<2x4x32x8xf32, #tpu.memory_space<vmem>>, vector<1x1x32x8xf32>
    %418 = vector.shape_cast %417 : vector<1x1x32x8xf32> to vector<32x8xf32>
    %cst_320 = arith.constant dense<0.000000e+00> : vector<16x8xf32>
    %419 = tpu.matmul %285, %418, %cst_320 {dimension_numbers = #tpu.dot_dimension_numbers<[1], [0], [0], [1], [0, 0, 1, 1], [], []>} : vector<16x32xf32>, vector<32x8xf32>, vector<16x8xf32> -> vector<16x8xf32>
    %c1_321 = arith.constant 1 : index
    %c3_322 = arith.constant 3 : index
    %c0_323 = arith.constant 0 : index
    %c0_324 = arith.constant 0 : index
    %420 = vector.load %arg8[%c1_321, %c3_322, %c0_323, %c0_324] : memref<2x4x1x8xf32, #tpu.memory_space<vmem>>, vector<1x1x1x8xf32>
    %421 = vector.shape_cast %420 : vector<1x1x1x8xf32> to vector<1x8xf32>
    %422 = vector.broadcast %421 : vector<1x8xf32> to vector<16x8xf32>
    %423 = arith.addf %419, %422 : vector<16x8xf32>
    %c1_325 = arith.constant 1 : index
    %c3_326 = arith.constant 3 : index
    %c0_327 = arith.constant 0 : index
    %c0_328 = arith.constant 0 : index
    %424 = vector.load %arg6[%c1_325, %c3_326, %c0_327, %c0_328] : memref<2x4x32x8xf32, #tpu.memory_space<vmem>>, vector<1x1x32x8xf32>
    %425 = vector.shape_cast %424 : vector<1x1x32x8xf32> to vector<32x8xf32>
    %cst_329 = arith.constant dense<0.000000e+00> : vector<16x8xf32>
    %426 = tpu.matmul %285, %425, %cst_329 {dimension_numbers = #tpu.dot_dimension_numbers<[1], [0], [0], [1], [0, 0, 1, 1], [], []>} : vector<16x32xf32>, vector<32x8xf32>, vector<16x8xf32> -> vector<16x8xf32>
    %c1_330 = arith.constant 1 : index
    %c3_331 = arith.constant 3 : index
    %c0_332 = arith.constant 0 : index
    %c0_333 = arith.constant 0 : index
    %427 = vector.load %arg9[%c1_330, %c3_331, %c0_332, %c0_333] : memref<2x4x1x8xf32, #tpu.memory_space<vmem>>, vector<1x1x1x8xf32>
    %428 = vector.shape_cast %427 : vector<1x1x1x8xf32> to vector<1x8xf32>
    %429 = vector.broadcast %428 : vector<1x8xf32> to vector<16x8xf32>
    %430 = arith.addf %426, %429 : vector<16x8xf32>
    %431 = vector.shape_cast %416 : vector<16x8xf32> to vector<2x8x8xf32>
    %432 = vector.shape_cast %423 : vector<16x8xf32> to vector<2x8x8xf32>
    %433 = vector.shape_cast %430 : vector<16x8xf32> to vector<2x8x8xf32>
    "tpu.trace_start"() <{level = 10 : i32, message = "btd,bsd->bts"}> : () -> ()
    %cst_334 = arith.constant dense<0.000000e+00> : vector<2x8x8xf32>
    %434 = tpu.matmul %431, %432, %cst_334 {dimension_numbers = #tpu.dot_dimension_numbers<[2], [2], [1], [1], [0, 0, 0, 1, 1, 1], [0], [0]>} : vector<2x8x8xf32>, vector<2x8x8xf32>, vector<2x8x8xf32> -> vector<2x8x8xf32>
    "tpu.trace_stop"() : () -> ()
    %435 = arith.addf %434, %9 : vector<2x8x8xf32>
    %cst_335 = arith.constant dense<0xFF800000> : vector<2x8xf32>
    %436 = vector.multi_reduction <maximumf>, %435, %cst_335 [2] : vector<2x8x8xf32> to vector<2x8xf32>
    %437 = vector.shape_cast %436 : vector<2x8xf32> to vector<2x8x1xf32>
    %438 = vector.broadcast %437 : vector<2x8x1xf32> to vector<2x8x8xf32>
    %439 = arith.subf %435, %438 : vector<2x8x8xf32>
    %440 = math.exp %439 : vector<2x8x8xf32>
    %cst_336 = arith.constant dense<0.000000e+00> : vector<2x8xf32>
    %441 = vector.multi_reduction <add>, %440, %cst_336 [2] : vector<2x8x8xf32> to vector<2x8xf32>
    %442 = vector.shape_cast %441 : vector<2x8xf32> to vector<2x8x1xf32>
    %443 = vector.broadcast %442 : vector<2x8x1xf32> to vector<2x8x8xf32>
    %444 = arith.divf %440, %443 : vector<2x8x8xf32>
    "tpu.trace_start"() <{level = 10 : i32, message = "bts,bsd->btd"}> : () -> ()
    %cst_337 = arith.constant dense<0.000000e+00> : vector<2x8x8xf32>
    %445 = tpu.matmul %444, %433, %cst_337 {dimension_numbers = #tpu.dot_dimension_numbers<[2], [1], [1], [2], [0, 0, 0, 1, 1, 2], [0], [0]>} : vector<2x8x8xf32>, vector<2x8x8xf32>, vector<2x8x8xf32> -> vector<2x8x8xf32>
    "tpu.trace_stop"() : () -> ()
    %446 = vector.shape_cast %445 : vector<2x8x8xf32> to vector<16x8xf32>
    %c1_338 = arith.constant 1 : index
    %c3_339 = arith.constant 3 : index
    %c0_340 = arith.constant 0 : index
    %c0_341 = arith.constant 0 : index
    %447 = vector.load %arg10[%c1_338, %c3_339, %c0_340, %c0_341] : memref<2x4x8x32xf32, #tpu.memory_space<vmem>>, vector<1x1x8x32xf32>
    %448 = vector.shape_cast %447 : vector<1x1x8x32xf32> to vector<8x32xf32>
    %cst_342 = arith.constant dense<0.000000e+00> : vector<16x32xf32>
    %449 = tpu.matmul %446, %448, %cst_342 {dimension_numbers = #tpu.dot_dimension_numbers<[1], [0], [0], [1], [0, 0, 1, 1], [], []>} : vector<16x8xf32>, vector<8x32xf32>, vector<16x32xf32> -> vector<16x32xf32>
    %450 = arith.addf %409, %449 : vector<16x32xf32>
    %451 = arith.addf %259, %450 : vector<16x32xf32>
    %c1_343 = arith.constant 1 : index
    %c0_344 = arith.constant 0 : index
    %c0_345 = arith.constant 0 : index
    %452 = vector.load %arg11[%c1_343, %c0_344, %c0_345] : memref<2x1x32xf32, #tpu.memory_space<vmem>>, vector<1x1x32xf32>
    %453 = vector.shape_cast %452 : vector<1x1x32xf32> to vector<1x32xf32>
    %454 = vector.broadcast %453 : vector<1x32xf32> to vector<16x32xf32>
    %455 = arith.addf %451, %454 : vector<16x32xf32>
    %c1_346 = arith.constant 1 : index
    %c0_347 = arith.constant 0 : index
    %c0_348 = arith.constant 0 : index
    %456 = vector.load %arg12[%c1_346, %c0_347, %c0_348] : memref<2x1x32xf32, #tpu.memory_space<vmem>>, vector<1x1x32xf32>
    %457 = vector.shape_cast %456 : vector<1x1x32xf32> to vector<1x32xf32>
    %c1_349 = arith.constant 1 : index
    %c0_350 = arith.constant 0 : index
    %c0_351 = arith.constant 0 : index
    %458 = vector.load %arg13[%c1_349, %c0_350, %c0_351] : memref<2x1x32xf32, #tpu.memory_space<vmem>>, vector<1x1x32xf32>
    %459 = vector.shape_cast %458 : vector<1x1x32xf32> to vector<1x32xf32>
    %cst_352 = arith.constant dense<0.000000e+00> : vector<16xf32>
    %460 = vector.multi_reduction <add>, %455, %cst_352 [1] : vector<16x32xf32> to vector<16xf32>
    %461 = vector.shape_cast %460 : vector<16xf32> to vector<16x1xf32>
    %cst_353 = arith.constant 3.200000e+01 : f32
    %462 = vector.broadcast %cst_353 : f32 to vector<16x1xf32>
    %463 = arith.divf %461, %462 : vector<16x1xf32>
    %464 = vector.broadcast %463 : vector<16x1xf32> to vector<16x32xf32>
    %465 = arith.subf %455, %464 : vector<16x32xf32>
    %466 = arith.mulf %465, %465 : vector<16x32xf32>
    %cst_354 = arith.constant dense<0.000000e+00> : vector<16xf32>
    %467 = vector.multi_reduction <add>, %466, %cst_354 [1] : vector<16x32xf32> to vector<16xf32>
    %468 = vector.shape_cast %467 : vector<16xf32> to vector<16x1xf32>
    %cst_355 = arith.constant 3.200000e+01 : f32
    %469 = vector.broadcast %cst_355 : f32 to vector<16x1xf32>
    %470 = arith.divf %468, %469 : vector<16x1xf32>
    %471 = vector.broadcast %463 : vector<16x1xf32> to vector<16x32xf32>
    %472 = arith.subf %455, %471 : vector<16x32xf32>
    %cst_356 = arith.constant 9.99999974E-6 : f32
    %473 = vector.broadcast %cst_356 : f32 to vector<16x1xf32>
    %474 = arith.addf %470, %473 : vector<16x1xf32>
    %475 = math.rsqrt %474 : vector<16x1xf32>
    %476 = vector.broadcast %475 : vector<16x1xf32> to vector<16x32xf32>
    %477 = arith.mulf %472, %476 : vector<16x32xf32>
    %478 = vector.broadcast %457 : vector<1x32xf32> to vector<16x32xf32>
    %479 = arith.mulf %477, %478 : vector<16x32xf32>
    %480 = vector.broadcast %459 : vector<1x32xf32> to vector<16x32xf32>
    %481 = arith.addf %479, %480 : vector<16x32xf32>
    %c1_357 = arith.constant 1 : index
    %c0_358 = arith.constant 0 : index
    %c0_359 = arith.constant 0 : index
    %482 = vector.load %arg14[%c1_357, %c0_358, %c0_359] : memref<2x32x128xf32, #tpu.memory_space<vmem>>, vector<1x32x128xf32>
    %483 = vector.shape_cast %482 : vector<1x32x128xf32> to vector<32x128xf32>
    %cst_360 = arith.constant dense<0.000000e+00> : vector<16x128xf32>
    %484 = tpu.matmul %481, %483, %cst_360 {dimension_numbers = #tpu.dot_dimension_numbers<[1], [0], [0], [1], [0, 0, 1, 1], [], []>} : vector<16x32xf32>, vector<32x128xf32>, vector<16x128xf32> -> vector<16x128xf32>
    %c1_361 = arith.constant 1 : index
    %c0_362 = arith.constant 0 : index
    %c0_363 = arith.constant 0 : index
    %485 = vector.load %arg15[%c1_361, %c0_362, %c0_363] : memref<2x1x128xf32, #tpu.memory_space<vmem>>, vector<1x1x128xf32>
    %486 = vector.shape_cast %485 : vector<1x1x128xf32> to vector<1x128xf32>
    %487 = vector.broadcast %486 : vector<1x128xf32> to vector<16x128xf32>
    %488 = arith.addf %484, %487 : vector<16x128xf32>
    %cst_364 = arith.constant 5.000000e-01 : f32
    %489 = vector.broadcast %cst_364 : f32 to vector<16x128xf32>
    %490 = arith.mulf %489, %488 : vector<16x128xf32>
    %cst_365 = arith.constant 4.471500e-02 : f32
    %491 = vector.broadcast %cst_365 : f32 to vector<16x128xf32>
    %492 = arith.mulf %491, %488 : vector<16x128xf32>
    %493 = arith.mulf %492, %488 : vector<16x128xf32>
    %494 = arith.mulf %493, %488 : vector<16x128xf32>
    %495 = arith.addf %488, %494 : vector<16x128xf32>
    %cst_366 = arith.constant 0.797884583 : f32
    %496 = vector.broadcast %cst_366 : f32 to vector<16x128xf32>
    %497 = arith.mulf %496, %495 : vector<16x128xf32>
    %498 = math.tanh %497 : vector<16x128xf32>
    %cst_367 = arith.constant 1.000000e+00 : f32
    %499 = vector.broadcast %cst_367 : f32 to vector<16x128xf32>
    %500 = arith.addf %499, %498 : vector<16x128xf32>
    %501 = arith.mulf %490, %500 : vector<16x128xf32>
    %c1_368 = arith.constant 1 : index
    %c0_369 = arith.constant 0 : index
    %c0_370 = arith.constant 0 : index
    %502 = vector.load %arg16[%c1_368, %c0_369, %c0_370] : memref<2x128x32xf32, #tpu.memory_space<vmem>>, vector<1x128x32xf32>
    %503 = vector.shape_cast %502 : vector<1x128x32xf32> to vector<128x32xf32>
    %cst_371 = arith.constant dense<0.000000e+00> : vector<16x32xf32>
    %504 = tpu.matmul %501, %503, %cst_371 {dimension_numbers = #tpu.dot_dimension_numbers<[1], [0], [0], [1], [0, 0, 1, 1], [], []>} : vector<16x128xf32>, vector<128x32xf32>, vector<16x32xf32> -> vector<16x32xf32>
    %c1_372 = arith.constant 1 : index
    %c0_373 = arith.constant 0 : index
    %c0_374 = arith.constant 0 : index
    %505 = vector.load %arg17[%c1_372, %c0_373, %c0_374] : memref<2x1x32xf32, #tpu.memory_space<vmem>>, vector<1x1x32xf32>
    %506 = vector.shape_cast %505 : vector<1x1x32xf32> to vector<1x32xf32>
    %507 = vector.broadcast %506 : vector<1x32xf32> to vector<16x32xf32>
    %508 = arith.addf %504, %507 : vector<16x32xf32>
    %509 = arith.addf %455, %508 : vector<16x32xf32>
    %c0_375 = arith.constant 0 : index
    %c0_376 = arith.constant 0 : index
    %510 = vector.load %arg18[%c0_375, %c0_376] : memref<1x32xf32, #tpu.memory_space<vmem>>, vector<1x32xf32>
    %c0_377 = arith.constant 0 : index
    %c0_378 = arith.constant 0 : index
    %511 = vector.load %arg19[%c0_377, %c0_378] : memref<1x32xf32, #tpu.memory_space<vmem>>, vector<1x32xf32>
    %cst_379 = arith.constant dense<0.000000e+00> : vector<16xf32>
    %512 = vector.multi_reduction <add>, %509, %cst_379 [1] : vector<16x32xf32> to vector<16xf32>
    %513 = vector.shape_cast %512 : vector<16xf32> to vector<16x1xf32>
    %cst_380 = arith.constant 3.200000e+01 : f32
    %514 = vector.broadcast %cst_380 : f32 to vector<16x1xf32>
    %515 = arith.divf %513, %514 : vector<16x1xf32>
    %516 = vector.broadcast %515 : vector<16x1xf32> to vector<16x32xf32>
    %517 = arith.subf %509, %516 : vector<16x32xf32>
    %518 = arith.mulf %517, %517 : vector<16x32xf32>
    %cst_381 = arith.constant dense<0.000000e+00> : vector<16xf32>
    %519 = vector.multi_reduction <add>, %518, %cst_381 [1] : vector<16x32xf32> to vector<16xf32>
    %520 = vector.shape_cast %519 : vector<16xf32> to vector<16x1xf32>
    %cst_382 = arith.constant 3.200000e+01 : f32
    %521 = vector.broadcast %cst_382 : f32 to vector<16x1xf32>
    %522 = arith.divf %520, %521 : vector<16x1xf32>
    %523 = vector.broadcast %515 : vector<16x1xf32> to vector<16x32xf32>
    %524 = arith.subf %509, %523 : vector<16x32xf32>
    %cst_383 = arith.constant 9.99999974E-6 : f32
    %525 = vector.broadcast %cst_383 : f32 to vector<16x1xf32>
    %526 = arith.addf %522, %525 : vector<16x1xf32>
    %527 = math.rsqrt %526 : vector<16x1xf32>
    %528 = vector.broadcast %527 : vector<16x1xf32> to vector<16x32xf32>
    %529 = arith.mulf %524, %528 : vector<16x32xf32>
    %530 = vector.broadcast %510 : vector<1x32xf32> to vector<16x32xf32>
    %531 = arith.mulf %529, %530 : vector<16x32xf32>
    %532 = vector.broadcast %511 : vector<1x32xf32> to vector<16x32xf32>
    %533 = arith.addf %531, %532 : vector<16x32xf32>
    %c0_384 = arith.constant 0 : index
    %c0_385 = arith.constant 0 : index
    %534 = vector.load %arg20[%c0_384, %c0_385] : memref<32x128xf32, #tpu.memory_space<vmem>>, vector<32x128xf32>
    %cst_386 = arith.constant dense<0.000000e+00> : vector<16x128xf32>
    %535 = tpu.matmul %533, %534, %cst_386 {dimension_numbers = #tpu.dot_dimension_numbers<[1], [0], [0], [1], [0, 0, 1, 1], [], []>} : vector<16x32xf32>, vector<32x128xf32>, vector<16x128xf32> -> vector<16x128xf32>
    %c0_387 = arith.constant 0 : index
    %c0_388 = arith.constant 0 : index
    %536 = vector.load %arg21[%c0_387, %c0_388] : memref<16x128xf32, #tpu.memory_space<vmem>>, vector<16x128xf32>
    tpu.vector_store %arg21[%c0_387, %c0_388], %535 {strides = array<i32>} : memref<16x128xf32, #tpu.memory_space<vmem>>, vector<16x128xf32>,
    return
  }
  func.func @transform_0(%arg0: i32) -> (i32, i32) {
    %c0_i32 = arith.constant 0 : i32
    %c0_i32_0 = arith.constant 0 : i32
    %c0_i32_1 = arith.constant 0 : i32
    return %c0_i32, %c0_i32_0 : i32, i32
  }
  func.func @transform_1(%arg0: i32) -> (i32, i32, i32) {
    %c0_i32 = arith.constant 0 : i32
    %c0_i32_0 = arith.constant 0 : i32
    %c0_i32_1 = arith.constant 0 : i32
    %c0_i32_2 = arith.constant 0 : i32
    return %c0_i32, %c0_i32_0, %c0_i32_1 : i32, i32, i32
  }
  func.func @transform_2(%arg0: i32) -> (i32, i32, i32) {
    %c0_i32 = arith.constant 0 : i32
    %c0_i32_0 = arith.constant 0 : i32
    %c0_i32_1 = arith.constant 0 : i32
    %c0_i32_2 = arith.constant 0 : i32
    return %c0_i32, %c0_i32_0, %c0_i32_1 : i32, i32, i32
  }
  func.func @transform_3(%arg0: i32) -> (i32, i32, i32, i32) {
    %c0_i32 = arith.constant 0 : i32
    %c0_i32_0 = arith.constant 0 : i32
    %c0_i32_1 = arith.constant 0 : i32
    %c0_i32_2 = arith.constant 0 : i32
    %c0_i32_3 = arith.constant 0 : i32
    return %c0_i32, %c0_i32_0, %c0_i32_1, %c0_i32_2 : i32, i32, i32, i32
  }
  func.func @transform_4(%arg0: i32) -> (i32, i32, i32, i32) {
    %c0_i32 = arith.constant 0 : i32
    %c0_i32_0 = arith.constant 0 : i32
    %c0_i32_1 = arith.constant 0 : i32
    %c0_i32_2 = arith.constant 0 : i32
    %c0_i32_3 = arith.constant 0 : i32
    return %c0_i32, %c0_i32_0, %c0_i32_1, %c0_i32_2 : i32, i32, i32, i32
  }
  func.func @transform_5(%arg0: i32) -> (i32, i32, i32, i32) {
    %c0_i32 = arith.constant 0 : i32
    %c0_i32_0 = arith.constant 0 : i32
    %c0_i32_1 = arith.constant 0 : i32
    %c0_i32_2 = arith.constant 0 : i32
    %c0_i32_3 = arith.constant 0 : i32
    return %c0_i32, %c0_i32_0, %c0_i32_1, %c0_i32_2 : i32, i32, i32, i32
  }
  func.func @transform_6(%arg0: i32) -> (i32, i32, i32, i32) {
    %c0_i32 = arith.constant 0 : i32
    %c0_i32_0 = arith.constant 0 : i32
    %c0_i32_1 = arith.constant 0 : i32
    %c0_i32_2 = arith.constant 0 : i32
    %c0_i32_3 = arith.constant 0 : i32
    return %c0_i32, %c0_i32_0, %c0_i32_1, %c0_i32_2 : i32, i32, i32, i32
  }
  func.func @transform_7(%arg0: i32) -> (i32, i32, i32, i32) {
    %c0_i32 = arith.constant 0 : i32
    %c0_i32_0 = arith.constant 0 : i32
    %c0_i32_1 = arith.constant 0 : i32
    %c0_i32_2 = arith.constant 0 : i32
    %c0_i32_3 = arith.constant 0 : i32
    return %c0_i32, %c0_i32_0, %c0_i32_1, %c0_i32_2 : i32, i32, i32, i32
  }
  func.func @transform_8(%arg0: i32) -> (i32, i32, i32, i32) {
    %c0_i32 = arith.constant 0 : i32
    %c0_i32_0 = arith.constant 0 : i32
    %c0_i32_1 = arith.constant 0 : i32
    %c0_i32_2 = arith.constant 0 : i32
    %c0_i32_3 = arith.constant 0 : i32
    return %c0_i32, %c0_i32_0, %c0_i32_1, %c0_i32_2 : i32, i32, i32, i32
  }
  func.func @transform_9(%arg0: i32) -> (i32, i32, i32, i32) {
    %c0_i32 = arith.constant 0 : i32
    %c0_i32_0 = arith.constant 0 : i32
    %c0_i32_1 = arith.constant 0 : i32
    %c0_i32_2 = arith.constant 0 : i32
    %c0_i32_3 = arith.constant 0 : i32
    return %c0_i32, %c0_i32_0, %c0_i32_1, %c0_i32_2 : i32, i32, i32, i32
  }
  func.func @transform_10(%arg0: i32) -> (i32, i32, i32) {
    %c0_i32 = arith.constant 0 : i32
    %c0_i32_0 = arith.constant 0 : i32
    %c0_i32_1 = arith.constant 0 : i32
    %c0_i32_2 = arith.constant 0 : i32
    return %c0_i32, %c0_i32_0, %c0_i32_1 : i32, i32, i32
  }
  func.func @transform_11(%arg0: i32) -> (i32, i32, i32) {
    %c0_i32 = arith.constant 0 : i32
    %c0_i32_0 = arith.constant 0 : i32
    %c0_i32_1 = arith.constant 0 : i32
    %c0_i32_2 = arith.constant 0 : i32
    return %c0_i32, %c0_i32_0, %c0_i32_1 : i32, i32, i32
  }
  func.func @transform_12(%arg0: i32) -> (i32, i32, i32) {
    %c0_i32 = arith.constant 0 : i32
    %c0_i32_0 = arith.constant 0 : i32
    %c0_i32_1 = arith.constant 0 : i32
    %c0_i32_2 = arith.constant 0 : i32
    return %c0_i32, %c0_i32_0, %c0_i32_1 : i32, i32, i32
  }
  func.func @transform_13(%arg0: i32) -> (i32, i32, i32) {
    %c0_i32 = arith.constant 0 : i32
    %c0_i32_0 = arith.constant 0 : i32
    %c0_i32_1 = arith.constant 0 : i32
    %c0_i32_2 = arith.constant 0 : i32
    return %c0_i32, %c0_i32_0, %c0_i32_1 : i32, i32, i32
  }
  func.func @transform_14(%arg0: i32) -> (i32, i32, i32) {
    %c0_i32 = arith.constant 0 : i32
    %c0_i32_0 = arith.constant 0 : i32
    %c0_i32_1 = arith.constant 0 : i32
    %c0_i32_2 = arith.constant 0 : i32
    return %c0_i32, %c0_i32_0, %c0_i32_1 : i32, i32, i32
  }
  func.func @transform_15(%arg0: i32) -> (i32, i32, i32) {
    %c0_i32 = arith.constant 0 : i32
    %c0_i32_0 = arith.constant 0 : i32
    %c0_i32_1 = arith.constant 0 : i32
    %c0_i32_2 = arith.constant 0 : i32
    return %c0_i32, %c0_i32_0, %c0_i32_1 : i32, i32, i32
  }
  func.func @transform_16(%arg0: i32) -> (i32, i32, i32) {
    %c0_i32 = arith.constant 0 : i32
    %c0_i32_0 = arith.constant 0 : i32
    %c0_i32_1 = arith.constant 0 : i32
    %c0_i32_2 = arith.constant 0 : i32
    return %c0_i32, %c0_i32_0, %c0_i32_1 : i32, i32, i32
  }
  func.func @transform_17(%arg0: i32) -> (i32, i32) {
    %c0_i32 = arith.constant 0 : i32
    %c0_i32_0 = arith.constant 0 : i32
    %c0_i32_1 = arith.constant 0 : i32
    return %c0_i32, %c0_i32_0 : i32, i32
  }
  func.func @transform_18(%arg0: i32) -> (i32, i32) {
    %c0_i32 = arith.constant 0 : i32
    %c0_i32_0 = arith.constant 0 : i32
    %c0_i32_1 = arith.constant 0 : i32
    return %c0_i32, %c0_i32_0 : i32, i32
  }
  func.func @transform_19(%arg0: i32) -> (i32, i32) {
    %c0_i32 = arith.constant 0 : i32
    %c0_i32_0 = arith.constant 0 : i32
    %c0_i32_1 = arith.constant 0 : i32
    return %c0_i32, %c0_i32_0 : i32, i32
  }
  func.func @transform_20(%arg0: i32) -> (i32, i32) {
    %c0_i32 = arith.constant 0 : i32
    %c0_i32_0 = arith.constant 0 : i32
    %c0_i32_1 = arith.constant 0 : i32
    return %c0_i32, %c0_i32_0 : i32, i32
  }
}

</mosaic_0001>

<llo_original>
// kernel: gpt_forward.1
$region0: #{gpt_forward.1}
  #allocation0 [shape = 'u32[]', space=smem, size = 0x4, offset = 0x4, fixed_abs, tag = 'smem constant byte address 0x4 - core index']
  #allocation1 [shape = 'u32[144,128]{1,0:T(1,128)}', space=vmem, size = 0x12000, scoped, tag = 'internal scratch']
  %s0 = inlined_call_operand.vmem [shape: f32[16,32], index: 0, kind: input, shape index: {}]
  %s1 = inlined_call_operand.vmem [shape: f32[2,1,32], index: 1, kind: input, shape index: {}]
  %s2 = inlined_call_operand.vmem [shape: f32[2,1,32], index: 2, kind: input, shape index: {}]
  %s3 = inlined_call_operand.vmem [shape: f32[2,4,32,8], index: 3, kind: input, shape index: {}]
  %s4 = inlined_call_operand.vmem [shape: f32[2,4,32,8], index: 4, kind: input, shape index: {}]
  %s5 = inlined_call_operand.vmem [shape: f32[2,4,32,8], index: 5, kind: input, shape index: {}]
  %s6 = inlined_call_operand.vmem [shape: f32[2,4,1,8], index: 6, kind: input, shape index: {}]
  %s7 = inlined_call_operand.vmem [shape: f32[2,4,1,8], index: 7, kind: input, shape index: {}]
  %s8 = inlined_call_operand.vmem [shape: f32[2,4,1,8], index: 8, kind: input, shape index: {}]
  %s9 = inlined_call_operand.vmem [shape: f32[2,4,8,32], index: 9, kind: input, shape index: {}]
  %s10 = inlined_call_operand.vmem [shape: f32[2,1,32], index: 10, kind: input, shape index: {}]
  %s11 = inlined_call_operand.vmem [shape: f32[2,1,32], index: 11, kind: input, shape index: {}]
  %s12 = inlined_call_operand.vmem [shape: f32[2,1,32], index: 12, kind: input, shape index: {}]
  %s13 = inlined_call_operand.vmem [shape: f32[2,32,128], index: 13, kind: input, shape index: {}]
  %s14 = inlined_call_operand.vmem [shape: f32[2,1,128], index: 14, kind: input, shape index: {}]
  %s15 = inlined_call_operand.vmem [shape: f32[2,128,32], index: 15, kind: input, shape index: {}]
  %s16 = inlined_call_operand.vmem [shape: f32[2,1,32], index: 16, kind: input, shape index: {}]
  %s17 = inlined_call_operand.vmem [shape: f32[1,32], index: 17, kind: input, shape index: {}]
  %s18 = inlined_call_operand.vmem [shape: f32[1,32], index: 18, kind: input, shape index: {}]
  %s19 = inlined_call_operand.vmem [shape: f32[32,128], index: 19, kind: input, shape index: {}]
  %s20 = inlined_call_operand.vmem [shape: f32[16,128], index: 20, kind: output, shape index: {}]
  %s21 = sld [smem:[#allocation0]]
  $region90: #{gpt_forward.1} parent=0
    _
  %s23 = ssub.s32 1, %s21
  %s24 = scalar_select 0, %s23, %s21
  // Predicated region
  $region2: #{gpt_forward.1} parent=0 // pred_check
    _
  $region3: #{gpt_forward.1} parent=0 // pred_check_branch
    %26 = sbr.rel (0) target = $region5
  $region4: #{gpt_forward.1} parent=0 // pred_region
    _
  $region5: #{gpt_forward.1} parent=0 // pred_fallthru
    _
  // Predicated region
  $region6: #{gpt_forward.1} parent=0 // pred_check
    _
  $region7: #{gpt_forward.1} parent=0 // pred_check_branch
    %28 = sbr.rel (0) target = $region9
  $region8: #{gpt_forward.1} parent=0 // pred_region
    _
  $region9: #{gpt_forward.1} parent=0 // pred_fallthru
    _
  // Predicated region
  $region10: #{gpt_forward.1} parent=0 // pred_check
    _
  $region11: #{gpt_forward.1} parent=0 // pred_check_branch
    %30 = sbr.rel (0) target = $region13
  $region12: #{gpt_forward.1} parent=0 // pred_region
    _
  $region13: #{gpt_forward.1} parent=0 // pred_fallthru
    _
  // Predicated region
  $region14: #{gpt_forward.1} parent=0 // pred_check
    _
  $region15: #{gpt_forward.1} parent=0 // pred_check_branch
    %32 = sbr.rel (0) target = $region17
  $region16: #{gpt_forward.1} parent=0 // pred_region
    _
  $region17: #{gpt_forward.1} parent=0 // pred_fallthru
    _
  // Predicated region
  $region18: #{gpt_forward.1} parent=0 // pred_check
    _
  $region19: #{gpt_forward.1} parent=0 // pred_check_branch
    %34 = sbr.rel (0) target = $region21
  $region20: #{gpt_forward.1} parent=0 // pred_region
    _
  $region21: #{gpt_forward.1} parent=0 // pred_fallthru
    _
  // Predicated region
  $region22: #{gpt_forward.1} parent=0 // pred_check
    _
  $region23: #{gpt_forward.1} parent=0 // pred_check_branch
    %36 = sbr.rel (0) target = $region25
  $region24: #{gpt_forward.1} parent=0 // pred_region
    _
  $region25: #{gpt_forward.1} parent=0 // pred_fallthru
    _
  // Predicated region
  $region26: #{gpt_forward.1} parent=0 // pred_check
    _
  $region27: #{gpt_forward.1} parent=0 // pred_check_branch
    %38 = sbr.rel (0) target = $region29
  $region28: #{gpt_forward.1} parent=0 // pred_region
    _
  $region29: #{gpt_forward.1} parent=0 // pred_fallthru
    _
  // Predicated region
  $region30: #{gpt_forward.1} parent=0 // pred_check
    _
  $region31: #{gpt_forward.1} parent=0 // pred_check_branch
    %40 = sbr.rel (0) target = $region33
  $region32: #{gpt_forward.1} parent=0 // pred_region
    _
  $region33: #{gpt_forward.1} parent=0 // pred_fallthru
    _
  // Predicated region
  $region34: #{gpt_forward.1} parent=0 // pred_check
    _
  $region35: #{gpt_forward.1} parent=0 // pred_check_branch
    %42 = sbr.rel (0) target = $region37
  $region36: #{gpt_forward.1} parent=0 // pred_region
    _
  $region37: #{gpt_forward.1} parent=0 // pred_fallthru
    _
  // Predicated region
  $region38: #{gpt_forward.1} parent=0 // pred_check
    _
  $region39: #{gpt_forward.1} parent=0 // pred_check_branch
    %44 = sbr.rel (0) target = $region41
  $region40: #{gpt_forward.1} parent=0 // pred_region
    _
  $region41: #{gpt_forward.1} parent=0 // pred_fallthru
    _
  // Predicated region
  $region42: #{gpt_forward.1} parent=0 // pred_check
    _
  $region43: #{gpt_forward.1} parent=0 // pred_check_branch
    %46 = sbr.rel (0) target = $region45
  $region44: #{gpt_forward.1} parent=0 // pred_region
    _
  $region45: #{gpt_forward.1} parent=0 // pred_fallthru
    _
  // Predicated region
  $region46: #{gpt_forward.1} parent=0 // pred_check
    _
  $region47: #{gpt_forward.1} parent=0 // pred_check_branch
    %48 = sbr.rel (0) target = $region49
  $region48: #{gpt_forward.1} parent=0 // pred_region
    _
  $region49: #{gpt_forward.1} parent=0 // pred_fallthru
    _
  // Predicated region
  $region50: #{gpt_forward.1} parent=0 // pred_check
    _
  $region51: #{gpt_forward.1} parent=0 // pred_check_branch
    %50 = sbr.rel (0) target = $region53
  $region52: #{gpt_forward.1} parent=0 // pred_region
    _
  $region53: #{gpt_forward.1} parent=0 // pred_fallthru
    _
  // Predicated region
  $region54: #{gpt_forward.1} parent=0 // pred_check
    _
  $region55: #{gpt_forward.1} parent=0 // pred_check_branch
    %52 = sbr.rel (0) target = $region57
  $region56: #{gpt_forward.1} parent=0 // pred_region
    _
  $region57: #{gpt_forward.1} parent=0 // pred_fallthru
    _
  // Predicated region
  $region58: #{gpt_forward.1} parent=0 // pred_check
    _
  $region59: #{gpt_forward.1} parent=0 // pred_check_branch
    %54 = sbr.rel (0) target = $region61
  $region60: #{gpt_forward.1} parent=0 // pred_region
    _
  $region61: #{gpt_forward.1} parent=0 // pred_fallthru
    _
  // Predicated region
  $region62: #{gpt_forward.1} parent=0 // pred_check
    _
  $region63: #{gpt_forward.1} parent=0 // pred_check_branch
    %56 = sbr.rel (0) target = $region65
  $region64: #{gpt_forward.1} parent=0 // pred_region
    _
  $region65: #{gpt_forward.1} parent=0 // pred_fallthru
    _
  // Predicated region
  $region66: #{gpt_forward.1} parent=0 // pred_check
    _
  $region67: #{gpt_forward.1} parent=0 // pred_check_branch
    %58 = sbr.rel (0) target = $region69
  $region68: #{gpt_forward.1} parent=0 // pred_region
    _
  $region69: #{gpt_forward.1} parent=0 // pred_fallthru
    _
  // Predicated region
  $region70: #{gpt_forward.1} parent=0 // pred_check
    _
  $region71: #{gpt_forward.1} parent=0 // pred_check_branch
    %60 = sbr.rel (0) target = $region73
  $region72: #{gpt_forward.1} parent=0 // pred_region
    _
  $region73: #{gpt_forward.1} parent=0 // pred_fallthru
    _
  // Predicated region
  $region74: #{gpt_forward.1} parent=0 // pred_check
    _
  $region75: #{gpt_forward.1} parent=0 // pred_check_branch
    %62 = sbr.rel (0) target = $region77
  $region76: #{gpt_forward.1} parent=0 // pred_region
    _
  $region77: #{gpt_forward.1} parent=0 // pred_fallthru
    _
  // Predicated region
  $region78: #{gpt_forward.1} parent=0 // pred_check
    _
  $region79: #{gpt_forward.1} parent=0 // pred_check_branch
    %64 = sbr.rel (0) target = $region81
  $region80: #{gpt_forward.1} parent=0 // pred_region
    _
  $region81: #{gpt_forward.1} parent=0 // pred_fallthru
    _
  %v65 = vld [vmem:[%s0] sm:$0xff]
  %v66 = vld [vmem:[%s0 + $0x8] sm:$0xff]
  %v67 = vlaneseq
  %v68 = vshrl.u32 %v67, 7
  %v69 = vlaneseq
  %v70 = vand.u32 %v69, 127
  %vm71 = vcmp.le.s32.totalorder %v70, %v68
  %v72 = vsel %vm71, 0.0, -1e+30
  %v73 = vld [vmem:[%s1] sm:$0x1]
  %v74 = vld [vmem:[%s2] sm:$0x1]
  %vm75 = vcmask 261120
  %v76 = vsel %vm75, %v65, 0.0
  %77 = vadd.xlane.f32.xlu0 %v76
  %v78 = vpop.xlane.xlu0 %77
  %v79 = vsel %vm75, %v66, 0.0
  %80 = vadd.xlane.f32.xlu0 %v79
  %v81 = vpop.xlane.xlu0 %80
  %v82 = vrcp.pop 32.0
  %v83 = vmul.f32 %v78, %v82
  %v84 = vmul.f32 %v81, %v82
  %v85 = vsub.f32 %v65, %v83
  %v86 = vsub.f32 %v66, %v84
  %v87 = vmul.f32 %v85, %v85
  %v88 = vmul.f32 %v86, %v86
  %v89 = vsel %vm75, %v87, 0.0
  %90 = vadd.xlane.f32.xlu0 %v89
  %v91 = vpop.xlane.xlu0 %90
  %v92 = vsel %vm75, %v88, 0.0
  %93 = vadd.xlane.f32.xlu0 %v92
  %v94 = vpop.xlane.xlu0 %93
  %v95 = vmul.f32 %v91, %v82
  %v96 = vmul.f32 %v94, %v82
  %v97 = vadd.f32 %v95, 1e-05
  %v98 = vadd.f32 %v96, 1e-05
  %v99 = vrsqrt.pop %v97
  %v100 = vrsqrt.pop %v98
  %v101 = vmul.f32 %v85, %v99
  %v102 = vmul.f32 %v86, %v100
  %v104 = vlaneseq
  %v105 = vshrl.u32 %v104, 7
  %v106 = vsub.s32 0, %v105
  %v107 = vrot.slane %v73, %v106
  %v109 = vmul.f32 %v101, %v107
  %v110 = vmul.f32 %v102, %v107
  %v112 = vlaneseq
  %v113 = vshrl.u32 %v112, 7
  %v114 = vsub.s32 0, %v113
  %v115 = vrot.slane %v74, %v114
  %v117 = vadd.f32 %v109, %v115
  %v118 = vadd.f32 %v110, %v115
  %v119 = vld [vmem:[%s3] sm:$0xff]
  %v120 = vld [vmem:[%s3 + $0x8] sm:$0xff]
  %v121 = vld [vmem:[%s3 + $0x10] sm:$0xff]
  %v122 = vld [vmem:[%s3 + $0x18] sm:$0xff]
  %v123 = vld [vmem:[%s6] sm:$0x1]
  %v125 = vlaneseq
  %v126 = vshrl.u32 %v125, 7
  %v127 = vsub.s32 0, %v126
  %v128 = vrot.slane %v123, %v127
  %v131 = vsel %vm75, %v117, 0
  %v134 = vsel %vm75, %v118, 0
  %136 = vmatprep.subr.mxu0 0.0
  %137 = vmatpush1.msra.mxu0 %v119
  %138 = vmatprep.subr.mxu0 0.0
  %139 = vmatpush1.msra.mxu0 %v120
  %140 = vmatprep.subr.mxu0 0.0
  %141 = vmatpush1.msra.mxu0 %v121
  %142 = vmatprep.subr.mxu0 0.0
  %143 = vmatpush1.msra.mxu0 %v122
  %144 = vmatprep.subr.mxu0 0.0
  %145 = vmatpush1.msra.mxu0 0.0
  %146 = vmatprep.subr.mxu0 0.0
  %147 = vmatpush1.msra.mxu0 0.0
  %148 = vmatprep.subr.mxu0 0.0
  %149 = vmatpush1.msra.mxu0 0.0
  %150 = vmatprep.subr.mxu0 0.0
  %151 = vmatpush1.msra.mxu0 0.0
  %152 = vmatprep.subr.mxu0 0.0
  %153 = vmatpush1.msra.mxu0 0.0
  %154 = vmatprep.subr.mxu0 0.0
  %155 = vmatpush1.msra.mxu0 0.0
  %156 = vmatprep.subr.mxu0 0.0
  %157 = vmatpush1.msra.mxu0 0.0
  %158 = vmatprep.subr.mxu0 0.0
  %159 = vmatpush1.msra.mxu0 0.0
  %160 = vmatprep.subr.mxu0 0.0
  %161 = vmatpush1.msra.mxu0 0.0
  %162 = vmatprep.subr.mxu0 0.0
  %163 = vmatpush1.msra.mxu0 0.0
  %164 = vmatprep.subr.mxu0 0.0
  %165 = vmatpush1.msra.mxu0 0.0
  %166 = vmatprep.subr.mxu0 0.0
  %167 = vmatpush1.msra.mxu0 0.0
  %168 = vmatprep.subr.mxu0 0.0
  %169 = vmatpush1.msra.mxu0 0.0
  %170 = vmatprep.subr.mxu0 0.0
  %171 = vmatpush1.msra.mxu0 0.0
  %172 = vmatprep.subr.mxu0 0.0
  %173 = vmatpush1.msra.mxu0 0.0
  %174 = vmatprep.subr.mxu0 0.0
  %175 = vmatpush1.msra.mxu0 0.0
  %176 = vmatprep.subr.mxu0 0.0
  %177 = vmatpush1.msra.mxu0 0.0
  %178 = vmatprep.subr.mxu0 0.0
  %179 = vmatpush1.msra.mxu0 0.0
  %180 = vmatprep.subr.mxu0 0.0
  %181 = vmatpush1.msra.mxu0 0.0
  %182 = vmatprep.subr.mxu0 0.0
  %183 = vmatpush1.msra.mxu0 0.0
  %184 = vmatprep.subr.mxu0 0.0
  %185 = vmatpush1.msra.mxu0 0.0
  %186 = vmatprep.subr.mxu0 0.0
  %187 = vmatpush1.msra.mxu0 0.0
  %188 = vmatprep.subr.mxu0 0.0
  %189 = vmatpush1.msra.mxu0 0.0
  %190 = vmatprep.subr.mxu0 0.0
  %191 = vmatpush1.msra.mxu0 0.0
  %192 = vmatprep.subr.mxu0 0.0
  %193 = vmatpush1.msra.mxu0 0.0
  %194 = vmatprep.subr.mxu0 0.0
  %195 = vmatpush1.msra.mxu0 0.0
  %196 = vmatprep.subr.mxu0 0.0
  %197 = vmatpush1.msra.mxu0 0.0
  %198 = vmatprep.subr.mxu0 0.0
  %199 = vmatpush1.msra.mxu0 0.0
  %200 = vmatprep.mubr.f32.mxu0 0.0
  %201 = vmatmul.mubr.f32.gmra.mrb[0].mxu0 %v131
  %v202 = vpop.f32.mrb[0].mxu0
  %v203 = vadd.f32 %v128, %v202
  %v204 = vpop.f32.mrb[0].mxu0
  %205 = vmatprep.mubr.f32.mxu0 0.0
  %206 = vmatmul.mubr.f32.gmra.mrb[0].mxu0 %v134
  %v207 = vpop.f32.mrb[0].mxu0
  %v208 = vadd.f32 %v128, %v207
  %v209 = vpop.f32.mrb[0].mxu0
  %210 = vdwg.mxu0
  %v211 = vld [vmem:[%s4] sm:$0xff]
  %v212 = vld [vmem:[%s4 + $0x8] sm:$0xff]
  %v213 = vld [vmem:[%s4 + $0x10] sm:$0xff]
  %v214 = vld [vmem:[%s4 + $0x18] sm:$0xff]
  %v215 = vld [vmem:[%s7] sm:$0x1]
  %v217 = vlaneseq
  %v218 = vshrl.u32 %v217, 7
  %v219 = vsub.s32 0, %v218
  %v220 = vrot.slane %v215, %v219
  %222 = vmatprep.subr.mxu0 0.0
  %223 = vmatpush1.msra.mxu0 %v211
  %224 = vmatprep.subr.mxu0 0.0
  %225 = vmatpush1.msra.mxu0 %v212
  %226 = vmatprep.subr.mxu0 0.0
  %227 = vmatpush1.msra.mxu0 %v213
  %228 = vmatprep.subr.mxu0 0.0
  %229 = vmatpush1.msra.mxu0 %v214
  %230 = vmatprep.subr.mxu0 0.0
  %231 = vmatpush1.msra.mxu0 0.0
  %232 = vmatprep.subr.mxu0 0.0
  %233 = vmatpush1.msra.mxu0 0.0
  %234 = vmatprep.subr.mxu0 0.0
  %235 = vmatpush1.msra.mxu0 0.0
  %236 = vmatprep.subr.mxu0 0.0
  %237 = vmatpush1.msra.mxu0 0.0
  %238 = vmatprep.subr.mxu0 0.0
  %239 = vmatpush1.msra.mxu0 0.0
  %240 = vmatprep.subr.mxu0 0.0
  %241 = vmatpush1.msra.mxu0 0.0
  %242 = vmatprep.subr.mxu0 0.0
  %243 = vmatpush1.msra.mxu0 0.0
  %244 = vmatprep.subr.mxu0 0.0
  %245 = vmatpush1.msra.mxu0 0.0
  %246 = vmatprep.subr.mxu0 0.0
  %247 = vmatpush1.msra.mxu0 0.0
  %248 = vmatprep.subr.mxu0 0.0
  %249 = vmatpush1.msra.mxu0 0.0
  %250 = vmatprep.subr.mxu0 0.0
  %251 = vmatpush1.msra.mxu0 0.0
  %252 = vmatprep.subr.mxu0 0.0
  %253 = vmatpush1.msra.mxu0 0.0
  %254 = vmatprep.subr.mxu0 0.0
  %255 = vmatpush1.msra.mxu0 0.0
  %256 = vmatprep.subr.mxu0 0.0
  %257 = vmatpush1.msra.mxu0 0.0
  %258 = vmatprep.subr.mxu0 0.0
  %259 = vmatpush1.msra.mxu0 0.0
  %260 = vmatprep.subr.mxu0 0.0
  %261 = vmatpush1.msra.mxu0 0.0
  %262 = vmatprep.subr.mxu0 0.0
  %263 = vmatpush1.msra.mxu0 0.0
  %264 = vmatprep.subr.mxu0 0.0
  %265 = vmatpush1.msra.mxu0 0.0
  %266 = vmatprep.subr.mxu0 0.0
  %267 = vmatpush1.msra.mxu0 0.0
  %268 = vmatprep.subr.mxu0 0.0
  %269 = vmatpush1.msra.mxu0 0.0
  %270 = vmatprep.subr.mxu0 0.0
  %271 = vmatpush1.msra.mxu0 0.0
  %272 = vmatprep.subr.mxu0 0.0
  %273 = vmatpush1.msra.mxu0 0.0
  %274 = vmatprep.subr.mxu0 0.0
  %275 = vmatpush1.msra.mxu0 0.0
  %276 = vmatprep.subr.mxu0 0.0
  %277 = vmatpush1.msra.mxu0 0.0
  %278 = vmatprep.subr.mxu0 0.0
  %279 = vmatpush1.msra.mxu0 0.0
  %280 = vmatprep.subr.mxu0 0.0
  %281 = vmatpush1.msra.mxu0 0.0
  %282 = vmatprep.subr.mxu0 0.0
  %283 = vmatpush1.msra.mxu0 0.0
  %284 = vmatprep.subr.mxu0 0.0
  %285 = vmatpush1.msra.mxu0 0.0
  %286 = vmatprep.mubr.f32.mxu0 0.0
  %287 = vmatmul.mubr.f32.gmra.mrb[0].mxu0 %v131
  %v288 = vpop.f32.mrb[0].mxu0
  %v289 = vadd.f32 %v220, %v288
  %v290 = vpop.f32.mrb[0].mxu0
  %291 = vmatprep.mubr.f32.mxu0 0.0
  %292 = vmatmul.mubr.f32.gmra.mrb[0].mxu0 %v134
  %v293 = vpop.f32.mrb[0].mxu0
  %v294 = vadd.f32 %v220, %v293
  %v295 = vpop.f32.mrb[0].mxu0
  %296 = vdwg.mxu0
  %v297 = vld [vmem:[%s5] sm:$0xff]
  %v298 = vld [vmem:[%s5 + $0x8] sm:$0xff]
  %v299 = vld [vmem:[%s5 + $0x10] sm:$0xff]
  %v300 = vld [vmem:[%s5 + $0x18] sm:$0xff]
  %v301 = vld [vmem:[%s8] sm:$0x1]
  %v303 = vlaneseq
  %v304 = vshrl.u32 %v303, 7
  %v305 = vsub.s32 0, %v304
  %v306 = vrot.slane %v301, %v305
  %308 = vmatprep.subr.mxu0 0.0
  %309 = vmatpush1.msra.mxu0 %v297
  %310 = vmatprep.subr.mxu0 0.0
  %311 = vmatpush1.msra.mxu0 %v298
  %312 = vmatprep.subr.mxu0 0.0
  %313 = vmatpush1.msra.mxu0 %v299
  %314 = vmatprep.subr.mxu0 0.0
  %315 = vmatpush1.msra.mxu0 %v300
  %316 = vmatprep.subr.mxu0 0.0
  %317 = vmatpush1.msra.mxu0 0.0
  %318 = vmatprep.subr.mxu0 0.0
  %319 = vmatpush1.msra.mxu0 0.0
  %320 = vmatprep.subr.mxu0 0.0
  %321 = vmatpush1.msra.mxu0 0.0
  %322 = vmatprep.subr.mxu0 0.0
  %323 = vmatpush1.msra.mxu0 0.0
  %324 = vmatprep.subr.mxu0 0.0
  %325 = vmatpush1.msra.mxu0 0.0
  %326 = vmatprep.subr.mxu0 0.0
  %327 = vmatpush1.msra.mxu0 0.0
  %328 = vmatprep.subr.mxu0 0.0
  %329 = vmatpush1.msra.mxu0 0.0
  %330 = vmatprep.subr.mxu0 0.0
  %331 = vmatpush1.msra.mxu0 0.0
  %332 = vmatprep.subr.mxu0 0.0
  %333 = vmatpush1.msra.mxu0 0.0
  %334 = vmatprep.subr.mxu0 0.0
  %335 = vmatpush1.msra.mxu0 0.0
  %336 = vmatprep.subr.mxu0 0.0
  %337 = vmatpush1.msra.mxu0 0.0
  %338 = vmatprep.subr.mxu0 0.0
  %339 = vmatpush1.msra.mxu0 0.0
  %340 = vmatprep.subr.mxu0 0.0
  %341 = vmatpush1.msra.mxu0 0.0
  %342 = vmatprep.subr.mxu0 0.0
  %343 = vmatpush1.msra.mxu0 0.0
  %344 = vmatprep.subr.mxu0 0.0
  %345 = vmatpush1.msra.mxu0 0.0
  %346 = vmatprep.subr.mxu0 0.0
  %347 = vmatpush1.msra.mxu0 0.0
  %348 = vmatprep.subr.mxu0 0.0
  %349 = vmatpush1.msra.mxu0 0.0
  %350 = vmatprep.subr.mxu0 0.0
  %351 = vmatpush1.msra.mxu0 0.0
  %352 = vmatprep.subr.mxu0 0.0
  %353 = vmatpush1.msra.mxu0 0.0
  %354 = vmatprep.subr.mxu0 0.0
  %355 = vmatpush1.msra.mxu0 0.0
  %356 = vmatprep.subr.mxu0 0.0
  %357 = vmatpush1.msra.mxu0 0.0
  %358 = vmatprep.subr.mxu0 0.0
  %359 = vmatpush1.msra.mxu0 0.0
  %360 = vmatprep.subr.mxu0 0.0
  %361 = vmatpush1.msra.mxu0 0.0
  %362 = vmatprep.subr.mxu0 0.0
  %363 = vmatpush1.msra.mxu0 0.0
  %364 = vmatprep.subr.mxu0 0.0
  %365 = vmatpush1.msra.mxu0 0.0
  %366 = vmatprep.subr.mxu0 0.0
  %367 = vmatpush1.msra.mxu0 0.0
  %368 = vmatprep.subr.mxu0 0.0
  %369 = vmatpush1.msra.mxu0 0.0
  %370 = vmatprep.subr.mxu0 0.0
  %371 = vmatpush1.msra.mxu0 0.0
  %372 = vmatprep.mubr.f32.mxu0 0.0
  %373 = vmatmul.mubr.f32.gmra.mrb[0].mxu0 %v131
  %v374 = vpop.f32.mrb[0].mxu0
  %v375 = vadd.f32 %v306, %v374
  %v376 = vpop.f32.mrb[0].mxu0
  %377 = vmatprep.mubr.f32.mxu0 0.0
  %378 = vmatmul.mubr.f32.gmra.mrb[0].mxu0 %v134
  %v379 = vpop.f32.mrb[0].mxu0
  %v380 = vadd.f32 %v306, %v379
  %v381 = vpop.f32.mrb[0].mxu0
  %382 = vdwg.mxu0
  %vm383 = vcmask 64512
  %v385 = vsel %vm383, %v203, 0
  %v388 = vsel %vm383, %v289, 0
  %390 = vmatprep.subr.mxu0 0.0
  %391 = vmatpush1.xpose.msra.mxu0 %v388
  %392 = vmatprep.subr.mxu0 0.0
  %393 = vmatpush1.xpose.msra.mxu0 0.0
  %394 = vmatprep.subr.mxu0 0.0
  %395 = vmatpush1.xpose.msra.mxu0 0.0
  %396 = vmatprep.subr.mxu0 0.0
  %397 = vmatpush1.xpose.msra.mxu0 0.0
  %398 = vmatprep.subr.mxu0 0.0
  %399 = vmatpush1.xpose.msra.mxu0 0.0
  %400 = vmatprep.subr.mxu0 0.0
  %401 = vmatpush1.xpose.msra.mxu0 0.0
  %402 = vmatprep.subr.mxu0 0.0
  %403 = vmatpush1.xpose.msra.mxu0 0.0
  %404 = vmatprep.subr.mxu0 0.0
  %405 = vmatpush1.xpose.msra.mxu0 0.0
  %406 = vmatprep.subr.mxu0 0.0
  %407 = vmatpush1.xpose.msra.mxu0 0.0
  %408 = vmatprep.subr.mxu0 0.0
  %409 = vmatpush1.xpose.msra.mxu0 0.0
  %410 = vmatprep.subr.mxu0 0.0
  %411 = vmatpush1.xpose.msra.mxu0 0.0
  %412 = vmatprep.subr.mxu0 0.0
  %413 = vmatpush1.xpose.msra.mxu0 0.0
  %414 = vmatprep.subr.mxu0 0.0
  %415 = vmatpush1.xpose.msra.mxu0 0.0
  %416 = vmatprep.subr.mxu0 0.0
  %417 = vmatpush1.xpose.msra.mxu0 0.0
  %418 = vmatprep.subr.mxu0 0.0
  %419 = vmatpush1.xpose.msra.mxu0 0.0
  %420 = vmatprep.subr.mxu0 0.0
  %421 = vmatpush1.xpose.msra.mxu0 0.0
  %422 = vmatprep.subr.mxu0 0.0
  %423 = vmatpush1.xpose.msra.mxu0 0.0
  %424 = vmatprep.subr.mxu0 0.0
  %425 = vmatpush1.xpose.msra.mxu0 0.0
  %426 = vmatprep.subr.mxu0 0.0
  %427 = vmatpush1.xpose.msra.mxu0 0.0
  %428 = vmatprep.subr.mxu0 0.0
  %429 = vmatpush1.xpose.msra.mxu0 0.0
  %430 = vmatprep.subr.mxu0 0.0
  %431 = vmatpush1.xpose.msra.mxu0 0.0
  %432 = vmatprep.subr.mxu0 0.0
  %433 = vmatpush1.xpose.msra.mxu0 0.0
  %434 = vmatprep.subr.mxu0 0.0
  %435 = vmatpush1.xpose.msra.mxu0 0.0
  %436 = vmatprep.subr.mxu0 0.0
  %437 = vmatpush1.xpose.msra.mxu0 0.0
  %438 = vmatprep.subr.mxu0 0.0
  %439 = vmatpush1.xpose.msra.mxu0 0.0
  %440 = vmatprep.subr.mxu0 0.0
  %441 = vmatpush1.xpose.msra.mxu0 0.0
  %442 = vmatprep.subr.mxu0 0.0
  %443 = vmatpush1.xpose.msra.mxu0 0.0
  %444 = vmatprep.subr.mxu0 0.0
  %445 = vmatpush1.xpose.msra.mxu0 0.0
  %446 = vmatprep.subr.mxu0 0.0
  %447 = vmatpush1.xpose.msra.mxu0 0.0
  %448 = vmatprep.subr.mxu0 0.0
  %449 = vmatpush1.xpose.msra.mxu0 0.0
  %450 = vmatprep.subr.mxu0 0.0
  %451 = vmatpush1.xpose.msra.mxu0 0.0
  %452 = vmatprep.subr.mxu0 0.0
  %453 = vmatpush1.xpose.msra.mxu0 0.0
  %454 = vmatprep.mubr.f32.mxu0 0.0
  %455 = vmatmul.mubr.f32.gmra.mrb[0].mxu0 %v385
  %v456 = vpop.f32.mrb[0].mxu0
  %v457 = vadd.f32 %v72, %v456
  %v458 = vpop.f32.mrb[0].mxu0
  %459 = vdwg.mxu0
  %v461 = vsel %vm383, %v208, 0
  %v464 = vsel %vm383, %v294, 0
  %466 = vmatprep.subr.mxu0 0.0
  %467 = vmatpush1.xpose.msra.mxu0 %v464
  %468 = vmatprep.subr.mxu0 0.0
  %469 = vmatpush1.xpose.msra.mxu0 0.0
  %470 = vmatprep.subr.mxu0 0.0
  %471 = vmatpush1.xpose.msra.mxu0 0.0
  %472 = vmatprep.subr.mxu0 0.0
  %473 = vmatpush1.xpose.msra.mxu0 0.0
  %474 = vmatprep.subr.mxu0 0.0
  %475 = vmatpush1.xpose.msra.mxu0 0.0
  %476 = vmatprep.subr.mxu0 0.0
  %477 = vmatpush1.xpose.msra.mxu0 0.0
  %478 = vmatprep.subr.mxu0 0.0
  %479 = vmatpush1.xpose.msra.mxu0 0.0
  %480 = vmatprep.subr.mxu0 0.0
  %481 = vmatpush1.xpose.msra.mxu0 0.0
  %482 = vmatprep.subr.mxu0 0.0
  %483 = vmatpush1.xpose.msra.mxu0 0.0
  %484 = vmatprep.subr.mxu0 0.0
  %485 = vmatpush1.xpose.msra.mxu0 0.0
  %486 = vmatprep.subr.mxu0 0.0
  %487 = vmatpush1.xpose.msra.mxu0 0.0
  %488 = vmatprep.subr.mxu0 0.0
  %489 = vmatpush1.xpose.msra.mxu0 0.0
  %490 = vmatprep.subr.mxu0 0.0
  %491 = vmatpush1.xpose.msra.mxu0 0.0
  %492 = vmatprep.subr.mxu0 0.0
  %493 = vmatpush1.xpose.msra.mxu0 0.0
  %494 = vmatprep.subr.mxu0 0.0
  %495 = vmatpush1.xpose.msra.mxu0 0.0
  %496 = vmatprep.subr.mxu0 0.0
  %497 = vmatpush1.xpose.msra.mxu0 0.0
  %498 = vmatprep.subr.mxu0 0.0
  %499 = vmatpush1.xpose.msra.mxu0 0.0
  %500 = vmatprep.subr.mxu0 0.0
  %501 = vmatpush1.xpose.msra.mxu0 0.0
  %502 = vmatprep.subr.mxu0 0.0
  %503 = vmatpush1.xpose.msra.mxu0 0.0
  %504 = vmatprep.subr.mxu0 0.0
  %505 = vmatpush1.xpose.msra.mxu0 0.0
  %506 = vmatprep.subr.mxu0 0.0
  %507 = vmatpush1.xpose.msra.mxu0 0.0
  %508 = vmatprep.subr.mxu0 0.0
  %509 = vmatpush1.xpose.msra.mxu0 0.0
  %510 = vmatprep.subr.mxu0 0.0
  %511 = vmatpush1.xpose.msra.mxu0 0.0
  %512 = vmatprep.subr.mxu0 0.0
  %513 = vmatpush1.xpose.msra.mxu0 0.0
  %514 = vmatprep.subr.mxu0 0.0
  %515 = vmatpush1.xpose.msra.mxu0 0.0
  %516 = vmatprep.subr.mxu0 0.0
  %517 = vmatpush1.xpose.msra.mxu0 0.0
  %518 = vmatprep.subr.mxu0 0.0
  %519 = vmatpush1.xpose.msra.mxu0 0.0
  %520 = vmatprep.subr.mxu0 0.0
  %521 = vmatpush1.xpose.msra.mxu0 0.0
  %522 = vmatprep.subr.mxu0 0.0
  %523 = vmatpush1.xpose.msra.mxu0 0.0
  %524 = vmatprep.subr.mxu0 0.0
  %525 = vmatpush1.xpose.msra.mxu0 0.0
  %526 = vmatprep.subr.mxu0 0.0
  %527 = vmatpush1.xpose.msra.mxu0 0.0
  %528 = vmatprep.subr.mxu0 0.0
  %529 = vmatpush1.xpose.msra.mxu0 0.0
  %530 = vmatprep.mubr.f32.mxu0 0.0
  %531 = vmatmul.mubr.f32.gmra.mrb[0].mxu0 %v461
  %v532 = vpop.f32.mrb[0].mxu0
  %v533 = vadd.f32 %v72, %v532
  %v534 = vpop.f32.mrb[0].mxu0
  %535 = vdwg.mxu0
  %v536 = vsel %vm383, %v457, -inf
  %537 = vmax.xlane.f32.xlu0 %v536
  %v538 = vpop.xlane.xlu0 %537
  %v539 = vsel %vm383, %v533, -inf
  %540 = vmax.xlane.f32.xlu0 %v539
  %v541 = vpop.xlane.xlu0 %540
  %v542 = vsub.f32 %v457, %v538
  %v543 = vsub.f32 %v533, %v541
  %v544 = vmul.f32 %v542, 1.442695
  %v545 = vpow.pop %v544
  %v546 = vmul.f32 %v543, 1.442695
  %v547 = vpow.pop %v546
  %v548 = vsel %vm383, %v545, 0.0
  %549 = vadd.xlane.f32.xlu0 %v548
  %v550 = vpop.xlane.xlu0 %549
  %v551 = vsel %vm383, %v547, 0.0
  %552 = vadd.xlane.f32.xlu0 %v551
  %v553 = vpop.xlane.xlu0 %552
  %v554 = vrcp.pop %v550
  %v555 = vmul.f32 %v545, %v554
  %v556 = vrcp.pop %v553
  %v557 = vmul.f32 %v547, %v556
  %v559 = vsel %vm383, %v555, 0
  %561 = vmatprep.subr.mxu0 0.0
  %562 = vmatpush1.msra.mxu0 %v375
  %563 = vmatprep.subr.mxu0 0.0
  %564 = vmatpush1.msra.mxu0 0.0
  %565 = vmatprep.subr.mxu0 0.0
  %566 = vmatpush1.msra.mxu0 0.0
  %567 = vmatprep.subr.mxu0 0.0
  %568 = vmatpush1.msra.mxu0 0.0
  %569 = vmatprep.subr.mxu0 0.0
  %570 = vmatpush1.msra.mxu0 0.0
  %571 = vmatprep.subr.mxu0 0.0
  %572 = vmatpush1.msra.mxu0 0.0
  %573 = vmatprep.subr.mxu0 0.0
  %574 = vmatpush1.msra.mxu0 0.0
  %575 = vmatprep.subr.mxu0 0.0
  %576 = vmatpush1.msra.mxu0 0.0
  %577 = vmatprep.subr.mxu0 0.0
  %578 = vmatpush1.msra.mxu0 0.0
  %579 = vmatprep.subr.mxu0 0.0
  %580 = vmatpush1.msra.mxu0 0.0
  %581 = vmatprep.subr.mxu0 0.0
  %582 = vmatpush1.msra.mxu0 0.0
  %583 = vmatprep.subr.mxu0 0.0
  %584 = vmatpush1.msra.mxu0 0.0
  %585 = vmatprep.subr.mxu0 0.0
  %586 = vmatpush1.msra.mxu0 0.0
  %587 = vmatprep.subr.mxu0 0.0
  %588 = vmatpush1.msra.mxu0 0.0
  %589 = vmatprep.subr.mxu0 0.0
  %590 = vmatpush1.msra.mxu0 0.0
  %591 = vmatprep.subr.mxu0 0.0
  %592 = vmatpush1.msra.mxu0 0.0
  %593 = vmatprep.subr.mxu0 0.0
  %594 = vmatpush1.msra.mxu0 0.0
  %595 = vmatprep.subr.mxu0 0.0
  %596 = vmatpush1.msra.mxu0 0.0
  %597 = vmatprep.subr.mxu0 0.0
  %598 = vmatpush1.msra.mxu0 0.0
  %599 = vmatprep.subr.mxu0 0.0
  %600 = vmatpush1.msra.mxu0 0.0
  %601 = vmatprep.subr.mxu0 0.0
  %602 = vmatpush1.msra.mxu0 0.0
  %603 = vmatprep.subr.mxu0 0.0
  %604 = vmatpush1.msra.mxu0 0.0
  %605 = vmatprep.subr.mxu0 0.0
  %606 = vmatpush1.msra.mxu0 0.0
  %607 = vmatprep.subr.mxu0 0.0
  %608 = vmatpush1.msra.mxu0 0.0
  %609 = vmatprep.subr.mxu0 0.0
  %610 = vmatpush1.msra.mxu0 0.0
  %611 = vmatprep.subr.mxu0 0.0
  %612 = vmatpush1.msra.mxu0 0.0
  %613 = vmatprep.subr.mxu0 0.0
  %614 = vmatpush1.msra.mxu0 0.0
  %615 = vmatprep.subr.mxu0 0.0
  %616 = vmatpush1.msra.mxu0 0.0
  %617 = vmatprep.subr.mxu0 0.0
  %618 = vmatpush1.msra.mxu0 0.0
  %619 = vmatprep.subr.mxu0 0.0
  %620 = vmatpush1.msra.mxu0 0.0
  %621 = vmatprep.subr.mxu0 0.0
  %622 = vmatpush1.msra.mxu0 0.0
  %623 = vmatprep.subr.mxu0 0.0
  %624 = vmatpush1.msra.mxu0 0.0
  %625 = vmatprep.mubr.f32.mxu0 0.0
  %626 = vmatmul.mubr.f32.gmra.mrb[0].mxu0 %v559
  %v627 = vpop.f32.mrb[0].mxu0
  %v628 = vadd.f32 0.0, %v627
  %v629 = vpop.f32.mrb[0].mxu0
  %630 = vdwg.mxu0
  %v632 = vsel %vm383, %v557, 0
  %634 = vmatprep.subr.mxu0 0.0
  %635 = vmatpush1.msra.mxu0 %v380
  %636 = vmatprep.subr.mxu0 0.0
  %637 = vmatpush1.msra.mxu0 0.0
  %638 = vmatprep.subr.mxu0 0.0
  %639 = vmatpush1.msra.mxu0 0.0
  %640 = vmatprep.subr.mxu0 0.0
  %641 = vmatpush1.msra.mxu0 0.0
  %642 = vmatprep.subr.mxu0 0.0
  %643 = vmatpush1.msra.mxu0 0.0
  %644 = vmatprep.subr.mxu0 0.0
  %645 = vmatpush1.msra.mxu0 0.0
  %646 = vmatprep.subr.mxu0 0.0
  %647 = vmatpush1.msra.mxu0 0.0
  %648 = vmatprep.subr.mxu0 0.0
  %649 = vmatpush1.msra.mxu0 0.0
  %650 = vmatprep.subr.mxu0 0.0
  %651 = vmatpush1.msra.mxu0 0.0
  %652 = vmatprep.subr.mxu0 0.0
  %653 = vmatpush1.msra.mxu0 0.0
  %654 = vmatprep.subr.mxu0 0.0
  %655 = vmatpush1.msra.mxu0 0.0
  %656 = vmatprep.subr.mxu0 0.0
  %657 = vmatpush1.msra.mxu0 0.0
  %658 = vmatprep.subr.mxu0 0.0
  %659 = vmatpush1.msra.mxu0 0.0
  %660 = vmatprep.subr.mxu0 0.0
  %661 = vmatpush1.msra.mxu0 0.0
  %662 = vmatprep.subr.mxu0 0.0
  %663 = vmatpush1.msra.mxu0 0.0
  %664 = vmatprep.subr.mxu0 0.0
  %665 = vmatpush1.msra.mxu0 0.0
  %666 = vmatprep.subr.mxu0 0.0
  %667 = vmatpush1.msra.mxu0 0.0
  %668 = vmatprep.subr.mxu0 0.0
  %669 = vmatpush1.msra.mxu0 0.0
  %670 = vmatprep.subr.mxu0 0.0
  %671 = vmatpush1.msra.mxu0 0.0
  %672 = vmatprep.subr.mxu0 0.0
  %673 = vmatpush1.msra.mxu0 0.0
  %674 = vmatprep.subr.mxu0 0.0
  %675 = vmatpush1.msra.mxu0 0.0
  %676 = vmatprep.subr.mxu0 0.0
  %677 = vmatpush1.msra.mxu0 0.0
  %678 = vmatprep.subr.mxu0 0.0
  %679 = vmatpush1.msra.mxu0 0.0
  %680 = vmatprep.subr.mxu0 0.0
  %681 = vmatpush1.msra.mxu0 0.0
  %682 = vmatprep.subr.mxu0 0.0
  %683 = vmatpush1.msra.mxu0 0.0
  %684 = vmatprep.subr.mxu0 0.0
  %685 = vmatpush1.msra.mxu0 0.0
  %686 = vmatprep.subr.mxu0 0.0
  %687 = vmatpush1.msra.mxu0 0.0
  %688 = vmatprep.subr.mxu0 0.0
  %689 = vmatpush1.msra.mxu0 0.0
  %690 = vmatprep.subr.mxu0 0.0
  %691 = vmatpush1.msra.mxu0 0.0
  %692 = vmatprep.subr.mxu0 0.0
  %693 = vmatpush1.msra.mxu0 0.0
  %694 = vmatprep.subr.mxu0 0.0
  %695 = vmatpush1.msra.mxu0 0.0
  %696 = vmatprep.subr.mxu0 0.0
  %697 = vmatpush1.msra.mxu0 0.0
  %698 = vmatprep.mubr.f32.mxu0 0.0
  %699 = vmatmul.mubr.f32.gmra.mrb[0].mxu0 %v632
  %v700 = vpop.f32.mrb[0].mxu0
  %v701 = vadd.f32 0.0, %v700
  %v702 = vpop.f32.mrb[0].mxu0
  %703 = vdwg.mxu0
  %v704 = vld [vmem:[%s9] sm:$0xff]
  %s705 = scalar_lea.vmem %s3, 32
  %v706 = vld [vmem:[%s705] sm:$0xff]
  %v707 = vld [vmem:[%s705 + $0x8] sm:$0xff]
  %v708 = vld [vmem:[%s705 + $0x10] sm:$0xff]
  %v709 = vld [vmem:[%s705 + $0x18] sm:$0xff]
  %s710 = scalar_lea.vmem %s6, 1
  %v711 = vld [vmem:[%s710] sm:$0x1]
  %v713 = vlaneseq
  %v714 = vshrl.u32 %v713, 7
  %v715 = vsub.s32 0, %v714
  %v716 = vrot.slane %v711, %v715
  %718 = vmatprep.subr.mxu0 0.0
  %719 = vmatpush1.msra.mxu0 %v706
  %720 = vmatprep.subr.mxu0 0.0
  %721 = vmatpush1.msra.mxu0 %v707
  %722 = vmatprep.subr.mxu0 0.0
  %723 = vmatpush1.msra.mxu0 %v708
  %724 = vmatprep.subr.mxu0 0.0
  %725 = vmatpush1.msra.mxu0 %v709
  %726 = vmatprep.subr.mxu0 0.0
  %727 = vmatpush1.msra.mxu0 0.0
  %728 = vmatprep.subr.mxu0 0.0
  %729 = vmatpush1.msra.mxu0 0.0
  %730 = vmatprep.subr.mxu0 0.0
  %731 = vmatpush1.msra.mxu0 0.0
  %732 = vmatprep.subr.mxu0 0.0
  %733 = vmatpush1.msra.mxu0 0.0
  %734 = vmatprep.subr.mxu0 0.0
  %735 = vmatpush1.msra.mxu0 0.0
  %736 = vmatprep.subr.mxu0 0.0
  %737 = vmatpush1.msra.mxu0 0.0
  %738 = vmatprep.subr.mxu0 0.0
  %739 = vmatpush1.msra.mxu0 0.0
  %740 = vmatprep.subr.mxu0 0.0
  %741 = vmatpush1.msra.mxu0 0.0
  %742 = vmatprep.subr.mxu0 0.0
  %743 = vmatpush1.msra.mxu0 0.0
  %744 = vmatprep.subr.mxu0 0.0
  %745 = vmatpush1.msra.mxu0 0.0
  %746 = vmatprep.subr.mxu0 0.0
  %747 = vmatpush1.msra.mxu0 0.0
  %748 = vmatprep.subr.mxu0 0.0
  %749 = vmatpush1.msra.mxu0 0.0
  %750 = vmatprep.subr.mxu0 0.0
  %751 = vmatpush1.msra.mxu0 0.0
  %752 = vmatprep.subr.mxu0 0.0
  %753 = vmatpush1.msra.mxu0 0.0
  %754 = vmatprep.subr.mxu0 0.0
  %755 = vmatpush1.msra.mxu0 0.0
  %756 = vmatprep.subr.mxu0 0.0
  %757 = vmatpush1.msra.mxu0 0.0
  %758 = vmatprep.subr.mxu0 0.0
  %759 = vmatpush1.msra.mxu0 0.0
  %760 = vmatprep.subr.mxu0 0.0
  %761 = vmatpush1.msra.mxu0 0.0
  %762 = vmatprep.subr.mxu0 0.0
  %763 = vmatpush1.msra.mxu0 0.0
  %764 = vmatprep.subr.mxu0 0.0
  %765 = vmatpush1.msra.mxu0 0.0
  %766 = vmatprep.subr.mxu0 0.0
  %767 = vmatpush1.msra.mxu0 0.0
  %768 = vmatprep.subr.mxu0 0.0
  %769 = vmatpush1.msra.mxu0 0.0
  %770 = vmatprep.subr.mxu0 0.0
  %771 = vmatpush1.msra.mxu0 0.0
  %772 = vmatprep.subr.mxu0 0.0
  %773 = vmatpush1.msra.mxu0 0.0
  %774 = vmatprep.subr.mxu0 0.0
  %775 = vmatpush1.msra.mxu0 0.0
  %776 = vmatprep.subr.mxu0 0.0
  %777 = vmatpush1.msra.mxu0 0.0
  %778 = vmatprep.subr.mxu0 0.0
  %779 = vmatpush1.msra.mxu0 0.0
  %780 = vmatprep.subr.mxu0 0.0
  %781 = vmatpush1.msra.mxu0 0.0
  %782 = vmatprep.mubr.f32.mxu0 0.0
  %783 = vmatmul.mubr.f32.gmra.mrb[0].mxu0 %v131
  %v784 = vpop.f32.mrb[0].mxu0
  %v785 = vadd.f32 %v716, %v784
  %v786 = vpop.f32.mrb[0].mxu0
  %787 = vmatprep.mubr.f32.mxu0 0.0
  %788 = vmatmul.mubr.f32.gmra.mrb[0].mxu0 %v134
  %v789 = vpop.f32.mrb[0].mxu0
  %v790 = vadd.f32 %v716, %v789
  %v791 = vpop.f32.mrb[0].mxu0
  %792 = vdwg.mxu0
  %s793 = scalar_lea.vmem %s4, 32
  %v794 = vld [vmem:[%s793] sm:$0xff]
  %v795 = vld [vmem:[%s793 + $0x8] sm:$0xff]
  %v796 = vld [vmem:[%s793 + $0x10] sm:$0xff]
  %v797 = vld [vmem:[%s793 + $0x18] sm:$0xff]
  %s798 = scalar_lea.vmem %s7, 1
  %v799 = vld [vmem:[%s798] sm:$0x1]
  %v801 = vlaneseq
  %v802 = vshrl.u32 %v801, 7
  %v803 = vsub.s32 0, %v802
  %v804 = vrot.slane %v799, %v803
  %806 = vmatprep.subr.mxu0 0.0
  %807 = vmatpush1.msra.mxu0 %v794
  %808 = vmatprep.subr.mxu0 0.0
  %809 = vmatpush1.msra.mxu0 %v795
  %810 = vmatprep.subr.mxu0 0.0
  %811 = vmatpush1.msra.mxu0 %v796
  %812 = vmatprep.subr.mxu0 0.0
  %813 = vmatpush1.msra.mxu0 %v797
  %814 = vmatprep.subr.mxu0 0.0
  %815 = vmatpush1.msra.mxu0 0.0
  %816 = vmatprep.subr.mxu0 0.0
  %817 = vmatpush1.msra.mxu0 0.0
  %818 = vmatprep.subr.mxu0 0.0
  %819 = vmatpush1.msra.mxu0 0.0
  %820 = vmatprep.subr.mxu0 0.0
  %821 = vmatpush1.msra.mxu0 0.0
  %822 = vmatprep.subr.mxu0 0.0
  %823 = vmatpush1.msra.mxu0 0.0
  %824 = vmatprep.subr.mxu0 0.0
  %825 = vmatpush1.msra.mxu0 0.0
  %826 = vmatprep.subr.mxu0 0.0
  %827 = vmatpush1.msra.mxu0 0.0
  %828 = vmatprep.subr.mxu0 0.0
  %829 = vmatpush1.msra.mxu0 0.0
  %830 = vmatprep.subr.mxu0 0.0
  %831 = vmatpush1.msra.mxu0 0.0
  %832 = vmatprep.subr.mxu0 0.0
  %833 = vmatpush1.msra.mxu0 0.0
  %834 = vmatprep.subr.mxu0 0.0
  %835 = vmatpush1.msra.mxu0 0.0
  %836 = vmatprep.subr.mxu0 0.0
  %837 = vmatpush1.msra.mxu0 0.0
  %838 = vmatprep.subr.mxu0 0.0
  %839 = vmatpush1.msra.mxu0 0.0
  %840 = vmatprep.subr.mxu0 0.0
  %841 = vmatpush1.msra.mxu0 0.0
  %842 = vmatprep.subr.mxu0 0.0
  %843 = vmatpush1.msra.mxu0 0.0
  %844 = vmatprep.subr.mxu0 0.0
  %845 = vmatpush1.msra.mxu0 0.0
  %846 = vmatprep.subr.mxu0 0.0
  %847 = vmatpush1.msra.mxu0 0.0
  %848 = vmatprep.subr.mxu0 0.0
  %849 = vmatpush1.msra.mxu0 0.0
  %850 = vmatprep.subr.mxu0 0.0
  %851 = vmatpush1.msra.mxu0 0.0
  %852 = vmatprep.subr.mxu0 0.0
  %853 = vmatpush1.msra.mxu0 0.0
  %854 = vmatprep.subr.mxu0 0.0
  %855 = vmatpush1.msra.mxu0 0.0
  %856 = vmatprep.subr.mxu0 0.0
  %857 = vmatpush1.msra.mxu0 0.0
  %858 = vmatprep.subr.mxu0 0.0
  %859 = vmatpush1.msra.mxu0 0.0
  %860 = vmatprep.subr.mxu0 0.0
  %861 = vmatpush1.msra.mxu0 0.0
  %862 = vmatprep.subr.mxu0 0.0
  %863 = vmatpush1.msra.mxu0 0.0
  %864 = vmatprep.subr.mxu0 0.0
  %865 = vmatpush1.msra.mxu0 0.0
  %866 = vmatprep.subr.mxu0 0.0
  %867 = vmatpush1.msra.mxu0 0.0
  %868 = vmatprep.subr.mxu0 0.0
  %869 = vmatpush1.msra.mxu0 0.0
  %870 = vmatprep.mubr.f32.mxu0 0.0
  %871 = vmatmul.mubr.f32.gmra.mrb[0].mxu0 %v131
  %v872 = vpop.f32.mrb[0].mxu0
  %v873 = vadd.f32 %v804, %v872
  %v874 = vpop.f32.mrb[0].mxu0
  %875 = vmatprep.mubr.f32.mxu0 0.0
  %876 = vmatmul.mubr.f32.gmra.mrb[0].mxu0 %v134
  %v877 = vpop.f32.mrb[0].mxu0
  %v878 = vadd.f32 %v804, %v877
  %v879 = vpop.f32.mrb[0].mxu0
  %880 = vdwg.mxu0
  %s881 = scalar_lea.vmem %s5, 32
  %v882 = vld [vmem:[%s881] sm:$0xff]
  %v883 = vld [vmem:[%s881 + $0x8] sm:$0xff]
  %v884 = vld [vmem:[%s881 + $0x10] sm:$0xff]
  %v885 = vld [vmem:[%s881 + $0x18] sm:$0xff]
  %s886 = scalar_lea.vmem %s8, 1
  %v887 = vld [vmem:[%s886] sm:$0x1]
  %v889 = vlaneseq
  %v890 = vshrl.u32 %v889, 7
  %v891 = vsub.s32 0, %v890
  %v892 = vrot.slane %v887, %v891
  %894 = vmatprep.subr.mxu0 0.0
  %895 = vmatpush1.msra.mxu0 %v882
  %896 = vmatprep.subr.mxu0 0.0
  %897 = vmatpush1.msra.mxu0 %v883
  %898 = vmatprep.subr.mxu0 0.0
  %899 = vmatpush1.msra.mxu0 %v884
  %900 = vmatprep.subr.mxu0 0.0
  %901 = vmatpush1.msra.mxu0 %v885
  %902 = vmatprep.subr.mxu0 0.0
  %903 = vmatpush1.msra.mxu0 0.0
  %904 = vmatprep.subr.mxu0 0.0
  %905 = vmatpush1.msra.mxu0 0.0
  %906 = vmatprep.subr.mxu0 0.0
  %907 = vmatpush1.msra.mxu0 0.0
  %908 = vmatprep.subr.mxu0 0.0
  %909 = vmatpush1.msra.mxu0 0.0
  %910 = vmatprep.subr.mxu0 0.0
  %911 = vmatpush1.msra.mxu0 0.0
  %912 = vmatprep.subr.mxu0 0.0
  %913 = vmatpush1.msra.mxu0 0.0
  %914 = vmatprep.subr.mxu0 0.0
  %915 = vmatpush1.msra.mxu0 0.0
  %916 = vmatprep.subr.mxu0 0.0
  %917 = vmatpush1.msra.mxu0 0.0
  %918 = vmatprep.subr.mxu0 0.0
  %919 = vmatpush1.msra.mxu0 0.0
  %920 = vmatprep.subr.mxu0 0.0
  %921 = vmatpush1.msra.mxu0 0.0
  %922 = vmatprep.subr.mxu0 0.0
  %923 = vmatpush1.msra.mxu0 0.0
  %924 = vmatprep.subr.mxu0 0.0
  %925 = vmatpush1.msra.mxu0 0.0
  %926 = vmatprep.subr.mxu0 0.0
  %927 = vmatpush1.msra.mxu0 0.0
  %928 = vmatprep.subr.mxu0 0.0
  %929 = vmatpush1.msra.mxu0 0.0
  %930 = vmatprep.subr.mxu0 0.0
  %931 = vmatpush1.msra.mxu0 0.0
  %932 = vmatprep.subr.mxu0 0.0
  %933 = vmatpush1.msra.mxu0 0.0
  %934 = vmatprep.subr.mxu0 0.0
  %935 = vmatpush1.msra.mxu0 0.0
  %936 = vmatprep.subr.mxu0 0.0
  %937 = vmatpush1.msra.mxu0 0.0
  %938 = vmatprep.subr.mxu0 0.0
  %939 = vmatpush1.msra.mxu0 0.0
  %940 = vmatprep.subr.mxu0 0.0
  %941 = vmatpush1.msra.mxu0 0.0
  %942 = vmatprep.subr.mxu0 0.0
  %943 = vmatpush1.msra.mxu0 0.0
  %944 = vmatprep.subr.mxu0 0.0
  %945 = vmatpush1.msra.mxu0 0.0
  %946 = vmatprep.subr.mxu0 0.0
  %947 = vmatpush1.msra.mxu0 0.0
  %948 = vmatprep.subr.mxu0 0.0
  %949 = vmatpush1.msra.mxu0 0.0
  %950 = vmatprep.subr.mxu0 0.0
  %951 = vmatpush1.msra.mxu0 0.0
  %952 = vmatprep.subr.mxu0 0.0
  %953 = vmatpush1.msra.mxu0 0.0
  %954 = vmatprep.subr.mxu0 0.0
  %955 = vmatpush1.msra.mxu0 0.0
  %956 = vmatprep.subr.mxu0 0.0
  %957 = vmatpush1.msra.mxu0 0.0
  %958 = vmatprep.mubr.f32.mxu0 0.0
  %959 = vmatmul.mubr.f32.gmra.mrb[0].mxu0 %v131
  %v960 = vpop.f32.mrb[0].mxu0
  %v961 = vadd.f32 %v892, %v960
  %v962 = vpop.f32.mrb[0].mxu0
  %963 = vmatprep.mubr.f32.mxu0 0.0
  %964 = vmatmul.mubr.f32.gmra.mrb[0].mxu0 %v134
  %v965 = vpop.f32.mrb[0].mxu0
  %v966 = vadd.f32 %v892, %v965
  %v967 = vpop.f32.mrb[0].mxu0
  %968 = vdwg.mxu0
  %v970 = vsel %vm383, %v785, 0
  %v973 = vsel %vm383, %v873, 0
  %975 = vmatprep.subr.mxu0 0.0
  %976 = vmatpush1.xpose.msra.mxu0 %v973
  %977 = vmatprep.subr.mxu0 0.0
  %978 = vmatpush1.xpose.msra.mxu0 0.0
  %979 = vmatprep.subr.mxu0 0.0
  %980 = vmatpush1.xpose.msra.mxu0 0.0
  %981 = vmatprep.subr.mxu0 0.0
  %982 = vmatpush1.xpose.msra.mxu0 0.0
  %983 = vmatprep.subr.mxu0 0.0
  %984 = vmatpush1.xpose.msra.mxu0 0.0
  %985 = vmatprep.subr.mxu0 0.0
  %986 = vmatpush1.xpose.msra.mxu0 0.0
  %987 = vmatprep.subr.mxu0 0.0
  %988 = vmatpush1.xpose.msra.mxu0 0.0
  %989 = vmatprep.subr.mxu0 0.0
  %990 = vmatpush1.xpose.msra.mxu0 0.0
  %991 = vmatprep.subr.mxu0 0.0
  %992 = vmatpush1.xpose.msra.mxu0 0.0
  %993 = vmatprep.subr.mxu0 0.0
  %994 = vmatpush1.xpose.msra.mxu0 0.0
  %995 = vmatprep.subr.mxu0 0.0
  %996 = vmatpush1.xpose.msra.mxu0 0.0
  %997 = vmatprep.subr.mxu0 0.0
  %998 = vmatpush1.xpose.msra.mxu0 0.0
  %999 = vmatprep.subr.mxu0 0.0
  %1000 = vmatpush1.xpose.msra.mxu0 0.0
  %1001 = vmatprep.subr.mxu0 0.0
  %1002 = vmatpush1.xpose.msra.mxu0 0.0
  %1003 = vmatprep.subr.mxu0 0.0
  %1004 = vmatpush1.xpose.msra.mxu0 0.0
  %1005 = vmatprep.subr.mxu0 0.0
  %1006 = vmatpush1.xpose.msra.mxu0 0.0
  %1007 = vmatprep.subr.mxu0 0.0
  %1008 = vmatpush1.xpose.msra.mxu0 0.0
  %1009 = vmatprep.subr.mxu0 0.0
  %1010 = vmatpush1.xpose.msra.mxu0 0.0
  %1011 = vmatprep.subr.mxu0 0.0
  %1012 = vmatpush1.xpose.msra.mxu0 0.0
  %1013 = vmatprep.subr.mxu0 0.0
  %1014 = vmatpush1.xpose.msra.mxu0 0.0
  %1015 = vmatprep.subr.mxu0 0.0
  %1016 = vmatpush1.xpose.msra.mxu0 0.0
  %1017 = vmatprep.subr.mxu0 0.0
  %1018 = vmatpush1.xpose.msra.mxu0 0.0
  %1019 = vmatprep.subr.mxu0 0.0
  %1020 = vmatpush1.xpose.msra.mxu0 0.0
  %1021 = vmatprep.subr.mxu0 0.0
  %1022 = vmatpush1.xpose.msra.mxu0 0.0
  %1023 = vmatprep.subr.mxu0 0.0
  %1024 = vmatpush1.xpose.msra.mxu0 0.0
  %1025 = vmatprep.subr.mxu0 0.0
  %1026 = vmatpush1.xpose.msra.mxu0 0.0
  %1027 = vmatprep.subr.mxu0 0.0
  %1028 = vmatpush1.xpose.msra.mxu0 0.0
  %1029 = vmatprep.subr.mxu0 0.0
  %1030 = vmatpush1.xpose.msra.mxu0 0.0
  %1031 = vmatprep.subr.mxu0 0.0
  %1032 = vmatpush1.xpose.msra.mxu0 0.0
  %1033 = vmatprep.subr.mxu0 0.0
  %1034 = vmatpush1.xpose.msra.mxu0 0.0
  %1035 = vmatprep.subr.mxu0 0.0
  %1036 = vmatpush1.xpose.msra.mxu0 0.0
  %1037 = vmatprep.subr.mxu0 0.0
  %1038 = vmatpush1.xpose.msra.mxu0 0.0
  %1039 = vmatprep.mubr.f32.mxu0 0.0
  %1040 = vmatmul.mubr.f32.gmra.mrb[0].mxu0 %v970
  %v1041 = vpop.f32.mrb[0].mxu0
  %v1042 = vadd.f32 %v72, %v1041
  %v1043 = vpop.f32.mrb[0].mxu0
  %1044 = vdwg.mxu0
  %v1046 = vsel %vm383, %v790, 0
  %v1049 = vsel %vm383, %v878, 0
  %1051 = vmatprep.subr.mxu0 0.0
  %1052 = vmatpush1.xpose.msra.mxu0 %v1049
  %1053 = vmatprep.subr.mxu0 0.0
  %1054 = vmatpush1.xpose.msra.mxu0 0.0
  %1055 = vmatprep.subr.mxu0 0.0
  %1056 = vmatpush1.xpose.msra.mxu0 0.0
  %1057 = vmatprep.subr.mxu0 0.0
  %1058 = vmatpush1.xpose.msra.mxu0 0.0
  %1059 = vmatprep.subr.mxu0 0.0
  %1060 = vmatpush1.xpose.msra.mxu0 0.0
  %1061 = vmatprep.subr.mxu0 0.0
  %1062 = vmatpush1.xpose.msra.mxu0 0.0
  %1063 = vmatprep.subr.mxu0 0.0
  %1064 = vmatpush1.xpose.msra.mxu0 0.0
  %1065 = vmatprep.subr.mxu0 0.0
  %1066 = vmatpush1.xpose.msra.mxu0 0.0
  %1067 = vmatprep.subr.mxu0 0.0
  %1068 = vmatpush1.xpose.msra.mxu0 0.0
  %1069 = vmatprep.subr.mxu0 0.0
  %1070 = vmatpush1.xpose.msra.mxu0 0.0
  %1071 = vmatprep.subr.mxu0 0.0
  %1072 = vmatpush1.xpose.msra.mxu0 0.0
  %1073 = vmatprep.subr.mxu0 0.0
  %1074 = vmatpush1.xpose.msra.mxu0 0.0
  %1075 = vmatprep.subr.mxu0 0.0
  %1076 = vmatpush1.xpose.msra.mxu0 0.0
  %1077 = vmatprep.subr.mxu0 0.0
  %1078 = vmatpush1.xpose.msra.mxu0 0.0
  %1079 = vmatprep.subr.mxu0 0.0
  %1080 = vmatpush1.xpose.msra.mxu0 0.0
  %1081 = vmatprep.subr.mxu0 0.0
  %1082 = vmatpush1.xpose.msra.mxu0 0.0
  %1083 = vmatprep.subr.mxu0 0.0
  %1084 = vmatpush1.xpose.msra.mxu0 0.0
  %1085 = vmatprep.subr.mxu0 0.0
  %1086 = vmatpush1.xpose.msra.mxu0 0.0
  %1087 = vmatprep.subr.mxu0 0.0
  %1088 = vmatpush1.xpose.msra.mxu0 0.0
  %1089 = vmatprep.subr.mxu0 0.0
  %1090 = vmatpush1.xpose.msra.mxu0 0.0
  %1091 = vmatprep.subr.mxu0 0.0
  %1092 = vmatpush1.xpose.msra.mxu0 0.0
  %1093 = vmatprep.subr.mxu0 0.0
  %1094 = vmatpush1.xpose.msra.mxu0 0.0
  %1095 = vmatprep.subr.mxu0 0.0
  %1096 = vmatpush1.xpose.msra.mxu0 0.0
  %1097 = vmatprep.subr.mxu0 0.0
  %1098 = vmatpush1.xpose.msra.mxu0 0.0
  %1099 = vmatprep.subr.mxu0 0.0
  %1100 = vmatpush1.xpose.msra.mxu0 0.0
  %1101 = vmatprep.subr.mxu0 0.0
  %1102 = vmatpush1.xpose.msra.mxu0 0.0
  %1103 = vmatprep.subr.mxu0 0.0
  %1104 = vmatpush1.xpose.msra.mxu0 0.0
  %1105 = vmatprep.subr.mxu0 0.0
  %1106 = vmatpush1.xpose.msra.mxu0 0.0
  %1107 = vmatprep.subr.mxu0 0.0
  %1108 = vmatpush1.xpose.msra.mxu0 0.0
  %1109 = vmatprep.subr.mxu0 0.0
  %1110 = vmatpush1.xpose.msra.mxu0 0.0
  %1111 = vmatprep.subr.mxu0 0.0
  %1112 = vmatpush1.xpose.msra.mxu0 0.0
  %1113 = vmatprep.subr.mxu0 0.0
  %1114 = vmatpush1.xpose.msra.mxu0 0.0
  %1115 = vmatprep.mubr.f32.mxu0 0.0
  %1116 = vmatmul.mubr.f32.gmra.mrb[0].mxu0 %v1046
  %v1117 = vpop.f32.mrb[0].mxu0
  %v1118 = vadd.f32 %v72, %v1117
  %v1119 = vpop.f32.mrb[0].mxu0
  %1120 = vdwg.mxu0
  %v1121 = vsel %vm383, %v1042, -inf
  %1122 = vmax.xlane.f32.xlu0 %v1121
  %v1123 = vpop.xlane.xlu0 %1122
  %v1124 = vsel %vm383, %v1118, -inf
  %1125 = vmax.xlane.f32.xlu0 %v1124
  %v1126 = vpop.xlane.xlu0 %1125
  %v1127 = vsub.f32 %v1042, %v1123
  %v1128 = vsub.f32 %v1118, %v1126
  %v1129 = vmul.f32 %v1127, 1.442695
  %v1130 = vpow.pop %v1129
  %v1131 = vmul.f32 %v1128, 1.442695
  %v1132 = vpow.pop %v1131
  %v1133 = vsel %vm383, %v1130, 0.0
  %1134 = vadd.xlane.f32.xlu0 %v1133
  %v1135 = vpop.xlane.xlu0 %1134
  %v1136 = vsel %vm383, %v1132, 0.0
  %1137 = vadd.xlane.f32.xlu0 %v1136
  %v1138 = vpop.xlane.xlu0 %1137
  %v1139 = vrcp.pop %v1135
  %v1140 = vmul.f32 %v1130, %v1139
  %v1141 = vrcp.pop %v1138
  %v1142 = vmul.f32 %v1132, %v1141
  %v1144 = vsel %vm383, %v1140, 0
  %1146 = vmatprep.subr.mxu0 0.0
  %1147 = vmatpush1.msra.mxu0 %v961
  %1148 = vmatprep.subr.mxu0 0.0
  %1149 = vmatpush1.msra.mxu0 0.0
  %1150 = vmatprep.subr.mxu0 0.0
  %1151 = vmatpush1.msra.mxu0 0.0
  %1152 = vmatprep.subr.mxu0 0.0
  %1153 = vmatpush1.msra.mxu0 0.0
  %1154 = vmatprep.subr.mxu0 0.0
  %1155 = vmatpush1.msra.mxu0 0.0
  %1156 = vmatprep.subr.mxu0 0.0
  %1157 = vmatpush1.msra.mxu0 0.0
  %1158 = vmatprep.subr.mxu0 0.0
  %1159 = vmatpush1.msra.mxu0 0.0
  %1160 = vmatprep.subr.mxu0 0.0
  %1161 = vmatpush1.msra.mxu0 0.0
  %1162 = vmatprep.subr.mxu0 0.0
  %1163 = vmatpush1.msra.mxu0 0.0
  %1164 = vmatprep.subr.mxu0 0.0
  %1165 = vmatpush1.msra.mxu0 0.0
  %1166 = vmatprep.subr.mxu0 0.0
  %1167 = vmatpush1.msra.mxu0 0.0
  %1168 = vmatprep.subr.mxu0 0.0
  %1169 = vmatpush1.msra.mxu0 0.0
  %1170 = vmatprep.subr.mxu0 0.0
  %1171 = vmatpush1.msra.mxu0 0.0
  %1172 = vmatprep.subr.mxu0 0.0
  %1173 = vmatpush1.msra.mxu0 0.0
  %1174 = vmatprep.subr.mxu0 0.0
  %1175 = vmatpush1.msra.mxu0 0.0
  %1176 = vmatprep.subr.mxu0 0.0
  %1177 = vmatpush1.msra.mxu0 0.0
  %1178 = vmatprep.subr.mxu0 0.0
  %1179 = vmatpush1.msra.mxu0 0.0
  %1180 = vmatprep.subr.mxu0 0.0
  %1181 = vmatpush1.msra.mxu0 0.0
  %1182 = vmatprep.subr.mxu0 0.0
  %1183 = vmatpush1.msra.mxu0 0.0
  %1184 = vmatprep.subr.mxu0 0.0
  %1185 = vmatpush1.msra.mxu0 0.0
  %1186 = vmatprep.subr.mxu0 0.0
  %1187 = vmatpush1.msra.mxu0 0.0
  %1188 = vmatprep.subr.mxu0 0.0
  %1189 = vmatpush1.msra.mxu0 0.0
  %1190 = vmatprep.subr.mxu0 0.0
  %1191 = vmatpush1.msra.mxu0 0.0
  %1192 = vmatprep.subr.mxu0 0.0
  %1193 = vmatpush1.msra.mxu0 0.0
  %1194 = vmatprep.subr.mxu0 0.0
  %1195 = vmatpush1.msra.mxu0 0.0
  %1196 = vmatprep.subr.mxu0 0.0
  %1197 = vmatpush1.msra.mxu0 0.0
  %1198 = vmatprep.subr.mxu0 0.0
  %1199 = vmatpush1.msra.mxu0 0.0
  %1200 = vmatprep.subr.mxu0 0.0
  %1201 = vmatpush1.msra.mxu0 0.0
  %1202 = vmatprep.subr.mxu0 0.0
  %1203 = vmatpush1.msra.mxu0 0.0
  %1204 = vmatprep.subr.mxu0 0.0
  %1205 = vmatpush1.msra.mxu0 0.0
  %1206 = vmatprep.subr.mxu0 0.0
  %1207 = vmatpush1.msra.mxu0 0.0
  %1208 = vmatprep.subr.mxu0 0.0
  %1209 = vmatpush1.msra.mxu0 0.0
  %1210 = vmatprep.mubr.f32.mxu0 0.0
  %1211 = vmatmul.mubr.f32.gmra.mrb[0].mxu0 %v1144
  %v1212 = vpop.f32.mrb[0].mxu0
  %v1213 = vadd.f32 0.0, %v1212
  %v1214 = vpop.f32.mrb[0].mxu0
  %1215 = vdwg.mxu0
  %v1217 = vsel %vm383, %v1142, 0
  %1219 = vmatprep.subr.mxu0 0.0
  %1220 = vmatpush1.msra.mxu0 %v966
  %1221 = vmatprep.subr.mxu0 0.0
  %1222 = vmatpush1.msra.mxu0 0.0
  %1223 = vmatprep.subr.mxu0 0.0
  %1224 = vmatpush1.msra.mxu0 0.0
  %1225 = vmatprep.subr.mxu0 0.0
  %1226 = vmatpush1.msra.mxu0 0.0
  %1227 = vmatprep.subr.mxu0 0.0
  %1228 = vmatpush1.msra.mxu0 0.0
  %1229 = vmatprep.subr.mxu0 0.0
  %1230 = vmatpush1.msra.mxu0 0.0
  %1231 = vmatprep.subr.mxu0 0.0
  %1232 = vmatpush1.msra.mxu0 0.0
  %1233 = vmatprep.subr.mxu0 0.0
  %1234 = vmatpush1.msra.mxu0 0.0
  %1235 = vmatprep.subr.mxu0 0.0
  %1236 = vmatpush1.msra.mxu0 0.0
  %1237 = vmatprep.subr.mxu0 0.0
  %1238 = vmatpush1.msra.mxu0 0.0
  %1239 = vmatprep.subr.mxu0 0.0
  %1240 = vmatpush1.msra.mxu0 0.0
  %1241 = vmatprep.subr.mxu0 0.0
  %1242 = vmatpush1.msra.mxu0 0.0
  %1243 = vmatprep.subr.mxu0 0.0
  %1244 = vmatpush1.msra.mxu0 0.0
  %1245 = vmatprep.subr.mxu0 0.0
  %1246 = vmatpush1.msra.mxu0 0.0
  %1247 = vmatprep.subr.mxu0 0.0
  %1248 = vmatpush1.msra.mxu0 0.0
  %1249 = vmatprep.subr.mxu0 0.0
  %1250 = vmatpush1.msra.mxu0 0.0
  %1251 = vmatprep.subr.mxu0 0.0
  %1252 = vmatpush1.msra.mxu0 0.0
  %1253 = vmatprep.subr.mxu0 0.0
  %1254 = vmatpush1.msra.mxu0 0.0
  %1255 = vmatprep.subr.mxu0 0.0
  %1256 = vmatpush1.msra.mxu0 0.0
  %1257 = vmatprep.subr.mxu0 0.0
  %1258 = vmatpush1.msra.mxu0 0.0
  %1259 = vmatprep.subr.mxu0 0.0
  %1260 = vmatpush1.msra.mxu0 0.0
  %1261 = vmatprep.subr.mxu0 0.0
  %1262 = vmatpush1.msra.mxu0 0.0
  %1263 = vmatprep.subr.mxu0 0.0
  %1264 = vmatpush1.msra.mxu0 0.0
  %1265 = vmatprep.subr.mxu0 0.0
  %1266 = vmatpush1.msra.mxu0 0.0
  %1267 = vmatprep.subr.mxu0 0.0
  %1268 = vmatpush1.msra.mxu0 0.0
  %1269 = vmatprep.subr.mxu0 0.0
  %1270 = vmatpush1.msra.mxu0 0.0
  %1271 = vmatprep.subr.mxu0 0.0
  %1272 = vmatpush1.msra.mxu0 0.0
  %1273 = vmatprep.subr.mxu0 0.0
  %1274 = vmatpush1.msra.mxu0 0.0
  %1275 = vmatprep.subr.mxu0 0.0
  %1276 = vmatpush1.msra.mxu0 0.0
  %1277 = vmatprep.subr.mxu0 0.0
  %1278 = vmatpush1.msra.mxu0 0.0
  %1279 = vmatprep.subr.mxu0 0.0
  %1280 = vmatpush1.msra.mxu0 0.0
  %1281 = vmatprep.subr.mxu0 0.0
  %1282 = vmatpush1.msra.mxu0 0.0
  %1283 = vmatprep.mubr.f32.mxu0 0.0
  %1284 = vmatmul.mubr.f32.gmra.mrb[0].mxu0 %v1217
  %v1285 = vpop.f32.mrb[0].mxu0
  %v1286 = vadd.f32 0.0, %v1285
  %v1287 = vpop.f32.mrb[0].mxu0
  %1288 = vdwg.mxu0
  %s1289 = scalar_lea.vmem %s9, 8
  %v1290 = vld [vmem:[%s1289] sm:$0xff]
  %v1292 = vsel %vm383, %v1213, 0
  %v1295 = vsel %vm383, %v1286, 0
  %1297 = vmatprep.subr.mxu0 0.0
  %1298 = vmatpush1.msra.mxu0 %v1290
  %1299 = vmatprep.subr.mxu0 0.0
  %1300 = vmatpush1.msra.mxu0 0.0
  %1301 = vmatprep.subr.mxu0 0.0
  %1302 = vmatpush1.msra.mxu0 0.0
  %1303 = vmatprep.subr.mxu0 0.0
  %1304 = vmatpush1.msra.mxu0 0.0
  %1305 = vmatprep.subr.mxu0 0.0
  %1306 = vmatpush1.msra.mxu0 0.0
  %1307 = vmatprep.subr.mxu0 0.0
  %1308 = vmatpush1.msra.mxu0 0.0
  %1309 = vmatprep.subr.mxu0 0.0
  %1310 = vmatpush1.msra.mxu0 0.0
  %1311 = vmatprep.subr.mxu0 0.0
  %1312 = vmatpush1.msra.mxu0 0.0
  %1313 = vmatprep.subr.mxu0 0.0
  %1314 = vmatpush1.msra.mxu0 0.0
  %1315 = vmatprep.subr.mxu0 0.0
  %1316 = vmatpush1.msra.mxu0 0.0
  %1317 = vmatprep.subr.mxu0 0.0
  %1318 = vmatpush1.msra.mxu0 0.0
  %1319 = vmatprep.subr.mxu0 0.0
  %1320 = vmatpush1.msra.mxu0 0.0
  %1321 = vmatprep.subr.mxu0 0.0
  %1322 = vmatpush1.msra.mxu0 0.0
  %1323 = vmatprep.subr.mxu0 0.0
  %1324 = vmatpush1.msra.mxu0 0.0
  %1325 = vmatprep.subr.mxu0 0.0
  %1326 = vmatpush1.msra.mxu0 0.0
  %1327 = vmatprep.subr.mxu0 0.0
  %1328 = vmatpush1.msra.mxu0 0.0
  %1329 = vmatprep.subr.mxu0 0.0
  %1330 = vmatpush1.msra.mxu0 0.0
  %1331 = vmatprep.subr.mxu0 0.0
  %1332 = vmatpush1.msra.mxu0 0.0
  %1333 = vmatprep.subr.mxu0 0.0
  %1334 = vmatpush1.msra.mxu0 0.0
  %1335 = vmatprep.subr.mxu0 0.0
  %1336 = vmatpush1.msra.mxu0 0.0
  %1337 = vmatprep.subr.mxu0 0.0
  %1338 = vmatpush1.msra.mxu0 0.0
  %1339 = vmatprep.subr.mxu0 0.0
  %1340 = vmatpush1.msra.mxu0 0.0
  %1341 = vmatprep.subr.mxu0 0.0
  %1342 = vmatpush1.msra.mxu0 0.0
  %1343 = vmatprep.subr.mxu0 0.0
  %1344 = vmatpush1.msra.mxu0 0.0
  %1345 = vmatprep.subr.mxu0 0.0
  %1346 = vmatpush1.msra.mxu0 0.0
  %1347 = vmatprep.subr.mxu0 0.0
  %1348 = vmatpush1.msra.mxu0 0.0
  %1349 = vmatprep.subr.mxu0 0.0
  %1350 = vmatpush1.msra.mxu0 0.0
  %1351 = vmatprep.subr.mxu0 0.0
  %1352 = vmatpush1.msra.mxu0 0.0
  %1353 = vmatprep.subr.mxu0 0.0
  %1354 = vmatpush1.msra.mxu0 0.0
  %1355 = vmatprep.subr.mxu0 0.0
  %1356 = vmatpush1.msra.mxu0 0.0
  %1357 = vmatprep.subr.mxu0 0.0
  %1358 = vmatpush1.msra.mxu0 0.0
  %1359 = vmatprep.subr.mxu0 0.0
  %1360 = vmatpush1.msra.mxu0 0.0
  %1361 = vmatprep.mubr.f32.mxu0 0.0
  %1362 = vmatmul.mubr.f32.gmra.mrb[0].mxu0 %v1292
  %v1363 = vpop.f32.mrb[0].mxu0
  %v1364 = vadd.f32 0.0, %v1363
  %v1365 = vpop.f32.mrb[0].mxu0
  %1366 = vmatprep.mubr.f32.mxu0 0.0
  %1367 = vmatmul.mubr.f32.gmra.mrb[0].mxu0 %v1295
  %v1368 = vpop.f32.mrb[0].mxu0
  %v1369 = vadd.f32 0.0, %v1368
  %v1370 = vpop.f32.mrb[0].mxu0
  %1371 = vdwg.mxu0
  %v1373 = vsel %vm383, %v628, 0
  %v1376 = vsel %vm383, %v701, 0
  %1378 = vmatprep.subr.mxu0 0.0
  %1379 = vmatpush1.msra.mxu0 %v704
  %1380 = vmatprep.subr.mxu0 0.0
  %1381 = vmatpush1.msra.mxu0 0.0
  %1382 = vmatprep.subr.mxu0 0.0
  %1383 = vmatpush1.msra.mxu0 0.0
  %1384 = vmatprep.subr.mxu0 0.0
  %1385 = vmatpush1.msra.mxu0 0.0
  %1386 = vmatprep.subr.mxu0 0.0
  %1387 = vmatpush1.msra.mxu0 0.0
  %1388 = vmatprep.subr.mxu0 0.0
  %1389 = vmatpush1.msra.mxu0 0.0
  %1390 = vmatprep.subr.mxu0 0.0
  %1391 = vmatpush1.msra.mxu0 0.0
  %1392 = vmatprep.subr.mxu0 0.0
  %1393 = vmatpush1.msra.mxu0 0.0
  %1394 = vmatprep.subr.mxu0 0.0
  %1395 = vmatpush1.msra.mxu0 0.0
  %1396 = vmatprep.subr.mxu0 0.0
  %1397 = vmatpush1.msra.mxu0 0.0
  %1398 = vmatprep.subr.mxu0 0.0
  %1399 = vmatpush1.msra.mxu0 0.0
  %1400 = vmatprep.subr.mxu0 0.0
  %1401 = vmatpush1.msra.mxu0 0.0
  %1402 = vmatprep.subr.mxu0 0.0
  %1403 = vmatpush1.msra.mxu0 0.0
  %1404 = vmatprep.subr.mxu0 0.0
  %1405 = vmatpush1.msra.mxu0 0.0
  %1406 = vmatprep.subr.mxu0 0.0
  %1407 = vmatpush1.msra.mxu0 0.0
  %1408 = vmatprep.subr.mxu0 0.0
  %1409 = vmatpush1.msra.mxu0 0.0
  %1410 = vmatprep.subr.mxu0 0.0
  %1411 = vmatpush1.msra.mxu0 0.0
  %1412 = vmatprep.subr.mxu0 0.0
  %1413 = vmatpush1.msra.mxu0 0.0
  %1414 = vmatprep.subr.mxu0 0.0
  %1415 = vmatpush1.msra.mxu0 0.0
  %1416 = vmatprep.subr.mxu0 0.0
  %1417 = vmatpush1.msra.mxu0 0.0
  %1418 = vmatprep.subr.mxu0 0.0
  %1419 = vmatpush1.msra.mxu0 0.0
  %1420 = vmatprep.subr.mxu0 0.0
  %1421 = vmatpush1.msra.mxu0 0.0
  %1422 = vmatprep.subr.mxu0 0.0
  %1423 = vmatpush1.msra.mxu0 0.0
  %1424 = vmatprep.subr.mxu0 0.0
  %1425 = vmatpush1.msra.mxu0 0.0
  %1426 = vmatprep.subr.mxu0 0.0
  %1427 = vmatpush1.msra.mxu0 0.0
  %1428 = vmatprep.subr.mxu0 0.0
  %1429 = vmatpush1.msra.mxu0 0.0
  %1430 = vmatprep.subr.mxu0 0.0
  %1431 = vmatpush1.msra.mxu0 0.0
  %1432 = vmatprep.subr.mxu0 0.0
  %1433 = vmatpush1.msra.mxu0 0.0
  %1434 = vmatprep.subr.mxu0 0.0
  %1435 = vmatpush1.msra.mxu0 0.0
  %1436 = vmatprep.subr.mxu0 0.0
  %1437 = vmatpush1.msra.mxu0 0.0
  %1438 = vmatprep.subr.mxu0 0.0
  %1439 = vmatpush1.msra.mxu0 0.0
  %1440 = vmatprep.subr.mxu0 0.0
  %1441 = vmatpush1.msra.mxu0 0.0
  %1442 = vmatprep.mubr.f32.mxu0 0.0
  %1443 = vmatmul.mubr.f32.gmra.mrb[0].mxu0 %v1373
  %v1444 = vpop.f32.mrb[0].mxu0
  %v1445 = vadd.f32 %v1364, %v1444
  %v1446 = vpop.f32.mrb[0].mxu0
  %1447 = vmatprep.mubr.f32.mxu0 0.0
  %1448 = vmatmul.mubr.f32.gmra.mrb[0].mxu0 %v1376
  %v1449 = vpop.f32.mrb[0].mxu0
  %v1450 = vadd.f32 %v1369, %v1449
  %v1451 = vpop.f32.mrb[0].mxu0
  %1452 = vdwg.mxu0
  %s1453 = scalar_lea.vmem %s3, 64
  %v1454 = vld [vmem:[%s1453] sm:$0xff]
  %v1455 = vld [vmem:[%s1453 + $0x8] sm:$0xff]
  %v1456 = vld [vmem:[%s1453 + $0x10] sm:$0xff]
  %v1457 = vld [vmem:[%s1453 + $0x18] sm:$0xff]
  %s1458 = scalar_lea.vmem %s6, 2
  %v1459 = vld [vmem:[%s1458] sm:$0x1]
  %v1461 = vlaneseq
  %v1462 = vshrl.u32 %v1461, 7
  %v1463 = vsub.s32 0, %v1462
  %v1464 = vrot.slane %v1459, %v1463
  %1466 = vmatprep.subr.mxu0 0.0
  %1467 = vmatpush1.msra.mxu0 %v1454
  %1468 = vmatprep.subr.mxu0 0.0
  %1469 = vmatpush1.msra.mxu0 %v1455
  %1470 = vmatprep.subr.mxu0 0.0
  %1471 = vmatpush1.msra.mxu0 %v1456
  %1472 = vmatprep.subr.mxu0 0.0
  %1473 = vmatpush1.msra.mxu0 %v1457
  %1474 = vmatprep.subr.mxu0 0.0
  %1475 = vmatpush1.msra.mxu0 0.0
  %1476 = vmatprep.subr.mxu0 0.0
  %1477 = vmatpush1.msra.mxu0 0.0
  %1478 = vmatprep.subr.mxu0 0.0
  %1479 = vmatpush1.msra.mxu0 0.0
  %1480 = vmatprep.subr.mxu0 0.0
  %1481 = vmatpush1.msra.mxu0 0.0
  %1482 = vmatprep.subr.mxu0 0.0
  %1483 = vmatpush1.msra.mxu0 0.0
  %1484 = vmatprep.subr.mxu0 0.0
  %1485 = vmatpush1.msra.mxu0 0.0
  %1486 = vmatprep.subr.mxu0 0.0
  %1487 = vmatpush1.msra.mxu0 0.0
  %1488 = vmatprep.subr.mxu0 0.0
  %1489 = vmatpush1.msra.mxu0 0.0
  %1490 = vmatprep.subr.mxu0 0.0
  %1491 = vmatpush1.msra.mxu0 0.0
  %1492 = vmatprep.subr.mxu0 0.0
  %1493 = vmatpush1.msra.mxu0 0.0
  %1494 = vmatprep.subr.mxu0 0.0
  %1495 = vmatpush1.msra.mxu0 0.0
  %1496 = vmatprep.subr.mxu0 0.0
  %1497 = vmatpush1.msra.mxu0 0.0
  %1498 = vmatprep.subr.mxu0 0.0
  %1499 = vmatpush1.msra.mxu0 0.0
  %1500 = vmatprep.subr.mxu0 0.0
  %1501 = vmatpush1.msra.mxu0 0.0
  %1502 = vmatprep.subr.mxu0 0.0
  %1503 = vmatpush1.msra.mxu0 0.0
  %1504 = vmatprep.subr.mxu0 0.0
  %1505 = vmatpush1.msra.mxu0 0.0
  %1506 = vmatprep.subr.mxu0 0.0
  %1507 = vmatpush1.msra.mxu0 0.0
  %1508 = vmatprep.subr.mxu0 0.0
  %1509 = vmatpush1.msra.mxu0 0.0
  %1510 = vmatprep.subr.mxu0 0.0
  %1511 = vmatpush1.msra.mxu0 0.0
  %1512 = vmatprep.subr.mxu0 0.0
  %1513 = vmatpush1.msra.mxu0 0.0
  %1514 = vmatprep.subr.mxu0 0.0
  %1515 = vmatpush1.msra.mxu0 0.0
  %1516 = vmatprep.subr.mxu0 0.0
  %1517 = vmatpush1.msra.mxu0 0.0
  %1518 = vmatprep.subr.mxu0 0.0
  %1519 = vmatpush1.msra.mxu0 0.0
  %1520 = vmatprep.subr.mxu0 0.0
  %1521 = vmatpush1.msra.mxu0 0.0
  %1522 = vmatprep.subr.mxu0 0.0
  %1523 = vmatpush1.msra.mxu0 0.0
  %1524 = vmatprep.subr.mxu0 0.0
  %1525 = vmatpush1.msra.mxu0 0.0
  %1526 = vmatprep.subr.mxu0 0.0
  %1527 = vmatpush1.msra.mxu0 0.0
  %1528 = vmatprep.subr.mxu0 0.0
  %1529 = vmatpush1.msra.mxu0 0.0
  %1530 = vmatprep.mubr.f32.mxu0 0.0
  %1531 = vmatmul.mubr.f32.gmra.mrb[0].mxu0 %v131
  %v1532 = vpop.f32.mrb[0].mxu0
  %v1533 = vadd.f32 %v1464, %v1532
  %v1534 = vpop.f32.mrb[0].mxu0
  %1535 = vmatprep.mubr.f32.mxu0 0.0
  %1536 = vmatmul.mubr.f32.gmra.mrb[0].mxu0 %v134
  %v1537 = vpop.f32.mrb[0].mxu0
  %v1538 = vadd.f32 %v1464, %v1537
  %v1539 = vpop.f32.mrb[0].mxu0
  %1540 = vdwg.mxu0
  %s1541 = scalar_lea.vmem %s4, 64
  %v1542 = vld [vmem:[%s1541] sm:$0xff]
  %v1543 = vld [vmem:[%s1541 + $0x8] sm:$0xff]
  %v1544 = vld [vmem:[%s1541 + $0x10] sm:$0xff]
  %v1545 = vld [vmem:[%s1541 + $0x18] sm:$0xff]
  %s1546 = scalar_lea.vmem %s7, 2
  %v1547 = vld [vmem:[%s1546] sm:$0x1]
  %v1549 = vlaneseq
  %v1550 = vshrl.u32 %v1549, 7
  %v1551 = vsub.s32 0, %v1550
  %v1552 = vrot.slane %v1547, %v1551
  %1554 = vmatprep.subr.mxu0 0.0
  %1555 = vmatpush1.msra.mxu0 %v1542
  %1556 = vmatprep.subr.mxu0 0.0
  %1557 = vmatpush1.msra.mxu0 %v1543
  %1558 = vmatprep.subr.mxu0 0.0
  %1559 = vmatpush1.msra.mxu0 %v1544
  %1560 = vmatprep.subr.mxu0 0.0
  %1561 = vmatpush1.msra.mxu0 %v1545
  %1562 = vmatprep.subr.mxu0 0.0
  %1563 = vmatpush1.msra.mxu0 0.0
  %1564 = vmatprep.subr.mxu0 0.0
  %1565 = vmatpush1.msra.mxu0 0.0
  %1566 = vmatprep.subr.mxu0 0.0
  %1567 = vmatpush1.msra.mxu0 0.0
  %1568 = vmatprep.subr.mxu0 0.0
  %1569 = vmatpush1.msra.mxu0 0.0
  %1570 = vmatprep.subr.mxu0 0.0
  %1571 = vmatpush1.msra.mxu0 0.0
  %1572 = vmatprep.subr.mxu0 0.0
  %1573 = vmatpush1.msra.mxu0 0.0
  %1574 = vmatprep.subr.mxu0 0.0
  %1575 = vmatpush1.msra.mxu0 0.0
  %1576 = vmatprep.subr.mxu0 0.0
  %1577 = vmatpush1.msra.mxu0 0.0
  %1578 = vmatprep.subr.mxu0 0.0
  %1579 = vmatpush1.msra.mxu0 0.0
  %1580 = vmatprep.subr.mxu0 0.0
  %1581 = vmatpush1.msra.mxu0 0.0
  %1582 = vmatprep.subr.mxu0 0.0
  %1583 = vmatpush1.msra.mxu0 0.0
  %1584 = vmatprep.subr.mxu0 0.0
  %1585 = vmatpush1.msra.mxu0 0.0
  %1586 = vmatprep.subr.mxu0 0.0
  %1587 = vmatpush1.msra.mxu0 0.0
  %1588 = vmatprep.subr.mxu0 0.0
  %1589 = vmatpush1.msra.mxu0 0.0
  %1590 = vmatprep.subr.mxu0 0.0
  %1591 = vmatpush1.msra.mxu0 0.0
  %1592 = vmatprep.subr.mxu0 0.0
  %1593 = vmatpush1.msra.mxu0 0.0
  %1594 = vmatprep.subr.mxu0 0.0
  %1595 = vmatpush1.msra.mxu0 0.0
  %1596 = vmatprep.subr.mxu0 0.0
  %1597 = vmatpush1.msra.mxu0 0.0
  %1598 = vmatprep.subr.mxu0 0.0
  %1599 = vmatpush1.msra.mxu0 0.0
  %1600 = vmatprep.subr.mxu0 0.0
  %1601 = vmatpush1.msra.mxu0 0.0
  %1602 = vmatprep.subr.mxu0 0.0
  %1603 = vmatpush1.msra.mxu0 0.0
  %1604 = vmatprep.subr.mxu0 0.0
  %1605 = vmatpush1.msra.mxu0 0.0
  %1606 = vmatprep.subr.mxu0 0.0
  %1607 = vmatpush1.msra.mxu0 0.0
  %1608 = vmatprep.subr.mxu0 0.0
  %1609 = vmatpush1.msra.mxu0 0.0
  %1610 = vmatprep.subr.mxu0 0.0
  %1611 = vmatpush1.msra.mxu0 0.0
  %1612 = vmatprep.subr.mxu0 0.0
  %1613 = vmatpush1.msra.mxu0 0.0
  %1614 = vmatprep.subr.mxu0 0.0
  %1615 = vmatpush1.msra.mxu0 0.0
  %1616 = vmatprep.subr.mxu0 0.0
  %1617 = vmatpush1.msra.mxu0 0.0
  %1618 = vmatprep.mubr.f32.mxu0 0.0
  %1619 = vmatmul.mubr.f32.gmra.mrb[0].mxu0 %v131
  %v1620 = vpop.f32.mrb[0].mxu0
  %v1621 = vadd.f32 %v1552, %v1620
  %v1622 = vpop.f32.mrb[0].mxu0
  %1623 = vmatprep.mubr.f32.mxu0 0.0
  %1624 = vmatmul.mubr.f32.gmra.mrb[0].mxu0 %v134
  %v1625 = vpop.f32.mrb[0].mxu0
  %v1626 = vadd.f32 %v1552, %v1625
  %v1627 = vpop.f32.mrb[0].mxu0
  %1628 = vdwg.mxu0
  %s1629 = scalar_lea.vmem %s5, 64
  %v1630 = vld [vmem:[%s1629] sm:$0xff]
  %v1631 = vld [vmem:[%s1629 + $0x8] sm:$0xff]
  %v1632 = vld [vmem:[%s1629 + $0x10] sm:$0xff]
  %v1633 = vld [vmem:[%s1629 + $0x18] sm:$0xff]
  %s1634 = scalar_lea.vmem %s8, 2
  %v1635 = vld [vmem:[%s1634] sm:$0x1]
  %v1637 = vlaneseq
  %v1638 = vshrl.u32 %v1637, 7
  %v1639 = vsub.s32 0, %v1638
  %v1640 = vrot.slane %v1635, %v1639
  %1642 = vmatprep.subr.mxu0 0.0
  %1643 = vmatpush1.msra.mxu0 %v1630
  %1644 = vmatprep.subr.mxu0 0.0
  %1645 = vmatpush1.msra.mxu0 %v1631
  %1646 = vmatprep.subr.mxu0 0.0
  %1647 = vmatpush1.msra.mxu0 %v1632
  %1648 = vmatprep.subr.mxu0 0.0
  %1649 = vmatpush1.msra.mxu0 %v1633
  %1650 = vmatprep.subr.mxu0 0.0
  %1651 = vmatpush1.msra.mxu0 0.0
  %1652 = vmatprep.subr.mxu0 0.0
  %1653 = vmatpush1.msra.mxu0 0.0
  %1654 = vmatprep.subr.mxu0 0.0
  %1655 = vmatpush1.msra.mxu0 0.0
  %1656 = vmatprep.subr.mxu0 0.0
  %1657 = vmatpush1.msra.mxu0 0.0
  %1658 = vmatprep.subr.mxu0 0.0
  %1659 = vmatpush1.msra.mxu0 0.0
  %1660 = vmatprep.subr.mxu0 0.0
  %1661 = vmatpush1.msra.mxu0 0.0
  %1662 = vmatprep.subr.mxu0 0.0
  %1663 = vmatpush1.msra.mxu0 0.0
  %1664 = vmatprep.subr.mxu0 0.0
  %1665 = vmatpush1.msra.mxu0 0.0
  %1666 = vmatprep.subr.mxu0 0.0
  %1667 = vmatpush1.msra.mxu0 0.0
  %1668 = vmatprep.subr.mxu0 0.0
  %1669 = vmatpush1.msra.mxu0 0.0
  %1670 = vmatprep.subr.mxu0 0.0
  %1671 = vmatpush1.msra.mxu0 0.0
  %1672 = vmatprep.subr.mxu0 0.0
  %1673 = vmatpush1.msra.mxu0 0.0
  %1674 = vmatprep.subr.mxu0 0.0
  %1675 = vmatpush1.msra.mxu0 0.0
  %1676 = vmatprep.subr.mxu0 0.0
  %1677 = vmatpush1.msra.mxu0 0.0
  %1678 = vmatprep.subr.mxu0 0.0
  %1679 = vmatpush1.msra.mxu0 0.0
  %1680 = vmatprep.subr.mxu0 0.0
  %1681 = vmatpush1.msra.mxu0 0.0
  %1682 = vmatprep.subr.mxu0 0.0
  %1683 = vmatpush1.msra.mxu0 0.0
  %1684 = vmatprep.subr.mxu0 0.0
  %1685 = vmatpush1.msra.mxu0 0.0
  %1686 = vmatprep.subr.mxu0 0.0
  %1687 = vmatpush1.msra.mxu0 0.0
  %1688 = vmatprep.subr.mxu0 0.0
  %1689 = vmatpush1.msra.mxu0 0.0
  %1690 = vmatprep.subr.mxu0 0.0
  %1691 = vmatpush1.msra.mxu0 0.0
  %1692 = vmatprep.subr.mxu0 0.0
  %1693 = vmatpush1.msra.mxu0 0.0
  %1694 = vmatprep.subr.mxu0 0.0
  %1695 = vmatpush1.msra.mxu0 0.0
  %1696 = vmatprep.subr.mxu0 0.0
  %1697 = vmatpush1.msra.mxu0 0.0
  %1698 = vmatprep.subr.mxu0 0.0
  %1699 = vmatpush1.msra.mxu0 0.0
  %1700 = vmatprep.subr.mxu0 0.0
  %1701 = vmatpush1.msra.mxu0 0.0
  %1702 = vmatprep.subr.mxu0 0.0
  %1703 = vmatpush1.msra.mxu0 0.0
  %1704 = vmatprep.subr.mxu0 0.0
  %1705 = vmatpush1.msra.mxu0 0.0
  %1706 = vmatprep.mubr.f32.mxu0 0.0
  %1707 = vmatmul.mubr.f32.gmra.mrb[0].mxu0 %v131
  %v1708 = vpop.f32.mrb[0].mxu0
  %v1709 = vadd.f32 %v1640, %v1708
  %v1710 = vpop.f32.mrb[0].mxu0
  %1711 = vmatprep.mubr.f32.mxu0 0.0
  %1712 = vmatmul.mubr.f32.gmra.mrb[0].mxu0 %v134
  %v1713 = vpop.f32.mrb[0].mxu0
  %v1714 = vadd.f32 %v1640, %v1713
  %v1715 = vpop.f32.mrb[0].mxu0
  %1716 = vdwg.mxu0
  %v1718 = vsel %vm383, %v1533, 0
  %v1721 = vsel %vm383, %v1621, 0
  %1723 = vmatprep.subr.mxu0 0.0
  %1724 = vmatpush1.xpose.msra.mxu0 %v1721
  %1725 = vmatprep.subr.mxu0 0.0
  %1726 = vmatpush1.xpose.msra.mxu0 0.0
  %1727 = vmatprep.subr.mxu0 0.0
  %1728 = vmatpush1.xpose.msra.mxu0 0.0
  %1729 = vmatprep.subr.mxu0 0.0
  %1730 = vmatpush1.xpose.msra.mxu0 0.0
  %1731 = vmatprep.subr.mxu0 0.0
  %1732 = vmatpush1.xpose.msra.mxu0 0.0
  %1733 = vmatprep.subr.mxu0 0.0
  %1734 = vmatpush1.xpose.msra.mxu0 0.0
  %1735 = vmatprep.subr.mxu0 0.0
  %1736 = vmatpush1.xpose.msra.mxu0 0.0
  %1737 = vmatprep.subr.mxu0 0.0
  %1738 = vmatpush1.xpose.msra.mxu0 0.0
  %1739 = vmatprep.subr.mxu0 0.0
  %1740 = vmatpush1.xpose.msra.mxu0 0.0
  %1741 = vmatprep.subr.mxu0 0.0
  %1742 = vmatpush1.xpose.msra.mxu0 0.0
  %1743 = vmatprep.subr.mxu0 0.0
  %1744 = vmatpush1.xpose.msra.mxu0 0.0
  %1745 = vmatprep.subr.mxu0 0.0
  %1746 = vmatpush1.xpose.msra.mxu0 0.0
  %1747 = vmatprep.subr.mxu0 0.0
  %1748 = vmatpush1.xpose.msra.mxu0 0.0
  %1749 = vmatprep.subr.mxu0 0.0
  %1750 = vmatpush1.xpose.msra.mxu0 0.0
  %1751 = vmatprep.subr.mxu0 0.0
  %1752 = vmatpush1.xpose.msra.mxu0 0.0
  %1753 = vmatprep.subr.mxu0 0.0
  %1754 = vmatpush1.xpose.msra.mxu0 0.0
  %1755 = vmatprep.subr.mxu0 0.0
  %1756 = vmatpush1.xpose.msra.mxu0 0.0
  %1757 = vmatprep.subr.mxu0 0.0
  %1758 = vmatpush1.xpose.msra.mxu0 0.0
  %1759 = vmatprep.subr.mxu0 0.0
  %1760 = vmatpush1.xpose.msra.mxu0 0.0
  %1761 = vmatprep.subr.mxu0 0.0
  %1762 = vmatpush1.xpose.msra.mxu0 0.0
  %1763 = vmatprep.subr.mxu0 0.0
  %1764 = vmatpush1.xpose.msra.mxu0 0.0
  %1765 = vmatprep.subr.mxu0 0.0
  %1766 = vmatpush1.xpose.msra.mxu0 0.0
  %1767 = vmatprep.subr.mxu0 0.0
  %1768 = vmatpush1.xpose.msra.mxu0 0.0
  %1769 = vmatprep.subr.mxu0 0.0
  %1770 = vmatpush1.xpose.msra.mxu0 0.0
  %1771 = vmatprep.subr.mxu0 0.0
  %1772 = vmatpush1.xpose.msra.mxu0 0.0
  %1773 = vmatprep.subr.mxu0 0.0
  %1774 = vmatpush1.xpose.msra.mxu0 0.0
  %1775 = vmatprep.subr.mxu0 0.0
  %1776 = vmatpush1.xpose.msra.mxu0 0.0
  %1777 = vmatprep.subr.mxu0 0.0
  %1778 = vmatpush1.xpose.msra.mxu0 0.0
  %1779 = vmatprep.subr.mxu0 0.0
  %1780 = vmatpush1.xpose.msra.mxu0 0.0
  %1781 = vmatprep.subr.mxu0 0.0
  %1782 = vmatpush1.xpose.msra.mxu0 0.0
  %1783 = vmatprep.subr.mxu0 0.0
  %1784 = vmatpush1.xpose.msra.mxu0 0.0
  %1785 = vmatprep.subr.mxu0 0.0
  %1786 = vmatpush1.xpose.msra.mxu0 0.0
  %1787 = vmatprep.mubr.f32.mxu0 0.0
  %1788 = vmatmul.mubr.f32.gmra.mrb[0].mxu0 %v1718
  %v1789 = vpop.f32.mrb[0].mxu0
  %v1790 = vadd.f32 %v72, %v1789
  %v1791 = vpop.f32.mrb[0].mxu0
  %1792 = vdwg.mxu0
  %v1794 = vsel %vm383, %v1538, 0
  %v1797 = vsel %vm383, %v1626, 0
  %1799 = vmatprep.subr.mxu0 0.0
  %1800 = vmatpush1.xpose.msra.mxu0 %v1797
  %1801 = vmatprep.subr.mxu0 0.0
  %1802 = vmatpush1.xpose.msra.mxu0 0.0
  %1803 = vmatprep.subr.mxu0 0.0
  %1804 = vmatpush1.xpose.msra.mxu0 0.0
  %1805 = vmatprep.subr.mxu0 0.0
  %1806 = vmatpush1.xpose.msra.mxu0 0.0
  %1807 = vmatprep.subr.mxu0 0.0
  %1808 = vmatpush1.xpose.msra.mxu0 0.0
  %1809 = vmatprep.subr.mxu0 0.0
  %1810 = vmatpush1.xpose.msra.mxu0 0.0
  %1811 = vmatprep.subr.mxu0 0.0
  %1812 = vmatpush1.xpose.msra.mxu0 0.0
  %1813 = vmatprep.subr.mxu0 0.0
  %1814 = vmatpush1.xpose.msra.mxu0 0.0
  %1815 = vmatprep.subr.mxu0 0.0
  %1816 = vmatpush1.xpose.msra.mxu0 0.0
  %1817 = vmatprep.subr.mxu0 0.0
  %1818 = vmatpush1.xpose.msra.mxu0 0.0
  %1819 = vmatprep.subr.mxu0 0.0
  %1820 = vmatpush1.xpose.msra.mxu0 0.0
  %1821 = vmatprep.subr.mxu0 0.0
  %1822 = vmatpush1.xpose.msra.mxu0 0.0
  %1823 = vmatprep.subr.mxu0 0.0
  %1824 = vmatpush1.xpose.msra.mxu0 0.0
  %1825 = vmatprep.subr.mxu0 0.0
  %1826 = vmatpush1.xpose.msra.mxu0 0.0
  %1827 = vmatprep.subr.mxu0 0.0
  %1828 = vmatpush1.xpose.msra.mxu0 0.0
  %1829 = vmatprep.subr.mxu0 0.0
  %1830 = vmatpush1.xpose.msra.mxu0 0.0
  %1831 = vmatprep.subr.mxu0 0.0
  %1832 = vmatpush1.xpose.msra.mxu0 0.0
  %1833 = vmatprep.subr.mxu0 0.0
  %1834 = vmatpush1.xpose.msra.mxu0 0.0
  %1835 = vmatprep.subr.mxu0 0.0
  %1836 = vmatpush1.xpose.msra.mxu0 0.0
  %1837 = vmatprep.subr.mxu0 0.0
  %1838 = vmatpush1.xpose.msra.mxu0 0.0
  %1839 = vmatprep.subr.mxu0 0.0
  %1840 = vmatpush1.xpose.msra.mxu0 0.0
  %1841 = vmatprep.subr.mxu0 0.0
  %1842 = vmatpush1.xpose.msra.mxu0 0.0
  %1843 = vmatprep.subr.mxu0 0.0
  %1844 = vmatpush1.xpose.msra.mxu0 0.0
  %1845 = vmatprep.subr.mxu0 0.0
  %1846 = vmatpush1.xpose.msra.mxu0 0.0
  %1847 = vmatprep.subr.mxu0 0.0
  %1848 = vmatpush1.xpose.msra.mxu0 0.0
  %1849 = vmatprep.subr.mxu0 0.0
  %1850 = vmatpush1.xpose.msra.mxu0 0.0
  %1851 = vmatprep.subr.mxu0 0.0
  %1852 = vmatpush1.xpose.msra.mxu0 0.0
  %1853 = vmatprep.subr.mxu0 0.0
  %1854 = vmatpush1.xpose.msra.mxu0 0.0
  %1855 = vmatprep.subr.mxu0 0.0
  %1856 = vmatpush1.xpose.msra.mxu0 0.0
  %1857 = vmatprep.subr.mxu0 0.0
  %1858 = vmatpush1.xpose.msra.mxu0 0.0
  %1859 = vmatprep.subr.mxu0 0.0
  %1860 = vmatpush1.xpose.msra.mxu0 0.0
  %1861 = vmatprep.subr.mxu0 0.0
  %1862 = vmatpush1.xpose.msra.mxu0 0.0
  %1863 = vmatprep.mubr.f32.mxu0 0.0
  %1864 = vmatmul.mubr.f32.gmra.mrb[0].mxu0 %v1794
  %v1865 = vpop.f32.mrb[0].mxu0
  %v1866 = vadd.f32 %v72, %v1865
  %v1867 = vpop.f32.mrb[0].mxu0
  %1868 = vdwg.mxu0
  %v1869 = vsel %vm383, %v1790, -inf
  %1870 = vmax.xlane.f32.xlu0 %v1869
  %v1871 = vpop.xlane.xlu0 %1870
  %v1872 = vsel %vm383, %v1866, -inf
  %1873 = vmax.xlane.f32.xlu0 %v1872
  %v1874 = vpop.xlane.xlu0 %1873
  %v1875 = vsub.f32 %v1790, %v1871
  %v1876 = vsub.f32 %v1866, %v1874
  %v1877 = vmul.f32 %v1875, 1.442695
  %v1878 = vpow.pop %v1877
  %v1879 = vmul.f32 %v1876, 1.442695
  %v1880 = vpow.pop %v1879
  %v1881 = vsel %vm383, %v1878, 0.0
  %1882 = vadd.xlane.f32.xlu0 %v1881
  %v1883 = vpop.xlane.xlu0 %1882
  %v1884 = vsel %vm383, %v1880, 0.0
  %1885 = vadd.xlane.f32.xlu0 %v1884
  %v1886 = vpop.xlane.xlu0 %1885
  %v1887 = vrcp.pop %v1883
  %v1888 = vmul.f32 %v1878, %v1887
  %v1889 = vrcp.pop %v1886
  %v1890 = vmul.f32 %v1880, %v1889
  %v1892 = vsel %vm383, %v1888, 0
  %1894 = vmatprep.subr.mxu0 0.0
  %1895 = vmatpush1.msra.mxu0 %v1709
  %1896 = vmatprep.subr.mxu0 0.0
  %1897 = vmatpush1.msra.mxu0 0.0
  %1898 = vmatprep.subr.mxu0 0.0
  %1899 = vmatpush1.msra.mxu0 0.0
  %1900 = vmatprep.subr.mxu0 0.0
  %1901 = vmatpush1.msra.mxu0 0.0
  %1902 = vmatprep.subr.mxu0 0.0
  %1903 = vmatpush1.msra.mxu0 0.0
  %1904 = vmatprep.subr.mxu0 0.0
  %1905 = vmatpush1.msra.mxu0 0.0
  %1906 = vmatprep.subr.mxu0 0.0
  %1907 = vmatpush1.msra.mxu0 0.0
  %1908 = vmatprep.subr.mxu0 0.0
  %1909 = vmatpush1.msra.mxu0 0.0
  %1910 = vmatprep.subr.mxu0 0.0
  %1911 = vmatpush1.msra.mxu0 0.0
  %1912 = vmatprep.subr.mxu0 0.0
  %1913 = vmatpush1.msra.mxu0 0.0
  %1914 = vmatprep.subr.mxu0 0.0
  %1915 = vmatpush1.msra.mxu0 0.0
  %1916 = vmatprep.subr.mxu0 0.0
  %1917 = vmatpush1.msra.mxu0 0.0
  %1918 = vmatprep.subr.mxu0 0.0
  %1919 = vmatpush1.msra.mxu0 0.0
  %1920 = vmatprep.subr.mxu0 0.0
  %1921 = vmatpush1.msra.mxu0 0.0
  %1922 = vmatprep.subr.mxu0 0.0
  %1923 = vmatpush1.msra.mxu0 0.0
  %1924 = vmatprep.subr.mxu0 0.0
  %1925 = vmatpush1.msra.mxu0 0.0
  %1926 = vmatprep.subr.mxu0 0.0
  %1927 = vmatpush1.msra.mxu0 0.0
  %1928 = vmatprep.subr.mxu0 0.0
  %1929 = vmatpush1.msra.mxu0 0.0
  %1930 = vmatprep.subr.mxu0 0.0
  %1931 = vmatpush1.msra.mxu0 0.0
  %1932 = vmatprep.subr.mxu0 0.0
  %1933 = vmatpush1.msra.mxu0 0.0
  %1934 = vmatprep.subr.mxu0 0.0
  %1935 = vmatpush1.msra.mxu0 0.0
  %1936 = vmatprep.subr.mxu0 0.0
  %1937 = vmatpush1.msra.mxu0 0.0
  %1938 = vmatprep.subr.mxu0 0.0
  %1939 = vmatpush1.msra.mxu0 0.0
  %1940 = vmatprep.subr.mxu0 0.0
  %1941 = vmatpush1.msra.mxu0 0.0
  %1942 = vmatprep.subr.mxu0 0.0
  %1943 = vmatpush1.msra.mxu0 0.0
  %1944 = vmatprep.subr.mxu0 0.0
  %1945 = vmatpush1.msra.mxu0 0.0
  %1946 = vmatprep.subr.mxu0 0.0
  %1947 = vmatpush1.msra.mxu0 0.0
  %1948 = vmatprep.subr.mxu0 0.0
  %1949 = vmatpush1.msra.mxu0 0.0
  %1950 = vmatprep.subr.mxu0 0.0
  %1951 = vmatpush1.msra.mxu0 0.0
  %1952 = vmatprep.subr.mxu0 0.0
  %1953 = vmatpush1.msra.mxu0 0.0
  %1954 = vmatprep.subr.mxu0 0.0
  %1955 = vmatpush1.msra.mxu0 0.0
  %1956 = vmatprep.subr.mxu0 0.0
  %1957 = vmatpush1.msra.mxu0 0.0
  %1958 = vmatprep.mubr.f32.mxu0 0.0
  %1959 = vmatmul.mubr.f32.gmra.mrb[0].mxu0 %v1892
  %v1960 = vpop.f32.mrb[0].mxu0
  %v1961 = vadd.f32 0.0, %v1960
  %v1962 = vpop.f32.mrb[0].mxu0
  %1963 = vdwg.mxu0
  %v1965 = vsel %vm383, %v1890, 0
  %1967 = vmatprep.subr.mxu0 0.0
  %1968 = vmatpush1.msra.mxu0 %v1714
  %1969 = vmatprep.subr.mxu0 0.0
  %1970 = vmatpush1.msra.mxu0 0.0
  %1971 = vmatprep.subr.mxu0 0.0
  %1972 = vmatpush1.msra.mxu0 0.0
  %1973 = vmatprep.subr.mxu0 0.0
  %1974 = vmatpush1.msra.mxu0 0.0
  %1975 = vmatprep.subr.mxu0 0.0
  %1976 = vmatpush1.msra.mxu0 0.0
  %1977 = vmatprep.subr.mxu0 0.0
  %1978 = vmatpush1.msra.mxu0 0.0
  %1979 = vmatprep.subr.mxu0 0.0
  %1980 = vmatpush1.msra.mxu0 0.0
  %1981 = vmatprep.subr.mxu0 0.0
  %1982 = vmatpush1.msra.mxu0 0.0
  %1983 = vmatprep.subr.mxu0 0.0
  %1984 = vmatpush1.msra.mxu0 0.0
  %1985 = vmatprep.subr.mxu0 0.0
  %1986 = vmatpush1.msra.mxu0 0.0
  %1987 = vmatprep.subr.mxu0 0.0
  %1988 = vmatpush1.msra.mxu0 0.0
  %1989 = vmatprep.subr.mxu0 0.0
  %1990 = vmatpush1.msra.mxu0 0.0
  %1991 = vmatprep.subr.mxu0 0.0
  %1992 = vmatpush1.msra.mxu0 0.0
  %1993 = vmatprep.subr.mxu0 0.0
  %1994 = vmatpush1.msra.mxu0 0.0
  %1995 = vmatprep.subr.mxu0 0.0
  %1996 = vmatpush1.msra.mxu0 0.0
  %1997 = vmatprep.subr.mxu0 0.0
  %1998 = vmatpush1.msra.mxu0 0.0
  %1999 = vmatprep.subr.mxu0 0.0
  %2000 = vmatpush1.msra.mxu0 0.0
  %2001 = vmatprep.subr.mxu0 0.0
  %2002 = vmatpush1.msra.mxu0 0.0
  %2003 = vmatprep.subr.mxu0 0.0
  %2004 = vmatpush1.msra.mxu0 0.0
  %2005 = vmatprep.subr.mxu0 0.0
  %2006 = vmatpush1.msra.mxu0 0.0
  %2007 = vmatprep.subr.mxu0 0.0
  %2008 = vmatpush1.msra.mxu0 0.0
  %2009 = vmatprep.subr.mxu0 0.0
  %2010 = vmatpush1.msra.mxu0 0.0
  %2011 = vmatprep.subr.mxu0 0.0
  %2012 = vmatpush1.msra.mxu0 0.0
  %2013 = vmatprep.subr.mxu0 0.0
  %2014 = vmatpush1.msra.mxu0 0.0
  %2015 = vmatprep.subr.mxu0 0.0
  %2016 = vmatpush1.msra.mxu0 0.0
  %2017 = vmatprep.subr.mxu0 0.0
  %2018 = vmatpush1.msra.mxu0 0.0
  %2019 = vmatprep.subr.mxu0 0.0
  %2020 = vmatpush1.msra.mxu0 0.0
  %2021 = vmatprep.subr.mxu0 0.0
  %2022 = vmatpush1.msra.mxu0 0.0
  %2023 = vmatprep.subr.mxu0 0.0
  %2024 = vmatpush1.msra.mxu0 0.0
  %2025 = vmatprep.subr.mxu0 0.0
  %2026 = vmatpush1.msra.mxu0 0.0
  %2027 = vmatprep.subr.mxu0 0.0
  %2028 = vmatpush1.msra.mxu0 0.0
  %2029 = vmatprep.subr.mxu0 0.0
  %2030 = vmatpush1.msra.mxu0 0.0
  %2031 = vmatprep.mubr.f32.mxu0 0.0
  %2032 = vmatmul.mubr.f32.gmra.mrb[0].mxu0 %v1965
  %v2033 = vpop.f32.mrb[0].mxu0
  %v2034 = vadd.f32 0.0, %v2033
  %v2035 = vpop.f32.mrb[0].mxu0
  %2036 = vdwg.mxu0
  %s2037 = scalar_lea.vmem %s9, 16
  %v2038 = vld [vmem:[%s2037] sm:$0xff]
  %v2040 = vsel %vm383, %v1961, 0
  %v2043 = vsel %vm383, %v2034, 0
  %2045 = vmatprep.subr.mxu0 0.0
  %2046 = vmatpush1.msra.mxu0 %v2038
  %2047 = vmatprep.subr.mxu0 0.0
  %2048 = vmatpush1.msra.mxu0 0.0
  %2049 = vmatprep.subr.mxu0 0.0
  %2050 = vmatpush1.msra.mxu0 0.0
  %2051 = vmatprep.subr.mxu0 0.0
  %2052 = vmatpush1.msra.mxu0 0.0
  %2053 = vmatprep.subr.mxu0 0.0
  %2054 = vmatpush1.msra.mxu0 0.0
  %2055 = vmatprep.subr.mxu0 0.0
  %2056 = vmatpush1.msra.mxu0 0.0
  %2057 = vmatprep.subr.mxu0 0.0
  %2058 = vmatpush1.msra.mxu0 0.0
  %2059 = vmatprep.subr.mxu0 0.0
  %2060 = vmatpush1.msra.mxu0 0.0
  %2061 = vmatprep.subr.mxu0 0.0
  %2062 = vmatpush1.msra.mxu0 0.0
  %2063 = vmatprep.subr.mxu0 0.0
  %2064 = vmatpush1.msra.mxu0 0.0
  %2065 = vmatprep.subr.mxu0 0.0
  %2066 = vmatpush1.msra.mxu0 0.0
  %2067 = vmatprep.subr.mxu0 0.0
  %2068 = vmatpush1.msra.mxu0 0.0
  %2069 = vmatprep.subr.mxu0 0.0
  %2070 = vmatpush1.msra.mxu0 0.0
  %2071 = vmatprep.subr.mxu0 0.0
  %2072 = vmatpush1.msra.mxu0 0.0
  %2073 = vmatprep.subr.mxu0 0.0
  %2074 = vmatpush1.msra.mxu0 0.0
  %2075 = vmatprep.subr.mxu0 0.0
  %2076 = vmatpush1.msra.mxu0 0.0
  %2077 = vmatprep.subr.mxu0 0.0
  %2078 = vmatpush1.msra.mxu0 0.0
  %2079 = vmatprep.subr.mxu0 0.0
  %2080 = vmatpush1.msra.mxu0 0.0
  %2081 = vmatprep.subr.mxu0 0.0
  %2082 = vmatpush1.msra.mxu0 0.0
  %2083 = vmatprep.subr.mxu0 0.0
  %2084 = vmatpush1.msra.mxu0 0.0
  %2085 = vmatprep.subr.mxu0 0.0
  %2086 = vmatpush1.msra.mxu0 0.0
  %2087 = vmatprep.subr.mxu0 0.0
  %2088 = vmatpush1.msra.mxu0 0.0
  %2089 = vmatprep.subr.mxu0 0.0
  %2090 = vmatpush1.msra.mxu0 0.0
  %2091 = vmatprep.subr.mxu0 0.0
  %2092 = vmatpush1.msra.mxu0 0.0
  %2093 = vmatprep.subr.mxu0 0.0
  %2094 = vmatpush1.msra.mxu0 0.0
  %2095 = vmatprep.subr.mxu0 0.0
  %2096 = vmatpush1.msra.mxu0 0.0
  %2097 = vmatprep.subr.mxu0 0.0
  %2098 = vmatpush1.msra.mxu0 0.0
  %2099 = vmatprep.subr.mxu0 0.0
  %2100 = vmatpush1.msra.mxu0 0.0
  %2101 = vmatprep.subr.mxu0 0.0
  %2102 = vmatpush1.msra.mxu0 0.0
  %2103 = vmatprep.subr.mxu0 0.0
  %2104 = vmatpush1.msra.mxu0 0.0
  %2105 = vmatprep.subr.mxu0 0.0
  %2106 = vmatpush1.msra.mxu0 0.0
  %2107 = vmatprep.subr.mxu0 0.0
  %2108 = vmatpush1.msra.mxu0 0.0
  %2109 = vmatprep.mubr.f32.mxu0 0.0
  %2110 = vmatmul.mubr.f32.gmra.mrb[0].mxu0 %v2040
  %v2111 = vpop.f32.mrb[0].mxu0
  %v2112 = vadd.f32 0.0, %v2111
  %v2113 = vpop.f32.mrb[0].mxu0
  %2114 = vmatprep.mubr.f32.mxu0 0.0
  %2115 = vmatmul.mubr.f32.gmra.mrb[0].mxu0 %v2043
  %v2116 = vpop.f32.mrb[0].mxu0
  %v2117 = vadd.f32 0.0, %v2116
  %v2118 = vpop.f32.mrb[0].mxu0
  %2119 = vdwg.mxu0
  %v2120 = vadd.f32 %v1445, %v2112
  %v2121 = vadd.f32 %v1450, %v2117
  %s2122 = scalar_lea.vmem %s3, 96
  %v2123 = vld [vmem:[%s2122] sm:$0xff]
  %v2124 = vld [vmem:[%s2122 + $0x8] sm:$0xff]
  %v2125 = vld [vmem:[%s2122 + $0x10] sm:$0xff]
  %v2126 = vld [vmem:[%s2122 + $0x18] sm:$0xff]
  %s2127 = scalar_lea.vmem %s6, 3
  %v2128 = vld [vmem:[%s2127] sm:$0x1]
  %v2130 = vlaneseq
  %v2131 = vshrl.u32 %v2130, 7
  %v2132 = vsub.s32 0, %v2131
  %v2133 = vrot.slane %v2128, %v2132
  %2135 = vmatprep.subr.mxu0 0.0
  %2136 = vmatpush1.msra.mxu0 %v2123
  %2137 = vmatprep.subr.mxu0 0.0
  %2138 = vmatpush1.msra.mxu0 %v2124
  %2139 = vmatprep.subr.mxu0 0.0
  %2140 = vmatpush1.msra.mxu0 %v2125
  %2141 = vmatprep.subr.mxu0 0.0
  %2142 = vmatpush1.msra.mxu0 %v2126
  %2143 = vmatprep.subr.mxu0 0.0
  %2144 = vmatpush1.msra.mxu0 0.0
  %2145 = vmatprep.subr.mxu0 0.0
  %2146 = vmatpush1.msra.mxu0 0.0
  %2147 = vmatprep.subr.mxu0 0.0
  %2148 = vmatpush1.msra.mxu0 0.0
  %2149 = vmatprep.subr.mxu0 0.0
  %2150 = vmatpush1.msra.mxu0 0.0
  %2151 = vmatprep.subr.mxu0 0.0
  %2152 = vmatpush1.msra.mxu0 0.0
  %2153 = vmatprep.subr.mxu0 0.0
  %2154 = vmatpush1.msra.mxu0 0.0
  %2155 = vmatprep.subr.mxu0 0.0
  %2156 = vmatpush1.msra.mxu0 0.0
  %2157 = vmatprep.subr.mxu0 0.0
  %2158 = vmatpush1.msra.mxu0 0.0
  %2159 = vmatprep.subr.mxu0 0.0
  %2160 = vmatpush1.msra.mxu0 0.0
  %2161 = vmatprep.subr.mxu0 0.0
  %2162 = vmatpush1.msra.mxu0 0.0
  %2163 = vmatprep.subr.mxu0 0.0
  %2164 = vmatpush1.msra.mxu0 0.0
  %2165 = vmatprep.subr.mxu0 0.0
  %2166 = vmatpush1.msra.mxu0 0.0
  %2167 = vmatprep.subr.mxu0 0.0
  %2168 = vmatpush1.msra.mxu0 0.0
  %2169 = vmatprep.subr.mxu0 0.0
  %2170 = vmatpush1.msra.mxu0 0.0
  %2171 = vmatprep.subr.mxu0 0.0
  %2172 = vmatpush1.msra.mxu0 0.0
  %2173 = vmatprep.subr.mxu0 0.0
  %2174 = vmatpush1.msra.mxu0 0.0
  %2175 = vmatprep.subr.mxu0 0.0
  %2176 = vmatpush1.msra.mxu0 0.0
  %2177 = vmatprep.subr.mxu0 0.0
  %2178 = vmatpush1.msra.mxu0 0.0
  %2179 = vmatprep.subr.mxu0 0.0
  %2180 = vmatpush1.msra.mxu0 0.0
  %2181 = vmatprep.subr.mxu0 0.0
  %2182 = vmatpush1.msra.mxu0 0.0
  %2183 = vmatprep.subr.mxu0 0.0
  %2184 = vmatpush1.msra.mxu0 0.0
  %2185 = vmatprep.subr.mxu0 0.0
  %2186 = vmatpush1.msra.mxu0 0.0
  %2187 = vmatprep.subr.mxu0 0.0
  %2188 = vmatpush1.msra.mxu0 0.0
  %2189 = vmatprep.subr.mxu0 0.0
  %2190 = vmatpush1.msra.mxu0 0.0
  %2191 = vmatprep.subr.mxu0 0.0
  %2192 = vmatpush1.msra.mxu0 0.0
  %2193 = vmatprep.subr.mxu0 0.0
  %2194 = vmatpush1.msra.mxu0 0.0
  %2195 = vmatprep.subr.mxu0 0.0
  %2196 = vmatpush1.msra.mxu0 0.0
  %2197 = vmatprep.subr.mxu0 0.0
  %2198 = vmatpush1.msra.mxu0 0.0
  %2199 = vmatprep.mubr.f32.mxu0 0.0
  %2200 = vmatmul.mubr.f32.gmra.mrb[0].mxu0 %v131
  %v2201 = vpop.f32.mrb[0].mxu0
  %v2202 = vadd.f32 %v2133, %v2201
  %v2203 = vpop.f32.mrb[0].mxu0
  %2204 = vmatprep.mubr.f32.mxu0 0.0
  %2205 = vmatmul.mubr.f32.gmra.mrb[0].mxu0 %v134
  %v2206 = vpop.f32.mrb[0].mxu0
  %v2207 = vadd.f32 %v2133, %v2206
  %v2208 = vpop.f32.mrb[0].mxu0
  %2209 = vdwg.mxu0
  %s2210 = scalar_lea.vmem %s4, 96
  %v2211 = vld [vmem:[%s2210] sm:$0xff]
  %v2212 = vld [vmem:[%s2210 + $0x8] sm:$0xff]
  %v2213 = vld [vmem:[%s2210 + $0x10] sm:$0xff]
  %v2214 = vld [vmem:[%s2210 + $0x18] sm:$0xff]
  %s2215 = scalar_lea.vmem %s7, 3
  %v2216 = vld [vmem:[%s2215] sm:$0x1]
  %v2218 = vlaneseq
  %v2219 = vshrl.u32 %v2218, 7
  %v2220 = vsub.s32 0, %v2219
  %v2221 = vrot.slane %v2216, %v2220
  %2223 = vmatprep.subr.mxu0 0.0
  %2224 = vmatpush1.msra.mxu0 %v2211
  %2225 = vmatprep.subr.mxu0 0.0
  %2226 = vmatpush1.msra.mxu0 %v2212
  %2227 = vmatprep.subr.mxu0 0.0
  %2228 = vmatpush1.msra.mxu0 %v2213
  %2229 = vmatprep.subr.mxu0 0.0
  %2230 = vmatpush1.msra.mxu0 %v2214
  %2231 = vmatprep.subr.mxu0 0.0
  %2232 = vmatpush1.msra.mxu0 0.0
  %2233 = vmatprep.subr.mxu0 0.0
  %2234 = vmatpush1.msra.mxu0 0.0
  %2235 = vmatprep.subr.mxu0 0.0
  %2236 = vmatpush1.msra.mxu0 0.0
  %2237 = vmatprep.subr.mxu0 0.0
  %2238 = vmatpush1.msra.mxu0 0.0
  %2239 = vmatprep.subr.mxu0 0.0
  %2240 = vmatpush1.msra.mxu0 0.0
  %2241 = vmatprep.subr.mxu0 0.0
  %2242 = vmatpush1.msra.mxu0 0.0
  %2243 = vmatprep.subr.mxu0 0.0
  %2244 = vmatpush1.msra.mxu0 0.0
  %2245 = vmatprep.subr.mxu0 0.0
  %2246 = vmatpush1.msra.mxu0 0.0
  %2247 = vmatprep.subr.mxu0 0.0
  %2248 = vmatpush1.msra.mxu0 0.0
  %2249 = vmatprep.subr.mxu0 0.0
  %2250 = vmatpush1.msra.mxu0 0.0
  %2251 = vmatprep.subr.mxu0 0.0
  %2252 = vmatpush1.msra.mxu0 0.0
  %2253 = vmatprep.subr.mxu0 0.0
  %2254 = vmatpush1.msra.mxu0 0.0
  %2255 = vmatprep.subr.mxu0 0.0
  %2256 = vmatpush1.msra.mxu0 0.0
  %2257 = vmatprep.subr.mxu0 0.0
  %2258 = vmatpush1.msra.mxu0 0.0
  %2259 = vmatprep.subr.mxu0 0.0
  %2260 = vmatpush1.msra.mxu0 0.0
  %2261 = vmatprep.subr.mxu0 0.0
  %2262 = vmatpush1.msra.mxu0 0.0
  %2263 = vmatprep.subr.mxu0 0.0
  %2264 = vmatpush1.msra.mxu0 0.0
  %2265 = vmatprep.subr.mxu0 0.0
  %2266 = vmatpush1.msra.mxu0 0.0
  %2267 = vmatprep.subr.mxu0 0.0
  %2268 = vmatpush1.msra.mxu0 0.0
  %2269 = vmatprep.subr.mxu0 0.0
  %2270 = vmatpush1.msra.mxu0 0.0
  %2271 = vmatprep.subr.mxu0 0.0
  %2272 = vmatpush1.msra.mxu0 0.0
  %2273 = vmatprep.subr.mxu0 0.0
  %2274 = vmatpush1.msra.mxu0 0.0
  %2275 = vmatprep.subr.mxu0 0.0
  %2276 = vmatpush1.msra.mxu0 0.0
  %2277 = vmatprep.subr.mxu0 0.0
  %2278 = vmatpush1.msra.mxu0 0.0
  %2279 = vmatprep.subr.mxu0 0.0
  %2280 = vmatpush1.msra.mxu0 0.0
  %2281 = vmatprep.subr.mxu0 0.0
  %2282 = vmatpush1.msra.mxu0 0.0
  %2283 = vmatprep.subr.mxu0 0.0
  %2284 = vmatpush1.msra.mxu0 0.0
  %2285 = vmatprep.subr.mxu0 0.0
  %2286 = vmatpush1.msra.mxu0 0.0
  %2287 = vmatprep.mubr.f32.mxu0 0.0
  %2288 = vmatmul.mubr.f32.gmra.mrb[0].mxu0 %v131
  %v2289 = vpop.f32.mrb[0].mxu0
  %v2290 = vadd.f32 %v2221, %v2289
  %v2291 = vpop.f32.mrb[0].mxu0
  %2292 = vmatprep.mubr.f32.mxu0 0.0
  %2293 = vmatmul.mubr.f32.gmra.mrb[0].mxu0 %v134
  %v2294 = vpop.f32.mrb[0].mxu0
  %v2295 = vadd.f32 %v2221, %v2294
  %v2296 = vpop.f32.mrb[0].mxu0
  %2297 = vdwg.mxu0
  %s2298 = scalar_lea.vmem %s5, 96
  %v2299 = vld [vmem:[%s2298] sm:$0xff]
  %v2300 = vld [vmem:[%s2298 + $0x8] sm:$0xff]
  %v2301 = vld [vmem:[%s2298 + $0x10] sm:$0xff]
  %v2302 = vld [vmem:[%s2298 + $0x18] sm:$0xff]
  %s2303 = scalar_lea.vmem %s8, 3
  %v2304 = vld [vmem:[%s2303] sm:$0x1]
  %v2306 = vlaneseq
  %v2307 = vshrl.u32 %v2306, 7
  %v2308 = vsub.s32 0, %v2307
  %v2309 = vrot.slane %v2304, %v2308
  %2311 = vmatprep.subr.mxu0 0.0
  %2312 = vmatpush1.msra.mxu0 %v2299
  %2313 = vmatprep.subr.mxu0 0.0
  %2314 = vmatpush1.msra.mxu0 %v2300
  %2315 = vmatprep.subr.mxu0 0.0
  %2316 = vmatpush1.msra.mxu0 %v2301
  %2317 = vmatprep.subr.mxu0 0.0
  %2318 = vmatpush1.msra.mxu0 %v2302
  %2319 = vmatprep.subr.mxu0 0.0
  %2320 = vmatpush1.msra.mxu0 0.0
  %2321 = vmatprep.subr.mxu0 0.0
  %2322 = vmatpush1.msra.mxu0 0.0
  %2323 = vmatprep.subr.mxu0 0.0
  %2324 = vmatpush1.msra.mxu0 0.0
  %2325 = vmatprep.subr.mxu0 0.0
  %2326 = vmatpush1.msra.mxu0 0.0
  %2327 = vmatprep.subr.mxu0 0.0
  %2328 = vmatpush1.msra.mxu0 0.0
  %2329 = vmatprep.subr.mxu0 0.0
  %2330 = vmatpush1.msra.mxu0 0.0
  %2331 = vmatprep.subr.mxu0 0.0
  %2332 = vmatpush1.msra.mxu0 0.0
  %2333 = vmatprep.subr.mxu0 0.0
  %2334 = vmatpush1.msra.mxu0 0.0
  %2335 = vmatprep.subr.mxu0 0.0
  %2336 = vmatpush1.msra.mxu0 0.0
  %2337 = vmatprep.subr.mxu0 0.0
  %2338 = vmatpush1.msra.mxu0 0.0
  %2339 = vmatprep.subr.mxu0 0.0
  %2340 = vmatpush1.msra.mxu0 0.0
  %2341 = vmatprep.subr.mxu0 0.0
  %2342 = vmatpush1.msra.mxu0 0.0
  %2343 = vmatprep.subr.mxu0 0.0
  %2344 = vmatpush1.msra.mxu0 0.0
  %2345 = vmatprep.subr.mxu0 0.0
  %2346 = vmatpush1.msra.mxu0 0.0
  %2347 = vmatprep.subr.mxu0 0.0
  %2348 = vmatpush1.msra.mxu0 0.0
  %2349 = vmatprep.subr.mxu0 0.0
  %2350 = vmatpush1.msra.mxu0 0.0
  %2351 = vmatprep.subr.mxu0 0.0
  %2352 = vmatpush1.msra.mxu0 0.0
  %2353 = vmatprep.subr.mxu0 0.0
  %2354 = vmatpush1.msra.mxu0 0.0
  %2355 = vmatprep.subr.mxu0 0.0
  %2356 = vmatpush1.msra.mxu0 0.0
  %2357 = vmatprep.subr.mxu0 0.0
  %2358 = vmatpush1.msra.mxu0 0.0
  %2359 = vmatprep.subr.mxu0 0.0
  %2360 = vmatpush1.msra.mxu0 0.0
  %2361 = vmatprep.subr.mxu0 0.0
  %2362 = vmatpush1.msra.mxu0 0.0
  %2363 = vmatprep.subr.mxu0 0.0
  %2364 = vmatpush1.msra.mxu0 0.0
  %2365 = vmatprep.subr.mxu0 0.0
  %2366 = vmatpush1.msra.mxu0 0.0
  %2367 = vmatprep.subr.mxu0 0.0
  %2368 = vmatpush1.msra.mxu0 0.0
  %2369 = vmatprep.subr.mxu0 0.0
  %2370 = vmatpush1.msra.mxu0 0.0
  %2371 = vmatprep.subr.mxu0 0.0
  %2372 = vmatpush1.msra.mxu0 0.0
  %2373 = vmatprep.subr.mxu0 0.0
  %2374 = vmatpush1.msra.mxu0 0.0
  %2375 = vmatprep.mubr.f32.mxu0 0.0
  %2376 = vmatmul.mubr.f32.gmra.mrb[0].mxu0 %v131
  %v2377 = vpop.f32.mrb[0].mxu0
  %v2378 = vadd.f32 %v2309, %v2377
  %v2379 = vpop.f32.mrb[0].mxu0
  %2380 = vmatprep.mubr.f32.mxu0 0.0
  %2381 = vmatmul.mubr.f32.gmra.mrb[0].mxu0 %v134
  %v2382 = vpop.f32.mrb[0].mxu0
  %v2383 = vadd.f32 %v2309, %v2382
  %v2384 = vpop.f32.mrb[0].mxu0
  %2385 = vdwg.mxu0
  %v2387 = vsel %vm383, %v2202, 0
  %v2390 = vsel %vm383, %v2290, 0
  %2392 = vmatprep.subr.mxu0 0.0
  %2393 = vmatpush1.xpose.msra.mxu0 %v2390
  %2394 = vmatprep.subr.mxu0 0.0
  %2395 = vmatpush1.xpose.msra.mxu0 0.0
  %2396 = vmatprep.subr.mxu0 0.0
  %2397 = vmatpush1.xpose.msra.mxu0 0.0
  %2398 = vmatprep.subr.mxu0 0.0
  %2399 = vmatpush1.xpose.msra.mxu0 0.0
  %2400 = vmatprep.subr.mxu0 0.0
  %2401 = vmatpush1.xpose.msra.mxu0 0.0
  %2402 = vmatprep.subr.mxu0 0.0
  %2403 = vmatpush1.xpose.msra.mxu0 0.0
  %2404 = vmatprep.subr.mxu0 0.0
  %2405 = vmatpush1.xpose.msra.mxu0 0.0
  %2406 = vmatprep.subr.mxu0 0.0
  %2407 = vmatpush1.xpose.msra.mxu0 0.0
  %2408 = vmatprep.subr.mxu0 0.0
  %2409 = vmatpush1.xpose.msra.mxu0 0.0
  %2410 = vmatprep.subr.mxu0 0.0
  %2411 = vmatpush1.xpose.msra.mxu0 0.0
  %2412 = vmatprep.subr.mxu0 0.0
  %2413 = vmatpush1.xpose.msra.mxu0 0.0
  %2414 = vmatprep.subr.mxu0 0.0
  %2415 = vmatpush1.xpose.msra.mxu0 0.0
  %2416 = vmatprep.subr.mxu0 0.0
  %2417 = vmatpush1.xpose.msra.mxu0 0.0
  %2418 = vmatprep.subr.mxu0 0.0
  %2419 = vmatpush1.xpose.msra.mxu0 0.0
  %2420 = vmatprep.subr.mxu0 0.0
  %2421 = vmatpush1.xpose.msra.mxu0 0.0
  %2422 = vmatprep.subr.mxu0 0.0
  %2423 = vmatpush1.xpose.msra.mxu0 0.0
  %2424 = vmatprep.subr.mxu0 0.0
  %2425 = vmatpush1.xpose.msra.mxu0 0.0
  %2426 = vmatprep.subr.mxu0 0.0
  %2427 = vmatpush1.xpose.msra.mxu0 0.0
  %2428 = vmatprep.subr.mxu0 0.0
  %2429 = vmatpush1.xpose.msra.mxu0 0.0
  %2430 = vmatprep.subr.mxu0 0.0
  %2431 = vmatpush1.xpose.msra.mxu0 0.0
  %2432 = vmatprep.subr.mxu0 0.0
  %2433 = vmatpush1.xpose.msra.mxu0 0.0
  %2434 = vmatprep.subr.mxu0 0.0
  %2435 = vmatpush1.xpose.msra.mxu0 0.0
  %2436 = vmatprep.subr.mxu0 0.0
  %2437 = vmatpush1.xpose.msra.mxu0 0.0
  %2438 = vmatprep.subr.mxu0 0.0
  %2439 = vmatpush1.xpose.msra.mxu0 0.0
  %2440 = vmatprep.subr.mxu0 0.0
  %2441 = vmatpush1.xpose.msra.mxu0 0.0
  %2442 = vmatprep.subr.mxu0 0.0
  %2443 = vmatpush1.xpose.msra.mxu0 0.0
  %2444 = vmatprep.subr.mxu0 0.0
  %2445 = vmatpush1.xpose.msra.mxu0 0.0
  %2446 = vmatprep.subr.mxu0 0.0
  %2447 = vmatpush1.xpose.msra.mxu0 0.0
  %2448 = vmatprep.subr.mxu0 0.0
  %2449 = vmatpush1.xpose.msra.mxu0 0.0
  %2450 = vmatprep.subr.mxu0 0.0
  %2451 = vmatpush1.xpose.msra.mxu0 0.0
  %2452 = vmatprep.subr.mxu0 0.0
  %2453 = vmatpush1.xpose.msra.mxu0 0.0
  %2454 = vmatprep.subr.mxu0 0.0
  %2455 = vmatpush1.xpose.msra.mxu0 0.0
  %2456 = vmatprep.mubr.f32.mxu0 0.0
  %2457 = vmatmul.mubr.f32.gmra.mrb[0].mxu0 %v2387
  %v2458 = vpop.f32.mrb[0].mxu0
  %v2459 = vadd.f32 %v72, %v2458
  %v2460 = vpop.f32.mrb[0].mxu0
  %2461 = vdwg.mxu0
  %v2463 = vsel %vm383, %v2207, 0
  %v2466 = vsel %vm383, %v2295, 0
  %2468 = vmatprep.subr.mxu0 0.0
  %2469 = vmatpush1.xpose.msra.mxu0 %v2466
  %2470 = vmatprep.subr.mxu0 0.0
  %2471 = vmatpush1.xpose.msra.mxu0 0.0
  %2472 = vmatprep.subr.mxu0 0.0
  %2473 = vmatpush1.xpose.msra.mxu0 0.0
  %2474 = vmatprep.subr.mxu0 0.0
  %2475 = vmatpush1.xpose.msra.mxu0 0.0
  %2476 = vmatprep.subr.mxu0 0.0
  %2477 = vmatpush1.xpose.msra.mxu0 0.0
  %2478 = vmatprep.subr.mxu0 0.0
  %2479 = vmatpush1.xpose.msra.mxu0 0.0
  %2480 = vmatprep.subr.mxu0 0.0
  %2481 = vmatpush1.xpose.msra.mxu0 0.0
  %2482 = vmatprep.subr.mxu0 0.0
  %2483 = vmatpush1.xpose.msra.mxu0 0.0
  %2484 = vmatprep.subr.mxu0 0.0
  %2485 = vmatpush1.xpose.msra.mxu0 0.0
  %2486 = vmatprep.subr.mxu0 0.0
  %2487 = vmatpush1.xpose.msra.mxu0 0.0
  %2488 = vmatprep.subr.mxu0 0.0
  %2489 = vmatpush1.xpose.msra.mxu0 0.0
  %2490 = vmatprep.subr.mxu0 0.0
  %2491 = vmatpush1.xpose.msra.mxu0 0.0
  %2492 = vmatprep.subr.mxu0 0.0
  %2493 = vmatpush1.xpose.msra.mxu0 0.0
  %2494 = vmatprep.subr.mxu0 0.0
  %2495 = vmatpush1.xpose.msra.mxu0 0.0
  %2496 = vmatprep.subr.mxu0 0.0
  %2497 = vmatpush1.xpose.msra.mxu0 0.0
  %2498 = vmatprep.subr.mxu0 0.0
  %2499 = vmatpush1.xpose.msra.mxu0 0.0
  %2500 = vmatprep.subr.mxu0 0.0
  %2501 = vmatpush1.xpose.msra.mxu0 0.0
  %2502 = vmatprep.subr.mxu0 0.0
  %2503 = vmatpush1.xpose.msra.mxu0 0.0
  %2504 = vmatprep.subr.mxu0 0.0
  %2505 = vmatpush1.xpose.msra.mxu0 0.0
  %2506 = vmatprep.subr.mxu0 0.0
  %2507 = vmatpush1.xpose.msra.mxu0 0.0
  %2508 = vmatprep.subr.mxu0 0.0
  %2509 = vmatpush1.xpose.msra.mxu0 0.0
  %2510 = vmatprep.subr.mxu0 0.0
  %2511 = vmatpush1.xpose.msra.mxu0 0.0
  %2512 = vmatprep.subr.mxu0 0.0
  %2513 = vmatpush1.xpose.msra.mxu0 0.0
  %2514 = vmatprep.subr.mxu0 0.0
  %2515 = vmatpush1.xpose.msra.mxu0 0.0
  %2516 = vmatprep.subr.mxu0 0.0
  %2517 = vmatpush1.xpose.msra.mxu0 0.0
  %2518 = vmatprep.subr.mxu0 0.0
  %2519 = vmatpush1.xpose.msra.mxu0 0.0
  %2520 = vmatprep.subr.mxu0 0.0
  %2521 = vmatpush1.xpose.msra.mxu0 0.0
  %2522 = vmatprep.subr.mxu0 0.0
  %2523 = vmatpush1.xpose.msra.mxu0 0.0
  %2524 = vmatprep.subr.mxu0 0.0
  %2525 = vmatpush1.xpose.msra.mxu0 0.0
  %2526 = vmatprep.subr.mxu0 0.0
  %2527 = vmatpush1.xpose.msra.mxu0 0.0
  %2528 = vmatprep.subr.mxu0 0.0
  %2529 = vmatpush1.xpose.msra.mxu0 0.0
  %2530 = vmatprep.subr.mxu0 0.0
  %2531 = vmatpush1.xpose.msra.mxu0 0.0
  %2532 = vmatprep.mubr.f32.mxu0 0.0
  %2533 = vmatmul.mubr.f32.gmra.mrb[0].mxu0 %v2463
  %v2534 = vpop.f32.mrb[0].mxu0
  %v2535 = vadd.f32 %v72, %v2534
  %v2536 = vpop.f32.mrb[0].mxu0
  %2537 = vdwg.mxu0
  %v2538 = vsel %vm383, %v2459, -inf
  %2539 = vmax.xlane.f32.xlu0 %v2538
  %v2540 = vpop.xlane.xlu0 %2539
  %v2541 = vsel %vm383, %v2535, -inf
  %2542 = vmax.xlane.f32.xlu0 %v2541
  %v2543 = vpop.xlane.xlu0 %2542
  %v2544 = vsub.f32 %v2459, %v2540
  %v2545 = vsub.f32 %v2535, %v2543
  %v2546 = vmul.f32 %v2544, 1.442695
  %v2547 = vpow.pop %v2546
  %v2548 = vmul.f32 %v2545, 1.442695
  %v2549 = vpow.pop %v2548
  %v2550 = vsel %vm383, %v2547, 0.0
  %2551 = vadd.xlane.f32.xlu0 %v2550
  %v2552 = vpop.xlane.xlu0 %2551
  %v2553 = vsel %vm383, %v2549, 0.0
  %2554 = vadd.xlane.f32.xlu0 %v2553
  %v2555 = vpop.xlane.xlu0 %2554
  %v2556 = vrcp.pop %v2552
  %v2557 = vmul.f32 %v2547, %v2556
  %v2558 = vrcp.pop %v2555
  %v2559 = vmul.f32 %v2549, %v2558
  %v2561 = vsel %vm383, %v2557, 0
  %2563 = vmatprep.subr.mxu0 0.0
  %2564 = vmatpush1.msra.mxu0 %v2378
  %2565 = vmatprep.subr.mxu0 0.0
  %2566 = vmatpush1.msra.mxu0 0.0
  %2567 = vmatprep.subr.mxu0 0.0
  %2568 = vmatpush1.msra.mxu0 0.0
  %2569 = vmatprep.subr.mxu0 0.0
  %2570 = vmatpush1.msra.mxu0 0.0
  %2571 = vmatprep.subr.mxu0 0.0
  %2572 = vmatpush1.msra.mxu0 0.0
  %2573 = vmatprep.subr.mxu0 0.0
  %2574 = vmatpush1.msra.mxu0 0.0
  %2575 = vmatprep.subr.mxu0 0.0
  %2576 = vmatpush1.msra.mxu0 0.0
  %2577 = vmatprep.subr.mxu0 0.0
  %2578 = vmatpush1.msra.mxu0 0.0
  %2579 = vmatprep.subr.mxu0 0.0
  %2580 = vmatpush1.msra.mxu0 0.0
  %2581 = vmatprep.subr.mxu0 0.0
  %2582 = vmatpush1.msra.mxu0 0.0
  %2583 = vmatprep.subr.mxu0 0.0
  %2584 = vmatpush1.msra.mxu0 0.0
  %2585 = vmatprep.subr.mxu0 0.0
  %2586 = vmatpush1.msra.mxu0 0.0
  %2587 = vmatprep.subr.mxu0 0.0
  %2588 = vmatpush1.msra.mxu0 0.0
  %2589 = vmatprep.subr.mxu0 0.0
  %2590 = vmatpush1.msra.mxu0 0.0
  %2591 = vmatprep.subr.mxu0 0.0
  %2592 = vmatpush1.msra.mxu0 0.0
  %2593 = vmatprep.subr.mxu0 0.0
  %2594 = vmatpush1.msra.mxu0 0.0
  %2595 = vmatprep.subr.mxu0 0.0
  %2596 = vmatpush1.msra.mxu0 0.0
  %2597 = vmatprep.subr.mxu0 0.0
  %2598 = vmatpush1.msra.mxu0 0.0
  %2599 = vmatprep.subr.mxu0 0.0
  %2600 = vmatpush1.msra.mxu0 0.0
  %2601 = vmatprep.subr.mxu0 0.0
  %2602 = vmatpush1.msra.mxu0 0.0
  %2603 = vmatprep.subr.mxu0 0.0
  %2604 = vmatpush1.msra.mxu0 0.0
  %2605 = vmatprep.subr.mxu0 0.0
  %2606 = vmatpush1.msra.mxu0 0.0
  %2607 = vmatprep.subr.mxu0 0.0
  %2608 = vmatpush1.msra.mxu0 0.0
  %2609 = vmatprep.subr.mxu0 0.0
  %2610 = vmatpush1.msra.mxu0 0.0
  %2611 = vmatprep.subr.mxu0 0.0
  %2612 = vmatpush1.msra.mxu0 0.0
  %2613 = vmatprep.subr.mxu0 0.0
  %2614 = vmatpush1.msra.mxu0 0.0
  %2615 = vmatprep.subr.mxu0 0.0
  %2616 = vmatpush1.msra.mxu0 0.0
  %2617 = vmatprep.subr.mxu0 0.0
  %2618 = vmatpush1.msra.mxu0 0.0
  %2619 = vmatprep.subr.mxu0 0.0
  %2620 = vmatpush1.msra.mxu0 0.0
  %2621 = vmatprep.subr.mxu0 0.0
  %2622 = vmatpush1.msra.mxu0 0.0
  %2623 = vmatprep.subr.mxu0 0.0
  %2624 = vmatpush1.msra.mxu0 0.0
  %2625 = vmatprep.subr.mxu0 0.0
  %2626 = vmatpush1.msra.mxu0 0.0
  %2627 = vmatprep.mubr.f32.mxu0 0.0
  %2628 = vmatmul.mubr.f32.gmra.mrb[0].mxu0 %v2561
  %v2629 = vpop.f32.mrb[0].mxu0
  %v2630 = vadd.f32 0.0, %v2629
  %v2631 = vpop.f32.mrb[0].mxu0
  %2632 = vdwg.mxu0
  %v2634 = vsel %vm383, %v2559, 0
  %2636 = vmatprep.subr.mxu0 0.0
  %2637 = vmatpush1.msra.mxu0 %v2383
  %2638 = vmatprep.subr.mxu0 0.0
  %2639 = vmatpush1.msra.mxu0 0.0
  %2640 = vmatprep.subr.mxu0 0.0
  %2641 = vmatpush1.msra.mxu0 0.0
  %2642 = vmatprep.subr.mxu0 0.0
  %2643 = vmatpush1.msra.mxu0 0.0
  %2644 = vmatprep.subr.mxu0 0.0
  %2645 = vmatpush1.msra.mxu0 0.0
  %2646 = vmatprep.subr.mxu0 0.0
  %2647 = vmatpush1.msra.mxu0 0.0
  %2648 = vmatprep.subr.mxu0 0.0
  %2649 = vmatpush1.msra.mxu0 0.0
  %2650 = vmatprep.subr.mxu0 0.0
  %2651 = vmatpush1.msra.mxu0 0.0
  %2652 = vmatprep.subr.mxu0 0.0
  %2653 = vmatpush1.msra.mxu0 0.0
  %2654 = vmatprep.subr.mxu0 0.0
  %2655 = vmatpush1.msra.mxu0 0.0
  %2656 = vmatprep.subr.mxu0 0.0
  %2657 = vmatpush1.msra.mxu0 0.0
  %2658 = vmatprep.subr.mxu0 0.0
  %2659 = vmatpush1.msra.mxu0 0.0
  %2660 = vmatprep.subr.mxu0 0.0
  %2661 = vmatpush1.msra.mxu0 0.0
  %2662 = vmatprep.subr.mxu0 0.0
  %2663 = vmatpush1.msra.mxu0 0.0
  %2664 = vmatprep.subr.mxu0 0.0
  %2665 = vmatpush1.msra.mxu0 0.0
  %2666 = vmatprep.subr.mxu0 0.0
  %2667 = vmatpush1.msra.mxu0 0.0
  %2668 = vmatprep.subr.mxu0 0.0
  %2669 = vmatpush1.msra.mxu0 0.0
  %2670 = vmatprep.subr.mxu0 0.0
  %2671 = vmatpush1.msra.mxu0 0.0
  %2672 = vmatprep.subr.mxu0 0.0
  %2673 = vmatpush1.msra.mxu0 0.0
  %2674 = vmatprep.subr.mxu0 0.0
  %2675 = vmatpush1.msra.mxu0 0.0
  %2676 = vmatprep.subr.mxu0 0.0
  %2677 = vmatpush1.msra.mxu0 0.0
  %2678 = vmatprep.subr.mxu0 0.0
  %2679 = vmatpush1.msra.mxu0 0.0
  %2680 = vmatprep.subr.mxu0 0.0
  %2681 = vmatpush1.msra.mxu0 0.0
  %2682 = vmatprep.subr.mxu0 0.0
  %2683 = vmatpush1.msra.mxu0 0.0
  %2684 = vmatprep.subr.mxu0 0.0
  %2685 = vmatpush1.msra.mxu0 0.0
  %2686 = vmatprep.subr.mxu0 0.0
  %2687 = vmatpush1.msra.mxu0 0.0
  %2688 = vmatprep.subr.mxu0 0.0
  %2689 = vmatpush1.msra.mxu0 0.0
  %2690 = vmatprep.subr.mxu0 0.0
  %2691 = vmatpush1.msra.mxu0 0.0
  %2692 = vmatprep.subr.mxu0 0.0
  %2693 = vmatpush1.msra.mxu0 0.0
  %2694 = vmatprep.subr.mxu0 0.0
  %2695 = vmatpush1.msra.mxu0 0.0
  %2696 = vmatprep.subr.mxu0 0.0
  %2697 = vmatpush1.msra.mxu0 0.0
  %2698 = vmatprep.subr.mxu0 0.0
  %2699 = vmatpush1.msra.mxu0 0.0
  %2700 = vmatprep.mubr.f32.mxu0 0.0
  %2701 = vmatmul.mubr.f32.gmra.mrb[0].mxu0 %v2634
  %v2702 = vpop.f32.mrb[0].mxu0
  %v2703 = vadd.f32 0.0, %v2702
  %v2704 = vpop.f32.mrb[0].mxu0
  %2705 = vdwg.mxu0
  %s2706 = scalar_lea.vmem %s9, 24
  %v2707 = vld [vmem:[%s2706] sm:$0xff]
  %v2709 = vsel %vm383, %v2630, 0
  %v2712 = vsel %vm383, %v2703, 0
  %2714 = vmatprep.subr.mxu0 0.0
  %2715 = vmatpush1.msra.mxu0 %v2707
  %2716 = vmatprep.subr.mxu0 0.0
  %2717 = vmatpush1.msra.mxu0 0.0
  %2718 = vmatprep.subr.mxu0 0.0
  %2719 = vmatpush1.msra.mxu0 0.0
  %2720 = vmatprep.subr.mxu0 0.0
  %2721 = vmatpush1.msra.mxu0 0.0
  %2722 = vmatprep.subr.mxu0 0.0
  %2723 = vmatpush1.msra.mxu0 0.0
  %2724 = vmatprep.subr.mxu0 0.0
  %2725 = vmatpush1.msra.mxu0 0.0
  %2726 = vmatprep.subr.mxu0 0.0
  %2727 = vmatpush1.msra.mxu0 0.0
  %2728 = vmatprep.subr.mxu0 0.0
  %2729 = vmatpush1.msra.mxu0 0.0
  %2730 = vmatprep.subr.mxu0 0.0
  %2731 = vmatpush1.msra.mxu0 0.0
  %2732 = vmatprep.subr.mxu0 0.0
  %2733 = vmatpush1.msra.mxu0 0.0
  %2734 = vmatprep.subr.mxu0 0.0
  %2735 = vmatpush1.msra.mxu0 0.0
  %2736 = vmatprep.subr.mxu0 0.0
  %2737 = vmatpush1.msra.mxu0 0.0
  %2738 = vmatprep.subr.mxu0 0.0
  %2739 = vmatpush1.msra.mxu0 0.0
  %2740 = vmatprep.subr.mxu0 0.0
  %2741 = vmatpush1.msra.mxu0 0.0
  %2742 = vmatprep.subr.mxu0 0.0
  %2743 = vmatpush1.msra.mxu0 0.0
  %2744 = vmatprep.subr.mxu0 0.0
  %2745 = vmatpush1.msra.mxu0 0.0
  %2746 = vmatprep.subr.mxu0 0.0
  %2747 = vmatpush1.msra.mxu0 0.0
  %2748 = vmatprep.subr.mxu0 0.0
  %2749 = vmatpush1.msra.mxu0 0.0
  %2750 = vmatprep.subr.mxu0 0.0
  %2751 = vmatpush1.msra.mxu0 0.0
  %2752 = vmatprep.subr.mxu0 0.0
  %2753 = vmatpush1.msra.mxu0 0.0
  %2754 = vmatprep.subr.mxu0 0.0
  %2755 = vmatpush1.msra.mxu0 0.0
  %2756 = vmatprep.subr.mxu0 0.0
  %2757 = vmatpush1.msra.mxu0 0.0
  %2758 = vmatprep.subr.mxu0 0.0
  %2759 = vmatpush1.msra.mxu0 0.0
  %2760 = vmatprep.subr.mxu0 0.0
  %2761 = vmatpush1.msra.mxu0 0.0
  %2762 = vmatprep.subr.mxu0 0.0
  %2763 = vmatpush1.msra.mxu0 0.0
  %2764 = vmatprep.subr.mxu0 0.0
  %2765 = vmatpush1.msra.mxu0 0.0
  %2766 = vmatprep.subr.mxu0 0.0
  %2767 = vmatpush1.msra.mxu0 0.0
  %2768 = vmatprep.subr.mxu0 0.0
  %2769 = vmatpush1.msra.mxu0 0.0
  %2770 = vmatprep.subr.mxu0 0.0
  %2771 = vmatpush1.msra.mxu0 0.0
  %2772 = vmatprep.subr.mxu0 0.0
  %2773 = vmatpush1.msra.mxu0 0.0
  %2774 = vmatprep.subr.mxu0 0.0
  %2775 = vmatpush1.msra.mxu0 0.0
  %2776 = vmatprep.subr.mxu0 0.0
  %2777 = vmatpush1.msra.mxu0 0.0
  %2778 = vmatprep.mubr.f32.mxu0 0.0
  %2779 = vmatmul.mubr.f32.gmra.mrb[0].mxu0 %v2709
  %v2780 = vpop.f32.mrb[0].mxu0
  %v2781 = vadd.f32 0.0, %v2780
  %v2782 = vpop.f32.mrb[0].mxu0
  %2783 = vmatprep.mubr.f32.mxu0 0.0
  %2784 = vmatmul.mubr.f32.gmra.mrb[0].mxu0 %v2712
  %v2785 = vpop.f32.mrb[0].mxu0
  %v2786 = vadd.f32 0.0, %v2785
  %v2787 = vpop.f32.mrb[0].mxu0
  %2788 = vdwg.mxu0
  %v2789 = vadd.f32 %v2120, %v2781
  %v2790 = vadd.f32 %v2121, %v2786
  %v2791 = vadd.f32 %v65, %v2789
  %v2792 = vadd.f32 %v66, %v2790
  %v2793 = vld [vmem:[%s10] sm:$0x1]
  %v2795 = vlaneseq
  %v2796 = vshrl.u32 %v2795, 7
  %v2797 = vsub.s32 0, %v2796
  %v2798 = vrot.slane %v2793, %v2797
  %v2800 = vadd.f32 %v2791, %v2798
  %v2801 = vadd.f32 %v2792, %v2798
  %v2802 = vld [vmem:[%s11] sm:$0x1]
  %v2803 = vld [vmem:[%s12] sm:$0x1]
  %v2804 = vsel %vm75, %v2800, 0.0
  %2805 = vadd.xlane.f32.xlu0 %v2804
  %v2806 = vpop.xlane.xlu0 %2805
  %v2807 = vsel %vm75, %v2801, 0.0
  %2808 = vadd.xlane.f32.xlu0 %v2807
  %v2809 = vpop.xlane.xlu0 %2808
  %v2810 = vmul.f32 %v2806, %v82
  %v2811 = vmul.f32 %v2809, %v82
  %v2812 = vsub.f32 %v2800, %v2810
  %v2813 = vsub.f32 %v2801, %v2811
  %v2814 = vmul.f32 %v2812, %v2812
  %v2815 = vmul.f32 %v2813, %v2813
  %v2816 = vsel %vm75, %v2814, 0.0
  %2817 = vadd.xlane.f32.xlu0 %v2816
  %v2818 = vpop.xlane.xlu0 %2817
  %v2819 = vsel %vm75, %v2815, 0.0
  %2820 = vadd.xlane.f32.xlu0 %v2819
  %v2821 = vpop.xlane.xlu0 %2820
  %v2822 = vmul.f32 %v2818, %v82
  %v2823 = vmul.f32 %v2821, %v82
  %v2824 = vadd.f32 %v2822, 1e-05
  %v2825 = vadd.f32 %v2823, 1e-05
  %v2826 = vrsqrt.pop %v2824
  %v2827 = vrsqrt.pop %v2825
  %v2828 = vmul.f32 %v2812, %v2826
  %v2829 = vmul.f32 %v2813, %v2827
  %v2831 = vlaneseq
  %v2832 = vshrl.u32 %v2831, 7
  %v2833 = vsub.s32 0, %v2832
  %v2834 = vrot.slane %v2802, %v2833
  %v2836 = vmul.f32 %v2828, %v2834
  %v2837 = vmul.f32 %v2829, %v2834
  %v2839 = vlaneseq
  %v2840 = vshrl.u32 %v2839, 7
  %v2841 = vsub.s32 0, %v2840
  %v2842 = vrot.slane %v2803, %v2841
  %v2844 = vadd.f32 %v2836, %v2842
  %v2845 = vadd.f32 %v2837, %v2842
  %v2846 = vld [vmem:[%s13] sm:$0xff]
  %v2847 = vld [vmem:[%s13 + $0x8] sm:$0xff]
  %v2848 = vld [vmem:[%s13 + $0x10] sm:$0xff]
  %v2849 = vld [vmem:[%s13 + $0x18] sm:$0xff]
  %v2850 = vld [vmem:[%s14] sm:$0x1]
  %v2852 = vlaneseq
  %v2853 = vshrl.u32 %v2852, 7
  %v2854 = vsub.s32 0, %v2853
  %v2855 = vrot.slane %v2850, %v2854
  %v2858 = vsel %vm75, %v2844, 0
  %v2861 = vsel %vm75, %v2845, 0
  %2863 = vmatprep.subr.mxu0 0.0
  %2864 = vmatpush1.msra.mxu0 %v2846
  %2865 = vmatprep.subr.mxu0 0.0
  %2866 = vmatpush1.msra.mxu0 %v2847
  %2867 = vmatprep.subr.mxu0 0.0
  %2868 = vmatpush1.msra.mxu0 %v2848
  %2869 = vmatprep.subr.mxu0 0.0
  %2870 = vmatpush1.msra.mxu0 %v2849
  %2871 = vmatprep.subr.mxu0 0.0
  %2872 = vmatpush1.msra.mxu0 0.0
  %2873 = vmatprep.subr.mxu0 0.0
  %2874 = vmatpush1.msra.mxu0 0.0
  %2875 = vmatprep.subr.mxu0 0.0
  %2876 = vmatpush1.msra.mxu0 0.0
  %2877 = vmatprep.subr.mxu0 0.0
  %2878 = vmatpush1.msra.mxu0 0.0
  %2879 = vmatprep.subr.mxu0 0.0
  %2880 = vmatpush1.msra.mxu0 0.0
  %2881 = vmatprep.subr.mxu0 0.0
  %2882 = vmatpush1.msra.mxu0 0.0
  %2883 = vmatprep.subr.mxu0 0.0
  %2884 = vmatpush1.msra.mxu0 0.0
  %2885 = vmatprep.subr.mxu0 0.0
  %2886 = vmatpush1.msra.mxu0 0.0
  %2887 = vmatprep.subr.mxu0 0.0
  %2888 = vmatpush1.msra.mxu0 0.0
  %2889 = vmatprep.subr.mxu0 0.0
  %2890 = vmatpush1.msra.mxu0 0.0
  %2891 = vmatprep.subr.mxu0 0.0
  %2892 = vmatpush1.msra.mxu0 0.0
  %2893 = vmatprep.subr.mxu0 0.0
  %2894 = vmatpush1.msra.mxu0 0.0
  %2895 = vmatprep.subr.mxu0 0.0
  %2896 = vmatpush1.msra.mxu0 0.0
  %2897 = vmatprep.subr.mxu0 0.0
  %2898 = vmatpush1.msra.mxu0 0.0
  %2899 = vmatprep.subr.mxu0 0.0
  %2900 = vmatpush1.msra.mxu0 0.0
  %2901 = vmatprep.subr.mxu0 0.0
  %2902 = vmatpush1.msra.mxu0 0.0
  %2903 = vmatprep.subr.mxu0 0.0
  %2904 = vmatpush1.msra.mxu0 0.0
  %2905 = vmatprep.subr.mxu0 0.0
  %2906 = vmatpush1.msra.mxu0 0.0
  %2907 = vmatprep.subr.mxu0 0.0
  %2908 = vmatpush1.msra.mxu0 0.0
  %2909 = vmatprep.subr.mxu0 0.0
  %2910 = vmatpush1.msra.mxu0 0.0
  %2911 = vmatprep.subr.mxu0 0.0
  %2912 = vmatpush1.msra.mxu0 0.0
  %2913 = vmatprep.subr.mxu0 0.0
  %2914 = vmatpush1.msra.mxu0 0.0
  %2915 = vmatprep.subr.mxu0 0.0
  %2916 = vmatpush1.msra.mxu0 0.0
  %2917 = vmatprep.subr.mxu0 0.0
  %2918 = vmatpush1.msra.mxu0 0.0
  %2919 = vmatprep.subr.mxu0 0.0
  %2920 = vmatpush1.msra.mxu0 0.0
  %2921 = vmatprep.subr.mxu0 0.0
  %2922 = vmatpush1.msra.mxu0 0.0
  %2923 = vmatprep.subr.mxu0 0.0
  %2924 = vmatpush1.msra.mxu0 0.0
  %2925 = vmatprep.subr.mxu0 0.0
  %2926 = vmatpush1.msra.mxu0 0.0
  %2927 = vmatprep.mubr.f32.mxu0 0.0
  %2928 = vmatmul.mubr.f32.gmra.mrb[0].mxu0 %v2858
  %v2929 = vpop.f32.mrb[0].mxu0
  %v2930 = vadd.f32 %v2855, %v2929
  %v2931 = vpop.f32.mrb[0].mxu0
  %2932 = vmatprep.mubr.f32.mxu0 0.0
  %2933 = vmatmul.mubr.f32.gmra.mrb[0].mxu0 %v2861
  %v2934 = vpop.f32.mrb[0].mxu0
  %v2935 = vadd.f32 %v2855, %v2934
  %v2936 = vpop.f32.mrb[0].mxu0
  %2937 = vdwg.mxu0
  %v2938 = vmul.f32 %v2930, 0.5
  %v2939 = vmul.f32 %v2935, 0.5
  %v2940 = vmul.f32 %v2930, 0.044715
  %v2941 = vmul.f32 %v2935, 0.044715
  %v2942 = vmul.f32 %v2940, %v2930
  %v2943 = vmul.f32 %v2941, %v2935
  %v2944 = vmul.f32 %v2942, %v2930
  %v2945 = vmul.f32 %v2943, %v2935
  %v2946 = vadd.f32 %v2930, %v2944
  %v2947 = vadd.f32 %v2935, %v2945
  %v2948 = vmul.f32 %v2946, 0.7978846
  %v2949 = vmul.f32 %v2947, 0.7978846
  %v2950 = vtanh.pop %v2948
  %v2951 = vtanh.pop %v2949
  %v2952 = vadd.f32 %v2950, 1.0
  %v2953 = vadd.f32 %v2951, 1.0
  %v2954 = vmul.f32 %v2938, %v2952
  %v2955 = vmul.f32 %v2939, %v2953
  %v2956 = vld [vmem:[%s15] sm:$0xff]
  %v2957 = vld [vmem:[%s15 + $0x8] sm:$0xff]
  %v2958 = vld [vmem:[%s15 + $0x10] sm:$0xff]
  %v2959 = vld [vmem:[%s15 + $0x18] sm:$0xff]
  %v2960 = vld [vmem:[%s15 + $0x20] sm:$0xff]
  %v2961 = vld [vmem:[%s15 + $0x28] sm:$0xff]
  %v2962 = vld [vmem:[%s15 + $0x30] sm:$0xff]
  %v2963 = vld [vmem:[%s15 + $0x38] sm:$0xff]
  %v2964 = vld [vmem:[%s15 + $0x40] sm:$0xff]
  %v2965 = vld [vmem:[%s15 + $0x48] sm:$0xff]
  %v2966 = vld [vmem:[%s15 + $0x50] sm:$0xff]
  %v2967 = vld [vmem:[%s15 + $0x58] sm:$0xff]
  %v2968 = vld [vmem:[%s15 + $0x60] sm:$0xff]
  %v2969 = vld [vmem:[%s15 + $0x68] sm:$0xff]
  %v2970 = vld [vmem:[%s15 + $0x70] sm:$0xff]
  %v2971 = vld [vmem:[%s15 + $0x78] sm:$0xff]
  %v2972 = vld [vmem:[%s16] sm:$0x1]
  %v2974 = vlaneseq
  %v2975 = vshrl.u32 %v2974, 7
  %v2976 = vsub.s32 0, %v2975
  %v2977 = vrot.slane %v2972, %v2976
  %2979 = vmatprep.subr.mxu0 0.0
  %2980 = vmatpush1.msra.mxu0 %v2956
  %2981 = vmatprep.subr.mxu0 0.0
  %2982 = vmatpush1.msra.mxu0 %v2957
  %2983 = vmatprep.subr.mxu0 0.0
  %2984 = vmatpush1.msra.mxu0 %v2958
  %2985 = vmatprep.subr.mxu0 0.0
  %2986 = vmatpush1.msra.mxu0 %v2959
  %2987 = vmatprep.subr.mxu0 0.0
  %2988 = vmatpush1.msra.mxu0 %v2960
  %2989 = vmatprep.subr.mxu0 0.0
  %2990 = vmatpush1.msra.mxu0 %v2961
  %2991 = vmatprep.subr.mxu0 0.0
  %2992 = vmatpush1.msra.mxu0 %v2962
  %2993 = vmatprep.subr.mxu0 0.0
  %2994 = vmatpush1.msra.mxu0 %v2963
  %2995 = vmatprep.subr.mxu0 0.0
  %2996 = vmatpush1.msra.mxu0 %v2964
  %2997 = vmatprep.subr.mxu0 0.0
  %2998 = vmatpush1.msra.mxu0 %v2965
  %2999 = vmatprep.subr.mxu0 0.0
  %3000 = vmatpush1.msra.mxu0 %v2966
  %3001 = vmatprep.subr.mxu0 0.0
  %3002 = vmatpush1.msra.mxu0 %v2967
  %3003 = vmatprep.subr.mxu0 0.0
  %3004 = vmatpush1.msra.mxu0 %v2968
  %3005 = vmatprep.subr.mxu0 0.0
  %3006 = vmatpush1.msra.mxu0 %v2969
  %3007 = vmatprep.subr.mxu0 0.0
  %3008 = vmatpush1.msra.mxu0 %v2970
  %3009 = vmatprep.subr.mxu0 0.0
  %3010 = vmatpush1.msra.mxu0 %v2971
  %3011 = vmatprep.subr.mxu0 0.0
  %3012 = vmatpush1.msra.mxu0 0.0
  %3013 = vmatprep.subr.mxu0 0.0
  %3014 = vmatpush1.msra.mxu0 0.0
  %3015 = vmatprep.subr.mxu0 0.0
  %3016 = vmatpush1.msra.mxu0 0.0
  %3017 = vmatprep.subr.mxu0 0.0
  %3018 = vmatpush1.msra.mxu0 0.0
  %3019 = vmatprep.subr.mxu0 0.0
  %3020 = vmatpush1.msra.mxu0 0.0
  %3021 = vmatprep.subr.mxu0 0.0
  %3022 = vmatpush1.msra.mxu0 0.0
  %3023 = vmatprep.subr.mxu0 0.0
  %3024 = vmatpush1.msra.mxu0 0.0
  %3025 = vmatprep.subr.mxu0 0.0
  %3026 = vmatpush1.msra.mxu0 0.0
  %3027 = vmatprep.subr.mxu0 0.0
  %3028 = vmatpush1.msra.mxu0 0.0
  %3029 = vmatprep.subr.mxu0 0.0
  %3030 = vmatpush1.msra.mxu0 0.0
  %3031 = vmatprep.subr.mxu0 0.0
  %3032 = vmatpush1.msra.mxu0 0.0
  %3033 = vmatprep.subr.mxu0 0.0
  %3034 = vmatpush1.msra.mxu0 0.0
  %3035 = vmatprep.subr.mxu0 0.0
  %3036 = vmatpush1.msra.mxu0 0.0
  %3037 = vmatprep.subr.mxu0 0.0
  %3038 = vmatpush1.msra.mxu0 0.0
  %3039 = vmatprep.subr.mxu0 0.0
  %3040 = vmatpush1.msra.mxu0 0.0
  %3041 = vmatprep.subr.mxu0 0.0
  %3042 = vmatpush1.msra.mxu0 0.0
  %3043 = vmatprep.mubr.f32.mxu0 0.0
  %3044 = vmatmul.mubr.f32.gmra.mrb[0].mxu0 %v2954
  %v3045 = vpop.f32.mrb[0].mxu0
  %v3046 = vadd.f32 %v2977, %v3045
  %v3047 = vpop.f32.mrb[0].mxu0
  %3048 = vmatprep.mubr.f32.mxu0 0.0
  %3049 = vmatmul.mubr.f32.gmra.mrb[0].mxu0 %v2955
  %v3050 = vpop.f32.mrb[0].mxu0
  %v3051 = vadd.f32 %v2977, %v3050
  %v3052 = vpop.f32.mrb[0].mxu0
  %3053 = vdwg.mxu0
  %v3054 = vadd.f32 %v2800, %v3046
  %v3055 = vadd.f32 %v2801, %v3051
  %s3056 = scalar_lea.vmem %s1, 1
  %v3057 = vld [vmem:[%s3056] sm:$0x1]
  %s3058 = scalar_lea.vmem %s2, 1
  %v3059 = vld [vmem:[%s3058] sm:$0x1]
  %v3060 = vsel %vm75, %v3054, 0.0
  %3061 = vadd.xlane.f32.xlu0 %v3060
  %v3062 = vpop.xlane.xlu0 %3061
  %v3063 = vsel %vm75, %v3055, 0.0
  %3064 = vadd.xlane.f32.xlu0 %v3063
  %v3065 = vpop.xlane.xlu0 %3064
  %v3066 = vmul.f32 %v3062, %v82
  %v3067 = vmul.f32 %v3065, %v82
  %v3068 = vsub.f32 %v3054, %v3066
  %v3069 = vsub.f32 %v3055, %v3067
  %v3070 = vmul.f32 %v3068, %v3068
  %v3071 = vmul.f32 %v3069, %v3069
  %v3072 = vsel %vm75, %v3070, 0.0
  %3073 = vadd.xlane.f32.xlu0 %v3072
  %v3074 = vpop.xlane.xlu0 %3073
  %v3075 = vsel %vm75, %v3071, 0.0
  %3076 = vadd.xlane.f32.xlu0 %v3075
  %v3077 = vpop.xlane.xlu0 %3076
  %v3078 = vmul.f32 %v3074, %v82
  %v3079 = vmul.f32 %v3077, %v82
  %v3080 = vadd.f32 %v3078, 1e-05
  %v3081 = vadd.f32 %v3079, 1e-05
  %v3082 = vrsqrt.pop %v3080
  %v3083 = vrsqrt.pop %v3081
  %v3084 = vmul.f32 %v3068, %v3082
  %v3085 = vmul.f32 %v3069, %v3083
  %v3087 = vlaneseq
  %v3088 = vshrl.u32 %v3087, 7
  %v3089 = vsub.s32 0, %v3088
  %v3090 = vrot.slane %v3057, %v3089
  %v3092 = vmul.f32 %v3084, %v3090
  %v3093 = vmul.f32 %v3085, %v3090
  %v3095 = vlaneseq
  %v3096 = vshrl.u32 %v3095, 7
  %v3097 = vsub.s32 0, %v3096
  %v3098 = vrot.slane %v3059, %v3097
  %v3100 = vadd.f32 %v3092, %v3098
  %v3101 = vadd.f32 %v3093, %v3098
  %s3102 = scalar_lea.vmem %s3, 128
  %v3103 = vld [vmem:[%s3102] sm:$0xff]
  %v3104 = vld [vmem:[%s3102 + $0x8] sm:$0xff]
  %v3105 = vld [vmem:[%s3102 + $0x10] sm:$0xff]
  %v3106 = vld [vmem:[%s3102 + $0x18] sm:$0xff]
  %s3107 = scalar_lea.vmem %s6, 4
  %v3108 = vld [vmem:[%s3107] sm:$0x1]
  %v3110 = vlaneseq
  %v3111 = vshrl.u32 %v3110, 7
  %v3112 = vsub.s32 0, %v3111
  %v3113 = vrot.slane %v3108, %v3112
  %v3116 = vsel %vm75, %v3100, 0
  %v3119 = vsel %vm75, %v3101, 0
  %3121 = vmatprep.subr.mxu0 0.0
  %3122 = vmatpush1.msra.mxu0 %v3103
  %3123 = vmatprep.subr.mxu0 0.0
  %3124 = vmatpush1.msra.mxu0 %v3104
  %3125 = vmatprep.subr.mxu0 0.0
  %3126 = vmatpush1.msra.mxu0 %v3105
  %3127 = vmatprep.subr.mxu0 0.0
  %3128 = vmatpush1.msra.mxu0 %v3106
  %3129 = vmatprep.subr.mxu0 0.0
  %3130 = vmatpush1.msra.mxu0 0.0
  %3131 = vmatprep.subr.mxu0 0.0
  %3132 = vmatpush1.msra.mxu0 0.0
  %3133 = vmatprep.subr.mxu0 0.0
  %3134 = vmatpush1.msra.mxu0 0.0
  %3135 = vmatprep.subr.mxu0 0.0
  %3136 = vmatpush1.msra.mxu0 0.0
  %3137 = vmatprep.subr.mxu0 0.0
  %3138 = vmatpush1.msra.mxu0 0.0
  %3139 = vmatprep.subr.mxu0 0.0
  %3140 = vmatpush1.msra.mxu0 0.0
  %3141 = vmatprep.subr.mxu0 0.0
  %3142 = vmatpush1.msra.mxu0 0.0
  %3143 = vmatprep.subr.mxu0 0.0
  %3144 = vmatpush1.msra.mxu0 0.0
  %3145 = vmatprep.subr.mxu0 0.0
  %3146 = vmatpush1.msra.mxu0 0.0
  %3147 = vmatprep.subr.mxu0 0.0
  %3148 = vmatpush1.msra.mxu0 0.0
  %3149 = vmatprep.subr.mxu0 0.0
  %3150 = vmatpush1.msra.mxu0 0.0
  %3151 = vmatprep.subr.mxu0 0.0
  %3152 = vmatpush1.msra.mxu0 0.0
  %3153 = vmatprep.subr.mxu0 0.0
  %3154 = vmatpush1.msra.mxu0 0.0
  %3155 = vmatprep.subr.mxu0 0.0
  %3156 = vmatpush1.msra.mxu0 0.0
  %3157 = vmatprep.subr.mxu0 0.0
  %3158 = vmatpush1.msra.mxu0 0.0
  %3159 = vmatprep.subr.mxu0 0.0
  %3160 = vmatpush1.msra.mxu0 0.0
  %3161 = vmatprep.subr.mxu0 0.0
  %3162 = vmatpush1.msra.mxu0 0.0
  %3163 = vmatprep.subr.mxu0 0.0
  %3164 = vmatpush1.msra.mxu0 0.0
  %3165 = vmatprep.subr.mxu0 0.0
  %3166 = vmatpush1.msra.mxu0 0.0
  %3167 = vmatprep.subr.mxu0 0.0
  %3168 = vmatpush1.msra.mxu0 0.0
  %3169 = vmatprep.subr.mxu0 0.0
  %3170 = vmatpush1.msra.mxu0 0.0
  %3171 = vmatprep.subr.mxu0 0.0
  %3172 = vmatpush1.msra.mxu0 0.0
  %3173 = vmatprep.subr.mxu0 0.0
  %3174 = vmatpush1.msra.mxu0 0.0
  %3175 = vmatprep.subr.mxu0 0.0
  %3176 = vmatpush1.msra.mxu0 0.0
  %3177 = vmatprep.subr.mxu0 0.0
  %3178 = vmatpush1.msra.mxu0 0.0
  %3179 = vmatprep.subr.mxu0 0.0
  %3180 = vmatpush1.msra.mxu0 0.0
  %3181 = vmatprep.subr.mxu0 0.0
  %3182 = vmatpush1.msra.mxu0 0.0
  %3183 = vmatprep.subr.mxu0 0.0
  %3184 = vmatpush1.msra.mxu0 0.0
  %3185 = vmatprep.mubr.f32.mxu0 0.0
  %3186 = vmatmul.mubr.f32.gmra.mrb[0].mxu0 %v3116
  %v3187 = vpop.f32.mrb[0].mxu0
  %v3188 = vadd.f32 %v3113, %v3187
  %v3189 = vpop.f32.mrb[0].mxu0
  %3190 = vmatprep.mubr.f32.mxu0 0.0
  %3191 = vmatmul.mubr.f32.gmra.mrb[0].mxu0 %v3119
  %v3192 = vpop.f32.mrb[0].mxu0
  %v3193 = vadd.f32 %v3113, %v3192
  %v3194 = vpop.f32.mrb[0].mxu0
  %3195 = vdwg.mxu0
  %s3196 = scalar_lea.vmem %s4, 128
  %v3197 = vld [vmem:[%s3196] sm:$0xff]
  %v3198 = vld [vmem:[%s3196 + $0x8] sm:$0xff]
  %v3199 = vld [vmem:[%s3196 + $0x10] sm:$0xff]
  %v3200 = vld [vmem:[%s3196 + $0x18] sm:$0xff]
  %s3201 = scalar_lea.vmem %s7, 4
  %v3202 = vld [vmem:[%s3201] sm:$0x1]
  %v3204 = vlaneseq
  %v3205 = vshrl.u32 %v3204, 7
  %v3206 = vsub.s32 0, %v3205
  %v3207 = vrot.slane %v3202, %v3206
  %3209 = vmatprep.subr.mxu0 0.0
  %3210 = vmatpush1.msra.mxu0 %v3197
  %3211 = vmatprep.subr.mxu0 0.0
  %3212 = vmatpush1.msra.mxu0 %v3198
  %3213 = vmatprep.subr.mxu0 0.0
  %3214 = vmatpush1.msra.mxu0 %v3199
  %3215 = vmatprep.subr.mxu0 0.0
  %3216 = vmatpush1.msra.mxu0 %v3200
  %3217 = vmatprep.subr.mxu0 0.0
  %3218 = vmatpush1.msra.mxu0 0.0
  %3219 = vmatprep.subr.mxu0 0.0
  %3220 = vmatpush1.msra.mxu0 0.0
  %3221 = vmatprep.subr.mxu0 0.0
  %3222 = vmatpush1.msra.mxu0 0.0
  %3223 = vmatprep.subr.mxu0 0.0
  %3224 = vmatpush1.msra.mxu0 0.0
  %3225 = vmatprep.subr.mxu0 0.0
  %3226 = vmatpush1.msra.mxu0 0.0
  %3227 = vmatprep.subr.mxu0 0.0
  %3228 = vmatpush1.msra.mxu0 0.0
  %3229 = vmatprep.subr.mxu0 0.0
  %3230 = vmatpush1.msra.mxu0 0.0
  %3231 = vmatprep.subr.mxu0 0.0
  %3232 = vmatpush1.msra.mxu0 0.0
  %3233 = vmatprep.subr.mxu0 0.0
  %3234 = vmatpush1.msra.mxu0 0.0
  %3235 = vmatprep.subr.mxu0 0.0
  %3236 = vmatpush1.msra.mxu0 0.0
  %3237 = vmatprep.subr.mxu0 0.0
  %3238 = vmatpush1.msra.mxu0 0.0
  %3239 = vmatprep.subr.mxu0 0.0
  %3240 = vmatpush1.msra.mxu0 0.0
  %3241 = vmatprep.subr.mxu0 0.0
  %3242 = vmatpush1.msra.mxu0 0.0
  %3243 = vmatprep.subr.mxu0 0.0
  %3244 = vmatpush1.msra.mxu0 0.0
  %3245 = vmatprep.subr.mxu0 0.0
  %3246 = vmatpush1.msra.mxu0 0.0
  %3247 = vmatprep.subr.mxu0 0.0
  %3248 = vmatpush1.msra.mxu0 0.0
  %3249 = vmatprep.subr.mxu0 0.0
  %3250 = vmatpush1.msra.mxu0 0.0
  %3251 = vmatprep.subr.mxu0 0.0
  %3252 = vmatpush1.msra.mxu0 0.0
  %3253 = vmatprep.subr.mxu0 0.0
  %3254 = vmatpush1.msra.mxu0 0.0
  %3255 = vmatprep.subr.mxu0 0.0
  %3256 = vmatpush1.msra.mxu0 0.0
  %3257 = vmatprep.subr.mxu0 0.0
  %3258 = vmatpush1.msra.mxu0 0.0
  %3259 = vmatprep.subr.mxu0 0.0
  %3260 = vmatpush1.msra.mxu0 0.0
  %3261 = vmatprep.subr.mxu0 0.0
  %3262 = vmatpush1.msra.mxu0 0.0
  %3263 = vmatprep.subr.mxu0 0.0
  %3264 = vmatpush1.msra.mxu0 0.0
  %3265 = vmatprep.subr.mxu0 0.0
  %3266 = vmatpush1.msra.mxu0 0.0
  %3267 = vmatprep.subr.mxu0 0.0
  %3268 = vmatpush1.msra.mxu0 0.0
  %3269 = vmatprep.subr.mxu0 0.0
  %3270 = vmatpush1.msra.mxu0 0.0
  %3271 = vmatprep.subr.mxu0 0.0
  %3272 = vmatpush1.msra.mxu0 0.0
  %3273 = vmatprep.mubr.f32.mxu0 0.0
  %3274 = vmatmul.mubr.f32.gmra.mrb[0].mxu0 %v3116
  %v3275 = vpop.f32.mrb[0].mxu0
  %v3276 = vadd.f32 %v3207, %v3275
  %v3277 = vpop.f32.mrb[0].mxu0
  %3278 = vmatprep.mubr.f32.mxu0 0.0
  %3279 = vmatmul.mubr.f32.gmra.mrb[0].mxu0 %v3119
  %v3280 = vpop.f32.mrb[0].mxu0
  %v3281 = vadd.f32 %v3207, %v3280
  %v3282 = vpop.f32.mrb[0].mxu0
  %3283 = vdwg.mxu0
  %s3284 = scalar_lea.vmem %s5, 128
  %v3285 = vld [vmem:[%s3284] sm:$0xff]
  %v3286 = vld [vmem:[%s3284 + $0x8] sm:$0xff]
  %v3287 = vld [vmem:[%s3284 + $0x10] sm:$0xff]
  %v3288 = vld [vmem:[%s3284 + $0x18] sm:$0xff]
  %s3289 = scalar_lea.vmem %s8, 4
  %v3290 = vld [vmem:[%s3289] sm:$0x1]
  %v3292 = vlaneseq
  %v3293 = vshrl.u32 %v3292, 7
  %v3294 = vsub.s32 0, %v3293
  %v3295 = vrot.slane %v3290, %v3294
  %3297 = vmatprep.subr.mxu0 0.0
  %3298 = vmatpush1.msra.mxu0 %v3285
  %3299 = vmatprep.subr.mxu0 0.0
  %3300 = vmatpush1.msra.mxu0 %v3286
  %3301 = vmatprep.subr.mxu0 0.0
  %3302 = vmatpush1.msra.mxu0 %v3287
  %3303 = vmatprep.subr.mxu0 0.0
  %3304 = vmatpush1.msra.mxu0 %v3288
  %3305 = vmatprep.subr.mxu0 0.0
  %3306 = vmatpush1.msra.mxu0 0.0
  %3307 = vmatprep.subr.mxu0 0.0
  %3308 = vmatpush1.msra.mxu0 0.0
  %3309 = vmatprep.subr.mxu0 0.0
  %3310 = vmatpush1.msra.mxu0 0.0
  %3311 = vmatprep.subr.mxu0 0.0
  %3312 = vmatpush1.msra.mxu0 0.0
  %3313 = vmatprep.subr.mxu0 0.0
  %3314 = vmatpush1.msra.mxu0 0.0
  %3315 = vmatprep.subr.mxu0 0.0
  %3316 = vmatpush1.msra.mxu0 0.0
  %3317 = vmatprep.subr.mxu0 0.0
  %3318 = vmatpush1.msra.mxu0 0.0
  %3319 = vmatprep.subr.mxu0 0.0
  %3320 = vmatpush1.msra.mxu0 0.0
  %3321 = vmatprep.subr.mxu0 0.0
  %3322 = vmatpush1.msra.mxu0 0.0
  %3323 = vmatprep.subr.mxu0 0.0
  %3324 = vmatpush1.msra.mxu0 0.0
  %3325 = vmatprep.subr.mxu0 0.0
  %3326 = vmatpush1.msra.mxu0 0.0
  %3327 = vmatprep.subr.mxu0 0.0
  %3328 = vmatpush1.msra.mxu0 0.0
  %3329 = vmatprep.subr.mxu0 0.0
  %3330 = vmatpush1.msra.mxu0 0.0
  %3331 = vmatprep.subr.mxu0 0.0
  %3332 = vmatpush1.msra.mxu0 0.0
  %3333 = vmatprep.subr.mxu0 0.0
  %3334 = vmatpush1.msra.mxu0 0.0
  %3335 = vmatprep.subr.mxu0 0.0
  %3336 = vmatpush1.msra.mxu0 0.0
  %3337 = vmatprep.subr.mxu0 0.0
  %3338 = vmatpush1.msra.mxu0 0.0
  %3339 = vmatprep.subr.mxu0 0.0
  %3340 = vmatpush1.msra.mxu0 0.0
  %3341 = vmatprep.subr.mxu0 0.0
  %3342 = vmatpush1.msra.mxu0 0.0
  %3343 = vmatprep.subr.mxu0 0.0
  %3344 = vmatpush1.msra.mxu0 0.0
  %3345 = vmatprep.subr.mxu0 0.0
  %3346 = vmatpush1.msra.mxu0 0.0
  %3347 = vmatprep.subr.mxu0 0.0
  %3348 = vmatpush1.msra.mxu0 0.0
  %3349 = vmatprep.subr.mxu0 0.0
  %3350 = vmatpush1.msra.mxu0 0.0
  %3351 = vmatprep.subr.mxu0 0.0
  %3352 = vmatpush1.msra.mxu0 0.0
  %3353 = vmatprep.subr.mxu0 0.0
  %3354 = vmatpush1.msra.mxu0 0.0
  %3355 = vmatprep.subr.mxu0 0.0
  %3356 = vmatpush1.msra.mxu0 0.0
  %3357 = vmatprep.subr.mxu0 0.0
  %3358 = vmatpush1.msra.mxu0 0.0
  %3359 = vmatprep.subr.mxu0 0.0
  %3360 = vmatpush1.msra.mxu0 0.0
  %3361 = vmatprep.mubr.f32.mxu0 0.0
  %3362 = vmatmul.mubr.f32.gmra.mrb[0].mxu0 %v3116
  %v3363 = vpop.f32.mrb[0].mxu0
  %v3364 = vadd.f32 %v3295, %v3363
  %v3365 = vpop.f32.mrb[0].mxu0
  %3366 = vmatprep.mubr.f32.mxu0 0.0
  %3367 = vmatmul.mubr.f32.gmra.mrb[0].mxu0 %v3119
  %v3368 = vpop.f32.mrb[0].mxu0
  %v3369 = vadd.f32 %v3295, %v3368
  %v3370 = vpop.f32.mrb[0].mxu0
  %3371 = vdwg.mxu0
  %v3373 = vsel %vm383, %v3188, 0
  %v3376 = vsel %vm383, %v3276, 0
  %3378 = vmatprep.subr.mxu0 0.0
  %3379 = vmatpush1.xpose.msra.mxu0 %v3376
  %3380 = vmatprep.subr.mxu0 0.0
  %3381 = vmatpush1.xpose.msra.mxu0 0.0
  %3382 = vmatprep.subr.mxu0 0.0
  %3383 = vmatpush1.xpose.msra.mxu0 0.0
  %3384 = vmatprep.subr.mxu0 0.0
  %3385 = vmatpush1.xpose.msra.mxu0 0.0
  %3386 = vmatprep.subr.mxu0 0.0
  %3387 = vmatpush1.xpose.msra.mxu0 0.0
  %3388 = vmatprep.subr.mxu0 0.0
  %3389 = vmatpush1.xpose.msra.mxu0 0.0
  %3390 = vmatprep.subr.mxu0 0.0
  %3391 = vmatpush1.xpose.msra.mxu0 0.0
  %3392 = vmatprep.subr.mxu0 0.0
  %3393 = vmatpush1.xpose.msra.mxu0 0.0
  %3394 = vmatprep.subr.mxu0 0.0
  %3395 = vmatpush1.xpose.msra.mxu0 0.0
  %3396 = vmatprep.subr.mxu0 0.0
  %3397 = vmatpush1.xpose.msra.mxu0 0.0
  %3398 = vmatprep.subr.mxu0 0.0
  %3399 = vmatpush1.xpose.msra.mxu0 0.0
  %3400 = vmatprep.subr.mxu0 0.0
  %3401 = vmatpush1.xpose.msra.mxu0 0.0
  %3402 = vmatprep.subr.mxu0 0.0
  %3403 = vmatpush1.xpose.msra.mxu0 0.0
  %3404 = vmatprep.subr.mxu0 0.0
  %3405 = vmatpush1.xpose.msra.mxu0 0.0
  %3406 = vmatprep.subr.mxu0 0.0
  %3407 = vmatpush1.xpose.msra.mxu0 0.0
  %3408 = vmatprep.subr.mxu0 0.0
  %3409 = vmatpush1.xpose.msra.mxu0 0.0
  %3410 = vmatprep.subr.mxu0 0.0
  %3411 = vmatpush1.xpose.msra.mxu0 0.0
  %3412 = vmatprep.subr.mxu0 0.0
  %3413 = vmatpush1.xpose.msra.mxu0 0.0
  %3414 = vmatprep.subr.mxu0 0.0
  %3415 = vmatpush1.xpose.msra.mxu0 0.0
  %3416 = vmatprep.subr.mxu0 0.0
  %3417 = vmatpush1.xpose.msra.mxu0 0.0
  %3418 = vmatprep.subr.mxu0 0.0
  %3419 = vmatpush1.xpose.msra.mxu0 0.0
  %3420 = vmatprep.subr.mxu0 0.0
  %3421 = vmatpush1.xpose.msra.mxu0 0.0
  %3422 = vmatprep.subr.mxu0 0.0
  %3423 = vmatpush1.xpose.msra.mxu0 0.0
  %3424 = vmatprep.subr.mxu0 0.0
  %3425 = vmatpush1.xpose.msra.mxu0 0.0
  %3426 = vmatprep.subr.mxu0 0.0
  %3427 = vmatpush1.xpose.msra.mxu0 0.0
  %3428 = vmatprep.subr.mxu0 0.0
  %3429 = vmatpush1.xpose.msra.mxu0 0.0
  %3430 = vmatprep.subr.mxu0 0.0
  %3431 = vmatpush1.xpose.msra.mxu0 0.0
  %3432 = vmatprep.subr.mxu0 0.0
  %3433 = vmatpush1.xpose.msra.mxu0 0.0
  %3434 = vmatprep.subr.mxu0 0.0
  %3435 = vmatpush1.xpose.msra.mxu0 0.0
  %3436 = vmatprep.subr.mxu0 0.0
  %3437 = vmatpush1.xpose.msra.mxu0 0.0
  %3438 = vmatprep.subr.mxu0 0.0
  %3439 = vmatpush1.xpose.msra.mxu0 0.0
  %3440 = vmatprep.subr.mxu0 0.0
  %3441 = vmatpush1.xpose.msra.mxu0 0.0
  %3442 = vmatprep.mubr.f32.mxu0 0.0
  %3443 = vmatmul.mubr.f32.gmra.mrb[0].mxu0 %v3373
  %v3444 = vpop.f32.mrb[0].mxu0
  %v3445 = vadd.f32 %v72, %v3444
  %v3446 = vpop.f32.mrb[0].mxu0
  %3447 = vdwg.mxu0
  %v3449 = vsel %vm383, %v3193, 0
  %v3452 = vsel %vm383, %v3281, 0
  %3454 = vmatprep.subr.mxu0 0.0
  %3455 = vmatpush1.xpose.msra.mxu0 %v3452
  %3456 = vmatprep.subr.mxu0 0.0
  %3457 = vmatpush1.xpose.msra.mxu0 0.0
  %3458 = vmatprep.subr.mxu0 0.0
  %3459 = vmatpush1.xpose.msra.mxu0 0.0
  %3460 = vmatprep.subr.mxu0 0.0
  %3461 = vmatpush1.xpose.msra.mxu0 0.0
  %3462 = vmatprep.subr.mxu0 0.0
  %3463 = vmatpush1.xpose.msra.mxu0 0.0
  %3464 = vmatprep.subr.mxu0 0.0
  %3465 = vmatpush1.xpose.msra.mxu0 0.0
  %3466 = vmatprep.subr.mxu0 0.0
  %3467 = vmatpush1.xpose.msra.mxu0 0.0
  %3468 = vmatprep.subr.mxu0 0.0
  %3469 = vmatpush1.xpose.msra.mxu0 0.0
  %3470 = vmatprep.subr.mxu0 0.0
  %3471 = vmatpush1.xpose.msra.mxu0 0.0
  %3472 = vmatprep.subr.mxu0 0.0
  %3473 = vmatpush1.xpose.msra.mxu0 0.0
  %3474 = vmatprep.subr.mxu0 0.0
  %3475 = vmatpush1.xpose.msra.mxu0 0.0
  %3476 = vmatprep.subr.mxu0 0.0
  %3477 = vmatpush1.xpose.msra.mxu0 0.0
  %3478 = vmatprep.subr.mxu0 0.0
  %3479 = vmatpush1.xpose.msra.mxu0 0.0
  %3480 = vmatprep.subr.mxu0 0.0
  %3481 = vmatpush1.xpose.msra.mxu0 0.0
  %3482 = vmatprep.subr.mxu0 0.0
  %3483 = vmatpush1.xpose.msra.mxu0 0.0
  %3484 = vmatprep.subr.mxu0 0.0
  %3485 = vmatpush1.xpose.msra.mxu0 0.0
  %3486 = vmatprep.subr.mxu0 0.0
  %3487 = vmatpush1.xpose.msra.mxu0 0.0
  %3488 = vmatprep.subr.mxu0 0.0
  %3489 = vmatpush1.xpose.msra.mxu0 0.0
  %3490 = vmatprep.subr.mxu0 0.0
  %3491 = vmatpush1.xpose.msra.mxu0 0.0
  %3492 = vmatprep.subr.mxu0 0.0
  %3493 = vmatpush1.xpose.msra.mxu0 0.0
  %3494 = vmatprep.subr.mxu0 0.0
  %3495 = vmatpush1.xpose.msra.mxu0 0.0
  %3496 = vmatprep.subr.mxu0 0.0
  %3497 = vmatpush1.xpose.msra.mxu0 0.0
  %3498 = vmatprep.subr.mxu0 0.0
  %3499 = vmatpush1.xpose.msra.mxu0 0.0
  %3500 = vmatprep.subr.mxu0 0.0
  %3501 = vmatpush1.xpose.msra.mxu0 0.0
  %3502 = vmatprep.subr.mxu0 0.0
  %3503 = vmatpush1.xpose.msra.mxu0 0.0
  %3504 = vmatprep.subr.mxu0 0.0
  %3505 = vmatpush1.xpose.msra.mxu0 0.0
  %3506 = vmatprep.subr.mxu0 0.0
  %3507 = vmatpush1.xpose.msra.mxu0 0.0
  %3508 = vmatprep.subr.mxu0 0.0
  %3509 = vmatpush1.xpose.msra.mxu0 0.0
  %3510 = vmatprep.subr.mxu0 0.0
  %3511 = vmatpush1.xpose.msra.mxu0 0.0
  %3512 = vmatprep.subr.mxu0 0.0
  %3513 = vmatpush1.xpose.msra.mxu0 0.0
  %3514 = vmatprep.subr.mxu0 0.0
  %3515 = vmatpush1.xpose.msra.mxu0 0.0
  %3516 = vmatprep.subr.mxu0 0.0
  %3517 = vmatpush1.xpose.msra.mxu0 0.0
  %3518 = vmatprep.mubr.f32.mxu0 0.0
  %3519 = vmatmul.mubr.f32.gmra.mrb[0].mxu0 %v3449
  %v3520 = vpop.f32.mrb[0].mxu0
  %v3521 = vadd.f32 %v72, %v3520
  %v3522 = vpop.f32.mrb[0].mxu0
  %3523 = vdwg.mxu0
  %v3524 = vsel %vm383, %v3445, -inf
  %3525 = vmax.xlane.f32.xlu0 %v3524
  %v3526 = vpop.xlane.xlu0 %3525
  %v3527 = vsel %vm383, %v3521, -inf
  %3528 = vmax.xlane.f32.xlu0 %v3527
  %v3529 = vpop.xlane.xlu0 %3528
  %v3530 = vsub.f32 %v3445, %v3526
  %v3531 = vsub.f32 %v3521, %v3529
  %v3532 = vmul.f32 %v3530, 1.442695
  %v3533 = vpow.pop %v3532
  %v3534 = vmul.f32 %v3531, 1.442695
  %v3535 = vpow.pop %v3534
  %v3536 = vsel %vm383, %v3533, 0.0
  %3537 = vadd.xlane.f32.xlu0 %v3536
  %v3538 = vpop.xlane.xlu0 %3537
  %v3539 = vsel %vm383, %v3535, 0.0
  %3540 = vadd.xlane.f32.xlu0 %v3539
  %v3541 = vpop.xlane.xlu0 %3540
  %v3542 = vrcp.pop %v3538
  %v3543 = vmul.f32 %v3533, %v3542
  %v3544 = vrcp.pop %v3541
  %v3545 = vmul.f32 %v3535, %v3544
  %v3547 = vsel %vm383, %v3543, 0
  %3549 = vmatprep.subr.mxu0 0.0
  %3550 = vmatpush1.msra.mxu0 %v3364
  %3551 = vmatprep.subr.mxu0 0.0
  %3552 = vmatpush1.msra.mxu0 0.0
  %3553 = vmatprep.subr.mxu0 0.0
  %3554 = vmatpush1.msra.mxu0 0.0
  %3555 = vmatprep.subr.mxu0 0.0
  %3556 = vmatpush1.msra.mxu0 0.0
  %3557 = vmatprep.subr.mxu0 0.0
  %3558 = vmatpush1.msra.mxu0 0.0
  %3559 = vmatprep.subr.mxu0 0.0
  %3560 = vmatpush1.msra.mxu0 0.0
  %3561 = vmatprep.subr.mxu0 0.0
  %3562 = vmatpush1.msra.mxu0 0.0
  %3563 = vmatprep.subr.mxu0 0.0
  %3564 = vmatpush1.msra.mxu0 0.0
  %3565 = vmatprep.subr.mxu0 0.0
  %3566 = vmatpush1.msra.mxu0 0.0
  %3567 = vmatprep.subr.mxu0 0.0
  %3568 = vmatpush1.msra.mxu0 0.0
  %3569 = vmatprep.subr.mxu0 0.0
  %3570 = vmatpush1.msra.mxu0 0.0
  %3571 = vmatprep.subr.mxu0 0.0
  %3572 = vmatpush1.msra.mxu0 0.0
  %3573 = vmatprep.subr.mxu0 0.0
  %3574 = vmatpush1.msra.mxu0 0.0
  %3575 = vmatprep.subr.mxu0 0.0
  %3576 = vmatpush1.msra.mxu0 0.0
  %3577 = vmatprep.subr.mxu0 0.0
  %3578 = vmatpush1.msra.mxu0 0.0
  %3579 = vmatprep.subr.mxu0 0.0
  %3580 = vmatpush1.msra.mxu0 0.0
  %3581 = vmatprep.subr.mxu0 0.0
  %3582 = vmatpush1.msra.mxu0 0.0
  %3583 = vmatprep.subr.mxu0 0.0
  %3584 = vmatpush1.msra.mxu0 0.0
  %3585 = vmatprep.subr.mxu0 0.0
  %3586 = vmatpush1.msra.mxu0 0.0
  %3587 = vmatprep.subr.mxu0 0.0
  %3588 = vmatpush1.msra.mxu0 0.0
  %3589 = vmatprep.subr.mxu0 0.0
  %3590 = vmatpush1.msra.mxu0 0.0
  %3591 = vmatprep.subr.mxu0 0.0
  %3592 = vmatpush1.msra.mxu0 0.0
  %3593 = vmatprep.subr.mxu0 0.0
  %3594 = vmatpush1.msra.mxu0 0.0
  %3595 = vmatprep.subr.mxu0 0.0
  %3596 = vmatpush1.msra.mxu0 0.0
  %3597 = vmatprep.subr.mxu0 0.0
  %3598 = vmatpush1.msra.mxu0 0.0
  %3599 = vmatprep.subr.mxu0 0.0
  %3600 = vmatpush1.msra.mxu0 0.0
  %3601 = vmatprep.subr.mxu0 0.0
  %3602 = vmatpush1.msra.mxu0 0.0
  %3603 = vmatprep.subr.mxu0 0.0
  %3604 = vmatpush1.msra.mxu0 0.0
  %3605 = vmatprep.subr.mxu0 0.0
  %3606 = vmatpush1.msra.mxu0 0.0
  %3607 = vmatprep.subr.mxu0 0.0
  %3608 = vmatpush1.msra.mxu0 0.0
  %3609 = vmatprep.subr.mxu0 0.0
  %3610 = vmatpush1.msra.mxu0 0.0
  %3611 = vmatprep.subr.mxu0 0.0
  %3612 = vmatpush1.msra.mxu0 0.0
  %3613 = vmatprep.mubr.f32.mxu0 0.0
  %3614 = vmatmul.mubr.f32.gmra.mrb[0].mxu0 %v3547
  %v3615 = vpop.f32.mrb[0].mxu0
  %v3616 = vadd.f32 0.0, %v3615
  %v3617 = vpop.f32.mrb[0].mxu0
  %3618 = vdwg.mxu0
  %v3620 = vsel %vm383, %v3545, 0
  %3622 = vmatprep.subr.mxu0 0.0
  %3623 = vmatpush1.msra.mxu0 %v3369
  %3624 = vmatprep.subr.mxu0 0.0
  %3625 = vmatpush1.msra.mxu0 0.0
  %3626 = vmatprep.subr.mxu0 0.0
  %3627 = vmatpush1.msra.mxu0 0.0
  %3628 = vmatprep.subr.mxu0 0.0
  %3629 = vmatpush1.msra.mxu0 0.0
  %3630 = vmatprep.subr.mxu0 0.0
  %3631 = vmatpush1.msra.mxu0 0.0
  %3632 = vmatprep.subr.mxu0 0.0
  %3633 = vmatpush1.msra.mxu0 0.0
  %3634 = vmatprep.subr.mxu0 0.0
  %3635 = vmatpush1.msra.mxu0 0.0
  %3636 = vmatprep.subr.mxu0 0.0
  %3637 = vmatpush1.msra.mxu0 0.0
  %3638 = vmatprep.subr.mxu0 0.0
  %3639 = vmatpush1.msra.mxu0 0.0
  %3640 = vmatprep.subr.mxu0 0.0
  %3641 = vmatpush1.msra.mxu0 0.0
  %3642 = vmatprep.subr.mxu0 0.0
  %3643 = vmatpush1.msra.mxu0 0.0
  %3644 = vmatprep.subr.mxu0 0.0
  %3645 = vmatpush1.msra.mxu0 0.0
  %3646 = vmatprep.subr.mxu0 0.0
  %3647 = vmatpush1.msra.mxu0 0.0
  %3648 = vmatprep.subr.mxu0 0.0
  %3649 = vmatpush1.msra.mxu0 0.0
  %3650 = vmatprep.subr.mxu0 0.0
  %3651 = vmatpush1.msra.mxu0 0.0
  %3652 = vmatprep.subr.mxu0 0.0
  %3653 = vmatpush1.msra.mxu0 0.0
  %3654 = vmatprep.subr.mxu0 0.0
  %3655 = vmatpush1.msra.mxu0 0.0
  %3656 = vmatprep.subr.mxu0 0.0
  %3657 = vmatpush1.msra.mxu0 0.0
  %3658 = vmatprep.subr.mxu0 0.0
  %3659 = vmatpush1.msra.mxu0 0.0
  %3660 = vmatprep.subr.mxu0 0.0
  %3661 = vmatpush1.msra.mxu0 0.0
  %3662 = vmatprep.subr.mxu0 0.0
  %3663 = vmatpush1.msra.mxu0 0.0
  %3664 = vmatprep.subr.mxu0 0.0
  %3665 = vmatpush1.msra.mxu0 0.0
  %3666 = vmatprep.subr.mxu0 0.0
  %3667 = vmatpush1.msra.mxu0 0.0
  %3668 = vmatprep.subr.mxu0 0.0
  %3669 = vmatpush1.msra.mxu0 0.0
  %3670 = vmatprep.subr.mxu0 0.0
  %3671 = vmatpush1.msra.mxu0 0.0
  %3672 = vmatprep.subr.mxu0 0.0
  %3673 = vmatpush1.msra.mxu0 0.0
  %3674 = vmatprep.subr.mxu0 0.0
  %3675 = vmatpush1.msra.mxu0 0.0
  %3676 = vmatprep.subr.mxu0 0.0
  %3677 = vmatpush1.msra.mxu0 0.0
  %3678 = vmatprep.subr.mxu0 0.0
  %3679 = vmatpush1.msra.mxu0 0.0
  %3680 = vmatprep.subr.mxu0 0.0
  %3681 = vmatpush1.msra.mxu0 0.0
  %3682 = vmatprep.subr.mxu0 0.0
  %3683 = vmatpush1.msra.mxu0 0.0
  %3684 = vmatprep.subr.mxu0 0.0
  %3685 = vmatpush1.msra.mxu0 0.0
  %3686 = vmatprep.mubr.f32.mxu0 0.0
  %3687 = vmatmul.mubr.f32.gmra.mrb[0].mxu0 %v3620
  %v3688 = vpop.f32.mrb[0].mxu0
  %v3689 = vadd.f32 0.0, %v3688
  %v3690 = vpop.f32.mrb[0].mxu0
  %3691 = vdwg.mxu0
  %s3692 = scalar_lea.vmem %s9, 32
  %v3693 = vld [vmem:[%s3692] sm:$0xff]
  %s3694 = scalar_lea.vmem %s3, 160
  %v3695 = vld [vmem:[%s3694] sm:$0xff]
  %v3696 = vld [vmem:[%s3694 + $0x8] sm:$0xff]
  %v3697 = vld [vmem:[%s3694 + $0x10] sm:$0xff]
  %v3698 = vld [vmem:[%s3694 + $0x18] sm:$0xff]
  %s3699 = scalar_lea.vmem %s6, 5
  %v3700 = vld [vmem:[%s3699] sm:$0x1]
  %v3702 = vlaneseq
  %v3703 = vshrl.u32 %v3702, 7
  %v3704 = vsub.s32 0, %v3703
  %v3705 = vrot.slane %v3700, %v3704
  %3707 = vmatprep.subr.mxu0 0.0
  %3708 = vmatpush1.msra.mxu0 %v3695
  %3709 = vmatprep.subr.mxu0 0.0
  %3710 = vmatpush1.msra.mxu0 %v3696
  %3711 = vmatprep.subr.mxu0 0.0
  %3712 = vmatpush1.msra.mxu0 %v3697
  %3713 = vmatprep.subr.mxu0 0.0
  %3714 = vmatpush1.msra.mxu0 %v3698
  %3715 = vmatprep.subr.mxu0 0.0
  %3716 = vmatpush1.msra.mxu0 0.0
  %3717 = vmatprep.subr.mxu0 0.0
  %3718 = vmatpush1.msra.mxu0 0.0
  %3719 = vmatprep.subr.mxu0 0.0
  %3720 = vmatpush1.msra.mxu0 0.0
  %3721 = vmatprep.subr.mxu0 0.0
  %3722 = vmatpush1.msra.mxu0 0.0
  %3723 = vmatprep.subr.mxu0 0.0
  %3724 = vmatpush1.msra.mxu0 0.0
  %3725 = vmatprep.subr.mxu0 0.0
  %3726 = vmatpush1.msra.mxu0 0.0
  %3727 = vmatprep.subr.mxu0 0.0
  %3728 = vmatpush1.msra.mxu0 0.0
  %3729 = vmatprep.subr.mxu0 0.0
  %3730 = vmatpush1.msra.mxu0 0.0
  %3731 = vmatprep.subr.mxu0 0.0
  %3732 = vmatpush1.msra.mxu0 0.0
  %3733 = vmatprep.subr.mxu0 0.0
  %3734 = vmatpush1.msra.mxu0 0.0
  %3735 = vmatprep.subr.mxu0 0.0
  %3736 = vmatpush1.msra.mxu0 0.0
  %3737 = vmatprep.subr.mxu0 0.0
  %3738 = vmatpush1.msra.mxu0 0.0
  %3739 = vmatprep.subr.mxu0 0.0
  %3740 = vmatpush1.msra.mxu0 0.0
  %3741 = vmatprep.subr.mxu0 0.0
  %3742 = vmatpush1.msra.mxu0 0.0
  %3743 = vmatprep.subr.mxu0 0.0
  %3744 = vmatpush1.msra.mxu0 0.0
  %3745 = vmatprep.subr.mxu0 0.0
  %3746 = vmatpush1.msra.mxu0 0.0
  %3747 = vmatprep.subr.mxu0 0.0
  %3748 = vmatpush1.msra.mxu0 0.0
  %3749 = vmatprep.subr.mxu0 0.0
  %3750 = vmatpush1.msra.mxu0 0.0
  %3751 = vmatprep.subr.mxu0 0.0
  %3752 = vmatpush1.msra.mxu0 0.0
  %3753 = vmatprep.subr.mxu0 0.0
  %3754 = vmatpush1.msra.mxu0 0.0
  %3755 = vmatprep.subr.mxu0 0.0
  %3756 = vmatpush1.msra.mxu0 0.0
  %3757 = vmatprep.subr.mxu0 0.0
  %3758 = vmatpush1.msra.mxu0 0.0
  %3759 = vmatprep.subr.mxu0 0.0
  %3760 = vmatpush1.msra.mxu0 0.0
  %3761 = vmatprep.subr.mxu0 0.0
  %3762 = vmatpush1.msra.mxu0 0.0
  %3763 = vmatprep.subr.mxu0 0.0
  %3764 = vmatpush1.msra.mxu0 0.0
  %3765 = vmatprep.subr.mxu0 0.0
  %3766 = vmatpush1.msra.mxu0 0.0
  %3767 = vmatprep.subr.mxu0 0.0
  %3768 = vmatpush1.msra.mxu0 0.0
  %3769 = vmatprep.subr.mxu0 0.0
  %3770 = vmatpush1.msra.mxu0 0.0
  %3771 = vmatprep.mubr.f32.mxu0 0.0
  %3772 = vmatmul.mubr.f32.gmra.mrb[0].mxu0 %v3116
  %v3773 = vpop.f32.mrb[0].mxu0
  %v3774 = vadd.f32 %v3705, %v3773
  %v3775 = vpop.f32.mrb[0].mxu0
  %3776 = vmatprep.mubr.f32.mxu0 0.0
  %3777 = vmatmul.mubr.f32.gmra.mrb[0].mxu0 %v3119
  %v3778 = vpop.f32.mrb[0].mxu0
  %v3779 = vadd.f32 %v3705, %v3778
  %v3780 = vpop.f32.mrb[0].mxu0
  %3781 = vdwg.mxu0
  %s3782 = scalar_lea.vmem %s4, 160
  %v3783 = vld [vmem:[%s3782] sm:$0xff]
  %v3784 = vld [vmem:[%s3782 + $0x8] sm:$0xff]
  %v3785 = vld [vmem:[%s3782 + $0x10] sm:$0xff]
  %v3786 = vld [vmem:[%s3782 + $0x18] sm:$0xff]
  %s3787 = scalar_lea.vmem %s7, 5
  %v3788 = vld [vmem:[%s3787] sm:$0x1]
  %v3790 = vlaneseq
  %v3791 = vshrl.u32 %v3790, 7
  %v3792 = vsub.s32 0, %v3791
  %v3793 = vrot.slane %v3788, %v3792
  %3795 = vmatprep.subr.mxu0 0.0
  %3796 = vmatpush1.msra.mxu0 %v3783
  %3797 = vmatprep.subr.mxu0 0.0
  %3798 = vmatpush1.msra.mxu0 %v3784
  %3799 = vmatprep.subr.mxu0 0.0
  %3800 = vmatpush1.msra.mxu0 %v3785
  %3801 = vmatprep.subr.mxu0 0.0
  %3802 = vmatpush1.msra.mxu0 %v3786
  %3803 = vmatprep.subr.mxu0 0.0
  %3804 = vmatpush1.msra.mxu0 0.0
  %3805 = vmatprep.subr.mxu0 0.0
  %3806 = vmatpush1.msra.mxu0 0.0
  %3807 = vmatprep.subr.mxu0 0.0
  %3808 = vmatpush1.msra.mxu0 0.0
  %3809 = vmatprep.subr.mxu0 0.0
  %3810 = vmatpush1.msra.mxu0 0.0
  %3811 = vmatprep.subr.mxu0 0.0
  %3812 = vmatpush1.msra.mxu0 0.0
  %3813 = vmatprep.subr.mxu0 0.0
  %3814 = vmatpush1.msra.mxu0 0.0
  %3815 = vmatprep.subr.mxu0 0.0
  %3816 = vmatpush1.msra.mxu0 0.0
  %3817 = vmatprep.subr.mxu0 0.0
  %3818 = vmatpush1.msra.mxu0 0.0
  %3819 = vmatprep.subr.mxu0 0.0
  %3820 = vmatpush1.msra.mxu0 0.0
  %3821 = vmatprep.subr.mxu0 0.0
  %3822 = vmatpush1.msra.mxu0 0.0
  %3823 = vmatprep.subr.mxu0 0.0
  %3824 = vmatpush1.msra.mxu0 0.0
  %3825 = vmatprep.subr.mxu0 0.0
  %3826 = vmatpush1.msra.mxu0 0.0
  %3827 = vmatprep.subr.mxu0 0.0
  %3828 = vmatpush1.msra.mxu0 0.0
  %3829 = vmatprep.subr.mxu0 0.0
  %3830 = vmatpush1.msra.mxu0 0.0
  %3831 = vmatprep.subr.mxu0 0.0
  %3832 = vmatpush1.msra.mxu0 0.0
  %3833 = vmatprep.subr.mxu0 0.0
  %3834 = vmatpush1.msra.mxu0 0.0
  %3835 = vmatprep.subr.mxu0 0.0
  %3836 = vmatpush1.msra.mxu0 0.0
  %3837 = vmatprep.subr.mxu0 0.0
  %3838 = vmatpush1.msra.mxu0 0.0
  %3839 = vmatprep.subr.mxu0 0.0
  %3840 = vmatpush1.msra.mxu0 0.0
  %3841 = vmatprep.subr.mxu0 0.0
  %3842 = vmatpush1.msra.mxu0 0.0
  %3843 = vmatprep.subr.mxu0 0.0
  %3844 = vmatpush1.msra.mxu0 0.0
  %3845 = vmatprep.subr.mxu0 0.0
  %3846 = vmatpush1.msra.mxu0 0.0
  %3847 = vmatprep.subr.mxu0 0.0
  %3848 = vmatpush1.msra.mxu0 0.0
  %3849 = vmatprep.subr.mxu0 0.0
  %3850 = vmatpush1.msra.mxu0 0.0
  %3851 = vmatprep.subr.mxu0 0.0
  %3852 = vmatpush1.msra.mxu0 0.0
  %3853 = vmatprep.subr.mxu0 0.0
  %3854 = vmatpush1.msra.mxu0 0.0
  %3855 = vmatprep.subr.mxu0 0.0
  %3856 = vmatpush1.msra.mxu0 0.0
  %3857 = vmatprep.subr.mxu0 0.0
  %3858 = vmatpush1.msra.mxu0 0.0
  %3859 = vmatprep.mubr.f32.mxu0 0.0
  %3860 = vmatmul.mubr.f32.gmra.mrb[0].mxu0 %v3116
  %v3861 = vpop.f32.mrb[0].mxu0
  %v3862 = vadd.f32 %v3793, %v3861
  %v3863 = vpop.f32.mrb[0].mxu0
  %3864 = vmatprep.mubr.f32.mxu0 0.0
  %3865 = vmatmul.mubr.f32.gmra.mrb[0].mxu0 %v3119
  %v3866 = vpop.f32.mrb[0].mxu0
  %v3867 = vadd.f32 %v3793, %v3866
  %v3868 = vpop.f32.mrb[0].mxu0
  %3869 = vdwg.mxu0
  %s3870 = scalar_lea.vmem %s5, 160
  %v3871 = vld [vmem:[%s3870] sm:$0xff]
  %v3872 = vld [vmem:[%s3870 + $0x8] sm:$0xff]
  %v3873 = vld [vmem:[%s3870 + $0x10] sm:$0xff]
  %v3874 = vld [vmem:[%s3870 + $0x18] sm:$0xff]
  %s3875 = scalar_lea.vmem %s8, 5
  %v3876 = vld [vmem:[%s3875] sm:$0x1]
  %v3878 = vlaneseq
  %v3879 = vshrl.u32 %v3878, 7
  %v3880 = vsub.s32 0, %v3879
  %v3881 = vrot.slane %v3876, %v3880
  %3883 = vmatprep.subr.mxu0 0.0
  %3884 = vmatpush1.msra.mxu0 %v3871
  %3885 = vmatprep.subr.mxu0 0.0
  %3886 = vmatpush1.msra.mxu0 %v3872
  %3887 = vmatprep.subr.mxu0 0.0
  %3888 = vmatpush1.msra.mxu0 %v3873
  %3889 = vmatprep.subr.mxu0 0.0
  %3890 = vmatpush1.msra.mxu0 %v3874
  %3891 = vmatprep.subr.mxu0 0.0
  %3892 = vmatpush1.msra.mxu0 0.0
  %3893 = vmatprep.subr.mxu0 0.0
  %3894 = vmatpush1.msra.mxu0 0.0
  %3895 = vmatprep.subr.mxu0 0.0
  %3896 = vmatpush1.msra.mxu0 0.0
  %3897 = vmatprep.subr.mxu0 0.0
  %3898 = vmatpush1.msra.mxu0 0.0
  %3899 = vmatprep.subr.mxu0 0.0
  %3900 = vmatpush1.msra.mxu0 0.0
  %3901 = vmatprep.subr.mxu0 0.0
  %3902 = vmatpush1.msra.mxu0 0.0
  %3903 = vmatprep.subr.mxu0 0.0
  %3904 = vmatpush1.msra.mxu0 0.0
  %3905 = vmatprep.subr.mxu0 0.0
  %3906 = vmatpush1.msra.mxu0 0.0
  %3907 = vmatprep.subr.mxu0 0.0
  %3908 = vmatpush1.msra.mxu0 0.0
  %3909 = vmatprep.subr.mxu0 0.0
  %3910 = vmatpush1.msra.mxu0 0.0
  %3911 = vmatprep.subr.mxu0 0.0
  %3912 = vmatpush1.msra.mxu0 0.0
  %3913 = vmatprep.subr.mxu0 0.0
  %3914 = vmatpush1.msra.mxu0 0.0
  %3915 = vmatprep.subr.mxu0 0.0
  %3916 = vmatpush1.msra.mxu0 0.0
  %3917 = vmatprep.subr.mxu0 0.0
  %3918 = vmatpush1.msra.mxu0 0.0
  %3919 = vmatprep.subr.mxu0 0.0
  %3920 = vmatpush1.msra.mxu0 0.0
  %3921 = vmatprep.subr.mxu0 0.0
  %3922 = vmatpush1.msra.mxu0 0.0
  %3923 = vmatprep.subr.mxu0 0.0
  %3924 = vmatpush1.msra.mxu0 0.0
  %3925 = vmatprep.subr.mxu0 0.0
  %3926 = vmatpush1.msra.mxu0 0.0
  %3927 = vmatprep.subr.mxu0 0.0
  %3928 = vmatpush1.msra.mxu0 0.0
  %3929 = vmatprep.subr.mxu0 0.0
  %3930 = vmatpush1.msra.mxu0 0.0
  %3931 = vmatprep.subr.mxu0 0.0
  %3932 = vmatpush1.msra.mxu0 0.0
  %3933 = vmatprep.subr.mxu0 0.0
  %3934 = vmatpush1.msra.mxu0 0.0
  %3935 = vmatprep.subr.mxu0 0.0
  %3936 = vmatpush1.msra.mxu0 0.0
  %3937 = vmatprep.subr.mxu0 0.0
  %3938 = vmatpush1.msra.mxu0 0.0
  %3939 = vmatprep.subr.mxu0 0.0
  %3940 = vmatpush1.msra.mxu0 0.0
  %3941 = vmatprep.subr.mxu0 0.0
  %3942 = vmatpush1.msra.mxu0 0.0
  %3943 = vmatprep.subr.mxu0 0.0
  %3944 = vmatpush1.msra.mxu0 0.0
  %3945 = vmatprep.subr.mxu0 0.0
  %3946 = vmatpush1.msra.mxu0 0.0
  %3947 = vmatprep.mubr.f32.mxu0 0.0
  %3948 = vmatmul.mubr.f32.gmra.mrb[0].mxu0 %v3116
  %v3949 = vpop.f32.mrb[0].mxu0
  %v3950 = vadd.f32 %v3881, %v3949
  %v3951 = vpop.f32.mrb[0].mxu0
  %3952 = vmatprep.mubr.f32.mxu0 0.0
  %3953 = vmatmul.mubr.f32.gmra.mrb[0].mxu0 %v3119
  %v3954 = vpop.f32.mrb[0].mxu0
  %v3955 = vadd.f32 %v3881, %v3954
  %v3956 = vpop.f32.mrb[0].mxu0
  %3957 = vdwg.mxu0
  %v3959 = vsel %vm383, %v3774, 0
  %v3962 = vsel %vm383, %v3862, 0
  %3964 = vmatprep.subr.mxu0 0.0
  %3965 = vmatpush1.xpose.msra.mxu0 %v3962
  %3966 = vmatprep.subr.mxu0 0.0
  %3967 = vmatpush1.xpose.msra.mxu0 0.0
  %3968 = vmatprep.subr.mxu0 0.0
  %3969 = vmatpush1.xpose.msra.mxu0 0.0
  %3970 = vmatprep.subr.mxu0 0.0
  %3971 = vmatpush1.xpose.msra.mxu0 0.0
  %3972 = vmatprep.subr.mxu0 0.0
  %3973 = vmatpush1.xpose.msra.mxu0 0.0
  %3974 = vmatprep.subr.mxu0 0.0
  %3975 = vmatpush1.xpose.msra.mxu0 0.0
  %3976 = vmatprep.subr.mxu0 0.0
  %3977 = vmatpush1.xpose.msra.mxu0 0.0
  %3978 = vmatprep.subr.mxu0 0.0
  %3979 = vmatpush1.xpose.msra.mxu0 0.0
  %3980 = vmatprep.subr.mxu0 0.0
  %3981 = vmatpush1.xpose.msra.mxu0 0.0
  %3982 = vmatprep.subr.mxu0 0.0
  %3983 = vmatpush1.xpose.msra.mxu0 0.0
  %3984 = vmatprep.subr.mxu0 0.0
  %3985 = vmatpush1.xpose.msra.mxu0 0.0
  %3986 = vmatprep.subr.mxu0 0.0
  %3987 = vmatpush1.xpose.msra.mxu0 0.0
  %3988 = vmatprep.subr.mxu0 0.0
  %3989 = vmatpush1.xpose.msra.mxu0 0.0
  %3990 = vmatprep.subr.mxu0 0.0
  %3991 = vmatpush1.xpose.msra.mxu0 0.0
  %3992 = vmatprep.subr.mxu0 0.0
  %3993 = vmatpush1.xpose.msra.mxu0 0.0
  %3994 = vmatprep.subr.mxu0 0.0
  %3995 = vmatpush1.xpose.msra.mxu0 0.0
  %3996 = vmatprep.subr.mxu0 0.0
  %3997 = vmatpush1.xpose.msra.mxu0 0.0
  %3998 = vmatprep.subr.mxu0 0.0
  %3999 = vmatpush1.xpose.msra.mxu0 0.0
  %4000 = vmatprep.subr.mxu0 0.0
  %4001 = vmatpush1.xpose.msra.mxu0 0.0
  %4002 = vmatprep.subr.mxu0 0.0
  %4003 = vmatpush1.xpose.msra.mxu0 0.0
  %4004 = vmatprep.subr.mxu0 0.0
  %4005 = vmatpush1.xpose.msra.mxu0 0.0
  %4006 = vmatprep.subr.mxu0 0.0
  %4007 = vmatpush1.xpose.msra.mxu0 0.0
  %4008 = vmatprep.subr.mxu0 0.0
  %4009 = vmatpush1.xpose.msra.mxu0 0.0
  %4010 = vmatprep.subr.mxu0 0.0
  %4011 = vmatpush1.xpose.msra.mxu0 0.0
  %4012 = vmatprep.subr.mxu0 0.0
  %4013 = vmatpush1.xpose.msra.mxu0 0.0
  %4014 = vmatprep.subr.mxu0 0.0
  %4015 = vmatpush1.xpose.msra.mxu0 0.0
  %4016 = vmatprep.subr.mxu0 0.0
  %4017 = vmatpush1.xpose.msra.mxu0 0.0
  %4018 = vmatprep.subr.mxu0 0.0
  %4019 = vmatpush1.xpose.msra.mxu0 0.0
  %4020 = vmatprep.subr.mxu0 0.0
  %4021 = vmatpush1.xpose.msra.mxu0 0.0
  %4022 = vmatprep.subr.mxu0 0.0
  %4023 = vmatpush1.xpose.msra.mxu0 0.0
  %4024 = vmatprep.subr.mxu0 0.0
  %4025 = vmatpush1.xpose.msra.mxu0 0.0
  %4026 = vmatprep.subr.mxu0 0.0
  %4027 = vmatpush1.xpose.msra.mxu0 0.0
  %4028 = vmatprep.mubr.f32.mxu0 0.0
  %4029 = vmatmul.mubr.f32.gmra.mrb[0].mxu0 %v3959
  %v4030 = vpop.f32.mrb[0].mxu0
  %v4031 = vadd.f32 %v72, %v4030
  %v4032 = vpop.f32.mrb[0].mxu0
  %4033 = vdwg.mxu0
  %v4035 = vsel %vm383, %v3779, 0
  %v4038 = vsel %vm383, %v3867, 0
  %4040 = vmatprep.subr.mxu0 0.0
  %4041 = vmatpush1.xpose.msra.mxu0 %v4038
  %4042 = vmatprep.subr.mxu0 0.0
  %4043 = vmatpush1.xpose.msra.mxu0 0.0
  %4044 = vmatprep.subr.mxu0 0.0
  %4045 = vmatpush1.xpose.msra.mxu0 0.0
  %4046 = vmatprep.subr.mxu0 0.0
  %4047 = vmatpush1.xpose.msra.mxu0 0.0
  %4048 = vmatprep.subr.mxu0 0.0
  %4049 = vmatpush1.xpose.msra.mxu0 0.0
  %4050 = vmatprep.subr.mxu0 0.0
  %4051 = vmatpush1.xpose.msra.mxu0 0.0
  %4052 = vmatprep.subr.mxu0 0.0
  %4053 = vmatpush1.xpose.msra.mxu0 0.0
  %4054 = vmatprep.subr.mxu0 0.0
  %4055 = vmatpush1.xpose.msra.mxu0 0.0
  %4056 = vmatprep.subr.mxu0 0.0
  %4057 = vmatpush1.xpose.msra.mxu0 0.0
  %4058 = vmatprep.subr.mxu0 0.0
  %4059 = vmatpush1.xpose.msra.mxu0 0.0
  %4060 = vmatprep.subr.mxu0 0.0
  %4061 = vmatpush1.xpose.msra.mxu0 0.0
  %4062 = vmatprep.subr.mxu0 0.0
  %4063 = vmatpush1.xpose.msra.mxu0 0.0
  %4064 = vmatprep.subr.mxu0 0.0
  %4065 = vmatpush1.xpose.msra.mxu0 0.0
  %4066 = vmatprep.subr.mxu0 0.0
  %4067 = vmatpush1.xpose.msra.mxu0 0.0
  %4068 = vmatprep.subr.mxu0 0.0
  %4069 = vmatpush1.xpose.msra.mxu0 0.0
  %4070 = vmatprep.subr.mxu0 0.0
  %4071 = vmatpush1.xpose.msra.mxu0 0.0
  %4072 = vmatprep.subr.mxu0 0.0
  %4073 = vmatpush1.xpose.msra.mxu0 0.0
  %4074 = vmatprep.subr.mxu0 0.0
  %4075 = vmatpush1.xpose.msra.mxu0 0.0
  %4076 = vmatprep.subr.mxu0 0.0
  %4077 = vmatpush1.xpose.msra.mxu0 0.0
  %4078 = vmatprep.subr.mxu0 0.0
  %4079 = vmatpush1.xpose.msra.mxu0 0.0
  %4080 = vmatprep.subr.mxu0 0.0
  %4081 = vmatpush1.xpose.msra.mxu0 0.0
  %4082 = vmatprep.subr.mxu0 0.0
  %4083 = vmatpush1.xpose.msra.mxu0 0.0
  %4084 = vmatprep.subr.mxu0 0.0
  %4085 = vmatpush1.xpose.msra.mxu0 0.0
  %4086 = vmatprep.subr.mxu0 0.0
  %4087 = vmatpush1.xpose.msra.mxu0 0.0
  %4088 = vmatprep.subr.mxu0 0.0
  %4089 = vmatpush1.xpose.msra.mxu0 0.0
  %4090 = vmatprep.subr.mxu0 0.0
  %4091 = vmatpush1.xpose.msra.mxu0 0.0
  %4092 = vmatprep.subr.mxu0 0.0
  %4093 = vmatpush1.xpose.msra.mxu0 0.0
  %4094 = vmatprep.subr.mxu0 0.0
  %4095 = vmatpush1.xpose.msra.mxu0 0.0
  %4096 = vmatprep.subr.mxu0 0.0
  %4097 = vmatpush1.xpose.msra.mxu0 0.0
  %4098 = vmatprep.subr.mxu0 0.0
  %4099 = vmatpush1.xpose.msra.mxu0 0.0
  %4100 = vmatprep.subr.mxu0 0.0
  %4101 = vmatpush1.xpose.msra.mxu0 0.0
  %4102 = vmatprep.subr.mxu0 0.0
  %4103 = vmatpush1.xpose.msra.mxu0 0.0
  %4104 = vmatprep.mubr.f32.mxu0 0.0
  %4105 = vmatmul.mubr.f32.gmra.mrb[0].mxu0 %v4035
  %v4106 = vpop.f32.mrb[0].mxu0
  %v4107 = vadd.f32 %v72, %v4106
  %v4108 = vpop.f32.mrb[0].mxu0
  %4109 = vdwg.mxu0
  %v4110 = vsel %vm383, %v4031, -inf
  %4111 = vmax.xlane.f32.xlu0 %v4110
  %v4112 = vpop.xlane.xlu0 %4111
  %v4113 = vsel %vm383, %v4107, -inf
  %4114 = vmax.xlane.f32.xlu0 %v4113
  %v4115 = vpop.xlane.xlu0 %4114
  %v4116 = vsub.f32 %v4031, %v4112
  %v4117 = vsub.f32 %v4107, %v4115
  %v4118 = vmul.f32 %v4116, 1.442695
  %v4119 = vpow.pop %v4118
  %v4120 = vmul.f32 %v4117, 1.442695
  %v4121 = vpow.pop %v4120
  %v4122 = vsel %vm383, %v4119, 0.0
  %4123 = vadd.xlane.f32.xlu0 %v4122
  %v4124 = vpop.xlane.xlu0 %4123
  %v4125 = vsel %vm383, %v4121, 0.0
  %4126 = vadd.xlane.f32.xlu0 %v4125
  %v4127 = vpop.xlane.xlu0 %4126
  %v4128 = vrcp.pop %v4124
  %v4129 = vmul.f32 %v4119, %v4128
  %v4130 = vrcp.pop %v4127
  %v4131 = vmul.f32 %v4121, %v4130
  %v4133 = vsel %vm383, %v4129, 0
  %4135 = vmatprep.subr.mxu0 0.0
  %4136 = vmatpush1.msra.mxu0 %v3950
  %4137 = vmatprep.subr.mxu0 0.0
  %4138 = vmatpush1.msra.mxu0 0.0
  %4139 = vmatprep.subr.mxu0 0.0
  %4140 = vmatpush1.msra.mxu0 0.0
  %4141 = vmatprep.subr.mxu0 0.0
  %4142 = vmatpush1.msra.mxu0 0.0
  %4143 = vmatprep.subr.mxu0 0.0
  %4144 = vmatpush1.msra.mxu0 0.0
  %4145 = vmatprep.subr.mxu0 0.0
  %4146 = vmatpush1.msra.mxu0 0.0
  %4147 = vmatprep.subr.mxu0 0.0
  %4148 = vmatpush1.msra.mxu0 0.0
  %4149 = vmatprep.subr.mxu0 0.0
  %4150 = vmatpush1.msra.mxu0 0.0
  %4151 = vmatprep.subr.mxu0 0.0
  %4152 = vmatpush1.msra.mxu0 0.0
  %4153 = vmatprep.subr.mxu0 0.0
  %4154 = vmatpush1.msra.mxu0 0.0
  %4155 = vmatprep.subr.mxu0 0.0
  %4156 = vmatpush1.msra.mxu0 0.0
  %4157 = vmatprep.subr.mxu0 0.0
  %4158 = vmatpush1.msra.mxu0 0.0
  %4159 = vmatprep.subr.mxu0 0.0
  %4160 = vmatpush1.msra.mxu0 0.0
  %4161 = vmatprep.subr.mxu0 0.0
  %4162 = vmatpush1.msra.mxu0 0.0
  %4163 = vmatprep.subr.mxu0 0.0
  %4164 = vmatpush1.msra.mxu0 0.0
  %4165 = vmatprep.subr.mxu0 0.0
  %4166 = vmatpush1.msra.mxu0 0.0
  %4167 = vmatprep.subr.mxu0 0.0
  %4168 = vmatpush1.msra.mxu0 0.0
  %4169 = vmatprep.subr.mxu0 0.0
  %4170 = vmatpush1.msra.mxu0 0.0
  %4171 = vmatprep.subr.mxu0 0.0
  %4172 = vmatpush1.msra.mxu0 0.0
  %4173 = vmatprep.subr.mxu0 0.0
  %4174 = vmatpush1.msra.mxu0 0.0
  %4175 = vmatprep.subr.mxu0 0.0
  %4176 = vmatpush1.msra.mxu0 0.0
  %4177 = vmatprep.subr.mxu0 0.0
  %4178 = vmatpush1.msra.mxu0 0.0
  %4179 = vmatprep.subr.mxu0 0.0
  %4180 = vmatpush1.msra.mxu0 0.0
  %4181 = vmatprep.subr.mxu0 0.0
  %4182 = vmatpush1.msra.mxu0 0.0
  %4183 = vmatprep.subr.mxu0 0.0
  %4184 = vmatpush1.msra.mxu0 0.0
  %4185 = vmatprep.subr.mxu0 0.0
  %4186 = vmatpush1.msra.mxu0 0.0
  %4187 = vmatprep.subr.mxu0 0.0
  %4188 = vmatpush1.msra.mxu0 0.0
  %4189 = vmatprep.subr.mxu0 0.0
  %4190 = vmatpush1.msra.mxu0 0.0
  %4191 = vmatprep.subr.mxu0 0.0
  %4192 = vmatpush1.msra.mxu0 0.0
  %4193 = vmatprep.subr.mxu0 0.0
  %4194 = vmatpush1.msra.mxu0 0.0
  %4195 = vmatprep.subr.mxu0 0.0
  %4196 = vmatpush1.msra.mxu0 0.0
  %4197 = vmatprep.subr.mxu0 0.0
  %4198 = vmatpush1.msra.mxu0 0.0
  %4199 = vmatprep.mubr.f32.mxu0 0.0
  %4200 = vmatmul.mubr.f32.gmra.mrb[0].mxu0 %v4133
  %v4201 = vpop.f32.mrb[0].mxu0
  %v4202 = vadd.f32 0.0, %v4201
  %v4203 = vpop.f32.mrb[0].mxu0
  %4204 = vdwg.mxu0
  %v4206 = vsel %vm383, %v4131, 0
  %4208 = vmatprep.subr.mxu0 0.0
  %4209 = vmatpush1.msra.mxu0 %v3955
  %4210 = vmatprep.subr.mxu0 0.0
  %4211 = vmatpush1.msra.mxu0 0.0
  %4212 = vmatprep.subr.mxu0 0.0
  %4213 = vmatpush1.msra.mxu0 0.0
  %4214 = vmatprep.subr.mxu0 0.0
  %4215 = vmatpush1.msra.mxu0 0.0
  %4216 = vmatprep.subr.mxu0 0.0
  %4217 = vmatpush1.msra.mxu0 0.0
  %4218 = vmatprep.subr.mxu0 0.0
  %4219 = vmatpush1.msra.mxu0 0.0
  %4220 = vmatprep.subr.mxu0 0.0
  %4221 = vmatpush1.msra.mxu0 0.0
  %4222 = vmatprep.subr.mxu0 0.0
  %4223 = vmatpush1.msra.mxu0 0.0
  %4224 = vmatprep.subr.mxu0 0.0
  %4225 = vmatpush1.msra.mxu0 0.0
  %4226 = vmatprep.subr.mxu0 0.0
  %4227 = vmatpush1.msra.mxu0 0.0
  %4228 = vmatprep.subr.mxu0 0.0
  %4229 = vmatpush1.msra.mxu0 0.0
  %4230 = vmatprep.subr.mxu0 0.0
  %4231 = vmatpush1.msra.mxu0 0.0
  %4232 = vmatprep.subr.mxu0 0.0
  %4233 = vmatpush1.msra.mxu0 0.0
  %4234 = vmatprep.subr.mxu0 0.0
  %4235 = vmatpush1.msra.mxu0 0.0
  %4236 = vmatprep.subr.mxu0 0.0
  %4237 = vmatpush1.msra.mxu0 0.0
  %4238 = vmatprep.subr.mxu0 0.0
  %4239 = vmatpush1.msra.mxu0 0.0
  %4240 = vmatprep.subr.mxu0 0.0
  %4241 = vmatpush1.msra.mxu0 0.0
  %4242 = vmatprep.subr.mxu0 0.0
  %4243 = vmatpush1.msra.mxu0 0.0
  %4244 = vmatprep.subr.mxu0 0.0
  %4245 = vmatpush1.msra.mxu0 0.0
  %4246 = vmatprep.subr.mxu0 0.0
  %4247 = vmatpush1.msra.mxu0 0.0
  %4248 = vmatprep.subr.mxu0 0.0
  %4249 = vmatpush1.msra.mxu0 0.0
  %4250 = vmatprep.subr.mxu0 0.0
  %4251 = vmatpush1.msra.mxu0 0.0
  %4252 = vmatprep.subr.mxu0 0.0
  %4253 = vmatpush1.msra.mxu0 0.0
  %4254 = vmatprep.subr.mxu0 0.0
  %4255 = vmatpush1.msra.mxu0 0.0
  %4256 = vmatprep.subr.mxu0 0.0
  %4257 = vmatpush1.msra.mxu0 0.0
  %4258 = vmatprep.subr.mxu0 0.0
  %4259 = vmatpush1.msra.mxu0 0.0
  %4260 = vmatprep.subr.mxu0 0.0
  %4261 = vmatpush1.msra.mxu0 0.0
  %4262 = vmatprep.subr.mxu0 0.0
  %4263 = vmatpush1.msra.mxu0 0.0
  %4264 = vmatprep.subr.mxu0 0.0
  %4265 = vmatpush1.msra.mxu0 0.0
  %4266 = vmatprep.subr.mxu0 0.0
  %4267 = vmatpush1.msra.mxu0 0.0
  %4268 = vmatprep.subr.mxu0 0.0
  %4269 = vmatpush1.msra.mxu0 0.0
  %4270 = vmatprep.subr.mxu0 0.0
  %4271 = vmatpush1.msra.mxu0 0.0
  %4272 = vmatprep.mubr.f32.mxu0 0.0
  %4273 = vmatmul.mubr.f32.gmra.mrb[0].mxu0 %v4206
  %v4274 = vpop.f32.mrb[0].mxu0
  %v4275 = vadd.f32 0.0, %v4274
  %v4276 = vpop.f32.mrb[0].mxu0
  %4277 = vdwg.mxu0
  %s4278 = scalar_lea.vmem %s9, 40
  %v4279 = vld [vmem:[%s4278] sm:$0xff]
  %v4281 = vsel %vm383, %v4202, 0
  %v4284 = vsel %vm383, %v4275, 0
  %4286 = vmatprep.subr.mxu0 0.0
  %4287 = vmatpush1.msra.mxu0 %v4279
  %4288 = vmatprep.subr.mxu0 0.0
  %4289 = vmatpush1.msra.mxu0 0.0
  %4290 = vmatprep.subr.mxu0 0.0
  %4291 = vmatpush1.msra.mxu0 0.0
  %4292 = vmatprep.subr.mxu0 0.0
  %4293 = vmatpush1.msra.mxu0 0.0
  %4294 = vmatprep.subr.mxu0 0.0
  %4295 = vmatpush1.msra.mxu0 0.0
  %4296 = vmatprep.subr.mxu0 0.0
  %4297 = vmatpush1.msra.mxu0 0.0
  %4298 = vmatprep.subr.mxu0 0.0
  %4299 = vmatpush1.msra.mxu0 0.0
  %4300 = vmatprep.subr.mxu0 0.0
  %4301 = vmatpush1.msra.mxu0 0.0
  %4302 = vmatprep.subr.mxu0 0.0
  %4303 = vmatpush1.msra.mxu0 0.0
  %4304 = vmatprep.subr.mxu0 0.0
  %4305 = vmatpush1.msra.mxu0 0.0
  %4306 = vmatprep.subr.mxu0 0.0
  %4307 = vmatpush1.msra.mxu0 0.0
  %4308 = vmatprep.subr.mxu0 0.0
  %4309 = vmatpush1.msra.mxu0 0.0
  %4310 = vmatprep.subr.mxu0 0.0
  %4311 = vmatpush1.msra.mxu0 0.0
  %4312 = vmatprep.subr.mxu0 0.0
  %4313 = vmatpush1.msra.mxu0 0.0
  %4314 = vmatprep.subr.mxu0 0.0
  %4315 = vmatpush1.msra.mxu0 0.0
  %4316 = vmatprep.subr.mxu0 0.0
  %4317 = vmatpush1.msra.mxu0 0.0
  %4318 = vmatprep.subr.mxu0 0.0
  %4319 = vmatpush1.msra.mxu0 0.0
  %4320 = vmatprep.subr.mxu0 0.0
  %4321 = vmatpush1.msra.mxu0 0.0
  %4322 = vmatprep.subr.mxu0 0.0
  %4323 = vmatpush1.msra.mxu0 0.0
  %4324 = vmatprep.subr.mxu0 0.0
  %4325 = vmatpush1.msra.mxu0 0.0
  %4326 = vmatprep.subr.mxu0 0.0
  %4327 = vmatpush1.msra.mxu0 0.0
  %4328 = vmatprep.subr.mxu0 0.0
  %4329 = vmatpush1.msra.mxu0 0.0
  %4330 = vmatprep.subr.mxu0 0.0
  %4331 = vmatpush1.msra.mxu0 0.0
  %4332 = vmatprep.subr.mxu0 0.0
  %4333 = vmatpush1.msra.mxu0 0.0
  %4334 = vmatprep.subr.mxu0 0.0
  %4335 = vmatpush1.msra.mxu0 0.0
  %4336 = vmatprep.subr.mxu0 0.0
  %4337 = vmatpush1.msra.mxu0 0.0
  %4338 = vmatprep.subr.mxu0 0.0
  %4339 = vmatpush1.msra.mxu0 0.0
  %4340 = vmatprep.subr.mxu0 0.0
  %4341 = vmatpush1.msra.mxu0 0.0
  %4342 = vmatprep.subr.mxu0 0.0
  %4343 = vmatpush1.msra.mxu0 0.0
  %4344 = vmatprep.subr.mxu0 0.0
  %4345 = vmatpush1.msra.mxu0 0.0
  %4346 = vmatprep.subr.mxu0 0.0
  %4347 = vmatpush1.msra.mxu0 0.0
  %4348 = vmatprep.subr.mxu0 0.0
  %4349 = vmatpush1.msra.mxu0 0.0
  %4350 = vmatprep.mubr.f32.mxu0 0.0
  %4351 = vmatmul.mubr.f32.gmra.mrb[0].mxu0 %v4281
  %v4352 = vpop.f32.mrb[0].mxu0
  %v4353 = vadd.f32 0.0, %v4352
  %v4354 = vpop.f32.mrb[0].mxu0
  %4355 = vmatprep.mubr.f32.mxu0 0.0
  %4356 = vmatmul.mubr.f32.gmra.mrb[0].mxu0 %v4284
  %v4357 = vpop.f32.mrb[0].mxu0
  %v4358 = vadd.f32 0.0, %v4357
  %v4359 = vpop.f32.mrb[0].mxu0
  %4360 = vdwg.mxu0
  %v4362 = vsel %vm383, %v3616, 0
  %v4365 = vsel %vm383, %v3689, 0
  %4367 = vmatprep.subr.mxu0 0.0
  %4368 = vmatpush1.msra.mxu0 %v3693
  %4369 = vmatprep.subr.mxu0 0.0
  %4370 = vmatpush1.msra.mxu0 0.0
  %4371 = vmatprep.subr.mxu0 0.0
  %4372 = vmatpush1.msra.mxu0 0.0
  %4373 = vmatprep.subr.mxu0 0.0
  %4374 = vmatpush1.msra.mxu0 0.0
  %4375 = vmatprep.subr.mxu0 0.0
  %4376 = vmatpush1.msra.mxu0 0.0
  %4377 = vmatprep.subr.mxu0 0.0
  %4378 = vmatpush1.msra.mxu0 0.0
  %4379 = vmatprep.subr.mxu0 0.0
  %4380 = vmatpush1.msra.mxu0 0.0
  %4381 = vmatprep.subr.mxu0 0.0
  %4382 = vmatpush1.msra.mxu0 0.0
  %4383 = vmatprep.subr.mxu0 0.0
  %4384 = vmatpush1.msra.mxu0 0.0
  %4385 = vmatprep.subr.mxu0 0.0
  %4386 = vmatpush1.msra.mxu0 0.0
  %4387 = vmatprep.subr.mxu0 0.0
  %4388 = vmatpush1.msra.mxu0 0.0
  %4389 = vmatprep.subr.mxu0 0.0
  %4390 = vmatpush1.msra.mxu0 0.0
  %4391 = vmatprep.subr.mxu0 0.0
  %4392 = vmatpush1.msra.mxu0 0.0
  %4393 = vmatprep.subr.mxu0 0.0
  %4394 = vmatpush1.msra.mxu0 0.0
  %4395 = vmatprep.subr.mxu0 0.0
  %4396 = vmatpush1.msra.mxu0 0.0
  %4397 = vmatprep.subr.mxu0 0.0
  %4398 = vmatpush1.msra.mxu0 0.0
  %4399 = vmatprep.subr.mxu0 0.0
  %4400 = vmatpush1.msra.mxu0 0.0
  %4401 = vmatprep.subr.mxu0 0.0
  %4402 = vmatpush1.msra.mxu0 0.0
  %4403 = vmatprep.subr.mxu0 0.0
  %4404 = vmatpush1.msra.mxu0 0.0
  %4405 = vmatprep.subr.mxu0 0.0
  %4406 = vmatpush1.msra.mxu0 0.0
  %4407 = vmatprep.subr.mxu0 0.0
  %4408 = vmatpush1.msra.mxu0 0.0
  %4409 = vmatprep.subr.mxu0 0.0
  %4410 = vmatpush1.msra.mxu0 0.0
  %4411 = vmatprep.subr.mxu0 0.0
  %4412 = vmatpush1.msra.mxu0 0.0
  %4413 = vmatprep.subr.mxu0 0.0
  %4414 = vmatpush1.msra.mxu0 0.0
  %4415 = vmatprep.subr.mxu0 0.0
  %4416 = vmatpush1.msra.mxu0 0.0
  %4417 = vmatprep.subr.mxu0 0.0
  %4418 = vmatpush1.msra.mxu0 0.0
  %4419 = vmatprep.subr.mxu0 0.0
  %4420 = vmatpush1.msra.mxu0 0.0
  %4421 = vmatprep.subr.mxu0 0.0
  %4422 = vmatpush1.msra.mxu0 0.0
  %4423 = vmatprep.subr.mxu0 0.0
  %4424 = vmatpush1.msra.mxu0 0.0
  %4425 = vmatprep.subr.mxu0 0.0
  %4426 = vmatpush1.msra.mxu0 0.0
  %4427 = vmatprep.subr.mxu0 0.0
  %4428 = vmatpush1.msra.mxu0 0.0
  %4429 = vmatprep.subr.mxu0 0.0
  %4430 = vmatpush1.msra.mxu0 0.0
  %4431 = vmatprep.mubr.f32.mxu0 0.0
  %4432 = vmatmul.mubr.f32.gmra.mrb[0].mxu0 %v4362
  %v4433 = vpop.f32.mrb[0].mxu0
  %v4434 = vadd.f32 %v4353, %v4433
  %v4435 = vpop.f32.mrb[0].mxu0
  %4436 = vmatprep.mubr.f32.mxu0 0.0
  %4437 = vmatmul.mubr.f32.gmra.mrb[0].mxu0 %v4365
  %v4438 = vpop.f32.mrb[0].mxu0
  %v4439 = vadd.f32 %v4358, %v4438
  %v4440 = vpop.f32.mrb[0].mxu0
  %4441 = vdwg.mxu0
  %s4442 = scalar_lea.vmem %s3, 192
  %v4443 = vld [vmem:[%s4442] sm:$0xff]
  %v4444 = vld [vmem:[%s4442 + $0x8] sm:$0xff]
  %v4445 = vld [vmem:[%s4442 + $0x10] sm:$0xff]
  %v4446 = vld [vmem:[%s4442 + $0x18] sm:$0xff]
  %s4447 = scalar_lea.vmem %s6, 6
  %v4448 = vld [vmem:[%s4447] sm:$0x1]
  %v4450 = vlaneseq
  %v4451 = vshrl.u32 %v4450, 7
  %v4452 = vsub.s32 0, %v4451
  %v4453 = vrot.slane %v4448, %v4452
  %4455 = vmatprep.subr.mxu0 0.0
  %4456 = vmatpush1.msra.mxu0 %v4443
  %4457 = vmatprep.subr.mxu0 0.0
  %4458 = vmatpush1.msra.mxu0 %v4444
  %4459 = vmatprep.subr.mxu0 0.0
  %4460 = vmatpush1.msra.mxu0 %v4445
  %4461 = vmatprep.subr.mxu0 0.0
  %4462 = vmatpush1.msra.mxu0 %v4446
  %4463 = vmatprep.subr.mxu0 0.0
  %4464 = vmatpush1.msra.mxu0 0.0
  %4465 = vmatprep.subr.mxu0 0.0
  %4466 = vmatpush1.msra.mxu0 0.0
  %4467 = vmatprep.subr.mxu0 0.0
  %4468 = vmatpush1.msra.mxu0 0.0
  %4469 = vmatprep.subr.mxu0 0.0
  %4470 = vmatpush1.msra.mxu0 0.0
  %4471 = vmatprep.subr.mxu0 0.0
  %4472 = vmatpush1.msra.mxu0 0.0
  %4473 = vmatprep.subr.mxu0 0.0
  %4474 = vmatpush1.msra.mxu0 0.0
  %4475 = vmatprep.subr.mxu0 0.0
  %4476 = vmatpush1.msra.mxu0 0.0
  %4477 = vmatprep.subr.mxu0 0.0
  %4478 = vmatpush1.msra.mxu0 0.0
  %4479 = vmatprep.subr.mxu0 0.0
  %4480 = vmatpush1.msra.mxu0 0.0
  %4481 = vmatprep.subr.mxu0 0.0
  %4482 = vmatpush1.msra.mxu0 0.0
  %4483 = vmatprep.subr.mxu0 0.0
  %4484 = vmatpush1.msra.mxu0 0.0
  %4485 = vmatprep.subr.mxu0 0.0
  %4486 = vmatpush1.msra.mxu0 0.0
  %4487 = vmatprep.subr.mxu0 0.0
  %4488 = vmatpush1.msra.mxu0 0.0
  %4489 = vmatprep.subr.mxu0 0.0
  %4490 = vmatpush1.msra.mxu0 0.0
  %4491 = vmatprep.subr.mxu0 0.0
  %4492 = vmatpush1.msra.mxu0 0.0
  %4493 = vmatprep.subr.mxu0 0.0
  %4494 = vmatpush1.msra.mxu0 0.0
  %4495 = vmatprep.subr.mxu0 0.0
  %4496 = vmatpush1.msra.mxu0 0.0
  %4497 = vmatprep.subr.mxu0 0.0
  %4498 = vmatpush1.msra.mxu0 0.0
  %4499 = vmatprep.subr.mxu0 0.0
  %4500 = vmatpush1.msra.mxu0 0.0
  %4501 = vmatprep.subr.mxu0 0.0
  %4502 = vmatpush1.msra.mxu0 0.0
  %4503 = vmatprep.subr.mxu0 0.0
  %4504 = vmatpush1.msra.mxu0 0.0
  %4505 = vmatprep.subr.mxu0 0.0
  %4506 = vmatpush1.msra.mxu0 0.0
  %4507 = vmatprep.subr.mxu0 0.0
  %4508 = vmatpush1.msra.mxu0 0.0
  %4509 = vmatprep.subr.mxu0 0.0
  %4510 = vmatpush1.msra.mxu0 0.0
  %4511 = vmatprep.subr.mxu0 0.0
  %4512 = vmatpush1.msra.mxu0 0.0
  %4513 = vmatprep.subr.mxu0 0.0
  %4514 = vmatpush1.msra.mxu0 0.0
  %4515 = vmatprep.subr.mxu0 0.0
  %4516 = vmatpush1.msra.mxu0 0.0
  %4517 = vmatprep.subr.mxu0 0.0
  %4518 = vmatpush1.msra.mxu0 0.0
  %4519 = vmatprep.mubr.f32.mxu0 0.0
  %4520 = vmatmul.mubr.f32.gmra.mrb[0].mxu0 %v3116
  %v4521 = vpop.f32.mrb[0].mxu0
  %v4522 = vadd.f32 %v4453, %v4521
  %v4523 = vpop.f32.mrb[0].mxu0
  %4524 = vmatprep.mubr.f32.mxu0 0.0
  %4525 = vmatmul.mubr.f32.gmra.mrb[0].mxu0 %v3119
  %v4526 = vpop.f32.mrb[0].mxu0
  %v4527 = vadd.f32 %v4453, %v4526
  %v4528 = vpop.f32.mrb[0].mxu0
  %4529 = vdwg.mxu0
  %s4530 = scalar_lea.vmem %s4, 192
  %v4531 = vld [vmem:[%s4530] sm:$0xff]
  %v4532 = vld [vmem:[%s4530 + $0x8] sm:$0xff]
  %v4533 = vld [vmem:[%s4530 + $0x10] sm:$0xff]
  %v4534 = vld [vmem:[%s4530 + $0x18] sm:$0xff]
  %s4535 = scalar_lea.vmem %s7, 6
  %v4536 = vld [vmem:[%s4535] sm:$0x1]
  %v4538 = vlaneseq
  %v4539 = vshrl.u32 %v4538, 7
  %v4540 = vsub.s32 0, %v4539
  %v4541 = vrot.slane %v4536, %v4540
  %4543 = vmatprep.subr.mxu0 0.0
  %4544 = vmatpush1.msra.mxu0 %v4531
  %4545 = vmatprep.subr.mxu0 0.0
  %4546 = vmatpush1.msra.mxu0 %v4532
  %4547 = vmatprep.subr.mxu0 0.0
  %4548 = vmatpush1.msra.mxu0 %v4533
  %4549 = vmatprep.subr.mxu0 0.0
  %4550 = vmatpush1.msra.mxu0 %v4534
  %4551 = vmatprep.subr.mxu0 0.0
  %4552 = vmatpush1.msra.mxu0 0.0
  %4553 = vmatprep.subr.mxu0 0.0
  %4554 = vmatpush1.msra.mxu0 0.0
  %4555 = vmatprep.subr.mxu0 0.0
  %4556 = vmatpush1.msra.mxu0 0.0
  %4557 = vmatprep.subr.mxu0 0.0
  %4558 = vmatpush1.msra.mxu0 0.0
  %4559 = vmatprep.subr.mxu0 0.0
  %4560 = vmatpush1.msra.mxu0 0.0
  %4561 = vmatprep.subr.mxu0 0.0
  %4562 = vmatpush1.msra.mxu0 0.0
  %4563 = vmatprep.subr.mxu0 0.0
  %4564 = vmatpush1.msra.mxu0 0.0
  %4565 = vmatprep.subr.mxu0 0.0
  %4566 = vmatpush1.msra.mxu0 0.0
  %4567 = vmatprep.subr.mxu0 0.0
  %4568 = vmatpush1.msra.mxu0 0.0
  %4569 = vmatprep.subr.mxu0 0.0
  %4570 = vmatpush1.msra.mxu0 0.0
  %4571 = vmatprep.subr.mxu0 0.0
  %4572 = vmatpush1.msra.mxu0 0.0
  %4573 = vmatprep.subr.mxu0 0.0
  %4574 = vmatpush1.msra.mxu0 0.0
  %4575 = vmatprep.subr.mxu0 0.0
  %4576 = vmatpush1.msra.mxu0 0.0
  %4577 = vmatprep.subr.mxu0 0.0
  %4578 = vmatpush1.msra.mxu0 0.0
  %4579 = vmatprep.subr.mxu0 0.0
  %4580 = vmatpush1.msra.mxu0 0.0
  %4581 = vmatprep.subr.mxu0 0.0
  %4582 = vmatpush1.msra.mxu0 0.0
  %4583 = vmatprep.subr.mxu0 0.0
  %4584 = vmatpush1.msra.mxu0 0.0
  %4585 = vmatprep.subr.mxu0 0.0
  %4586 = vmatpush1.msra.mxu0 0.0
  %4587 = vmatprep.subr.mxu0 0.0
  %4588 = vmatpush1.msra.mxu0 0.0
  %4589 = vmatprep.subr.mxu0 0.0
  %4590 = vmatpush1.msra.mxu0 0.0
  %4591 = vmatprep.subr.mxu0 0.0
  %4592 = vmatpush1.msra.mxu0 0.0
  %4593 = vmatprep.subr.mxu0 0.0
  %4594 = vmatpush1.msra.mxu0 0.0
  %4595 = vmatprep.subr.mxu0 0.0
  %4596 = vmatpush1.msra.mxu0 0.0
  %4597 = vmatprep.subr.mxu0 0.0
  %4598 = vmatpush1.msra.mxu0 0.0
  %4599 = vmatprep.subr.mxu0 0.0
  %4600 = vmatpush1.msra.mxu0 0.0
  %4601 = vmatprep.subr.mxu0 0.0
  %4602 = vmatpush1.msra.mxu0 0.0
  %4603 = vmatprep.subr.mxu0 0.0
  %4604 = vmatpush1.msra.mxu0 0.0
  %4605 = vmatprep.subr.mxu0 0.0
  %4606 = vmatpush1.msra.mxu0 0.0
  %4607 = vmatprep.mubr.f32.mxu0 0.0
  %4608 = vmatmul.mubr.f32.gmra.mrb[0].mxu0 %v3116
  %v4609 = vpop.f32.mrb[0].mxu0
  %v4610 = vadd.f32 %v4541, %v4609
  %v4611 = vpop.f32.mrb[0].mxu0
  %4612 = vmatprep.mubr.f32.mxu0 0.0
  %4613 = vmatmul.mubr.f32.gmra.mrb[0].mxu0 %v3119
  %v4614 = vpop.f32.mrb[0].mxu0
  %v4615 = vadd.f32 %v4541, %v4614
  %v4616 = vpop.f32.mrb[0].mxu0
  %4617 = vdwg.mxu0
  %s4618 = scalar_lea.vmem %s5, 192
  %v4619 = vld [vmem:[%s4618] sm:$0xff]
  %v4620 = vld [vmem:[%s4618 + $0x8] sm:$0xff]
  %v4621 = vld [vmem:[%s4618 + $0x10] sm:$0xff]
  %v4622 = vld [vmem:[%s4618 + $0x18] sm:$0xff]
  %s4623 = scalar_lea.vmem %s8, 6
  %v4624 = vld [vmem:[%s4623] sm:$0x1]
  %v4626 = vlaneseq
  %v4627 = vshrl.u32 %v4626, 7
  %v4628 = vsub.s32 0, %v4627
  %v4629 = vrot.slane %v4624, %v4628
  %4631 = vmatprep.subr.mxu0 0.0
  %4632 = vmatpush1.msra.mxu0 %v4619
  %4633 = vmatprep.subr.mxu0 0.0
  %4634 = vmatpush1.msra.mxu0 %v4620
  %4635 = vmatprep.subr.mxu0 0.0
  %4636 = vmatpush1.msra.mxu0 %v4621
  %4637 = vmatprep.subr.mxu0 0.0
  %4638 = vmatpush1.msra.mxu0 %v4622
  %4639 = vmatprep.subr.mxu0 0.0
  %4640 = vmatpush1.msra.mxu0 0.0
  %4641 = vmatprep.subr.mxu0 0.0
  %4642 = vmatpush1.msra.mxu0 0.0
  %4643 = vmatprep.subr.mxu0 0.0
  %4644 = vmatpush1.msra.mxu0 0.0
  %4645 = vmatprep.subr.mxu0 0.0
  %4646 = vmatpush1.msra.mxu0 0.0
  %4647 = vmatprep.subr.mxu0 0.0
  %4648 = vmatpush1.msra.mxu0 0.0
  %4649 = vmatprep.subr.mxu0 0.0
  %4650 = vmatpush1.msra.mxu0 0.0
  %4651 = vmatprep.subr.mxu0 0.0
  %4652 = vmatpush1.msra.mxu0 0.0
  %4653 = vmatprep.subr.mxu0 0.0
  %4654 = vmatpush1.msra.mxu0 0.0
  %4655 = vmatprep.subr.mxu0 0.0
  %4656 = vmatpush1.msra.mxu0 0.0
  %4657 = vmatprep.subr.mxu0 0.0
  %4658 = vmatpush1.msra.mxu0 0.0
  %4659 = vmatprep.subr.mxu0 0.0
  %4660 = vmatpush1.msra.mxu0 0.0
  %4661 = vmatprep.subr.mxu0 0.0
  %4662 = vmatpush1.msra.mxu0 0.0
  %4663 = vmatprep.subr.mxu0 0.0
  %4664 = vmatpush1.msra.mxu0 0.0
  %4665 = vmatprep.subr.mxu0 0.0
  %4666 = vmatpush1.msra.mxu0 0.0
  %4667 = vmatprep.subr.mxu0 0.0
  %4668 = vmatpush1.msra.mxu0 0.0
  %4669 = vmatprep.subr.mxu0 0.0
  %4670 = vmatpush1.msra.mxu0 0.0
  %4671 = vmatprep.subr.mxu0 0.0
  %4672 = vmatpush1.msra.mxu0 0.0
  %4673 = vmatprep.subr.mxu0 0.0
  %4674 = vmatpush1.msra.mxu0 0.0
  %4675 = vmatprep.subr.mxu0 0.0
  %4676 = vmatpush1.msra.mxu0 0.0
  %4677 = vmatprep.subr.mxu0 0.0
  %4678 = vmatpush1.msra.mxu0 0.0
  %4679 = vmatprep.subr.mxu0 0.0
  %4680 = vmatpush1.msra.mxu0 0.0
  %4681 = vmatprep.subr.mxu0 0.0
  %4682 = vmatpush1.msra.mxu0 0.0
  %4683 = vmatprep.subr.mxu0 0.0
  %4684 = vmatpush1.msra.mxu0 0.0
  %4685 = vmatprep.subr.mxu0 0.0
  %4686 = vmatpush1.msra.mxu0 0.0
  %4687 = vmatprep.subr.mxu0 0.0
  %4688 = vmatpush1.msra.mxu0 0.0
  %4689 = vmatprep.subr.mxu0 0.0
  %4690 = vmatpush1.msra.mxu0 0.0
  %4691 = vmatprep.subr.mxu0 0.0
  %4692 = vmatpush1.msra.mxu0 0.0
  %4693 = vmatprep.subr.mxu0 0.0
  %4694 = vmatpush1.msra.mxu0 0.0
  %4695 = vmatprep.mubr.f32.mxu0 0.0
  %4696 = vmatmul.mubr.f32.gmra.mrb[0].mxu0 %v3116
  %v4697 = vpop.f32.mrb[0].mxu0
  %v4698 = vadd.f32 %v4629, %v4697
  %v4699 = vpop.f32.mrb[0].mxu0
  %4700 = vmatprep.mubr.f32.mxu0 0.0
  %4701 = vmatmul.mubr.f32.gmra.mrb[0].mxu0 %v3119
  %v4702 = vpop.f32.mrb[0].mxu0
  %v4703 = vadd.f32 %v4629, %v4702
  %v4704 = vpop.f32.mrb[0].mxu0
  %4705 = vdwg.mxu0
  %v4707 = vsel %vm383, %v4522, 0
  %v4710 = vsel %vm383, %v4610, 0
  %4712 = vmatprep.subr.mxu0 0.0
  %4713 = vmatpush1.xpose.msra.mxu0 %v4710
  %4714 = vmatprep.subr.mxu0 0.0
  %4715 = vmatpush1.xpose.msra.mxu0 0.0
  %4716 = vmatprep.subr.mxu0 0.0
  %4717 = vmatpush1.xpose.msra.mxu0 0.0
  %4718 = vmatprep.subr.mxu0 0.0
  %4719 = vmatpush1.xpose.msra.mxu0 0.0
  %4720 = vmatprep.subr.mxu0 0.0
  %4721 = vmatpush1.xpose.msra.mxu0 0.0
  %4722 = vmatprep.subr.mxu0 0.0
  %4723 = vmatpush1.xpose.msra.mxu0 0.0
  %4724 = vmatprep.subr.mxu0 0.0
  %4725 = vmatpush1.xpose.msra.mxu0 0.0
  %4726 = vmatprep.subr.mxu0 0.0
  %4727 = vmatpush1.xpose.msra.mxu0 0.0
  %4728 = vmatprep.subr.mxu0 0.0
  %4729 = vmatpush1.xpose.msra.mxu0 0.0
  %4730 = vmatprep.subr.mxu0 0.0
  %4731 = vmatpush1.xpose.msra.mxu0 0.0
  %4732 = vmatprep.subr.mxu0 0.0
  %4733 = vmatpush1.xpose.msra.mxu0 0.0
  %4734 = vmatprep.subr.mxu0 0.0
  %4735 = vmatpush1.xpose.msra.mxu0 0.0
  %4736 = vmatprep.subr.mxu0 0.0
  %4737 = vmatpush1.xpose.msra.mxu0 0.0
  %4738 = vmatprep.subr.mxu0 0.0
  %4739 = vmatpush1.xpose.msra.mxu0 0.0
  %4740 = vmatprep.subr.mxu0 0.0
  %4741 = vmatpush1.xpose.msra.mxu0 0.0
  %4742 = vmatprep.subr.mxu0 0.0
  %4743 = vmatpush1.xpose.msra.mxu0 0.0
  %4744 = vmatprep.subr.mxu0 0.0
  %4745 = vmatpush1.xpose.msra.mxu0 0.0
  %4746 = vmatprep.subr.mxu0 0.0
  %4747 = vmatpush1.xpose.msra.mxu0 0.0
  %4748 = vmatprep.subr.mxu0 0.0
  %4749 = vmatpush1.xpose.msra.mxu0 0.0
  %4750 = vmatprep.subr.mxu0 0.0
  %4751 = vmatpush1.xpose.msra.mxu0 0.0
  %4752 = vmatprep.subr.mxu0 0.0
  %4753 = vmatpush1.xpose.msra.mxu0 0.0
  %4754 = vmatprep.subr.mxu0 0.0
  %4755 = vmatpush1.xpose.msra.mxu0 0.0
  %4756 = vmatprep.subr.mxu0 0.0
  %4757 = vmatpush1.xpose.msra.mxu0 0.0
  %4758 = vmatprep.subr.mxu0 0.0
  %4759 = vmatpush1.xpose.msra.mxu0 0.0
  %4760 = vmatprep.subr.mxu0 0.0
  %4761 = vmatpush1.xpose.msra.mxu0 0.0
  %4762 = vmatprep.subr.mxu0 0.0
  %4763 = vmatpush1.xpose.msra.mxu0 0.0
  %4764 = vmatprep.subr.mxu0 0.0
  %4765 = vmatpush1.xpose.msra.mxu0 0.0
  %4766 = vmatprep.subr.mxu0 0.0
  %4767 = vmatpush1.xpose.msra.mxu0 0.0
  %4768 = vmatprep.subr.mxu0 0.0
  %4769 = vmatpush1.xpose.msra.mxu0 0.0
  %4770 = vmatprep.subr.mxu0 0.0
  %4771 = vmatpush1.xpose.msra.mxu0 0.0
  %4772 = vmatprep.subr.mxu0 0.0
  %4773 = vmatpush1.xpose.msra.mxu0 0.0
  %4774 = vmatprep.subr.mxu0 0.0
  %4775 = vmatpush1.xpose.msra.mxu0 0.0
  %4776 = vmatprep.mubr.f32.mxu0 0.0
  %4777 = vmatmul.mubr.f32.gmra.mrb[0].mxu0 %v4707
  %v4778 = vpop.f32.mrb[0].mxu0
  %v4779 = vadd.f32 %v72, %v4778
  %v4780 = vpop.f32.mrb[0].mxu0
  %4781 = vdwg.mxu0
  %v4783 = vsel %vm383, %v4527, 0
  %v4786 = vsel %vm383, %v4615, 0
  %4788 = vmatprep.subr.mxu0 0.0
  %4789 = vmatpush1.xpose.msra.mxu0 %v4786
  %4790 = vmatprep.subr.mxu0 0.0
  %4791 = vmatpush1.xpose.msra.mxu0 0.0
  %4792 = vmatprep.subr.mxu0 0.0
  %4793 = vmatpush1.xpose.msra.mxu0 0.0
  %4794 = vmatprep.subr.mxu0 0.0
  %4795 = vmatpush1.xpose.msra.mxu0 0.0
  %4796 = vmatprep.subr.mxu0 0.0
  %4797 = vmatpush1.xpose.msra.mxu0 0.0
  %4798 = vmatprep.subr.mxu0 0.0
  %4799 = vmatpush1.xpose.msra.mxu0 0.0
  %4800 = vmatprep.subr.mxu0 0.0
  %4801 = vmatpush1.xpose.msra.mxu0 0.0
  %4802 = vmatprep.subr.mxu0 0.0
  %4803 = vmatpush1.xpose.msra.mxu0 0.0
  %4804 = vmatprep.subr.mxu0 0.0
  %4805 = vmatpush1.xpose.msra.mxu0 0.0
  %4806 = vmatprep.subr.mxu0 0.0
  %4807 = vmatpush1.xpose.msra.mxu0 0.0
  %4808 = vmatprep.subr.mxu0 0.0
  %4809 = vmatpush1.xpose.msra.mxu0 0.0
  %4810 = vmatprep.subr.mxu0 0.0
  %4811 = vmatpush1.xpose.msra.mxu0 0.0
  %4812 = vmatprep.subr.mxu0 0.0
  %4813 = vmatpush1.xpose.msra.mxu0 0.0
  %4814 = vmatprep.subr.mxu0 0.0
  %4815 = vmatpush1.xpose.msra.mxu0 0.0
  %4816 = vmatprep.subr.mxu0 0.0
  %4817 = vmatpush1.xpose.msra.mxu0 0.0
  %4818 = vmatprep.subr.mxu0 0.0
  %4819 = vmatpush1.xpose.msra.mxu0 0.0
  %4820 = vmatprep.subr.mxu0 0.0
  %4821 = vmatpush1.xpose.msra.mxu0 0.0
  %4822 = vmatprep.subr.mxu0 0.0
  %4823 = vmatpush1.xpose.msra.mxu0 0.0
  %4824 = vmatprep.subr.mxu0 0.0
  %4825 = vmatpush1.xpose.msra.mxu0 0.0
  %4826 = vmatprep.subr.mxu0 0.0
  %4827 = vmatpush1.xpose.msra.mxu0 0.0
  %4828 = vmatprep.subr.mxu0 0.0
  %4829 = vmatpush1.xpose.msra.mxu0 0.0
  %4830 = vmatprep.subr.mxu0 0.0
  %4831 = vmatpush1.xpose.msra.mxu0 0.0
  %4832 = vmatprep.subr.mxu0 0.0
  %4833 = vmatpush1.xpose.msra.mxu0 0.0
  %4834 = vmatprep.subr.mxu0 0.0
  %4835 = vmatpush1.xpose.msra.mxu0 0.0
  %4836 = vmatprep.subr.mxu0 0.0
  %4837 = vmatpush1.xpose.msra.mxu0 0.0
  %4838 = vmatprep.subr.mxu0 0.0
  %4839 = vmatpush1.xpose.msra.mxu0 0.0
  %4840 = vmatprep.subr.mxu0 0.0
  %4841 = vmatpush1.xpose.msra.mxu0 0.0
  %4842 = vmatprep.subr.mxu0 0.0
  %4843 = vmatpush1.xpose.msra.mxu0 0.0
  %4844 = vmatprep.subr.mxu0 0.0
  %4845 = vmatpush1.xpose.msra.mxu0 0.0
  %4846 = vmatprep.subr.mxu0 0.0
  %4847 = vmatpush1.xpose.msra.mxu0 0.0
  %4848 = vmatprep.subr.mxu0 0.0
  %4849 = vmatpush1.xpose.msra.mxu0 0.0
  %4850 = vmatprep.subr.mxu0 0.0
  %4851 = vmatpush1.xpose.msra.mxu0 0.0
  %4852 = vmatprep.mubr.f32.mxu0 0.0
  %4853 = vmatmul.mubr.f32.gmra.mrb[0].mxu0 %v4783
  %v4854 = vpop.f32.mrb[0].mxu0
  %v4855 = vadd.f32 %v72, %v4854
  %v4856 = vpop.f32.mrb[0].mxu0
  %4857 = vdwg.mxu0
  %v4858 = vsel %vm383, %v4779, -inf
  %4859 = vmax.xlane.f32.xlu0 %v4858
  %v4860 = vpop.xlane.xlu0 %4859
  %v4861 = vsel %vm383, %v4855, -inf
  %4862 = vmax.xlane.f32.xlu0 %v4861
  %v4863 = vpop.xlane.xlu0 %4862
  %v4864 = vsub.f32 %v4779, %v4860
  %v4865 = vsub.f32 %v4855, %v4863
  %v4866 = vmul.f32 %v4864, 1.442695
  %v4867 = vpow.pop %v4866
  %v4868 = vmul.f32 %v4865, 1.442695
  %v4869 = vpow.pop %v4868
  %v4870 = vsel %vm383, %v4867, 0.0
  %4871 = vadd.xlane.f32.xlu0 %v4870
  %v4872 = vpop.xlane.xlu0 %4871
  %v4873 = vsel %vm383, %v4869, 0.0
  %4874 = vadd.xlane.f32.xlu0 %v4873
  %v4875 = vpop.xlane.xlu0 %4874
  %v4876 = vrcp.pop %v4872
  %v4877 = vmul.f32 %v4867, %v4876
  %v4878 = vrcp.pop %v4875
  %v4879 = vmul.f32 %v4869, %v4878
  %v4881 = vsel %vm383, %v4877, 0
  %4883 = vmatprep.subr.mxu0 0.0
  %4884 = vmatpush1.msra.mxu0 %v4698
  %4885 = vmatprep.subr.mxu0 0.0
  %4886 = vmatpush1.msra.mxu0 0.0
  %4887 = vmatprep.subr.mxu0 0.0
  %4888 = vmatpush1.msra.mxu0 0.0
  %4889 = vmatprep.subr.mxu0 0.0
  %4890 = vmatpush1.msra.mxu0 0.0
  %4891 = vmatprep.subr.mxu0 0.0
  %4892 = vmatpush1.msra.mxu0 0.0
  %4893 = vmatprep.subr.mxu0 0.0
  %4894 = vmatpush1.msra.mxu0 0.0
  %4895 = vmatprep.subr.mxu0 0.0
  %4896 = vmatpush1.msra.mxu0 0.0
  %4897 = vmatprep.subr.mxu0 0.0
  %4898 = vmatpush1.msra.mxu0 0.0
  %4899 = vmatprep.subr.mxu0 0.0
  %4900 = vmatpush1.msra.mxu0 0.0
  %4901 = vmatprep.subr.mxu0 0.0
  %4902 = vmatpush1.msra.mxu0 0.0
  %4903 = vmatprep.subr.mxu0 0.0
  %4904 = vmatpush1.msra.mxu0 0.0
  %4905 = vmatprep.subr.mxu0 0.0
  %4906 = vmatpush1.msra.mxu0 0.0
  %4907 = vmatprep.subr.mxu0 0.0
  %4908 = vmatpush1.msra.mxu0 0.0
  %4909 = vmatprep.subr.mxu0 0.0
  %4910 = vmatpush1.msra.mxu0 0.0
  %4911 = vmatprep.subr.mxu0 0.0
  %4912 = vmatpush1.msra.mxu0 0.0
  %4913 = vmatprep.subr.mxu0 0.0
  %4914 = vmatpush1.msra.mxu0 0.0
  %4915 = vmatprep.subr.mxu0 0.0
  %4916 = vmatpush1.msra.mxu0 0.0
  %4917 = vmatprep.subr.mxu0 0.0
  %4918 = vmatpush1.msra.mxu0 0.0
  %4919 = vmatprep.subr.mxu0 0.0
  %4920 = vmatpush1.msra.mxu0 0.0
  %4921 = vmatprep.subr.mxu0 0.0
  %4922 = vmatpush1.msra.mxu0 0.0
  %4923 = vmatprep.subr.mxu0 0.0
  %4924 = vmatpush1.msra.mxu0 0.0
  %4925 = vmatprep.subr.mxu0 0.0
  %4926 = vmatpush1.msra.mxu0 0.0
  %4927 = vmatprep.subr.mxu0 0.0
  %4928 = vmatpush1.msra.mxu0 0.0
  %4929 = vmatprep.subr.mxu0 0.0
  %4930 = vmatpush1.msra.mxu0 0.0
  %4931 = vmatprep.subr.mxu0 0.0
  %4932 = vmatpush1.msra.mxu0 0.0
  %4933 = vmatprep.subr.mxu0 0.0
  %4934 = vmatpush1.msra.mxu0 0.0
  %4935 = vmatprep.subr.mxu0 0.0
  %4936 = vmatpush1.msra.mxu0 0.0
  %4937 = vmatprep.subr.mxu0 0.0
  %4938 = vmatpush1.msra.mxu0 0.0
  %4939 = vmatprep.subr.mxu0 0.0
  %4940 = vmatpush1.msra.mxu0 0.0
  %4941 = vmatprep.subr.mxu0 0.0
  %4942 = vmatpush1.msra.mxu0 0.0
  %4943 = vmatprep.subr.mxu0 0.0
  %4944 = vmatpush1.msra.mxu0 0.0
  %4945 = vmatprep.subr.mxu0 0.0
  %4946 = vmatpush1.msra.mxu0 0.0
  %4947 = vmatprep.mubr.f32.mxu0 0.0
  %4948 = vmatmul.mubr.f32.gmra.mrb[0].mxu0 %v4881
  %v4949 = vpop.f32.mrb[0].mxu0
  %v4950 = vadd.f32 0.0, %v4949
  %v4951 = vpop.f32.mrb[0].mxu0
  %4952 = vdwg.mxu0
  %v4954 = vsel %vm383, %v4879, 0
  %4956 = vmatprep.subr.mxu0 0.0
  %4957 = vmatpush1.msra.mxu0 %v4703
  %4958 = vmatprep.subr.mxu0 0.0
  %4959 = vmatpush1.msra.mxu0 0.0
  %4960 = vmatprep.subr.mxu0 0.0
  %4961 = vmatpush1.msra.mxu0 0.0
  %4962 = vmatprep.subr.mxu0 0.0
  %4963 = vmatpush1.msra.mxu0 0.0
  %4964 = vmatprep.subr.mxu0 0.0
  %4965 = vmatpush1.msra.mxu0 0.0
  %4966 = vmatprep.subr.mxu0 0.0
  %4967 = vmatpush1.msra.mxu0 0.0
  %4968 = vmatprep.subr.mxu0 0.0
  %4969 = vmatpush1.msra.mxu0 0.0
  %4970 = vmatprep.subr.mxu0 0.0
  %4971 = vmatpush1.msra.mxu0 0.0
  %4972 = vmatprep.subr.mxu0 0.0
  %4973 = vmatpush1.msra.mxu0 0.0
  %4974 = vmatprep.subr.mxu0 0.0
  %4975 = vmatpush1.msra.mxu0 0.0
  %4976 = vmatprep.subr.mxu0 0.0
  %4977 = vmatpush1.msra.mxu0 0.0
  %4978 = vmatprep.subr.mxu0 0.0
  %4979 = vmatpush1.msra.mxu0 0.0
  %4980 = vmatprep.subr.mxu0 0.0
  %4981 = vmatpush1.msra.mxu0 0.0
  %4982 = vmatprep.subr.mxu0 0.0
  %4983 = vmatpush1.msra.mxu0 0.0
  %4984 = vmatprep.subr.mxu0 0.0
  %4985 = vmatpush1.msra.mxu0 0.0
  %4986 = vmatprep.subr.mxu0 0.0
  %4987 = vmatpush1.msra.mxu0 0.0
  %4988 = vmatprep.subr.mxu0 0.0
  %4989 = vmatpush1.msra.mxu0 0.0
  %4990 = vmatprep.subr.mxu0 0.0
  %4991 = vmatpush1.msra.mxu0 0.0
  %4992 = vmatprep.subr.mxu0 0.0
  %4993 = vmatpush1.msra.mxu0 0.0
  %4994 = vmatprep.subr.mxu0 0.0
  %4995 = vmatpush1.msra.mxu0 0.0
  %4996 = vmatprep.subr.mxu0 0.0
  %4997 = vmatpush1.msra.mxu0 0.0
  %4998 = vmatprep.subr.mxu0 0.0
  %4999 = vmatpush1.msra.mxu0 0.0
  %5000 = vmatprep.subr.mxu0 0.0
  %5001 = vmatpush1.msra.mxu0 0.0
  %5002 = vmatprep.subr.mxu0 0.0
  %5003 = vmatpush1.msra.mxu0 0.0
  %5004 = vmatprep.subr.mxu0 0.0
  %5005 = vmatpush1.msra.mxu0 0.0
  %5006 = vmatprep.subr.mxu0 0.0
  %5007 = vmatpush1.msra.mxu0 0.0
  %5008 = vmatprep.subr.mxu0 0.0
  %5009 = vmatpush1.msra.mxu0 0.0
  %5010 = vmatprep.subr.mxu0 0.0
  %5011 = vmatpush1.msra.mxu0 0.0
  %5012 = vmatprep.subr.mxu0 0.0
  %5013 = vmatpush1.msra.mxu0 0.0
  %5014 = vmatprep.subr.mxu0 0.0
  %5015 = vmatpush1.msra.mxu0 0.0
  %5016 = vmatprep.subr.mxu0 0.0
  %5017 = vmatpush1.msra.mxu0 0.0
  %5018 = vmatprep.subr.mxu0 0.0
  %5019 = vmatpush1.msra.mxu0 0.0
  %5020 = vmatprep.mubr.f32.mxu0 0.0
  %5021 = vmatmul.mubr.f32.gmra.mrb[0].mxu0 %v4954
  %v5022 = vpop.f32.mrb[0].mxu0
  %v5023 = vadd.f32 0.0, %v5022
  %v5024 = vpop.f32.mrb[0].mxu0
  %5025 = vdwg.mxu0
  %s5026 = scalar_lea.vmem %s9, 48
  %v5027 = vld [vmem:[%s5026] sm:$0xff]
  %v5029 = vsel %vm383, %v4950, 0
  %v5032 = vsel %vm383, %v5023, 0
  %5034 = vmatprep.subr.mxu0 0.0
  %5035 = vmatpush1.msra.mxu0 %v5027
  %5036 = vmatprep.subr.mxu0 0.0
  %5037 = vmatpush1.msra.mxu0 0.0
  %5038 = vmatprep.subr.mxu0 0.0
  %5039 = vmatpush1.msra.mxu0 0.0
  %5040 = vmatprep.subr.mxu0 0.0
  %5041 = vmatpush1.msra.mxu0 0.0
  %5042 = vmatprep.subr.mxu0 0.0
  %5043 = vmatpush1.msra.mxu0 0.0
  %5044 = vmatprep.subr.mxu0 0.0
  %5045 = vmatpush1.msra.mxu0 0.0
  %5046 = vmatprep.subr.mxu0 0.0
  %5047 = vmatpush1.msra.mxu0 0.0
  %5048 = vmatprep.subr.mxu0 0.0
  %5049 = vmatpush1.msra.mxu0 0.0
  %5050 = vmatprep.subr.mxu0 0.0
  %5051 = vmatpush1.msra.mxu0 0.0
  %5052 = vmatprep.subr.mxu0 0.0
  %5053 = vmatpush1.msra.mxu0 0.0
  %5054 = vmatprep.subr.mxu0 0.0
  %5055 = vmatpush1.msra.mxu0 0.0
  %5056 = vmatprep.subr.mxu0 0.0
  %5057 = vmatpush1.msra.mxu0 0.0
  %5058 = vmatprep.subr.mxu0 0.0
  %5059 = vmatpush1.msra.mxu0 0.0
  %5060 = vmatprep.subr.mxu0 0.0
  %5061 = vmatpush1.msra.mxu0 0.0
  %5062 = vmatprep.subr.mxu0 0.0
  %5063 = vmatpush1.msra.mxu0 0.0
  %5064 = vmatprep.subr.mxu0 0.0
  %5065 = vmatpush1.msra.mxu0 0.0
  %5066 = vmatprep.subr.mxu0 0.0
  %5067 = vmatpush1.msra.mxu0 0.0
  %5068 = vmatprep.subr.mxu0 0.0
  %5069 = vmatpush1.msra.mxu0 0.0
  %5070 = vmatprep.subr.mxu0 0.0
  %5071 = vmatpush1.msra.mxu0 0.0
  %5072 = vmatprep.subr.mxu0 0.0
  %5073 = vmatpush1.msra.mxu0 0.0
  %5074 = vmatprep.subr.mxu0 0.0
  %5075 = vmatpush1.msra.mxu0 0.0
  %5076 = vmatprep.subr.mxu0 0.0
  %5077 = vmatpush1.msra.mxu0 0.0
  %5078 = vmatprep.subr.mxu0 0.0
  %5079 = vmatpush1.msra.mxu0 0.0
  %5080 = vmatprep.subr.mxu0 0.0
  %5081 = vmatpush1.msra.mxu0 0.0
  %5082 = vmatprep.subr.mxu0 0.0
  %5083 = vmatpush1.msra.mxu0 0.0
  %5084 = vmatprep.subr.mxu0 0.0
  %5085 = vmatpush1.msra.mxu0 0.0
  %5086 = vmatprep.subr.mxu0 0.0
  %5087 = vmatpush1.msra.mxu0 0.0
  %5088 = vmatprep.subr.mxu0 0.0
  %5089 = vmatpush1.msra.mxu0 0.0
  %5090 = vmatprep.subr.mxu0 0.0
  %5091 = vmatpush1.msra.mxu0 0.0
  %5092 = vmatprep.subr.mxu0 0.0
  %5093 = vmatpush1.msra.mxu0 0.0
  %5094 = vmatprep.subr.mxu0 0.0
  %5095 = vmatpush1.msra.mxu0 0.0
  %5096 = vmatprep.subr.mxu0 0.0
  %5097 = vmatpush1.msra.mxu0 0.0
  %5098 = vmatprep.mubr.f32.mxu0 0.0
  %5099 = vmatmul.mubr.f32.gmra.mrb[0].mxu0 %v5029
  %v5100 = vpop.f32.mrb[0].mxu0
  %v5101 = vadd.f32 0.0, %v5100
  %v5102 = vpop.f32.mrb[0].mxu0
  %5103 = vmatprep.mubr.f32.mxu0 0.0
  %5104 = vmatmul.mubr.f32.gmra.mrb[0].mxu0 %v5032
  %v5105 = vpop.f32.mrb[0].mxu0
  %v5106 = vadd.f32 0.0, %v5105
  %v5107 = vpop.f32.mrb[0].mxu0
  %5108 = vdwg.mxu0
  %v5109 = vadd.f32 %v4434, %v5101
  %v5110 = vadd.f32 %v4439, %v5106
  %s5111 = scalar_lea.vmem %s3, 224
  %v5112 = vld [vmem:[%s5111] sm:$0xff]
  %v5113 = vld [vmem:[%s5111 + $0x8] sm:$0xff]
  %v5114 = vld [vmem:[%s5111 + $0x10] sm:$0xff]
  %v5115 = vld [vmem:[%s5111 + $0x18] sm:$0xff]
  %s5116 = scalar_lea.vmem %s6, 7
  %v5117 = vld [vmem:[%s5116] sm:$0x1]
  %v5119 = vlaneseq
  %v5120 = vshrl.u32 %v5119, 7
  %v5121 = vsub.s32 0, %v5120
  %v5122 = vrot.slane %v5117, %v5121
  %5124 = vmatprep.subr.mxu0 0.0
  %5125 = vmatpush1.msra.mxu0 %v5112
  %5126 = vmatprep.subr.mxu0 0.0
  %5127 = vmatpush1.msra.mxu0 %v5113
  %5128 = vmatprep.subr.mxu0 0.0
  %5129 = vmatpush1.msra.mxu0 %v5114
  %5130 = vmatprep.subr.mxu0 0.0
  %5131 = vmatpush1.msra.mxu0 %v5115
  %5132 = vmatprep.subr.mxu0 0.0
  %5133 = vmatpush1.msra.mxu0 0.0
  %5134 = vmatprep.subr.mxu0 0.0
  %5135 = vmatpush1.msra.mxu0 0.0
  %5136 = vmatprep.subr.mxu0 0.0
  %5137 = vmatpush1.msra.mxu0 0.0
  %5138 = vmatprep.subr.mxu0 0.0
  %5139 = vmatpush1.msra.mxu0 0.0
  %5140 = vmatprep.subr.mxu0 0.0
  %5141 = vmatpush1.msra.mxu0 0.0
  %5142 = vmatprep.subr.mxu0 0.0
  %5143 = vmatpush1.msra.mxu0 0.0
  %5144 = vmatprep.subr.mxu0 0.0
  %5145 = vmatpush1.msra.mxu0 0.0
  %5146 = vmatprep.subr.mxu0 0.0
  %5147 = vmatpush1.msra.mxu0 0.0
  %5148 = vmatprep.subr.mxu0 0.0
  %5149 = vmatpush1.msra.mxu0 0.0
  %5150 = vmatprep.subr.mxu0 0.0
  %5151 = vmatpush1.msra.mxu0 0.0
  %5152 = vmatprep.subr.mxu0 0.0
  %5153 = vmatpush1.msra.mxu0 0.0
  %5154 = vmatprep.subr.mxu0 0.0
  %5155 = vmatpush1.msra.mxu0 0.0
  %5156 = vmatprep.subr.mxu0 0.0
  %5157 = vmatpush1.msra.mxu0 0.0
  %5158 = vmatprep.subr.mxu0 0.0
  %5159 = vmatpush1.msra.mxu0 0.0
  %5160 = vmatprep.subr.mxu0 0.0
  %5161 = vmatpush1.msra.mxu0 0.0
  %5162 = vmatprep.subr.mxu0 0.0
  %5163 = vmatpush1.msra.mxu0 0.0
  %5164 = vmatprep.subr.mxu0 0.0
  %5165 = vmatpush1.msra.mxu0 0.0
  %5166 = vmatprep.subr.mxu0 0.0
  %5167 = vmatpush1.msra.mxu0 0.0
  %5168 = vmatprep.subr.mxu0 0.0
  %5169 = vmatpush1.msra.mxu0 0.0
  %5170 = vmatprep.subr.mxu0 0.0
  %5171 = vmatpush1.msra.mxu0 0.0
  %5172 = vmatprep.subr.mxu0 0.0
  %5173 = vmatpush1.msra.mxu0 0.0
  %5174 = vmatprep.subr.mxu0 0.0
  %5175 = vmatpush1.msra.mxu0 0.0
  %5176 = vmatprep.subr.mxu0 0.0
  %5177 = vmatpush1.msra.mxu0 0.0
  %5178 = vmatprep.subr.mxu0 0.0
  %5179 = vmatpush1.msra.mxu0 0.0
  %5180 = vmatprep.subr.mxu0 0.0
  %5181 = vmatpush1.msra.mxu0 0.0
  %5182 = vmatprep.subr.mxu0 0.0
  %5183 = vmatpush1.msra.mxu0 0.0
  %5184 = vmatprep.subr.mxu0 0.0
  %5185 = vmatpush1.msra.mxu0 0.0
  %5186 = vmatprep.subr.mxu0 0.0
  %5187 = vmatpush1.msra.mxu0 0.0
  %5188 = vmatprep.mubr.f32.mxu0 0.0
  %5189 = vmatmul.mubr.f32.gmra.mrb[0].mxu0 %v3116
  %v5190 = vpop.f32.mrb[0].mxu0
  %v5191 = vadd.f32 %v5122, %v5190
  %v5192 = vpop.f32.mrb[0].mxu0
  %5193 = vmatprep.mubr.f32.mxu0 0.0
  %5194 = vmatmul.mubr.f32.gmra.mrb[0].mxu0 %v3119
  %v5195 = vpop.f32.mrb[0].mxu0
  %v5196 = vadd.f32 %v5122, %v5195
  %v5197 = vpop.f32.mrb[0].mxu0
  %5198 = vdwg.mxu0
  %s5199 = scalar_lea.vmem %s4, 224
  %v5200 = vld [vmem:[%s5199] sm:$0xff]
  %v5201 = vld [vmem:[%s5199 + $0x8] sm:$0xff]
  %v5202 = vld [vmem:[%s5199 + $0x10] sm:$0xff]
  %v5203 = vld [vmem:[%s5199 + $0x18] sm:$0xff]
  %s5204 = scalar_lea.vmem %s7, 7
  %v5205 = vld [vmem:[%s5204] sm:$0x1]
  %v5207 = vlaneseq
  %v5208 = vshrl.u32 %v5207, 7
  %v5209 = vsub.s32 0, %v5208
  %v5210 = vrot.slane %v5205, %v5209
  %5212 = vmatprep.subr.mxu0 0.0
  %5213 = vmatpush1.msra.mxu0 %v5200
  %5214 = vmatprep.subr.mxu0 0.0
  %5215 = vmatpush1.msra.mxu0 %v5201
  %5216 = vmatprep.subr.mxu0 0.0
  %5217 = vmatpush1.msra.mxu0 %v5202
  %5218 = vmatprep.subr.mxu0 0.0
  %5219 = vmatpush1.msra.mxu0 %v5203
  %5220 = vmatprep.subr.mxu0 0.0
  %5221 = vmatpush1.msra.mxu0 0.0
  %5222 = vmatprep.subr.mxu0 0.0
  %5223 = vmatpush1.msra.mxu0 0.0
  %5224 = vmatprep.subr.mxu0 0.0
  %5225 = vmatpush1.msra.mxu0 0.0
  %5226 = vmatprep.subr.mxu0 0.0
  %5227 = vmatpush1.msra.mxu0 0.0
  %5228 = vmatprep.subr.mxu0 0.0
  %5229 = vmatpush1.msra.mxu0 0.0
  %5230 = vmatprep.subr.mxu0 0.0
  %5231 = vmatpush1.msra.mxu0 0.0
  %5232 = vmatprep.subr.mxu0 0.0
  %5233 = vmatpush1.msra.mxu0 0.0
  %5234 = vmatprep.subr.mxu0 0.0
  %5235 = vmatpush1.msra.mxu0 0.0
  %5236 = vmatprep.subr.mxu0 0.0
  %5237 = vmatpush1.msra.mxu0 0.0
  %5238 = vmatprep.subr.mxu0 0.0
  %5239 = vmatpush1.msra.mxu0 0.0
  %5240 = vmatprep.subr.mxu0 0.0
  %5241 = vmatpush1.msra.mxu0 0.0
  %5242 = vmatprep.subr.mxu0 0.0
  %5243 = vmatpush1.msra.mxu0 0.0
  %5244 = vmatprep.subr.mxu0 0.0
  %5245 = vmatpush1.msra.mxu0 0.0
  %5246 = vmatprep.subr.mxu0 0.0
  %5247 = vmatpush1.msra.mxu0 0.0
  %5248 = vmatprep.subr.mxu0 0.0
  %5249 = vmatpush1.msra.mxu0 0.0
  %5250 = vmatprep.subr.mxu0 0.0
  %5251 = vmatpush1.msra.mxu0 0.0
  %5252 = vmatprep.subr.mxu0 0.0
  %5253 = vmatpush1.msra.mxu0 0.0
  %5254 = vmatprep.subr.mxu0 0.0
  %5255 = vmatpush1.msra.mxu0 0.0
  %5256 = vmatprep.subr.mxu0 0.0
  %5257 = vmatpush1.msra.mxu0 0.0
  %5258 = vmatprep.subr.mxu0 0.0
  %5259 = vmatpush1.msra.mxu0 0.0
  %5260 = vmatprep.subr.mxu0 0.0
  %5261 = vmatpush1.msra.mxu0 0.0
  %5262 = vmatprep.subr.mxu0 0.0
  %5263 = vmatpush1.msra.mxu0 0.0
  %5264 = vmatprep.subr.mxu0 0.0
  %5265 = vmatpush1.msra.mxu0 0.0
  %5266 = vmatprep.subr.mxu0 0.0
  %5267 = vmatpush1.msra.mxu0 0.0
  %5268 = vmatprep.subr.mxu0 0.0
  %5269 = vmatpush1.msra.mxu0 0.0
  %5270 = vmatprep.subr.mxu0 0.0
  %5271 = vmatpush1.msra.mxu0 0.0
  %5272 = vmatprep.subr.mxu0 0.0
  %5273 = vmatpush1.msra.mxu0 0.0
  %5274 = vmatprep.subr.mxu0 0.0
  %5275 = vmatpush1.msra.mxu0 0.0
  %5276 = vmatprep.mubr.f32.mxu0 0.0
  %5277 = vmatmul.mubr.f32.gmra.mrb[0].mxu0 %v3116
  %v5278 = vpop.f32.mrb[0].mxu0
  %v5279 = vadd.f32 %v5210, %v5278
  %v5280 = vpop.f32.mrb[0].mxu0
  %5281 = vmatprep.mubr.f32.mxu0 0.0
  %5282 = vmatmul.mubr.f32.gmra.mrb[0].mxu0 %v3119
  %v5283 = vpop.f32.mrb[0].mxu0
  %v5284 = vadd.f32 %v5210, %v5283
  %v5285 = vpop.f32.mrb[0].mxu0
  %5286 = vdwg.mxu0
  %s5287 = scalar_lea.vmem %s5, 224
  %v5288 = vld [vmem:[%s5287] sm:$0xff]
  %v5289 = vld [vmem:[%s5287 + $0x8] sm:$0xff]
  %v5290 = vld [vmem:[%s5287 + $0x10] sm:$0xff]
  %v5291 = vld [vmem:[%s5287 + $0x18] sm:$0xff]
  %s5292 = scalar_lea.vmem %s8, 7
  %v5293 = vld [vmem:[%s5292] sm:$0x1]
  %v5295 = vlaneseq
  %v5296 = vshrl.u32 %v5295, 7
  %v5297 = vsub.s32 0, %v5296
  %v5298 = vrot.slane %v5293, %v5297
  %5300 = vmatprep.subr.mxu0 0.0
  %5301 = vmatpush1.msra.mxu0 %v5288
  %5302 = vmatprep.subr.mxu0 0.0
  %5303 = vmatpush1.msra.mxu0 %v5289
  %5304 = vmatprep.subr.mxu0 0.0
  %5305 = vmatpush1.msra.mxu0 %v5290
  %5306 = vmatprep.subr.mxu0 0.0
  %5307 = vmatpush1.msra.mxu0 %v5291
  %5308 = vmatprep.subr.mxu0 0.0
  %5309 = vmatpush1.msra.mxu0 0.0
  %5310 = vmatprep.subr.mxu0 0.0
  %5311 = vmatpush1.msra.mxu0 0.0
  %5312 = vmatprep.subr.mxu0 0.0
  %5313 = vmatpush1.msra.mxu0 0.0
  %5314 = vmatprep.subr.mxu0 0.0
  %5315 = vmatpush1.msra.mxu0 0.0
  %5316 = vmatprep.subr.mxu0 0.0
  %5317 = vmatpush1.msra.mxu0 0.0
  %5318 = vmatprep.subr.mxu0 0.0
  %5319 = vmatpush1.msra.mxu0 0.0
  %5320 = vmatprep.subr.mxu0 0.0
  %5321 = vmatpush1.msra.mxu0 0.0
  %5322 = vmatprep.subr.mxu0 0.0
  %5323 = vmatpush1.msra.mxu0 0.0
  %5324 = vmatprep.subr.mxu0 0.0
  %5325 = vmatpush1.msra.mxu0 0.0
  %5326 = vmatprep.subr.mxu0 0.0
  %5327 = vmatpush1.msra.mxu0 0.0
  %5328 = vmatprep.subr.mxu0 0.0
  %5329 = vmatpush1.msra.mxu0 0.0
  %5330 = vmatprep.subr.mxu0 0.0
  %5331 = vmatpush1.msra.mxu0 0.0
  %5332 = vmatprep.subr.mxu0 0.0
  %5333 = vmatpush1.msra.mxu0 0.0
  %5334 = vmatprep.subr.mxu0 0.0
  %5335 = vmatpush1.msra.mxu0 0.0
  %5336 = vmatprep.subr.mxu0 0.0
  %5337 = vmatpush1.msra.mxu0 0.0
  %5338 = vmatprep.subr.mxu0 0.0
  %5339 = vmatpush1.msra.mxu0 0.0
  %5340 = vmatprep.subr.mxu0 0.0
  %5341 = vmatpush1.msra.mxu0 0.0
  %5342 = vmatprep.subr.mxu0 0.0
  %5343 = vmatpush1.msra.mxu0 0.0
  %5344 = vmatprep.subr.mxu0 0.0
  %5345 = vmatpush1.msra.mxu0 0.0
  %5346 = vmatprep.subr.mxu0 0.0
  %5347 = vmatpush1.msra.mxu0 0.0
  %5348 = vmatprep.subr.mxu0 0.0
  %5349 = vmatpush1.msra.mxu0 0.0
  %5350 = vmatprep.subr.mxu0 0.0
  %5351 = vmatpush1.msra.mxu0 0.0
  %5352 = vmatprep.subr.mxu0 0.0
  %5353 = vmatpush1.msra.mxu0 0.0
  %5354 = vmatprep.subr.mxu0 0.0
  %5355 = vmatpush1.msra.mxu0 0.0
  %5356 = vmatprep.subr.mxu0 0.0
  %5357 = vmatpush1.msra.mxu0 0.0
  %5358 = vmatprep.subr.mxu0 0.0
  %5359 = vmatpush1.msra.mxu0 0.0
  %5360 = vmatprep.subr.mxu0 0.0
  %5361 = vmatpush1.msra.mxu0 0.0
  %5362 = vmatprep.subr.mxu0 0.0
  %5363 = vmatpush1.msra.mxu0 0.0
  %5364 = vmatprep.mubr.f32.mxu0 0.0
  %5365 = vmatmul.mubr.f32.gmra.mrb[0].mxu0 %v3116
  %v5366 = vpop.f32.mrb[0].mxu0
  %v5367 = vadd.f32 %v5298, %v5366
  %v5368 = vpop.f32.mrb[0].mxu0
  %5369 = vmatprep.mubr.f32.mxu0 0.0
  %5370 = vmatmul.mubr.f32.gmra.mrb[0].mxu0 %v3119
  %v5371 = vpop.f32.mrb[0].mxu0
  %v5372 = vadd.f32 %v5298, %v5371
  %v5373 = vpop.f32.mrb[0].mxu0
  %5374 = vdwg.mxu0
  %v5376 = vsel %vm383, %v5191, 0
  %v5379 = vsel %vm383, %v5279, 0
  %5381 = vmatprep.subr.mxu0 0.0
  %5382 = vmatpush1.xpose.msra.mxu0 %v5379
  %5383 = vmatprep.subr.mxu0 0.0
  %5384 = vmatpush1.xpose.msra.mxu0 0.0
  %5385 = vmatprep.subr.mxu0 0.0
  %5386 = vmatpush1.xpose.msra.mxu0 0.0
  %5387 = vmatprep.subr.mxu0 0.0
  %5388 = vmatpush1.xpose.msra.mxu0 0.0
  %5389 = vmatprep.subr.mxu0 0.0
  %5390 = vmatpush1.xpose.msra.mxu0 0.0
  %5391 = vmatprep.subr.mxu0 0.0
  %5392 = vmatpush1.xpose.msra.mxu0 0.0
  %5393 = vmatprep.subr.mxu0 0.0
  %5394 = vmatpush1.xpose.msra.mxu0 0.0
  %5395 = vmatprep.subr.mxu0 0.0
  %5396 = vmatpush1.xpose.msra.mxu0 0.0
  %5397 = vmatprep.subr.mxu0 0.0
  %5398 = vmatpush1.xpose.msra.mxu0 0.0
  %5399 = vmatprep.subr.mxu0 0.0
  %5400 = vmatpush1.xpose.msra.mxu0 0.0
  %5401 = vmatprep.subr.mxu0 0.0
  %5402 = vmatpush1.xpose.msra.mxu0 0.0
  %5403 = vmatprep.subr.mxu0 0.0
  %5404 = vmatpush1.xpose.msra.mxu0 0.0
  %5405 = vmatprep.subr.mxu0 0.0
  %5406 = vmatpush1.xpose.msra.mxu0 0.0
  %5407 = vmatprep.subr.mxu0 0.0
  %5408 = vmatpush1.xpose.msra.mxu0 0.0
  %5409 = vmatprep.subr.mxu0 0.0
  %5410 = vmatpush1.xpose.msra.mxu0 0.0
  %5411 = vmatprep.subr.mxu0 0.0
  %5412 = vmatpush1.xpose.msra.mxu0 0.0
  %5413 = vmatprep.subr.mxu0 0.0
  %5414 = vmatpush1.xpose.msra.mxu0 0.0
  %5415 = vmatprep.subr.mxu0 0.0
  %5416 = vmatpush1.xpose.msra.mxu0 0.0
  %5417 = vmatprep.subr.mxu0 0.0
  %5418 = vmatpush1.xpose.msra.mxu0 0.0
  %5419 = vmatprep.subr.mxu0 0.0
  %5420 = vmatpush1.xpose.msra.mxu0 0.0
  %5421 = vmatprep.subr.mxu0 0.0
  %5422 = vmatpush1.xpose.msra.mxu0 0.0
  %5423 = vmatprep.subr.mxu0 0.0
  %5424 = vmatpush1.xpose.msra.mxu0 0.0
  %5425 = vmatprep.subr.mxu0 0.0
  %5426 = vmatpush1.xpose.msra.mxu0 0.0
  %5427 = vmatprep.subr.mxu0 0.0
  %5428 = vmatpush1.xpose.msra.mxu0 0.0
  %5429 = vmatprep.subr.mxu0 0.0
  %5430 = vmatpush1.xpose.msra.mxu0 0.0
  %5431 = vmatprep.subr.mxu0 0.0
  %5432 = vmatpush1.xpose.msra.mxu0 0.0
  %5433 = vmatprep.subr.mxu0 0.0
  %5434 = vmatpush1.xpose.msra.mxu0 0.0
  %5435 = vmatprep.subr.mxu0 0.0
  %5436 = vmatpush1.xpose.msra.mxu0 0.0
  %5437 = vmatprep.subr.mxu0 0.0
  %5438 = vmatpush1.xpose.msra.mxu0 0.0
  %5439 = vmatprep.subr.mxu0 0.0
  %5440 = vmatpush1.xpose.msra.mxu0 0.0
  %5441 = vmatprep.subr.mxu0 0.0
  %5442 = vmatpush1.xpose.msra.mxu0 0.0
  %5443 = vmatprep.subr.mxu0 0.0
  %5444 = vmatpush1.xpose.msra.mxu0 0.0
  %5445 = vmatprep.mubr.f32.mxu0 0.0
  %5446 = vmatmul.mubr.f32.gmra.mrb[0].mxu0 %v5376
  %v5447 = vpop.f32.mrb[0].mxu0
  %v5448 = vadd.f32 %v72, %v5447
  %v5449 = vpop.f32.mrb[0].mxu0
  %5450 = vdwg.mxu0
  %v5452 = vsel %vm383, %v5196, 0
  %v5455 = vsel %vm383, %v5284, 0
  %5457 = vmatprep.subr.mxu0 0.0
  %5458 = vmatpush1.xpose.msra.mxu0 %v5455
  %5459 = vmatprep.subr.mxu0 0.0
  %5460 = vmatpush1.xpose.msra.mxu0 0.0
  %5461 = vmatprep.subr.mxu0 0.0
  %5462 = vmatpush1.xpose.msra.mxu0 0.0
  %5463 = vmatprep.subr.mxu0 0.0
  %5464 = vmatpush1.xpose.msra.mxu0 0.0
  %5465 = vmatprep.subr.mxu0 0.0
  %5466 = vmatpush1.xpose.msra.mxu0 0.0
  %5467 = vmatprep.subr.mxu0 0.0
  %5468 = vmatpush1.xpose.msra.mxu0 0.0
  %5469 = vmatprep.subr.mxu0 0.0
  %5470 = vmatpush1.xpose.msra.mxu0 0.0
  %5471 = vmatprep.subr.mxu0 0.0
  %5472 = vmatpush1.xpose.msra.mxu0 0.0
  %5473 = vmatprep.subr.mxu0 0.0
  %5474 = vmatpush1.xpose.msra.mxu0 0.0
  %5475 = vmatprep.subr.mxu0 0.0
  %5476 = vmatpush1.xpose.msra.mxu0 0.0
  %5477 = vmatprep.subr.mxu0 0.0
  %5478 = vmatpush1.xpose.msra.mxu0 0.0
  %5479 = vmatprep.subr.mxu0 0.0
  %5480 = vmatpush1.xpose.msra.mxu0 0.0
  %5481 = vmatprep.subr.mxu0 0.0
  %5482 = vmatpush1.xpose.msra.mxu0 0.0
  %5483 = vmatprep.subr.mxu0 0.0
  %5484 = vmatpush1.xpose.msra.mxu0 0.0
  %5485 = vmatprep.subr.mxu0 0.0
  %5486 = vmatpush1.xpose.msra.mxu0 0.0
  %5487 = vmatprep.subr.mxu0 0.0
  %5488 = vmatpush1.xpose.msra.mxu0 0.0
  %5489 = vmatprep.subr.mxu0 0.0
  %5490 = vmatpush1.xpose.msra.mxu0 0.0
  %5491 = vmatprep.subr.mxu0 0.0
  %5492 = vmatpush1.xpose.msra.mxu0 0.0
  %5493 = vmatprep.subr.mxu0 0.0
  %5494 = vmatpush1.xpose.msra.mxu0 0.0
  %5495 = vmatprep.subr.mxu0 0.0
  %5496 = vmatpush1.xpose.msra.mxu0 0.0
  %5497 = vmatprep.subr.mxu0 0.0
  %5498 = vmatpush1.xpose.msra.mxu0 0.0
  %5499 = vmatprep.subr.mxu0 0.0
  %5500 = vmatpush1.xpose.msra.mxu0 0.0
  %5501 = vmatprep.subr.mxu0 0.0
  %5502 = vmatpush1.xpose.msra.mxu0 0.0
  %5503 = vmatprep.subr.mxu0 0.0
  %5504 = vmatpush1.xpose.msra.mxu0 0.0
  %5505 = vmatprep.subr.mxu0 0.0
  %5506 = vmatpush1.xpose.msra.mxu0 0.0
  %5507 = vmatprep.subr.mxu0 0.0
  %5508 = vmatpush1.xpose.msra.mxu0 0.0
  %5509 = vmatprep.subr.mxu0 0.0
  %5510 = vmatpush1.xpose.msra.mxu0 0.0
  %5511 = vmatprep.subr.mxu0 0.0
  %5512 = vmatpush1.xpose.msra.mxu0 0.0
  %5513 = vmatprep.subr.mxu0 0.0
  %5514 = vmatpush1.xpose.msra.mxu0 0.0
  %5515 = vmatprep.subr.mxu0 0.0
  %5516 = vmatpush1.xpose.msra.mxu0 0.0
  %5517 = vmatprep.subr.mxu0 0.0
  %5518 = vmatpush1.xpose.msra.mxu0 0.0
  %5519 = vmatprep.subr.mxu0 0.0
  %5520 = vmatpush1.xpose.msra.mxu0 0.0
  %5521 = vmatprep.mubr.f32.mxu0 0.0
  %5522 = vmatmul.mubr.f32.gmra.mrb[0].mxu0 %v5452
  %v5523 = vpop.f32.mrb[0].mxu0
  %v5524 = vadd.f32 %v72, %v5523
  %v5525 = vpop.f32.mrb[0].mxu0
  %5526 = vdwg.mxu0
  %v5527 = vsel %vm383, %v5448, -inf
  %5528 = vmax.xlane.f32.xlu0 %v5527
  %v5529 = vpop.xlane.xlu0 %5528
  %v5530 = vsel %vm383, %v5524, -inf
  %5531 = vmax.xlane.f32.xlu0 %v5530
  %v5532 = vpop.xlane.xlu0 %5531
  %v5533 = vsub.f32 %v5448, %v5529
  %v5534 = vsub.f32 %v5524, %v5532
  %v5535 = vmul.f32 %v5533, 1.442695
  %v5536 = vpow.pop %v5535
  %v5537 = vmul.f32 %v5534, 1.442695
  %v5538 = vpow.pop %v5537
  %v5539 = vsel %vm383, %v5536, 0.0
  %5540 = vadd.xlane.f32.xlu0 %v5539
  %v5541 = vpop.xlane.xlu0 %5540
  %v5542 = vsel %vm383, %v5538, 0.0
  %5543 = vadd.xlane.f32.xlu0 %v5542
  %v5544 = vpop.xlane.xlu0 %5543
  %v5545 = vrcp.pop %v5541
  %v5546 = vmul.f32 %v5536, %v5545
  %v5547 = vrcp.pop %v5544
  %v5548 = vmul.f32 %v5538, %v5547
  %v5550 = vsel %vm383, %v5546, 0
  %5552 = vmatprep.subr.mxu0 0.0
  %5553 = vmatpush1.msra.mxu0 %v5367
  %5554 = vmatprep.subr.mxu0 0.0
  %5555 = vmatpush1.msra.mxu0 0.0
  %5556 = vmatprep.subr.mxu0 0.0
  %5557 = vmatpush1.msra.mxu0 0.0
  %5558 = vmatprep.subr.mxu0 0.0
  %5559 = vmatpush1.msra.mxu0 0.0
  %5560 = vmatprep.subr.mxu0 0.0
  %5561 = vmatpush1.msra.mxu0 0.0
  %5562 = vmatprep.subr.mxu0 0.0
  %5563 = vmatpush1.msra.mxu0 0.0
  %5564 = vmatprep.subr.mxu0 0.0
  %5565 = vmatpush1.msra.mxu0 0.0
  %5566 = vmatprep.subr.mxu0 0.0
  %5567 = vmatpush1.msra.mxu0 0.0
  %5568 = vmatprep.subr.mxu0 0.0
  %5569 = vmatpush1.msra.mxu0 0.0
  %5570 = vmatprep.subr.mxu0 0.0
  %5571 = vmatpush1.msra.mxu0 0.0
  %5572 = vmatprep.subr.mxu0 0.0
  %5573 = vmatpush1.msra.mxu0 0.0
  %5574 = vmatprep.subr.mxu0 0.0
  %5575 = vmatpush1.msra.mxu0 0.0
  %5576 = vmatprep.subr.mxu0 0.0
  %5577 = vmatpush1.msra.mxu0 0.0
  %5578 = vmatprep.subr.mxu0 0.0
  %5579 = vmatpush1.msra.mxu0 0.0
  %5580 = vmatprep.subr.mxu0 0.0
  %5581 = vmatpush1.msra.mxu0 0.0
  %5582 = vmatprep.subr.mxu0 0.0
  %5583 = vmatpush1.msra.mxu0 0.0
  %5584 = vmatprep.subr.mxu0 0.0
  %5585 = vmatpush1.msra.mxu0 0.0
  %5586 = vmatprep.subr.mxu0 0.0
  %5587 = vmatpush1.msra.mxu0 0.0
  %5588 = vmatprep.subr.mxu0 0.0
  %5589 = vmatpush1.msra.mxu0 0.0
  %5590 = vmatprep.subr.mxu0 0.0
  %5591 = vmatpush1.msra.mxu0 0.0
  %5592 = vmatprep.subr.mxu0 0.0
  %5593 = vmatpush1.msra.mxu0 0.0
  %5594 = vmatprep.subr.mxu0 0.0
  %5595 = vmatpush1.msra.mxu0 0.0
  %5596 = vmatprep.subr.mxu0 0.0
  %5597 = vmatpush1.msra.mxu0 0.0
  %5598 = vmatprep.subr.mxu0 0.0
  %5599 = vmatpush1.msra.mxu0 0.0
  %5600 = vmatprep.subr.mxu0 0.0
  %5601 = vmatpush1.msra.mxu0 0.0
  %5602 = vmatprep.subr.mxu0 0.0
  %5603 = vmatpush1.msra.mxu0 0.0
  %5604 = vmatprep.subr.mxu0 0.0
  %5605 = vmatpush1.msra.mxu0 0.0
  %5606 = vmatprep.subr.mxu0 0.0
  %5607 = vmatpush1.msra.mxu0 0.0
  %5608 = vmatprep.subr.mxu0 0.0
  %5609 = vmatpush1.msra.mxu0 0.0
  %5610 = vmatprep.subr.mxu0 0.0
  %5611 = vmatpush1.msra.mxu0 0.0
  %5612 = vmatprep.subr.mxu0 0.0
  %5613 = vmatpush1.msra.mxu0 0.0
  %5614 = vmatprep.subr.mxu0 0.0
  %5615 = vmatpush1.msra.mxu0 0.0
  %5616 = vmatprep.mubr.f32.mxu0 0.0
  %5617 = vmatmul.mubr.f32.gmra.mrb[0].mxu0 %v5550
  %v5618 = vpop.f32.mrb[0].mxu0
  %v5619 = vadd.f32 0.0, %v5618
  %v5620 = vpop.f32.mrb[0].mxu0
  %5621 = vdwg.mxu0
  %v5623 = vsel %vm383, %v5548, 0
  %5625 = vmatprep.subr.mxu0 0.0
  %5626 = vmatpush1.msra.mxu0 %v5372
  %5627 = vmatprep.subr.mxu0 0.0
  %5628 = vmatpush1.msra.mxu0 0.0
  %5629 = vmatprep.subr.mxu0 0.0
  %5630 = vmatpush1.msra.mxu0 0.0
  %5631 = vmatprep.subr.mxu0 0.0
  %5632 = vmatpush1.msra.mxu0 0.0
  %5633 = vmatprep.subr.mxu0 0.0
  %5634 = vmatpush1.msra.mxu0 0.0
  %5635 = vmatprep.subr.mxu0 0.0
  %5636 = vmatpush1.msra.mxu0 0.0
  %5637 = vmatprep.subr.mxu0 0.0
  %5638 = vmatpush1.msra.mxu0 0.0
  %5639 = vmatprep.subr.mxu0 0.0
  %5640 = vmatpush1.msra.mxu0 0.0
  %5641 = vmatprep.subr.mxu0 0.0
  %5642 = vmatpush1.msra.mxu0 0.0
  %5643 = vmatprep.subr.mxu0 0.0
  %5644 = vmatpush1.msra.mxu0 0.0
  %5645 = vmatprep.subr.mxu0 0.0
  %5646 = vmatpush1.msra.mxu0 0.0
  %5647 = vmatprep.subr.mxu0 0.0
  %5648 = vmatpush1.msra.mxu0 0.0
  %5649 = vmatprep.subr.mxu0 0.0
  %5650 = vmatpush1.msra.mxu0 0.0
  %5651 = vmatprep.subr.mxu0 0.0
  %5652 = vmatpush1.msra.mxu0 0.0
  %5653 = vmatprep.subr.mxu0 0.0
  %5654 = vmatpush1.msra.mxu0 0.0
  %5655 = vmatprep.subr.mxu0 0.0
  %5656 = vmatpush1.msra.mxu0 0.0
  %5657 = vmatprep.subr.mxu0 0.0
  %5658 = vmatpush1.msra.mxu0 0.0
  %5659 = vmatprep.subr.mxu0 0.0
  %5660 = vmatpush1.msra.mxu0 0.0
  %5661 = vmatprep.subr.mxu0 0.0
  %5662 = vmatpush1.msra.mxu0 0.0
  %5663 = vmatprep.subr.mxu0 0.0
  %5664 = vmatpush1.msra.mxu0 0.0
  %5665 = vmatprep.subr.mxu0 0.0
  %5666 = vmatpush1.msra.mxu0 0.0
  %5667 = vmatprep.subr.mxu0 0.0
  %5668 = vmatpush1.msra.mxu0 0.0
  %5669 = vmatprep.subr.mxu0 0.0
  %5670 = vmatpush1.msra.mxu0 0.0
  %5671 = vmatprep.subr.mxu0 0.0
  %5672 = vmatpush1.msra.mxu0 0.0
  %5673 = vmatprep.subr.mxu0 0.0
  %5674 = vmatpush1.msra.mxu0 0.0
  %5675 = vmatprep.subr.mxu0 0.0
  %5676 = vmatpush1.msra.mxu0 0.0
  %5677 = vmatprep.subr.mxu0 0.0
  %5678 = vmatpush1.msra.mxu0 0.0
  %5679 = vmatprep.subr.mxu0 0.0
  %5680 = vmatpush1.msra.mxu0 0.0
  %5681 = vmatprep.subr.mxu0 0.0
  %5682 = vmatpush1.msra.mxu0 0.0
  %5683 = vmatprep.subr.mxu0 0.0
  %5684 = vmatpush1.msra.mxu0 0.0
  %5685 = vmatprep.subr.mxu0 0.0
  %5686 = vmatpush1.msra.mxu0 0.0
  %5687 = vmatprep.subr.mxu0 0.0
  %5688 = vmatpush1.msra.mxu0 0.0
  %5689 = vmatprep.mubr.f32.mxu0 0.0
  %5690 = vmatmul.mubr.f32.gmra.mrb[0].mxu0 %v5623
  %v5691 = vpop.f32.mrb[0].mxu0
  %v5692 = vadd.f32 0.0, %v5691
  %v5693 = vpop.f32.mrb[0].mxu0
  %5694 = vdwg.mxu0
  %s5695 = scalar_lea.vmem %s9, 56
  %v5696 = vld [vmem:[%s5695] sm:$0xff]
  %v5698 = vsel %vm383, %v5619, 0
  %v5701 = vsel %vm383, %v5692, 0
  %5703 = vmatprep.subr.mxu0 0.0
  %5704 = vmatpush1.msra.mxu0 %v5696
  %5705 = vmatprep.subr.mxu0 0.0
  %5706 = vmatpush1.msra.mxu0 0.0
  %5707 = vmatprep.subr.mxu0 0.0
  %5708 = vmatpush1.msra.mxu0 0.0
  %5709 = vmatprep.subr.mxu0 0.0
  %5710 = vmatpush1.msra.mxu0 0.0
  %5711 = vmatprep.subr.mxu0 0.0
  %5712 = vmatpush1.msra.mxu0 0.0
  %5713 = vmatprep.subr.mxu0 0.0
  %5714 = vmatpush1.msra.mxu0 0.0
  %5715 = vmatprep.subr.mxu0 0.0
  %5716 = vmatpush1.msra.mxu0 0.0
  %5717 = vmatprep.subr.mxu0 0.0
  %5718 = vmatpush1.msra.mxu0 0.0
  %5719 = vmatprep.subr.mxu0 0.0
  %5720 = vmatpush1.msra.mxu0 0.0
  %5721 = vmatprep.subr.mxu0 0.0
  %5722 = vmatpush1.msra.mxu0 0.0
  %5723 = vmatprep.subr.mxu0 0.0
  %5724 = vmatpush1.msra.mxu0 0.0
  %5725 = vmatprep.subr.mxu0 0.0
  %5726 = vmatpush1.msra.mxu0 0.0
  %5727 = vmatprep.subr.mxu0 0.0
  %5728 = vmatpush1.msra.mxu0 0.0
  %5729 = vmatprep.subr.mxu0 0.0
  %5730 = vmatpush1.msra.mxu0 0.0
  %5731 = vmatprep.subr.mxu0 0.0
  %5732 = vmatpush1.msra.mxu0 0.0
  %5733 = vmatprep.subr.mxu0 0.0
  %5734 = vmatpush1.msra.mxu0 0.0
  %5735 = vmatprep.subr.mxu0 0.0
  %5736 = vmatpush1.msra.mxu0 0.0
  %5737 = vmatprep.subr.mxu0 0.0
  %5738 = vmatpush1.msra.mxu0 0.0
  %5739 = vmatprep.subr.mxu0 0.0
  %5740 = vmatpush1.msra.mxu0 0.0
  %5741 = vmatprep.subr.mxu0 0.0
  %5742 = vmatpush1.msra.mxu0 0.0
  %5743 = vmatprep.subr.mxu0 0.0
  %5744 = vmatpush1.msra.mxu0 0.0
  %5745 = vmatprep.subr.mxu0 0.0
  %5746 = vmatpush1.msra.mxu0 0.0
  %5747 = vmatprep.subr.mxu0 0.0
  %5748 = vmatpush1.msra.mxu0 0.0
  %5749 = vmatprep.subr.mxu0 0.0
  %5750 = vmatpush1.msra.mxu0 0.0
  %5751 = vmatprep.subr.mxu0 0.0
  %5752 = vmatpush1.msra.mxu0 0.0
  %5753 = vmatprep.subr.mxu0 0.0
  %5754 = vmatpush1.msra.mxu0 0.0
  %5755 = vmatprep.subr.mxu0 0.0
  %5756 = vmatpush1.msra.mxu0 0.0
  %5757 = vmatprep.subr.mxu0 0.0
  %5758 = vmatpush1.msra.mxu0 0.0
  %5759 = vmatprep.subr.mxu0 0.0
  %5760 = vmatpush1.msra.mxu0 0.0
  %5761 = vmatprep.subr.mxu0 0.0
  %5762 = vmatpush1.msra.mxu0 0.0
  %5763 = vmatprep.subr.mxu0 0.0
  %5764 = vmatpush1.msra.mxu0 0.0
  %5765 = vmatprep.subr.mxu0 0.0
  %5766 = vmatpush1.msra.mxu0 0.0
  %5767 = vmatprep.mubr.f32.mxu0 0.0
  %5768 = vmatmul.mubr.f32.gmra.mrb[0].mxu0 %v5698
  %v5769 = vpop.f32.mrb[0].mxu0
  %v5770 = vadd.f32 0.0, %v5769
  %v5771 = vpop.f32.mrb[0].mxu0
  %5772 = vmatprep.mubr.f32.mxu0 0.0
  %5773 = vmatmul.mubr.f32.gmra.mrb[0].mxu0 %v5701
  %v5774 = vpop.f32.mrb[0].mxu0
  %v5775 = vadd.f32 0.0, %v5774
  %v5776 = vpop.f32.mrb[0].mxu0
  %5777 = vdwg.mxu0
  %v5778 = vadd.f32 %v5109, %v5770
  %v5779 = vadd.f32 %v5110, %v5775
  %v5780 = vadd.f32 %v3054, %v5778
  %v5781 = vadd.f32 %v3055, %v5779
  %s5782 = scalar_lea.vmem %s10, 1
  %v5783 = vld [vmem:[%s5782] sm:$0x1]
  %v5785 = vlaneseq
  %v5786 = vshrl.u32 %v5785, 7
  %v5787 = vsub.s32 0, %v5786
  %v5788 = vrot.slane %v5783, %v5787
  %v5790 = vadd.f32 %v5780, %v5788
  %v5791 = vadd.f32 %v5781, %v5788
  %s5792 = scalar_lea.vmem %s11, 1
  %v5793 = vld [vmem:[%s5792] sm:$0x1]
  %s5794 = scalar_lea.vmem %s12, 1
  %v5795 = vld [vmem:[%s5794] sm:$0x1]
  %v5796 = vsel %vm75, %v5790, 0.0
  %5797 = vadd.xlane.f32.xlu0 %v5796
  %v5798 = vpop.xlane.xlu0 %5797
  %v5799 = vsel %vm75, %v5791, 0.0
  %5800 = vadd.xlane.f32.xlu0 %v5799
  %v5801 = vpop.xlane.xlu0 %5800
  %v5802 = vmul.f32 %v5798, %v82
  %v5803 = vmul.f32 %v5801, %v82
  %v5804 = vsub.f32 %v5790, %v5802
  %v5805 = vsub.f32 %v5791, %v5803
  %v5806 = vmul.f32 %v5804, %v5804
  %v5807 = vmul.f32 %v5805, %v5805
  %v5808 = vsel %vm75, %v5806, 0.0
  %5809 = vadd.xlane.f32.xlu0 %v5808
  %v5810 = vpop.xlane.xlu0 %5809
  %v5811 = vsel %vm75, %v5807, 0.0
  %5812 = vadd.xlane.f32.xlu0 %v5811
  %v5813 = vpop.xlane.xlu0 %5812
  %v5814 = vmul.f32 %v5810, %v82
  %v5815 = vmul.f32 %v5813, %v82
  %v5816 = vadd.f32 %v5814, 1e-05
  %v5817 = vadd.f32 %v5815, 1e-05
  %v5818 = vrsqrt.pop %v5816
  %v5819 = vrsqrt.pop %v5817
  %v5820 = vmul.f32 %v5804, %v5818
  %v5821 = vmul.f32 %v5805, %v5819
  %v5823 = vlaneseq
  %v5824 = vshrl.u32 %v5823, 7
  %v5825 = vsub.s32 0, %v5824
  %v5826 = vrot.slane %v5793, %v5825
  %v5828 = vmul.f32 %v5820, %v5826
  %v5829 = vmul.f32 %v5821, %v5826
  %v5831 = vlaneseq
  %v5832 = vshrl.u32 %v5831, 7
  %v5833 = vsub.s32 0, %v5832
  %v5834 = vrot.slane %v5795, %v5833
  %v5836 = vadd.f32 %v5828, %v5834
  %v5837 = vadd.f32 %v5829, %v5834
  %s5838 = scalar_lea.vmem %s13, 32
  %v5839 = vld [vmem:[%s5838] sm:$0xff]
  %v5840 = vld [vmem:[%s5838 + $0x8] sm:$0xff]
  %v5841 = vld [vmem:[%s5838 + $0x10] sm:$0xff]
  %v5842 = vld [vmem:[%s5838 + $0x18] sm:$0xff]
  %s5843 = scalar_lea.vmem %s14, 1
  %v5844 = vld [vmem:[%s5843] sm:$0x1]
  %v5846 = vlaneseq
  %v5847 = vshrl.u32 %v5846, 7
  %v5848 = vsub.s32 0, %v5847
  %v5849 = vrot.slane %v5844, %v5848
  %v5852 = vsel %vm75, %v5836, 0
  %v5855 = vsel %vm75, %v5837, 0
  %5857 = vmatprep.subr.mxu0 0.0
  %5858 = vmatpush1.msra.mxu0 %v5839
  %5859 = vmatprep.subr.mxu0 0.0
  %5860 = vmatpush1.msra.mxu0 %v5840
  %5861 = vmatprep.subr.mxu0 0.0
  %5862 = vmatpush1.msra.mxu0 %v5841
  %5863 = vmatprep.subr.mxu0 0.0
  %5864 = vmatpush1.msra.mxu0 %v5842
  %5865 = vmatprep.subr.mxu0 0.0
  %5866 = vmatpush1.msra.mxu0 0.0
  %5867 = vmatprep.subr.mxu0 0.0
  %5868 = vmatpush1.msra.mxu0 0.0
  %5869 = vmatprep.subr.mxu0 0.0
  %5870 = vmatpush1.msra.mxu0 0.0
  %5871 = vmatprep.subr.mxu0 0.0
  %5872 = vmatpush1.msra.mxu0 0.0
  %5873 = vmatprep.subr.mxu0 0.0
  %5874 = vmatpush1.msra.mxu0 0.0
  %5875 = vmatprep.subr.mxu0 0.0
  %5876 = vmatpush1.msra.mxu0 0.0
  %5877 = vmatprep.subr.mxu0 0.0
  %5878 = vmatpush1.msra.mxu0 0.0
  %5879 = vmatprep.subr.mxu0 0.0
  %5880 = vmatpush1.msra.mxu0 0.0
  %5881 = vmatprep.subr.mxu0 0.0
  %5882 = vmatpush1.msra.mxu0 0.0
  %5883 = vmatprep.subr.mxu0 0.0
  %5884 = vmatpush1.msra.mxu0 0.0
  %5885 = vmatprep.subr.mxu0 0.0
  %5886 = vmatpush1.msra.mxu0 0.0
  %5887 = vmatprep.subr.mxu0 0.0
  %5888 = vmatpush1.msra.mxu0 0.0
  %5889 = vmatprep.subr.mxu0 0.0
  %5890 = vmatpush1.msra.mxu0 0.0
  %5891 = vmatprep.subr.mxu0 0.0
  %5892 = vmatpush1.msra.mxu0 0.0
  %5893 = vmatprep.subr.mxu0 0.0
  %5894 = vmatpush1.msra.mxu0 0.0
  %5895 = vmatprep.subr.mxu0 0.0
  %5896 = vmatpush1.msra.mxu0 0.0
  %5897 = vmatprep.subr.mxu0 0.0
  %5898 = vmatpush1.msra.mxu0 0.0
  %5899 = vmatprep.subr.mxu0 0.0
  %5900 = vmatpush1.msra.mxu0 0.0
  %5901 = vmatprep.subr.mxu0 0.0
  %5902 = vmatpush1.msra.mxu0 0.0
  %5903 = vmatprep.subr.mxu0 0.0
  %5904 = vmatpush1.msra.mxu0 0.0
  %5905 = vmatprep.subr.mxu0 0.0
  %5906 = vmatpush1.msra.mxu0 0.0
  %5907 = vmatprep.subr.mxu0 0.0
  %5908 = vmatpush1.msra.mxu0 0.0
  %5909 = vmatprep.subr.mxu0 0.0
  %5910 = vmatpush1.msra.mxu0 0.0
  %5911 = vmatprep.subr.mxu0 0.0
  %5912 = vmatpush1.msra.mxu0 0.0
  %5913 = vmatprep.subr.mxu0 0.0
  %5914 = vmatpush1.msra.mxu0 0.0
  %5915 = vmatprep.subr.mxu0 0.0
  %5916 = vmatpush1.msra.mxu0 0.0
  %5917 = vmatprep.subr.mxu0 0.0
  %5918 = vmatpush1.msra.mxu0 0.0
  %5919 = vmatprep.subr.mxu0 0.0
  %5920 = vmatpush1.msra.mxu0 0.0
  %5921 = vmatprep.mubr.f32.mxu0 0.0
  %5922 = vmatmul.mubr.f32.gmra.mrb[0].mxu0 %v5852
  %v5923 = vpop.f32.mrb[0].mxu0
  %v5924 = vadd.f32 %v5849, %v5923
  %v5925 = vpop.f32.mrb[0].mxu0
  %5926 = vmatprep.mubr.f32.mxu0 0.0
  %5927 = vmatmul.mubr.f32.gmra.mrb[0].mxu0 %v5855
  %v5928 = vpop.f32.mrb[0].mxu0
  %v5929 = vadd.f32 %v5849, %v5928
  %v5930 = vpop.f32.mrb[0].mxu0
  %5931 = vdwg.mxu0
  %v5932 = vmul.f32 %v5924, 0.5
  %v5933 = vmul.f32 %v5929, 0.5
  %v5934 = vmul.f32 %v5924, 0.044715
  %v5935 = vmul.f32 %v5929, 0.044715
  %v5936 = vmul.f32 %v5934, %v5924
  %v5937 = vmul.f32 %v5935, %v5929
  %v5938 = vmul.f32 %v5936, %v5924
  %v5939 = vmul.f32 %v5937, %v5929
  %v5940 = vadd.f32 %v5924, %v5938
  %v5941 = vadd.f32 %v5929, %v5939
  %v5942 = vmul.f32 %v5940, 0.7978846
  %v5943 = vmul.f32 %v5941, 0.7978846
  %v5944 = vtanh.pop %v5942
  %v5945 = vtanh.pop %v5943
  %v5946 = vadd.f32 %v5944, 1.0
  %v5947 = vadd.f32 %v5945, 1.0
  %v5948 = vmul.f32 %v5932, %v5946
  %v5949 = vmul.f32 %v5933, %v5947
  %s5950 = scalar_lea.vmem %s15, 128
  %v5951 = vld [vmem:[%s5950] sm:$0xff]
  %v5952 = vld [vmem:[%s5950 + $0x8] sm:$0xff]
  %v5953 = vld [vmem:[%s5950 + $0x10] sm:$0xff]
  %v5954 = vld [vmem:[%s5950 + $0x18] sm:$0xff]
  %v5955 = vld [vmem:[%s5950 + $0x20] sm:$0xff]
  %v5956 = vld [vmem:[%s5950 + $0x28] sm:$0xff]
  %v5957 = vld [vmem:[%s5950 + $0x30] sm:$0xff]
  %v5958 = vld [vmem:[%s5950 + $0x38] sm:$0xff]
  %v5959 = vld [vmem:[%s5950 + $0x40] sm:$0xff]
  %v5960 = vld [vmem:[%s5950 + $0x48] sm:$0xff]
  %v5961 = vld [vmem:[%s5950 + $0x50] sm:$0xff]
  %v5962 = vld [vmem:[%s5950 + $0x58] sm:$0xff]
  %v5963 = vld [vmem:[%s5950 + $0x60] sm:$0xff]
  %v5964 = vld [vmem:[%s5950 + $0x68] sm:$0xff]
  %v5965 = vld [vmem:[%s5950 + $0x70] sm:$0xff]
  %v5966 = vld [vmem:[%s5950 + $0x78] sm:$0xff]
  %s5967 = scalar_lea.vmem %s16, 1
  %v5968 = vld [vmem:[%s5967] sm:$0x1]
  %v5970 = vlaneseq
  %v5971 = vshrl.u32 %v5970, 7
  %v5972 = vsub.s32 0, %v5971
  %v5973 = vrot.slane %v5968, %v5972
  %5975 = vmatprep.subr.mxu0 0.0
  %5976 = vmatpush1.msra.mxu0 %v5951
  %5977 = vmatprep.subr.mxu0 0.0
  %5978 = vmatpush1.msra.mxu0 %v5952
  %5979 = vmatprep.subr.mxu0 0.0
  %5980 = vmatpush1.msra.mxu0 %v5953
  %5981 = vmatprep.subr.mxu0 0.0
  %5982 = vmatpush1.msra.mxu0 %v5954
  %5983 = vmatprep.subr.mxu0 0.0
  %5984 = vmatpush1.msra.mxu0 %v5955
  %5985 = vmatprep.subr.mxu0 0.0
  %5986 = vmatpush1.msra.mxu0 %v5956
  %5987 = vmatprep.subr.mxu0 0.0
  %5988 = vmatpush1.msra.mxu0 %v5957
  %5989 = vmatprep.subr.mxu0 0.0
  %5990 = vmatpush1.msra.mxu0 %v5958
  %5991 = vmatprep.subr.mxu0 0.0
  %5992 = vmatpush1.msra.mxu0 %v5959
  %5993 = vmatprep.subr.mxu0 0.0
  %5994 = vmatpush1.msra.mxu0 %v5960
  %5995 = vmatprep.subr.mxu0 0.0
  %5996 = vmatpush1.msra.mxu0 %v5961
  %5997 = vmatprep.subr.mxu0 0.0
  %5998 = vmatpush1.msra.mxu0 %v5962
  %5999 = vmatprep.subr.mxu0 0.0
  %6000 = vmatpush1.msra.mxu0 %v5963
  %6001 = vmatprep.subr.mxu0 0.0
  %6002 = vmatpush1.msra.mxu0 %v5964
  %6003 = vmatprep.subr.mxu0 0.0
  %6004 = vmatpush1.msra.mxu0 %v5965
  %6005 = vmatprep.subr.mxu0 0.0
  %6006 = vmatpush1.msra.mxu0 %v5966
  %6007 = vmatprep.subr.mxu0 0.0
  %6008 = vmatpush1.msra.mxu0 0.0
  %6009 = vmatprep.subr.mxu0 0.0
  %6010 = vmatpush1.msra.mxu0 0.0
  %6011 = vmatprep.subr.mxu0 0.0
  %6012 = vmatpush1.msra.mxu0 0.0
  %6013 = vmatprep.subr.mxu0 0.0
  %6014 = vmatpush1.msra.mxu0 0.0
  %6015 = vmatprep.subr.mxu0 0.0
  %6016 = vmatpush1.msra.mxu0 0.0
  %6017 = vmatprep.subr.mxu0 0.0
  %6018 = vmatpush1.msra.mxu0 0.0
  %6019 = vmatprep.subr.mxu0 0.0
  %6020 = vmatpush1.msra.mxu0 0.0
  %6021 = vmatprep.subr.mxu0 0.0
  %6022 = vmatpush1.msra.mxu0 0.0
  %6023 = vmatprep.subr.mxu0 0.0
  %6024 = vmatpush1.msra.mxu0 0.0
  %6025 = vmatprep.subr.mxu0 0.0
  %6026 = vmatpush1.msra.mxu0 0.0
  %6027 = vmatprep.subr.mxu0 0.0
  %6028 = vmatpush1.msra.mxu0 0.0
  %6029 = vmatprep.subr.mxu0 0.0
  %6030 = vmatpush1.msra.mxu0 0.0
  %6031 = vmatprep.subr.mxu0 0.0
  %6032 = vmatpush1.msra.mxu0 0.0
  %6033 = vmatprep.subr.mxu0 0.0
  %6034 = vmatpush1.msra.mxu0 0.0
  %6035 = vmatprep.subr.mxu0 0.0
  %6036 = vmatpush1.msra.mxu0 0.0
  %6037 = vmatprep.subr.mxu0 0.0
  %6038 = vmatpush1.msra.mxu0 0.0
  %6039 = vmatprep.mubr.f32.mxu0 0.0
  %6040 = vmatmul.mubr.f32.gmra.mrb[0].mxu0 %v5948
  %v6041 = vpop.f32.mrb[0].mxu0
  %v6042 = vadd.f32 %v5973, %v6041
  %v6043 = vpop.f32.mrb[0].mxu0
  %6044 = vmatprep.mubr.f32.mxu0 0.0
  %6045 = vmatmul.mubr.f32.gmra.mrb[0].mxu0 %v5949
  %v6046 = vpop.f32.mrb[0].mxu0
  %v6047 = vadd.f32 %v5973, %v6046
  %v6048 = vpop.f32.mrb[0].mxu0
  %6049 = vdwg.mxu0
  %v6050 = vadd.f32 %v5790, %v6042
  %v6051 = vadd.f32 %v5791, %v6047
  %v6052 = vld [vmem:[%s17] sm:$0x1]
  %v6053 = vld [vmem:[%s18] sm:$0x1]
  %v6054 = vsel %vm75, %v6050, 0.0
  %6055 = vadd.xlane.f32.xlu0 %v6054
  %v6056 = vpop.xlane.xlu0 %6055
  %v6057 = vsel %vm75, %v6051, 0.0
  %6058 = vadd.xlane.f32.xlu0 %v6057
  %v6059 = vpop.xlane.xlu0 %6058
  %v6060 = vmul.f32 %v6056, %v82
  %v6061 = vmul.f32 %v6059, %v82
  %v6062 = vsub.f32 %v6050, %v6060
  %v6063 = vsub.f32 %v6051, %v6061
  %v6064 = vmul.f32 %v6062, %v6062
  %v6065 = vmul.f32 %v6063, %v6063
  %v6066 = vsel %vm75, %v6064, 0.0
  %6067 = vadd.xlane.f32.xlu0 %v6066
  %v6068 = vpop.xlane.xlu0 %6067
  %v6069 = vsel %vm75, %v6065, 0.0
  %6070 = vadd.xlane.f32.xlu0 %v6069
  %v6071 = vpop.xlane.xlu0 %6070
  %v6072 = vmul.f32 %v6068, %v82
  %v6073 = vmul.f32 %v6071, %v82
  %v6074 = vadd.f32 %v6072, 1e-05
  %v6075 = vadd.f32 %v6073, 1e-05
  %v6076 = vrsqrt.pop %v6074
  %v6077 = vrsqrt.pop %v6075
  %v6078 = vmul.f32 %v6062, %v6076
  %v6079 = vmul.f32 %v6063, %v6077
  %v6081 = vlaneseq
  %v6082 = vshrl.u32 %v6081, 7
  %v6083 = vsub.s32 0, %v6082
  %v6084 = vrot.slane %v6052, %v6083
  %v6086 = vmul.f32 %v6078, %v6084
  %v6087 = vmul.f32 %v6079, %v6084
  %v6089 = vlaneseq
  %v6090 = vshrl.u32 %v6089, 7
  %v6091 = vsub.s32 0, %v6090
  %v6092 = vrot.slane %v6053, %v6091
  %v6094 = vadd.f32 %v6086, %v6092
  %v6095 = vadd.f32 %v6087, %v6092
  %v6096 = vld [vmem:[%s19] sm:$0xff]
  %v6097 = vld [vmem:[%s19 + $0x8] sm:$0xff]
  %v6098 = vld [vmem:[%s19 + $0x10] sm:$0xff]
  %v6099 = vld [vmem:[%s19 + $0x18] sm:$0xff]
  %v6101 = vsel %vm75, %v6094, 0
  %v6104 = vsel %vm75, %v6095, 0
  %6106 = vmatprep.subr.mxu0 0.0
  %6107 = vmatpush1.msra.mxu0 %v6096
  %6108 = vmatprep.subr.mxu0 0.0
  %6109 = vmatpush1.msra.mxu0 %v6097
  %6110 = vmatprep.subr.mxu0 0.0
  %6111 = vmatpush1.msra.mxu0 %v6098
  %6112 = vmatprep.subr.mxu0 0.0
  %6113 = vmatpush1.msra.mxu0 %v6099
  %6114 = vmatprep.subr.mxu0 0.0
  %6115 = vmatpush1.msra.mxu0 0.0
  %6116 = vmatprep.subr.mxu0 0.0
  %6117 = vmatpush1.msra.mxu0 0.0
  %6118 = vmatprep.subr.mxu0 0.0
  %6119 = vmatpush1.msra.mxu0 0.0
  %6120 = vmatprep.subr.mxu0 0.0
  %6121 = vmatpush1.msra.mxu0 0.0
  %6122 = vmatprep.subr.mxu0 0.0
  %6123 = vmatpush1.msra.mxu0 0.0
  %6124 = vmatprep.subr.mxu0 0.0
  %6125 = vmatpush1.msra.mxu0 0.0
  %6126 = vmatprep.subr.mxu0 0.0
  %6127 = vmatpush1.msra.mxu0 0.0
  %6128 = vmatprep.subr.mxu0 0.0
  %6129 = vmatpush1.msra.mxu0 0.0
  %6130 = vmatprep.subr.mxu0 0.0
  %6131 = vmatpush1.msra.mxu0 0.0
  %6132 = vmatprep.subr.mxu0 0.0
  %6133 = vmatpush1.msra.mxu0 0.0
  %6134 = vmatprep.subr.mxu0 0.0
  %6135 = vmatpush1.msra.mxu0 0.0
  %6136 = vmatprep.subr.mxu0 0.0
  %6137 = vmatpush1.msra.mxu0 0.0
  %6138 = vmatprep.subr.mxu0 0.0
  %6139 = vmatpush1.msra.mxu0 0.0
  %6140 = vmatprep.subr.mxu0 0.0
  %6141 = vmatpush1.msra.mxu0 0.0
  %6142 = vmatprep.subr.mxu0 0.0
  %6143 = vmatpush1.msra.mxu0 0.0
  %6144 = vmatprep.subr.mxu0 0.0
  %6145 = vmatpush1.msra.mxu0 0.0
  %6146 = vmatprep.subr.mxu0 0.0
  %6147 = vmatpush1.msra.mxu0 0.0
  %6148 = vmatprep.subr.mxu0 0.0
  %6149 = vmatpush1.msra.mxu0 0.0
  %6150 = vmatprep.subr.mxu0 0.0
  %6151 = vmatpush1.msra.mxu0 0.0
  %6152 = vmatprep.subr.mxu0 0.0
  %6153 = vmatpush1.msra.mxu0 0.0
  %6154 = vmatprep.subr.mxu0 0.0
  %6155 = vmatpush1.msra.mxu0 0.0
  %6156 = vmatprep.subr.mxu0 0.0
  %6157 = vmatpush1.msra.mxu0 0.0
  %6158 = vmatprep.subr.mxu0 0.0
  %6159 = vmatpush1.msra.mxu0 0.0
  %6160 = vmatprep.subr.mxu0 0.0
  %6161 = vmatpush1.msra.mxu0 0.0
  %6162 = vmatprep.subr.mxu0 0.0
  %6163 = vmatpush1.msra.mxu0 0.0
  %6164 = vmatprep.subr.mxu0 0.0
  %6165 = vmatpush1.msra.mxu0 0.0
  %6166 = vmatprep.subr.mxu0 0.0
  %6167 = vmatpush1.msra.mxu0 0.0
  %6168 = vmatprep.subr.mxu0 0.0
  %6169 = vmatpush1.msra.mxu0 0.0
  %6170 = vmatprep.mubr.f32.mxu0 0.0
  %6171 = vmatmul.mubr.f32.gmra.mrb[0].mxu0 %v6101
  %v6172 = vpop.f32.mrb[0].mxu0
  %v6173 = vadd.f32 0.0, %v6172
  %v6174 = vpop.f32.mrb[0].mxu0
  %6175 = vmatprep.mubr.f32.mxu0 0.0
  %6176 = vmatmul.mubr.f32.gmra.mrb[0].mxu0 %v6104
  %v6177 = vpop.f32.mrb[0].mxu0
  %v6178 = vadd.f32 0.0, %v6177
  %v6179 = vpop.f32.mrb[0].mxu0
  %6180 = vdwg.mxu0
  %6181 = vst [vmem:[%s20] sm:$0xff] %v6173
  %6182 = vst [vmem:[%s20 + $0x8] sm:$0xff] %v6178
  // Predicated region
  $region82: #{gpt_forward.1} parent=0 // pred_check
    _
  $region83: #{gpt_forward.1} parent=0 // pred_check_branch
    %6184 = sbr.rel (0) target = $region85
  $region84: #{gpt_forward.1} parent=0 // pred_region
    _
  $region85: #{gpt_forward.1} parent=0 // pred_fallthru
    _
  // Predicated region
  $region86: #{gpt_forward.1} parent=0 // pred_check
    _
  $region87: #{gpt_forward.1} parent=0 // pred_check_branch
    %6186 = sbr.rel (0) target = $region89
  $region88: #{gpt_forward.1} parent=0 // pred_region
    _
  $region89: #{gpt_forward.1} parent=0 // pred_fallthru
    _

</llo_original>
